<compile_context>
chip_gen: v6e
topology: v6e:2x2x1
jax: 0.10.0
libtpu: 0.0.40
codegen_flags: <defaults>
</compile_context>

<pallas_src>
import functools

import jax
import jax.numpy as jnp
from jax import lax
from jax.experimental import pallas as pl
from jax.experimental.pallas import tpu as pltpu

D_IN = 1000
D_OUT = 500
D_IN_P = 1024      # lane-aligned padding of the 1000-d input features
D_OUT_P = 512      # lane-aligned padding of the 500-d output features
INV_SCALE = 5.0
DROP_P = 0.5
NEG_INF = -1e30


def _round_up(x, m):
    return ((x + m - 1) // m) * m


def _chip_config():
    """(preferred row tile, vmem_limit_bytes) per TPU generation."""
    try:
        kind = jax.devices()[0].device_kind.lower()
    except Exception:
        kind = ""
    if "v5e" in kind or "v5 lite" in kind or "v5lite" in kind:
        return 128, 96 << 20          # v5e: 128-wide MXU, 128 MiB VMEM
    if "v6" in kind:
        return 256, 96 << 20          # v6e: 256-wide MXU, 128 MiB VMEM
    if "7" in kind:
        return 256, 48 << 20          # v7x: 256-wide MXU, 64 MiB VMEM per TC
    return 128, 48 << 20              # unknown: conservative


def _tile_config(B, block_rows=None):
    if block_rows is None:
        block_rows, _ = _chip_config()
    assert block_rows % 8 == 0
    TM = min(block_rows, _round_up(B, 128))
    B_pad = _round_up(B, TM)
    return TM, B_pad


def dropout_keep_mask(key, n):
    """Inverted-dropout keep mask, pre-scaled by 1/(1-p), streamed as bf16."""
    keep = jax.random.bernoulli(key, 1.0 - DROP_P, (n, n))
    return (keep.astype(jnp.float32) * (1.0 / (1.0 - DROP_P))).astype(jnp.bfloat16)


# -----------------------------------------------------------------------------
# Kernel 1: fused Q/K/V projections.  Grid over row tiles; the three bf16
# weights + f32 biases stay VMEM-resident (constant index_map) while the bf16
# x tiles stream through the auto-pipeline.  Outputs stored as bf16.
# -----------------------------------------------------------------------------
def _qkv_proj_kernel(x1_ref, x2_ref, x3_ref,
                     wq_ref, bq_ref, wk_ref, bk_ref, wv_ref, bv_ref,
                     q_ref, k_ref, v_ref):
    q = jnp.dot(x1_ref[...], wq_ref[...], preferred_element_type=jnp.float32) + bq_ref[...]
    k = jnp.dot(x2_ref[...], wk_ref[...], preferred_element_type=jnp.float32) + bk_ref[...]
    v = jnp.dot(x3_ref[...], wv_ref[...], preferred_element_type=jnp.float32) + bv_ref[...]
    q_ref[...] = q.astype(q_ref.dtype)
    k_ref[...] = k.astype(k_ref.dtype)
    v_ref[...] = v.astype(v_ref.dtype)


# -----------------------------------------------------------------------------
# Kernel 2: scaled-dot-product attention + dropout.  Grid over query-row tiles;
# bf16 K and V are VMEM-resident.  The 1/5 scale was already folded into Wq/bq,
# and padded key rows are masked with an in-kernel iota compare (b_actual is a
# trace-time constant).
# -----------------------------------------------------------------------------
def _attn_kernel(q_ref, k_ref, v_ref, keep_ref, o_ref, *, b_actual, need_mask):
    q = q_ref[...]                       # (TM, D_OUT_P)   bf16
    k = k_ref[...]                       # (B_pad, D_OUT_P) bf16
    s = lax.dot_general(q, k, dimension_numbers=(((1,), (1,)), ((), ())),
                        preferred_element_type=jnp.float32)
    if need_mask:
        col = lax.broadcasted_iota(jnp.int32, s.shape, 1)
        s = jnp.where(col < b_actual, s, NEG_INF)
    m = jnp.max(s, axis=-1, keepdims=True)
    e = jnp.exp(s - m)
    denom = jnp.sum(e, axis=-1, keepdims=True)
    p = e * pl.reciprocal(denom, approx=True)
    p = (p * keep_ref[...]).astype(jnp.bfloat16)      # keep pre-scaled by 1/(1-p)
    o_ref[...] = jnp.dot(p, v_ref[...], preferred_element_type=jnp.float32)


def prepare_params(params):
    """Pad to lane-dense sizes, fold the 1/5 score scale into Wq/bq, cast weights
    to bf16.  Call ONCE at init; the result is reused on every forward."""
    wq_t, bq, wk_t, bk, wv_t, bv = params
    f32 = jnp.float32

    def pad_w(w, scale=1.0):
        wp = jnp.pad(w.astype(f32) * scale,
                     ((0, D_IN_P - D_IN), (0, D_OUT_P - D_OUT)))
        return wp.astype(jnp.bfloat16)

    def pad_b(b, scale=1.0):
        return jnp.pad(b.astype(f32) * scale, ((0, 0), (0, D_OUT_P - D_OUT)))

    s = 1.0 / INV_SCALE
    return (pad_w(wq_t, s), pad_b(bq, s),
            pad_w(wk_t), pad_b(bk),
            pad_w(wv_t), pad_b(bv))


def model_forward(x1, x2, x3, x4, x5, pparams, dropout_key, block_rows=None):
    """Pallas implementation of Model.forward.  x4, x5 are ignored (as in torch)."""
    del x4, x5
    wq_p, bq_p, wk_p, bk_p, wv_p, bv_p = pparams
    B = x1.shape[0]
    f32, bf16 = jnp.float32, jnp.bfloat16

    TM, B_pad = _tile_config(B, block_rows)
    n_tiles = B_pad // TM
    _, vmem_limit = _chip_config()

    def pad_x(x):  # stream x as bf16 (halves DMA bytes + double-buffer VMEM)
        return jnp.pad(x.astype(bf16), ((0, B_pad - B), (0, D_IN_P - D_IN)))

    x1p, x2p, x3p = pad_x(x1), pad_x(x2), pad_x(x3)

    cparams = pltpu.CompilerParams(
        dimension_semantics=("parallel",),
        vmem_limit_bytes=vmem_limit,
    )

    x_spec = pl.BlockSpec((TM, D_IN_P), lambda i: (i, 0))
    w_spec = pl.BlockSpec((D_IN_P, D_OUT_P), lambda i: (0, 0))
    b_spec = pl.BlockSpec((1, D_OUT_P), lambda i: (0, 0))
    row_spec = pl.BlockSpec((TM, D_OUT_P), lambda i: (i, 0))

    q, k, v = pl.pallas_call(
        _qkv_proj_kernel,
        out_shape=(jax.ShapeDtypeStruct((B_pad, D_OUT_P), bf16),) * 3,
        grid=(n_tiles,),
        in_specs=[x_spec, x_spec, x_spec,
                  w_spec, b_spec, w_spec, b_spec, w_spec, b_spec],
        out_specs=(row_spec, row_spec, row_spec),
        compiler_params=cparams,
    )(x1p, x2p, x3p, wq_p, bq_p, wk_p, bk_p, wv_p, bv_p)

    # Dropout keep mask (bf16, values are exactly 0.0 / 2.0).
    keep = dropout_keep_mask(dropout_key, B_pad)

    attn = functools.partial(_attn_kernel, b_actual=B, need_mask=(B_pad > B))
    out_pad = pl.pallas_call(
        attn,
        out_shape=jax.ShapeDtypeStruct((B_pad, D_OUT_P), f32),
        grid=(n_tiles,),
        in_specs=[
            pl.BlockSpec((TM, D_OUT_P), lambda i: (i, 0)),     # q tile (bf16)
            pl.BlockSpec((B_pad, D_OUT_P), lambda i: (0, 0)),  # k resident (bf16)
            pl.BlockSpec((B_pad, D_OUT_P), lambda i: (0, 0)),  # v resident (bf16)
            pl.BlockSpec((TM, B_pad), lambda i: (i, 0)),       # keep-mask tile (bf16)
        ],
        out_specs=pl.BlockSpec((TM, D_OUT_P), lambda i: (i, 0)),
        compiler_params=cparams,
    )(q, k, v, keep)

    return out_pad[:B, :D_OUT]


def init_params(key):
    """Deterministic Kaiming-uniform-ish init matching torch.nn.Linear shapes."""
    ks = jax.random.split(key, 6)
    bound = 1.0 / (D_IN ** 0.5)

    def u(k, shape):
        return jax.random.uniform(k, shape, jnp.float32, minval=-bound, maxval=bound)

    # torch Linear stores weight as (out, in); we pass the transpose (in, out).
    wq_t = u(ks[0], (D_IN, D_OUT)); bq = u(ks[1], (1, D_OUT))
    wk_t = u(ks[2], (D_IN, D_OUT)); bk = u(ks[3], (1, D_OUT))
    wv_t = u(ks[4], (D_IN, D_OUT)); bv = u(ks[5], (1, D_OUT))
    return (wq_t, bq, wk_t, bk, wv_t, bv)


def _reference(x1, x2, x3, params, keep_bf16):
    """Pure-JAX reference mirroring the kernel's bf16-operand / f32-accumulate math."""
    wq_t, bq, wk_t, bk, wv_t, bv = params
    bf16 = jnp.bfloat16

    def lin(x, w, b):
        y = jnp.dot(x.astype(bf16), w.astype(bf16),
                    preferred_element_type=jnp.float32) + b
        return y.astype(bf16)

    q = lin(x1, wq_t, bq)
    k = lin(x2, wk_t, bk)
    v = lin(x3, wv_t, bv)
    s = jnp.dot(q, k.T, preferred_element_type=jnp.float32) / INV_SCALE
    p = jax.nn.softmax(s, axis=-1)
    p = (p * keep_bf16).astype(bf16)
    return jnp.dot(p, v, preferred_element_type=jnp.float32)


if __name__ == "__main__":
    key = jax.random.PRNGKey(0)
    k_par, k1, k2, k3, k4, k5, k_drop = jax.random.split(key, 7)

    params = init_params(k_par)
    pparams = prepare_params(params)        # pad/scale/cast weights ONCE

    # Small batch of rows; feature dims fixed by the Linear layers (1000 -> 500).
    B = 4
    x1 = jax.random.normal(k1, (B, D_IN), jnp.float32)
    x2 = jax.random.normal(k2, (B, D_IN), jnp.float32)
    x3 = jax.random.normal(k3, (B, D_IN), jnp.float32)
    x4 = jax.random.normal(k4, (B, D_IN), jnp.float32)  # unused, mirrors torch signature
    x5 = jax.random.normal(k5, (B, D_IN), jnp.float32)  # unused, mirrors torch signature

    out = model_forward(x1, x2, x3, x4, x5, pparams, dropout_key=k_drop)
    out = jax.block_until_ready(out)
    assert out.shape == (B, D_OUT) and out.dtype == jnp.float32

    # Correctness: compare against a pure-JAX forward using the exact same
    # dropout keep mask (sliced from the same (B_pad, B_pad) draw).
    _, B_pad = _tile_config(B)
    keep = dropout_keep_mask(k_drop, B_pad)[:B, :B]
    ref = _reference(x1, x2, x3, params, keep)
    err = float(jnp.max(jnp.abs(out - ref)))
    scale = float(jnp.max(jnp.abs(ref))) + 1e-6
    assert err <= 5e-2 * scale + 1e-3, f"mismatch: max_abs_err={err}, ref_scale={scale}"

    print("KERNEL_OK")
</pallas_src>

<mosaic_0001>
module attributes {stable_mosaic.version = 11 : i64} {
  func.func @_qkv_proj_kernel(%arg0: i32, %arg1: memref<128x1024xbf16, #tpu.memory_space<vmem>>, %arg2: memref<128x1024xbf16, #tpu.memory_space<vmem>>, %arg3: memref<128x1024xbf16, #tpu.memory_space<vmem>>, %arg4: memref<1024x512xbf16, #tpu.memory_space<vmem>>, %arg5: memref<1x512xf32, #tpu.memory_space<vmem>>, %arg6: memref<1024x512xbf16, #tpu.memory_space<vmem>>, %arg7: memref<1x512xf32, #tpu.memory_space<vmem>>, %arg8: memref<1024x512xbf16, #tpu.memory_space<vmem>>, %arg9: memref<1x512xf32, #tpu.memory_space<vmem>>, %arg10: memref<128x512xbf16, #tpu.memory_space<vmem>>, %arg11: memref<128x512xbf16, #tpu.memory_space<vmem>>, %arg12: memref<128x512xbf16, #tpu.memory_space<vmem>>) attributes {dimension_semantics = [#tpu.dimension_semantics<parallel>], iteration_bounds = array<i64: 1>, scalar_prefetch = 0 : i64, scratch_operands = 0 : i64, tpu.core_type = #tpu.core_type<tc>, window_params = [{transform_indices = @transform_0, window_bounds = array<i64: 128, 1024>}, {transform_indices = @transform_1, window_bounds = array<i64: 128, 1024>}, {transform_indices = @transform_2, window_bounds = array<i64: 128, 1024>}, {pipeline_mode = #tpu.pipeline_mode<synchronous>, transform_indices = @transform_3, window_bounds = array<i64: 1024, 512>}, {pipeline_mode = #tpu.pipeline_mode<synchronous>, transform_indices = @transform_4, window_bounds = array<i64: 1, 512>}, {pipeline_mode = #tpu.pipeline_mode<synchronous>, transform_indices = @transform_5, window_bounds = array<i64: 1024, 512>}, {pipeline_mode = #tpu.pipeline_mode<synchronous>, transform_indices = @transform_6, window_bounds = array<i64: 1, 512>}, {pipeline_mode = #tpu.pipeline_mode<synchronous>, transform_indices = @transform_7, window_bounds = array<i64: 1024, 512>}, {pipeline_mode = #tpu.pipeline_mode<synchronous>, transform_indices = @transform_8, window_bounds = array<i64: 1, 512>}, {transform_indices = @transform_9, window_bounds = array<i64: 128, 512>}, {transform_indices = @transform_10, window_bounds = array<i64: 128, 512>}, {transform_indices = @transform_11, window_bounds = array<i64: 128, 512>}]} {
    %c0 = arith.constant 0 : index
    %c0_0 = arith.constant 0 : index
    %0 = vector.load %arg1[%c0, %c0_0] : memref<128x1024xbf16, #tpu.memory_space<vmem>>, vector<128x1024xbf16>
    %c0_1 = arith.constant 0 : index
    %c0_2 = arith.constant 0 : index
    %1 = vector.load %arg4[%c0_1, %c0_2] : memref<1024x512xbf16, #tpu.memory_space<vmem>>, vector<1024x512xbf16>
    %cst = arith.constant dense<0.000000e+00> : vector<128x512xf32>
    %2 = tpu.matmul %0, %1, %cst {dimension_numbers = #tpu.dot_dimension_numbers<[1], [0], [0], [1], [0, 0, 1, 1], [], []>} : vector<128x1024xbf16>, vector<1024x512xbf16>, vector<128x512xf32> -> vector<128x512xf32>
    %c0_3 = arith.constant 0 : index
    %c0_4 = arith.constant 0 : index
    %3 = vector.load %arg5[%c0_3, %c0_4] : memref<1x512xf32, #tpu.memory_space<vmem>>, vector<1x512xf32>
    %4 = vector.broadcast %3 : vector<1x512xf32> to vector<128x512xf32>
    %5 = arith.addf %2, %4 : vector<128x512xf32>
    %c0_5 = arith.constant 0 : index
    %c0_6 = arith.constant 0 : index
    %6 = vector.load %arg2[%c0_5, %c0_6] : memref<128x1024xbf16, #tpu.memory_space<vmem>>, vector<128x1024xbf16>
    %c0_7 = arith.constant 0 : index
    %c0_8 = arith.constant 0 : index
    %7 = vector.load %arg6[%c0_7, %c0_8] : memref<1024x512xbf16, #tpu.memory_space<vmem>>, vector<1024x512xbf16>
    %cst_9 = arith.constant dense<0.000000e+00> : vector<128x512xf32>
    %8 = tpu.matmul %6, %7, %cst_9 {dimension_numbers = #tpu.dot_dimension_numbers<[1], [0], [0], [1], [0, 0, 1, 1], [], []>} : vector<128x1024xbf16>, vector<1024x512xbf16>, vector<128x512xf32> -> vector<128x512xf32>
    %c0_10 = arith.constant 0 : index
    %c0_11 = arith.constant 0 : index
    %9 = vector.load %arg7[%c0_10, %c0_11] : memref<1x512xf32, #tpu.memory_space<vmem>>, vector<1x512xf32>
    %10 = vector.broadcast %9 : vector<1x512xf32> to vector<128x512xf32>
    %11 = arith.addf %8, %10 : vector<128x512xf32>
    %c0_12 = arith.constant 0 : index
    %c0_13 = arith.constant 0 : index
    %12 = vector.load %arg3[%c0_12, %c0_13] : memref<128x1024xbf16, #tpu.memory_space<vmem>>, vector<128x1024xbf16>
    %c0_14 = arith.constant 0 : index
    %c0_15 = arith.constant 0 : index
    %13 = vector.load %arg8[%c0_14, %c0_15] : memref<1024x512xbf16, #tpu.memory_space<vmem>>, vector<1024x512xbf16>
    %cst_16 = arith.constant dense<0.000000e+00> : vector<128x512xf32>
    %14 = tpu.matmul %12, %13, %cst_16 {dimension_numbers = #tpu.dot_dimension_numbers<[1], [0], [0], [1], [0, 0, 1, 1], [], []>} : vector<128x1024xbf16>, vector<1024x512xbf16>, vector<128x512xf32> -> vector<128x512xf32>
    %c0_17 = arith.constant 0 : index
    %c0_18 = arith.constant 0 : index
    %15 = vector.load %arg9[%c0_17, %c0_18] : memref<1x512xf32, #tpu.memory_space<vmem>>, vector<1x512xf32>
    %16 = vector.broadcast %15 : vector<1x512xf32> to vector<128x512xf32>
    %17 = arith.addf %14, %16 : vector<128x512xf32>
    %18 = arith.truncf %5 : vector<128x512xf32> to vector<128x512xbf16>
    %c0_19 = arith.constant 0 : index
    %c0_20 = arith.constant 0 : index
    %19 = vector.load %arg10[%c0_19, %c0_20] : memref<128x512xbf16, #tpu.memory_space<vmem>>, vector<128x512xbf16>
    tpu.vector_store %arg10[%c0_19, %c0_20], %18 {strides = array<i32>} : memref<128x512xbf16, #tpu.memory_space<vmem>>, vector<128x512xbf16>,
    %20 = arith.truncf %11 : vector<128x512xf32> to vector<128x512xbf16>
    %c0_21 = arith.constant 0 : index
    %c0_22 = arith.constant 0 : index
    %21 = vector.load %arg11[%c0_21, %c0_22] : memref<128x512xbf16, #tpu.memory_space<vmem>>, vector<128x512xbf16>
    tpu.vector_store %arg11[%c0_21, %c0_22], %20 {strides = array<i32>} : memref<128x512xbf16, #tpu.memory_space<vmem>>, vector<128x512xbf16>,
    %22 = arith.truncf %17 : vector<128x512xf32> to vector<128x512xbf16>
    %c0_23 = arith.constant 0 : index
    %c0_24 = arith.constant 0 : index
    %23 = vector.load %arg12[%c0_23, %c0_24] : memref<128x512xbf16, #tpu.memory_space<vmem>>, vector<128x512xbf16>
    tpu.vector_store %arg12[%c0_23, %c0_24], %22 {strides = array<i32>} : memref<128x512xbf16, #tpu.memory_space<vmem>>, vector<128x512xbf16>,
    return
  }
  func.func @transform_0(%arg0: i32) -> (i32, i32) {
    %c0_i32 = arith.constant 0 : i32
    %c0_i32_0 = arith.constant 0 : i32
    return %arg0, %c0_i32 : i32, i32
  }
  func.func @transform_1(%arg0: i32) -> (i32, i32) {
    %c0_i32 = arith.constant 0 : i32
    %c0_i32_0 = arith.constant 0 : i32
    return %arg0, %c0_i32 : i32, i32
  }
  func.func @transform_2(%arg0: i32) -> (i32, i32) {
    %c0_i32 = arith.constant 0 : i32
    %c0_i32_0 = arith.constant 0 : i32
    return %arg0, %c0_i32 : i32, i32
  }
  func.func @transform_3(%arg0: i32) -> (i32, i32) {
    %c0_i32 = arith.constant 0 : i32
    %c0_i32_0 = arith.constant 0 : i32
    %c0_i32_1 = arith.constant 0 : i32
    return %c0_i32, %c0_i32_0 : i32, i32
  }
  func.func @transform_4(%arg0: i32) -> (i32, i32) {
    %c0_i32 = arith.constant 0 : i32
    %c0_i32_0 = arith.constant 0 : i32
    %c0_i32_1 = arith.constant 0 : i32
    return %c0_i32, %c0_i32_0 : i32, i32
  }
  func.func @transform_5(%arg0: i32) -> (i32, i32) {
    %c0_i32 = arith.constant 0 : i32
    %c0_i32_0 = arith.constant 0 : i32
    %c0_i32_1 = arith.constant 0 : i32
    return %c0_i32, %c0_i32_0 : i32, i32
  }
  func.func @transform_6(%arg0: i32) -> (i32, i32) {
    %c0_i32 = arith.constant 0 : i32
    %c0_i32_0 = arith.constant 0 : i32
    %c0_i32_1 = arith.constant 0 : i32
    return %c0_i32, %c0_i32_0 : i32, i32
  }
  func.func @transform_7(%arg0: i32) -> (i32, i32) {
    %c0_i32 = arith.constant 0 : i32
    %c0_i32_0 = arith.constant 0 : i32
    %c0_i32_1 = arith.constant 0 : i32
    return %c0_i32, %c0_i32_0 : i32, i32
  }
  func.func @transform_8(%arg0: i32) -> (i32, i32) {
    %c0_i32 = arith.constant 0 : i32
    %c0_i32_0 = arith.constant 0 : i32
    %c0_i32_1 = arith.constant 0 : i32
    return %c0_i32, %c0_i32_0 : i32, i32
  }
  func.func @transform_9(%arg0: i32) -> (i32, i32) {
    %c0_i32 = arith.constant 0 : i32
    %c0_i32_0 = arith.constant 0 : i32
    return %arg0, %c0_i32 : i32, i32
  }
  func.func @transform_10(%arg0: i32) -> (i32, i32) {
    %c0_i32 = arith.constant 0 : i32
    %c0_i32_0 = arith.constant 0 : i32
    return %arg0, %c0_i32 : i32, i32
  }
  func.func @transform_11(%arg0: i32) -> (i32, i32) {
    %c0_i32 = arith.constant 0 : i32
    %c0_i32_0 = arith.constant 0 : i32
    return %arg0, %c0_i32 : i32, i32
  }
}

</mosaic_0001>

<llo_original>
// kernel: tpu_custom_call.1
$region0: #{tpu_custom_call.1}
  #allocation0 [shape = 'u32[]', space=smem, size = 0x4, offset = 0x4, fixed_abs, tag = 'smem constant byte address 0x4 - core index']
  #allocation1 [shape = 'u32[144,128]{1,0:T(1,128)}', space=vmem, size = 0x12000, scoped, tag = 'internal scratch']
  %s0 = inlined_call_operand.hbm [shape: bf16[128,1024], index: 0, kind: input, shape index: {}]
  %s1 = inlined_call_operand.hbm [shape: bf16[128,1024], index: 1, kind: input, shape index: {}]
  %s2 = inlined_call_operand.hbm [shape: bf16[128,1024], index: 2, kind: input, shape index: {}]
  %s3 = inlined_call_operand.hbm [shape: bf16[1024,512], index: 3, kind: input, shape index: {}]
  %s4 = inlined_call_operand.vmem [shape: f32[1,512], index: 4, kind: input, shape index: {}]
  %s5 = inlined_call_operand.hbm [shape: bf16[1024,512], index: 5, kind: input, shape index: {}]
  %s6 = inlined_call_operand.vmem [shape: f32[1,512], index: 6, kind: input, shape index: {}]
  %s7 = inlined_call_operand.hbm [shape: bf16[1024,512], index: 7, kind: input, shape index: {}]
  %s8 = inlined_call_operand.vmem [shape: f32[1,512], index: 8, kind: input, shape index: {}]
  %s9 = inlined_call_operand.hbm [shape: bf16[128,512], index: 9, kind: output, shape index: {0}]
  %s10 = inlined_call_operand.hbm [shape: bf16[128,512], index: 10, kind: output, shape index: {1}]
  %s11 = inlined_call_operand.hbm [shape: bf16[128,512], index: 11, kind: output, shape index: {2}]
  %12 = xla_tuple %s9, %s10, %s11
  %s13 = sld [smem:[#allocation0]]
  $region86: #{tpu_custom_call.1} parent=0
    _
  %s15 = ssub.s32 1, %s13
  %s16 = scalar_select 0, %s15, %s13
  $region1: #{tpu_custom_call.1} parent=0
    #allocation2 [shape = 'u8[262144]{0}', space=vmem, size = 0x40000, scoped, tag = 'input window, operand 0, single buffered']
    #allocation3 [shape = 's32[1]{0}', space=sflag, size = 0x4, scoped, tag = 'scoped memory for tpu_custom_call.1']
    #allocation4 [shape = 's32[1]{0}', space=sflag, size = 0x4, scoped, tag = 'scoped memory for tpu_custom_call.1']
    #allocation5 [shape = 'u8[262144]{0}', space=vmem, size = 0x40000, scoped, tag = 'input window, operand 1, single buffered']
    #allocation6 [shape = 's32[1]{0}', space=sflag, size = 0x4, scoped, tag = 'scoped memory for tpu_custom_call.1']
    #allocation7 [shape = 'u8[262144]{0}', space=vmem, size = 0x40000, scoped, tag = 'input window, operand 2, single buffered']
    #allocation8 [shape = 'u8[1048576]{0}', space=vmem, size = 0x100000, scoped, tag = 'input window, operand 3, single buffered']
    #allocation9 [shape = 's32[1]{0}', space=sflag, size = 0x4, scoped, tag = 'scoped memory for tpu_custom_call.1']
    #allocation10 [shape = 'u8[1048576]{0}', space=vmem, size = 0x100000, scoped, tag = 'input window, operand 5, single buffered']
    #allocation11 [shape = 'u8[1048576]{0}', space=vmem, size = 0x100000, scoped, tag = 'input window, operand 7, single buffered']
    #allocation12 [shape = 's32[1]{0}', space=sflag, size = 0x4, scoped, tag = 'scoped memory for tpu_custom_call.1']
    #allocation13 [shape = 'u8[131072]{0}', space=vmem, size = 0x20000, scoped, tag = 'output window, operand 0, single buffered']
    #allocation14 [shape = 'u8[131072]{0}', space=vmem, size = 0x20000, scoped, tag = 'output window, operand 1, single buffered']
    #allocation15 [shape = 's32[1]{0}', space=sflag, size = 0x4, scoped, tag = 'scoped memory for tpu_custom_call.1']
    #allocation16 [shape = 'u8[131072]{0}', space=vmem, size = 0x20000, scoped, tag = 'output window, operand 2, single buffered']
    %17 = vsyncpa [#allocation3], 0
    %18 = vsyncpa [#allocation6], 0
    %19 = vsyncpa [#allocation9], 0
    %20 = vsyncpa [#allocation12], 0
    %21 = vsyncpa [#allocation4], 0
    %22 = vsyncpa [#allocation15], 0
    // Predicated region
    $region2: #{tpu_custom_call.1} parent=1 // pred_check
      _
    $region3: #{tpu_custom_call.1} parent=1 // pred_check_branch
      %24 = sbr.rel (0) target = $region5
    $region4: #{tpu_custom_call.1} parent=1 // pred_region
      %s26 = ssub.s32 8192, 8192
      %27 = vsyncadd [#allocation3], %s26
      %s28 = sshll.u32 [#allocation2], 4
      %s29 = int_to_ptr.vmem [resolvable:$true] %s28
      %34 = dma.hbm_to_vmem [thread:$0]  %s0, 8192, %s29, [#allocation3], 512, 512, 32
    $region5: #{tpu_custom_call.1} parent=1 // pred_fallthru
      _
    // Predicated region
    $region6: #{tpu_custom_call.1} parent=1 // pred_check
      _
    $region7: #{tpu_custom_call.1} parent=1 // pred_check_branch
      %36 = sbr.rel (0) target = $region9
    $region8: #{tpu_custom_call.1} parent=1 // pred_region
      %s38 = ssub.s32 8192, 8192
      %39 = vsyncadd [#allocation6], %s38
      %s40 = sshll.u32 [#allocation5], 4
      %s41 = int_to_ptr.vmem [resolvable:$true] %s40
      %46 = dma.hbm_to_vmem [thread:$0]  %s1, 8192, %s41, [#allocation6], 512, 512, 32
    $region9: #{tpu_custom_call.1} parent=1 // pred_fallthru
      _
    // Predicated region
    $region10: #{tpu_custom_call.1} parent=1 // pred_check
      _
    $region11: #{tpu_custom_call.1} parent=1 // pred_check_branch
      %48 = sbr.rel (0) target = $region13
    $region12: #{tpu_custom_call.1} parent=1 // pred_region
      %s50 = ssub.s32 8192, 8192
      %51 = vsyncadd [#allocation6], %s50
      %s52 = sshll.u32 [#allocation7], 4
      %s53 = int_to_ptr.vmem [resolvable:$true] %s52
      %58 = dma.hbm_to_vmem [thread:$0]  %s2, 8192, %s53, [#allocation6], 512, 512, 32
    $region13: #{tpu_custom_call.1} parent=1 // pred_fallthru
      _
    // Predicated region
    $region14: #{tpu_custom_call.1} parent=1 // pred_check
      _
    $region15: #{tpu_custom_call.1} parent=1 // pred_check_branch
      %60 = sbr.rel (0) target = $region17
    $region16: #{tpu_custom_call.1} parent=1 // pred_region
      %s62 = ssub.s32 32768, 32768
      %63 = vsyncadd [#allocation9], %s62
      %s64 = sshll.u32 [#allocation8], 4
      %s65 = int_to_ptr.vmem [resolvable:$true] %s64
      %70 = dma.hbm_to_vmem [thread:$0]  %s3, 32768, %s65, [#allocation9], 256, 256, 16
    $region17: #{tpu_custom_call.1} parent=1 // pred_fallthru
      _
    // Predicated region
    $region18: #{tpu_custom_call.1} parent=1 // pred_check
      _
    $region19: #{tpu_custom_call.1} parent=1 // pred_check_branch
      %72 = sbr.rel (0) target = $region21
    $region20: #{tpu_custom_call.1} parent=1 // pred_region
      _
    $region21: #{tpu_custom_call.1} parent=1 // pred_fallthru
      _
    // Predicated region
    $region22: #{tpu_custom_call.1} parent=1 // pred_check
      _
    $region23: #{tpu_custom_call.1} parent=1 // pred_check_branch
      %74 = sbr.rel (0) target = $region25
    $region24: #{tpu_custom_call.1} parent=1 // pred_region
      %s76 = ssub.s32 32768, 32768
      %77 = vsyncadd [#allocation9], %s76
      %s78 = sshll.u32 [#allocation10], 4
      %s79 = int_to_ptr.vmem [resolvable:$true] %s78
      %84 = dma.hbm_to_vmem [thread:$0]  %s5, 32768, %s79, [#allocation9], 256, 256, 16
    $region25: #{tpu_custom_call.1} parent=1 // pred_fallthru
      _
    // Predicated region
    $region26: #{tpu_custom_call.1} parent=1 // pred_check
      _
    $region27: #{tpu_custom_call.1} parent=1 // pred_check_branch
      %86 = sbr.rel (0) target = $region29
    $region28: #{tpu_custom_call.1} parent=1 // pred_region
      _
    $region29: #{tpu_custom_call.1} parent=1 // pred_fallthru
      _
    // Predicated region
    $region30: #{tpu_custom_call.1} parent=1 // pred_check
      _
    $region31: #{tpu_custom_call.1} parent=1 // pred_check_branch
      %88 = sbr.rel (0) target = $region33
    $region32: #{tpu_custom_call.1} parent=1 // pred_region
      %s90 = ssub.s32 32768, 32768
      %91 = vsyncadd [#allocation12], %s90
      %s92 = sshll.u32 [#allocation11], 4
      %s93 = int_to_ptr.vmem [resolvable:$true] %s92
      %98 = dma.hbm_to_vmem [thread:$0]  %s7, 32768, %s93, [#allocation12], 256, 256, 16
    $region33: #{tpu_custom_call.1} parent=1 // pred_fallthru
      _
    // Predicated region
    $region34: #{tpu_custom_call.1} parent=1 // pred_check
      _
    $region35: #{tpu_custom_call.1} parent=1 // pred_check_branch
      %100 = sbr.rel (0) target = $region37
    $region36: #{tpu_custom_call.1} parent=1 // pred_region
      _
    $region37: #{tpu_custom_call.1} parent=1 // pred_fallthru
      _
    // Predicated region
    $region38: #{tpu_custom_call.1} parent=1 // pred_check
      _
    $region39: #{tpu_custom_call.1} parent=1 // pred_check_branch
      %102 = sbr.rel (0) target = $region41
    $region40: #{tpu_custom_call.1} parent=1 // pred_region
      %103 = dma.done [#allocation3], 8192
    $region41: #{tpu_custom_call.1} parent=1 // pred_fallthru
      _
    // Predicated region
    $region42: #{tpu_custom_call.1} parent=1 // pred_check
      _
    $region43: #{tpu_custom_call.1} parent=1 // pred_check_branch
      %105 = sbr.rel (0) target = $region45
    $region44: #{tpu_custom_call.1} parent=1 // pred_region
      %106 = dma.done [#allocation6], 8192
    $region45: #{tpu_custom_call.1} parent=1 // pred_fallthru
      _
    // Predicated region
    $region46: #{tpu_custom_call.1} parent=1 // pred_check
      _
    $region47: #{tpu_custom_call.1} parent=1 // pred_check_branch
      %108 = sbr.rel (0) target = $region49
    $region48: #{tpu_custom_call.1} parent=1 // pred_region
      %109 = dma.done [#allocation6], 8192
    $region49: #{tpu_custom_call.1} parent=1 // pred_fallthru
      _
    // Predicated region
    $region50: #{tpu_custom_call.1} parent=1 // pred_check
      _
    $region51: #{tpu_custom_call.1} parent=1 // pred_check_branch
      %111 = sbr.rel (0) target = $region53
    $region52: #{tpu_custom_call.1} parent=1 // pred_region
      %112 = dma.done [#allocation9], 32768
    $region53: #{tpu_custom_call.1} parent=1 // pred_fallthru
      _
    // Predicated region
    $region54: #{tpu_custom_call.1} parent=1 // pred_check
      _
    $region55: #{tpu_custom_call.1} parent=1 // pred_check_branch
      %114 = sbr.rel (0) target = $region57
    $region56: #{tpu_custom_call.1} parent=1 // pred_region
      %115 = dma.done [#allocation9], 32768
    $region57: #{tpu_custom_call.1} parent=1 // pred_fallthru
      _
    // Predicated region
    $region58: #{tpu_custom_call.1} parent=1 // pred_check
      _
    $region59: #{tpu_custom_call.1} parent=1 // pred_check_branch
      %117 = sbr.rel (0) target = $region61
    $region60: #{tpu_custom_call.1} parent=1 // pred_region
      %118 = dma.done [#allocation12], 32768
    $region61: #{tpu_custom_call.1} parent=1 // pred_fallthru
      _
    %v119 = vld [vmem:[#allocation2] sm:$0xff]
    %v120 = vld [vmem:[#allocation2 + $0x8] sm:$0xff]
    %v121 = vld [vmem:[#allocation2 + $0x10] sm:$0xff]
    %v122 = vld [vmem:[#allocation2 + $0x18] sm:$0xff]
    %v123 = vld [vmem:[#allocation2 + $0x20] sm:$0xff]
    %v124 = vld [vmem:[#allocation2 + $0x28] sm:$0xff]
    %v125 = vld [vmem:[#allocation2 + $0x30] sm:$0xff]
    %v126 = vld [vmem:[#allocation2 + $0x38] sm:$0xff]
    %v127 = vld [vmem:[#allocation2 + $0x40] sm:$0xff]
    %v128 = vld [vmem:[#allocation2 + $0x48] sm:$0xff]
    %v129 = vld [vmem:[#allocation2 + $0x50] sm:$0xff]
    %v130 = vld [vmem:[#allocation2 + $0x58] sm:$0xff]
    %v131 = vld [vmem:[#allocation2 + $0x60] sm:$0xff]
    %v132 = vld [vmem:[#allocation2 + $0x68] sm:$0xff]
    %v133 = vld [vmem:[#allocation2 + $0x70] sm:$0xff]
    %v134 = vld [vmem:[#allocation2 + $0x78] sm:$0xff]
    %v135 = vld [vmem:[#allocation2 + $0x80] sm:$0xff]
    %v136 = vld [vmem:[#allocation2 + $0x88] sm:$0xff]
    %v137 = vld [vmem:[#allocation2 + $0x90] sm:$0xff]
    %v138 = vld [vmem:[#allocation2 + $0x98] sm:$0xff]
    %v139 = vld [vmem:[#allocation2 + $0xa0] sm:$0xff]
    %v140 = vld [vmem:[#allocation2 + $0xa8] sm:$0xff]
    %v141 = vld [vmem:[#allocation2 + $0xb0] sm:$0xff]
    %v142 = vld [vmem:[#allocation2 + $0xb8] sm:$0xff]
    %v143 = vld [vmem:[#allocation2 + $0xc0] sm:$0xff]
    %v144 = vld [vmem:[#allocation2 + $0xc8] sm:$0xff]
    %v145 = vld [vmem:[#allocation2 + $0xd0] sm:$0xff]
    %v146 = vld [vmem:[#allocation2 + $0xd8] sm:$0xff]
    %v147 = vld [vmem:[#allocation2 + $0xe0] sm:$0xff]
    %v148 = vld [vmem:[#allocation2 + $0xe8] sm:$0xff]
    %v149 = vld [vmem:[#allocation2 + $0xf0] sm:$0xff]
    %v150 = vld [vmem:[#allocation2 + $0xf8] sm:$0xff]
    %v151 = vld [vmem:[#allocation2 + $0x100] sm:$0xff]
    %v152 = vld [vmem:[#allocation2 + $0x108] sm:$0xff]
    %v153 = vld [vmem:[#allocation2 + $0x110] sm:$0xff]
    %v154 = vld [vmem:[#allocation2 + $0x118] sm:$0xff]
    %v155 = vld [vmem:[#allocation2 + $0x120] sm:$0xff]
    %v156 = vld [vmem:[#allocation2 + $0x128] sm:$0xff]
    %v157 = vld [vmem:[#allocation2 + $0x130] sm:$0xff]
    %v158 = vld [vmem:[#allocation2 + $0x138] sm:$0xff]
    %v159 = vld [vmem:[#allocation2 + $0x140] sm:$0xff]
    %v160 = vld [vmem:[#allocation2 + $0x148] sm:$0xff]
    %v161 = vld [vmem:[#allocation2 + $0x150] sm:$0xff]
    %v162 = vld [vmem:[#allocation2 + $0x158] sm:$0xff]
    %v163 = vld [vmem:[#allocation2 + $0x160] sm:$0xff]
    %v164 = vld [vmem:[#allocation2 + $0x168] sm:$0xff]
    %v165 = vld [vmem:[#allocation2 + $0x170] sm:$0xff]
    %v166 = vld [vmem:[#allocation2 + $0x178] sm:$0xff]
    %v167 = vld [vmem:[#allocation2 + $0x180] sm:$0xff]
    %v168 = vld [vmem:[#allocation2 + $0x188] sm:$0xff]
    %v169 = vld [vmem:[#allocation2 + $0x190] sm:$0xff]
    %v170 = vld [vmem:[#allocation2 + $0x198] sm:$0xff]
    %v171 = vld [vmem:[#allocation2 + $0x1a0] sm:$0xff]
    %v172 = vld [vmem:[#allocation2 + $0x1a8] sm:$0xff]
    %v173 = vld [vmem:[#allocation2 + $0x1b0] sm:$0xff]
    %v174 = vld [vmem:[#allocation2 + $0x1b8] sm:$0xff]
    %v175 = vld [vmem:[#allocation2 + $0x1c0] sm:$0xff]
    %v176 = vld [vmem:[#allocation2 + $0x1c8] sm:$0xff]
    %v177 = vld [vmem:[#allocation2 + $0x1d0] sm:$0xff]
    %v178 = vld [vmem:[#allocation2 + $0x1d8] sm:$0xff]
    %v179 = vld [vmem:[#allocation2 + $0x1e0] sm:$0xff]
    %v180 = vld [vmem:[#allocation2 + $0x1e8] sm:$0xff]
    %v181 = vld [vmem:[#allocation2 + $0x1f0] sm:$0xff]
    %v182 = vld [vmem:[#allocation2 + $0x1f8] sm:$0xff]
    %v183 = vld [vmem:[#allocation8] sm:$0xff]
    %v184 = vld [vmem:[#allocation8 + $0x8] sm:$0xff]
    %v185 = vld [vmem:[#allocation8 + $0x10] sm:$0xff]
    %v186 = vld [vmem:[#allocation8 + $0x18] sm:$0xff]
    %v187 = vld [vmem:[#allocation8 + $0x20] sm:$0xff]
    %v188 = vld [vmem:[#allocation8 + $0x28] sm:$0xff]
    %v189 = vld [vmem:[#allocation8 + $0x30] sm:$0xff]
    %v190 = vld [vmem:[#allocation8 + $0x38] sm:$0xff]
    %v191 = vld [vmem:[#allocation8 + $0x40] sm:$0xff]
    %v192 = vld [vmem:[#allocation8 + $0x48] sm:$0xff]
    %v193 = vld [vmem:[#allocation8 + $0x50] sm:$0xff]
    %v194 = vld [vmem:[#allocation8 + $0x58] sm:$0xff]
    %v195 = vld [vmem:[#allocation8 + $0x60] sm:$0xff]
    %v196 = vld [vmem:[#allocation8 + $0x68] sm:$0xff]
    %v197 = vld [vmem:[#allocation8 + $0x70] sm:$0xff]
    %v198 = vld [vmem:[#allocation8 + $0x78] sm:$0xff]
    %v199 = vld [vmem:[#allocation8 + $0x80] sm:$0xff]
    %v200 = vld [vmem:[#allocation8 + $0x88] sm:$0xff]
    %v201 = vld [vmem:[#allocation8 + $0x90] sm:$0xff]
    %v202 = vld [vmem:[#allocation8 + $0x98] sm:$0xff]
    %v203 = vld [vmem:[#allocation8 + $0xa0] sm:$0xff]
    %v204 = vld [vmem:[#allocation8 + $0xa8] sm:$0xff]
    %v205 = vld [vmem:[#allocation8 + $0xb0] sm:$0xff]
    %v206 = vld [vmem:[#allocation8 + $0xb8] sm:$0xff]
    %v207 = vld [vmem:[#allocation8 + $0xc0] sm:$0xff]
    %v208 = vld [vmem:[#allocation8 + $0xc8] sm:$0xff]
    %v209 = vld [vmem:[#allocation8 + $0xd0] sm:$0xff]
    %v210 = vld [vmem:[#allocation8 + $0xd8] sm:$0xff]
    %v211 = vld [vmem:[#allocation8 + $0xe0] sm:$0xff]
    %v212 = vld [vmem:[#allocation8 + $0xe8] sm:$0xff]
    %v213 = vld [vmem:[#allocation8 + $0xf0] sm:$0xff]
    %v214 = vld [vmem:[#allocation8 + $0xf8] sm:$0xff]
    %v215 = vld [vmem:[#allocation8 + $0x100] sm:$0xff]
    %v216 = vld [vmem:[#allocation8 + $0x108] sm:$0xff]
    %v217 = vld [vmem:[#allocation8 + $0x110] sm:$0xff]
    %v218 = vld [vmem:[#allocation8 + $0x118] sm:$0xff]
    %v219 = vld [vmem:[#allocation8 + $0x120] sm:$0xff]
    %v220 = vld [vmem:[#allocation8 + $0x128] sm:$0xff]
    %v221 = vld [vmem:[#allocation8 + $0x130] sm:$0xff]
    %v222 = vld [vmem:[#allocation8 + $0x138] sm:$0xff]
    %v223 = vld [vmem:[#allocation8 + $0x140] sm:$0xff]
    %v224 = vld [vmem:[#allocation8 + $0x148] sm:$0xff]
    %v225 = vld [vmem:[#allocation8 + $0x150] sm:$0xff]
    %v226 = vld [vmem:[#allocation8 + $0x158] sm:$0xff]
    %v227 = vld [vmem:[#allocation8 + $0x160] sm:$0xff]
    %v228 = vld [vmem:[#allocation8 + $0x168] sm:$0xff]
    %v229 = vld [vmem:[#allocation8 + $0x170] sm:$0xff]
    %v230 = vld [vmem:[#allocation8 + $0x178] sm:$0xff]
    %v231 = vld [vmem:[#allocation8 + $0x180] sm:$0xff]
    %v232 = vld [vmem:[#allocation8 + $0x188] sm:$0xff]
    %v233 = vld [vmem:[#allocation8 + $0x190] sm:$0xff]
    %v234 = vld [vmem:[#allocation8 + $0x198] sm:$0xff]
    %v235 = vld [vmem:[#allocation8 + $0x1a0] sm:$0xff]
    %v236 = vld [vmem:[#allocation8 + $0x1a8] sm:$0xff]
    %v237 = vld [vmem:[#allocation8 + $0x1b0] sm:$0xff]
    %v238 = vld [vmem:[#allocation8 + $0x1b8] sm:$0xff]
    %v239 = vld [vmem:[#allocation8 + $0x1c0] sm:$0xff]
    %v240 = vld [vmem:[#allocation8 + $0x1c8] sm:$0xff]
    %v241 = vld [vmem:[#allocation8 + $0x1d0] sm:$0xff]
    %v242 = vld [vmem:[#allocation8 + $0x1d8] sm:$0xff]
    %v243 = vld [vmem:[#allocation8 + $0x1e0] sm:$0xff]
    %v244 = vld [vmem:[#allocation8 + $0x1e8] sm:$0xff]
    %v245 = vld [vmem:[#allocation8 + $0x1f0] sm:$0xff]
    %v246 = vld [vmem:[#allocation8 + $0x1f8] sm:$0xff]
    %v247 = vld [vmem:[#allocation8 + $0x200] sm:$0xff]
    %v248 = vld [vmem:[#allocation8 + $0x208] sm:$0xff]
    %v249 = vld [vmem:[#allocation8 + $0x210] sm:$0xff]
    %v250 = vld [vmem:[#allocation8 + $0x218] sm:$0xff]
    %v251 = vld [vmem:[#allocation8 + $0x220] sm:$0xff]
    %v252 = vld [vmem:[#allocation8 + $0x228] sm:$0xff]
    %v253 = vld [vmem:[#allocation8 + $0x230] sm:$0xff]
    %v254 = vld [vmem:[#allocation8 + $0x238] sm:$0xff]
    %v255 = vld [vmem:[#allocation8 + $0x240] sm:$0xff]
    %v256 = vld [vmem:[#allocation8 + $0x248] sm:$0xff]
    %v257 = vld [vmem:[#allocation8 + $0x250] sm:$0xff]
    %v258 = vld [vmem:[#allocation8 + $0x258] sm:$0xff]
    %v259 = vld [vmem:[#allocation8 + $0x260] sm:$0xff]
    %v260 = vld [vmem:[#allocation8 + $0x268] sm:$0xff]
    %v261 = vld [vmem:[#allocation8 + $0x270] sm:$0xff]
    %v262 = vld [vmem:[#allocation8 + $0x278] sm:$0xff]
    %v263 = vld [vmem:[#allocation8 + $0x280] sm:$0xff]
    %v264 = vld [vmem:[#allocation8 + $0x288] sm:$0xff]
    %v265 = vld [vmem:[#allocation8 + $0x290] sm:$0xff]
    %v266 = vld [vmem:[#allocation8 + $0x298] sm:$0xff]
    %v267 = vld [vmem:[#allocation8 + $0x2a0] sm:$0xff]
    %v268 = vld [vmem:[#allocation8 + $0x2a8] sm:$0xff]
    %v269 = vld [vmem:[#allocation8 + $0x2b0] sm:$0xff]
    %v270 = vld [vmem:[#allocation8 + $0x2b8] sm:$0xff]
    %v271 = vld [vmem:[#allocation8 + $0x2c0] sm:$0xff]
    %v272 = vld [vmem:[#allocation8 + $0x2c8] sm:$0xff]
    %v273 = vld [vmem:[#allocation8 + $0x2d0] sm:$0xff]
    %v274 = vld [vmem:[#allocation8 + $0x2d8] sm:$0xff]
    %v275 = vld [vmem:[#allocation8 + $0x2e0] sm:$0xff]
    %v276 = vld [vmem:[#allocation8 + $0x2e8] sm:$0xff]
    %v277 = vld [vmem:[#allocation8 + $0x2f0] sm:$0xff]
    %v278 = vld [vmem:[#allocation8 + $0x2f8] sm:$0xff]
    %v279 = vld [vmem:[#allocation8 + $0x300] sm:$0xff]
    %v280 = vld [vmem:[#allocation8 + $0x308] sm:$0xff]
    %v281 = vld [vmem:[#allocation8 + $0x310] sm:$0xff]
    %v282 = vld [vmem:[#allocation8 + $0x318] sm:$0xff]
    %v283 = vld [vmem:[#allocation8 + $0x320] sm:$0xff]
    %v284 = vld [vmem:[#allocation8 + $0x328] sm:$0xff]
    %v285 = vld [vmem:[#allocation8 + $0x330] sm:$0xff]
    %v286 = vld [vmem:[#allocation8 + $0x338] sm:$0xff]
    %v287 = vld [vmem:[#allocation8 + $0x340] sm:$0xff]
    %v288 = vld [vmem:[#allocation8 + $0x348] sm:$0xff]
    %v289 = vld [vmem:[#allocation8 + $0x350] sm:$0xff]
    %v290 = vld [vmem:[#allocation8 + $0x358] sm:$0xff]
    %v291 = vld [vmem:[#allocation8 + $0x360] sm:$0xff]
    %v292 = vld [vmem:[#allocation8 + $0x368] sm:$0xff]
    %v293 = vld [vmem:[#allocation8 + $0x370] sm:$0xff]
    %v294 = vld [vmem:[#allocation8 + $0x378] sm:$0xff]
    %v295 = vld [vmem:[#allocation8 + $0x380] sm:$0xff]
    %v296 = vld [vmem:[#allocation8 + $0x388] sm:$0xff]
    %v297 = vld [vmem:[#allocation8 + $0x390] sm:$0xff]
    %v298 = vld [vmem:[#allocation8 + $0x398] sm:$0xff]
    %v299 = vld [vmem:[#allocation8 + $0x3a0] sm:$0xff]
    %v300 = vld [vmem:[#allocation8 + $0x3a8] sm:$0xff]
    %v301 = vld [vmem:[#allocation8 + $0x3b0] sm:$0xff]
    %v302 = vld [vmem:[#allocation8 + $0x3b8] sm:$0xff]
    %v303 = vld [vmem:[#allocation8 + $0x3c0] sm:$0xff]
    %v304 = vld [vmem:[#allocation8 + $0x3c8] sm:$0xff]
    %v305 = vld [vmem:[#allocation8 + $0x3d0] sm:$0xff]
    %v306 = vld [vmem:[#allocation8 + $0x3d8] sm:$0xff]
    %v307 = vld [vmem:[#allocation8 + $0x3e0] sm:$0xff]
    %v308 = vld [vmem:[#allocation8 + $0x3e8] sm:$0xff]
    %v309 = vld [vmem:[#allocation8 + $0x3f0] sm:$0xff]
    %v310 = vld [vmem:[#allocation8 + $0x3f8] sm:$0xff]
    %v311 = vld [vmem:[#allocation8 + $0x400] sm:$0xff]
    %v312 = vld [vmem:[#allocation8 + $0x408] sm:$0xff]
    %v313 = vld [vmem:[#allocation8 + $0x410] sm:$0xff]
    %v314 = vld [vmem:[#allocation8 + $0x418] sm:$0xff]
    %v315 = vld [vmem:[#allocation8 + $0x420] sm:$0xff]
    %v316 = vld [vmem:[#allocation8 + $0x428] sm:$0xff]
    %v317 = vld [vmem:[#allocation8 + $0x430] sm:$0xff]
    %v318 = vld [vmem:[#allocation8 + $0x438] sm:$0xff]
    %v319 = vld [vmem:[#allocation8 + $0x440] sm:$0xff]
    %v320 = vld [vmem:[#allocation8 + $0x448] sm:$0xff]
    %v321 = vld [vmem:[#allocation8 + $0x450] sm:$0xff]
    %v322 = vld [vmem:[#allocation8 + $0x458] sm:$0xff]
    %v323 = vld [vmem:[#allocation8 + $0x460] sm:$0xff]
    %v324 = vld [vmem:[#allocation8 + $0x468] sm:$0xff]
    %v325 = vld [vmem:[#allocation8 + $0x470] sm:$0xff]
    %v326 = vld [vmem:[#allocation8 + $0x478] sm:$0xff]
    %v327 = vld [vmem:[#allocation8 + $0x480] sm:$0xff]
    %v328 = vld [vmem:[#allocation8 + $0x488] sm:$0xff]
    %v329 = vld [vmem:[#allocation8 + $0x490] sm:$0xff]
    %v330 = vld [vmem:[#allocation8 + $0x498] sm:$0xff]
    %v331 = vld [vmem:[#allocation8 + $0x4a0] sm:$0xff]
    %v332 = vld [vmem:[#allocation8 + $0x4a8] sm:$0xff]
    %v333 = vld [vmem:[#allocation8 + $0x4b0] sm:$0xff]
    %v334 = vld [vmem:[#allocation8 + $0x4b8] sm:$0xff]
    %v335 = vld [vmem:[#allocation8 + $0x4c0] sm:$0xff]
    %v336 = vld [vmem:[#allocation8 + $0x4c8] sm:$0xff]
    %v337 = vld [vmem:[#allocation8 + $0x4d0] sm:$0xff]
    %v338 = vld [vmem:[#allocation8 + $0x4d8] sm:$0xff]
    %v339 = vld [vmem:[#allocation8 + $0x4e0] sm:$0xff]
    %v340 = vld [vmem:[#allocation8 + $0x4e8] sm:$0xff]
    %v341 = vld [vmem:[#allocation8 + $0x4f0] sm:$0xff]
    %v342 = vld [vmem:[#allocation8 + $0x4f8] sm:$0xff]
    %v343 = vld [vmem:[#allocation8 + $0x500] sm:$0xff]
    %v344 = vld [vmem:[#allocation8 + $0x508] sm:$0xff]
    %v345 = vld [vmem:[#allocation8 + $0x510] sm:$0xff]
    %v346 = vld [vmem:[#allocation8 + $0x518] sm:$0xff]
    %v347 = vld [vmem:[#allocation8 + $0x520] sm:$0xff]
    %v348 = vld [vmem:[#allocation8 + $0x528] sm:$0xff]
    %v349 = vld [vmem:[#allocation8 + $0x530] sm:$0xff]
    %v350 = vld [vmem:[#allocation8 + $0x538] sm:$0xff]
    %v351 = vld [vmem:[#allocation8 + $0x540] sm:$0xff]
    %v352 = vld [vmem:[#allocation8 + $0x548] sm:$0xff]
    %v353 = vld [vmem:[#allocation8 + $0x550] sm:$0xff]
    %v354 = vld [vmem:[#allocation8 + $0x558] sm:$0xff]
    %v355 = vld [vmem:[#allocation8 + $0x560] sm:$0xff]
    %v356 = vld [vmem:[#allocation8 + $0x568] sm:$0xff]
    %v357 = vld [vmem:[#allocation8 + $0x570] sm:$0xff]
    %v358 = vld [vmem:[#allocation8 + $0x578] sm:$0xff]
    %v359 = vld [vmem:[#allocation8 + $0x580] sm:$0xff]
    %v360 = vld [vmem:[#allocation8 + $0x588] sm:$0xff]
    %v361 = vld [vmem:[#allocation8 + $0x590] sm:$0xff]
    %v362 = vld [vmem:[#allocation8 + $0x598] sm:$0xff]
    %v363 = vld [vmem:[#allocation8 + $0x5a0] sm:$0xff]
    %v364 = vld [vmem:[#allocation8 + $0x5a8] sm:$0xff]
    %v365 = vld [vmem:[#allocation8 + $0x5b0] sm:$0xff]
    %v366 = vld [vmem:[#allocation8 + $0x5b8] sm:$0xff]
    %v367 = vld [vmem:[#allocation8 + $0x5c0] sm:$0xff]
    %v368 = vld [vmem:[#allocation8 + $0x5c8] sm:$0xff]
    %v369 = vld [vmem:[#allocation8 + $0x5d0] sm:$0xff]
    %v370 = vld [vmem:[#allocation8 + $0x5d8] sm:$0xff]
    %v371 = vld [vmem:[#allocation8 + $0x5e0] sm:$0xff]
    %v372 = vld [vmem:[#allocation8 + $0x5e8] sm:$0xff]
    %v373 = vld [vmem:[#allocation8 + $0x5f0] sm:$0xff]
    %v374 = vld [vmem:[#allocation8 + $0x5f8] sm:$0xff]
    %v375 = vld [vmem:[#allocation8 + $0x600] sm:$0xff]
    %v376 = vld [vmem:[#allocation8 + $0x608] sm:$0xff]
    %v377 = vld [vmem:[#allocation8 + $0x610] sm:$0xff]
    %v378 = vld [vmem:[#allocation8 + $0x618] sm:$0xff]
    %v379 = vld [vmem:[#allocation8 + $0x620] sm:$0xff]
    %v380 = vld [vmem:[#allocation8 + $0x628] sm:$0xff]
    %v381 = vld [vmem:[#allocation8 + $0x630] sm:$0xff]
    %v382 = vld [vmem:[#allocation8 + $0x638] sm:$0xff]
    %v383 = vld [vmem:[#allocation8 + $0x640] sm:$0xff]
    %v384 = vld [vmem:[#allocation8 + $0x648] sm:$0xff]
    %v385 = vld [vmem:[#allocation8 + $0x650] sm:$0xff]
    %v386 = vld [vmem:[#allocation8 + $0x658] sm:$0xff]
    %v387 = vld [vmem:[#allocation8 + $0x660] sm:$0xff]
    %v388 = vld [vmem:[#allocation8 + $0x668] sm:$0xff]
    %v389 = vld [vmem:[#allocation8 + $0x670] sm:$0xff]
    %v390 = vld [vmem:[#allocation8 + $0x678] sm:$0xff]
    %v391 = vld [vmem:[#allocation8 + $0x680] sm:$0xff]
    %v392 = vld [vmem:[#allocation8 + $0x688] sm:$0xff]
    %v393 = vld [vmem:[#allocation8 + $0x690] sm:$0xff]
    %v394 = vld [vmem:[#allocation8 + $0x698] sm:$0xff]
    %v395 = vld [vmem:[#allocation8 + $0x6a0] sm:$0xff]
    %v396 = vld [vmem:[#allocation8 + $0x6a8] sm:$0xff]
    %v397 = vld [vmem:[#allocation8 + $0x6b0] sm:$0xff]
    %v398 = vld [vmem:[#allocation8 + $0x6b8] sm:$0xff]
    %v399 = vld [vmem:[#allocation8 + $0x6c0] sm:$0xff]
    %v400 = vld [vmem:[#allocation8 + $0x6c8] sm:$0xff]
    %v401 = vld [vmem:[#allocation8 + $0x6d0] sm:$0xff]
    %v402 = vld [vmem:[#allocation8 + $0x6d8] sm:$0xff]
    %v403 = vld [vmem:[#allocation8 + $0x6e0] sm:$0xff]
    %v404 = vld [vmem:[#allocation8 + $0x6e8] sm:$0xff]
    %v405 = vld [vmem:[#allocation8 + $0x6f0] sm:$0xff]
    %v406 = vld [vmem:[#allocation8 + $0x6f8] sm:$0xff]
    %v407 = vld [vmem:[#allocation8 + $0x700] sm:$0xff]
    %v408 = vld [vmem:[#allocation8 + $0x708] sm:$0xff]
    %v409 = vld [vmem:[#allocation8 + $0x710] sm:$0xff]
    %v410 = vld [vmem:[#allocation8 + $0x718] sm:$0xff]
    %v411 = vld [vmem:[#allocation8 + $0x720] sm:$0xff]
    %v412 = vld [vmem:[#allocation8 + $0x728] sm:$0xff]
    %v413 = vld [vmem:[#allocation8 + $0x730] sm:$0xff]
    %v414 = vld [vmem:[#allocation8 + $0x738] sm:$0xff]
    %v415 = vld [vmem:[#allocation8 + $0x740] sm:$0xff]
    %v416 = vld [vmem:[#allocation8 + $0x748] sm:$0xff]
    %v417 = vld [vmem:[#allocation8 + $0x750] sm:$0xff]
    %v418 = vld [vmem:[#allocation8 + $0x758] sm:$0xff]
    %v419 = vld [vmem:[#allocation8 + $0x760] sm:$0xff]
    %v420 = vld [vmem:[#allocation8 + $0x768] sm:$0xff]
    %v421 = vld [vmem:[#allocation8 + $0x770] sm:$0xff]
    %v422 = vld [vmem:[#allocation8 + $0x778] sm:$0xff]
    %v423 = vld [vmem:[#allocation8 + $0x780] sm:$0xff]
    %v424 = vld [vmem:[#allocation8 + $0x788] sm:$0xff]
    %v425 = vld [vmem:[#allocation8 + $0x790] sm:$0xff]
    %v426 = vld [vmem:[#allocation8 + $0x798] sm:$0xff]
    %v427 = vld [vmem:[#allocation8 + $0x7a0] sm:$0xff]
    %v428 = vld [vmem:[#allocation8 + $0x7a8] sm:$0xff]
    %v429 = vld [vmem:[#allocation8 + $0x7b0] sm:$0xff]
    %v430 = vld [vmem:[#allocation8 + $0x7b8] sm:$0xff]
    %v431 = vld [vmem:[#allocation8 + $0x7c0] sm:$0xff]
    %v432 = vld [vmem:[#allocation8 + $0x7c8] sm:$0xff]
    %v433 = vld [vmem:[#allocation8 + $0x7d0] sm:$0xff]
    %v434 = vld [vmem:[#allocation8 + $0x7d8] sm:$0xff]
    %v435 = vld [vmem:[#allocation8 + $0x7e0] sm:$0xff]
    %v436 = vld [vmem:[#allocation8 + $0x7e8] sm:$0xff]
    %v437 = vld [vmem:[#allocation8 + $0x7f0] sm:$0xff]
    %v438 = vld [vmem:[#allocation8 + $0x7f8] sm:$0xff]
    %v439 = vld [vmem:[%s4] sm:$0xf]
    %v441 = vlaneseq
    %v442 = vshrl.u32 %v441, 7
    %v443 = vsub.s32 0, %v442
    %v444 = vrot.slane %v439, %v443
    %v445 = vlaneseq
    %v446 = vshrl.u32 %v445, 7
    %v447 = vsub.s32 1, %v446
    %v448 = vrot.slane %v439, %v447
    %v449 = vlaneseq
    %v450 = vshrl.u32 %v449, 7
    %v451 = vsub.s32 2, %v450
    %v452 = vrot.slane %v439, %v451
    %v453 = vlaneseq
    %v454 = vshrl.u32 %v453, 7
    %v455 = vsub.s32 3, %v454
    %v456 = vrot.slane %v439, %v455
    %v525 = vunpack.c.l.b16 %v119
    %v526 = vunpack.c.h.b16 %v119
    %v527 = vunpack.c.l.b16 %v120
    %v528 = vunpack.c.h.b16 %v120
    %v529 = vunpack.c.l.b16 %v121
    %v530 = vunpack.c.h.b16 %v121
    %v531 = vunpack.c.l.b16 %v122
    %v532 = vunpack.c.h.b16 %v122
    %v533 = vunpack.c.l.b16 %v123
    %v534 = vunpack.c.h.b16 %v123
    %v535 = vunpack.c.l.b16 %v124
    %v536 = vunpack.c.h.b16 %v124
    %v537 = vunpack.c.l.b16 %v125
    %v538 = vunpack.c.h.b16 %v125
    %v539 = vunpack.c.l.b16 %v126
    %v540 = vunpack.c.h.b16 %v126
    %v541 = vunpack.c.l.b16 %v127
    %v542 = vunpack.c.h.b16 %v127
    %v543 = vunpack.c.l.b16 %v128
    %v544 = vunpack.c.h.b16 %v128
    %v545 = vunpack.c.l.b16 %v129
    %v546 = vunpack.c.h.b16 %v129
    %v547 = vunpack.c.l.b16 %v130
    %v548 = vunpack.c.h.b16 %v130
    %v549 = vunpack.c.l.b16 %v131
    %v550 = vunpack.c.h.b16 %v131
    %v551 = vunpack.c.l.b16 %v132
    %v552 = vunpack.c.h.b16 %v132
    %v553 = vunpack.c.l.b16 %v133
    %v554 = vunpack.c.h.b16 %v133
    %v555 = vunpack.c.l.b16 %v134
    %v556 = vunpack.c.h.b16 %v134
    %v557 = vunpack.c.l.b16 %v135
    %v558 = vunpack.c.h.b16 %v135
    %v559 = vunpack.c.l.b16 %v136
    %v560 = vunpack.c.h.b16 %v136
    %v561 = vunpack.c.l.b16 %v137
    %v562 = vunpack.c.h.b16 %v137
    %v563 = vunpack.c.l.b16 %v138
    %v564 = vunpack.c.h.b16 %v138
    %v565 = vunpack.c.l.b16 %v139
    %v566 = vunpack.c.h.b16 %v139
    %v567 = vunpack.c.l.b16 %v140
    %v568 = vunpack.c.h.b16 %v140
    %v569 = vunpack.c.l.b16 %v141
    %v570 = vunpack.c.h.b16 %v141
    %v571 = vunpack.c.l.b16 %v142
    %v572 = vunpack.c.h.b16 %v142
    %v573 = vunpack.c.l.b16 %v143
    %v574 = vunpack.c.h.b16 %v143
    %v575 = vunpack.c.l.b16 %v144
    %v576 = vunpack.c.h.b16 %v144
    %v577 = vunpack.c.l.b16 %v145
    %v578 = vunpack.c.h.b16 %v145
    %v579 = vunpack.c.l.b16 %v146
    %v580 = vunpack.c.h.b16 %v146
    %v581 = vunpack.c.l.b16 %v147
    %v582 = vunpack.c.h.b16 %v147
    %v583 = vunpack.c.l.b16 %v148
    %v584 = vunpack.c.h.b16 %v148
    %v585 = vunpack.c.l.b16 %v149
    %v586 = vunpack.c.h.b16 %v149
    %v587 = vunpack.c.l.b16 %v150
    %v588 = vunpack.c.h.b16 %v150
    %v589 = vunpack.c.l.b16 %v151
    %v590 = vunpack.c.h.b16 %v151
    %v591 = vunpack.c.l.b16 %v152
    %v592 = vunpack.c.h.b16 %v152
    %v593 = vunpack.c.l.b16 %v153
    %v594 = vunpack.c.h.b16 %v153
    %v595 = vunpack.c.l.b16 %v154
    %v596 = vunpack.c.h.b16 %v154
    %v597 = vunpack.c.l.b16 %v155
    %v598 = vunpack.c.h.b16 %v155
    %v599 = vunpack.c.l.b16 %v156
    %v600 = vunpack.c.h.b16 %v156
    %v601 = vunpack.c.l.b16 %v157
    %v602 = vunpack.c.h.b16 %v157
    %v603 = vunpack.c.l.b16 %v158
    %v604 = vunpack.c.h.b16 %v158
    %v605 = vunpack.c.l.b16 %v159
    %v606 = vunpack.c.h.b16 %v159
    %v607 = vunpack.c.l.b16 %v160
    %v608 = vunpack.c.h.b16 %v160
    %v609 = vunpack.c.l.b16 %v161
    %v610 = vunpack.c.h.b16 %v161
    %v611 = vunpack.c.l.b16 %v162
    %v612 = vunpack.c.h.b16 %v162
    %v613 = vunpack.c.l.b16 %v163
    %v614 = vunpack.c.h.b16 %v163
    %v615 = vunpack.c.l.b16 %v164
    %v616 = vunpack.c.h.b16 %v164
    %v617 = vunpack.c.l.b16 %v165
    %v618 = vunpack.c.h.b16 %v165
    %v619 = vunpack.c.l.b16 %v166
    %v620 = vunpack.c.h.b16 %v166
    %v621 = vunpack.c.l.b16 %v167
    %v622 = vunpack.c.h.b16 %v167
    %v623 = vunpack.c.l.b16 %v168
    %v624 = vunpack.c.h.b16 %v168
    %v625 = vunpack.c.l.b16 %v169
    %v626 = vunpack.c.h.b16 %v169
    %v627 = vunpack.c.l.b16 %v170
    %v628 = vunpack.c.h.b16 %v170
    %v629 = vunpack.c.l.b16 %v171
    %v630 = vunpack.c.h.b16 %v171
    %v631 = vunpack.c.l.b16 %v172
    %v632 = vunpack.c.h.b16 %v172
    %v633 = vunpack.c.l.b16 %v173
    %v634 = vunpack.c.h.b16 %v173
    %v635 = vunpack.c.l.b16 %v174
    %v636 = vunpack.c.h.b16 %v174
    %v637 = vunpack.c.l.b16 %v175
    %v638 = vunpack.c.h.b16 %v175
    %v639 = vunpack.c.l.b16 %v176
    %v640 = vunpack.c.h.b16 %v176
    %v641 = vunpack.c.l.b16 %v177
    %v642 = vunpack.c.h.b16 %v177
    %v643 = vunpack.c.l.b16 %v178
    %v644 = vunpack.c.h.b16 %v178
    %v645 = vunpack.c.l.b16 %v179
    %v646 = vunpack.c.h.b16 %v179
    %v647 = vunpack.c.l.b16 %v180
    %v648 = vunpack.c.h.b16 %v180
    %v649 = vunpack.c.l.b16 %v181
    %v650 = vunpack.c.h.b16 %v181
    %v651 = vunpack.c.l.b16 %v182
    %v652 = vunpack.c.h.b16 %v182
    %v653 = vpack.c.b16 %v533, %v525
    %v654 = vpack.c.b16 %v534, %v526
    %v655 = vpack.c.b16 %v535, %v527
    %v656 = vpack.c.b16 %v536, %v528
    %v657 = vpack.c.b16 %v537, %v529
    %v658 = vpack.c.b16 %v538, %v530
    %v659 = vpack.c.b16 %v539, %v531
    %v660 = vpack.c.b16 %v540, %v532
    %v661 = vpack.c.b16 %v549, %v541
    %v662 = vpack.c.b16 %v550, %v542
    %v663 = vpack.c.b16 %v551, %v543
    %v664 = vpack.c.b16 %v552, %v544
    %v665 = vpack.c.b16 %v553, %v545
    %v666 = vpack.c.b16 %v554, %v546
    %v667 = vpack.c.b16 %v555, %v547
    %v668 = vpack.c.b16 %v556, %v548
    %v669 = vpack.c.b16 %v565, %v557
    %v670 = vpack.c.b16 %v566, %v558
    %v671 = vpack.c.b16 %v567, %v559
    %v672 = vpack.c.b16 %v568, %v560
    %v673 = vpack.c.b16 %v569, %v561
    %v674 = vpack.c.b16 %v570, %v562
    %v675 = vpack.c.b16 %v571, %v563
    %v676 = vpack.c.b16 %v572, %v564
    %v677 = vpack.c.b16 %v581, %v573
    %v678 = vpack.c.b16 %v582, %v574
    %v679 = vpack.c.b16 %v583, %v575
    %v680 = vpack.c.b16 %v584, %v576
    %v681 = vpack.c.b16 %v585, %v577
    %v682 = vpack.c.b16 %v586, %v578
    %v683 = vpack.c.b16 %v587, %v579
    %v684 = vpack.c.b16 %v588, %v580
    %v685 = vpack.c.b16 %v597, %v589
    %v686 = vpack.c.b16 %v598, %v590
    %v687 = vpack.c.b16 %v599, %v591
    %v688 = vpack.c.b16 %v600, %v592
    %v689 = vpack.c.b16 %v601, %v593
    %v690 = vpack.c.b16 %v602, %v594
    %v691 = vpack.c.b16 %v603, %v595
    %v692 = vpack.c.b16 %v604, %v596
    %v693 = vpack.c.b16 %v613, %v605
    %v694 = vpack.c.b16 %v614, %v606
    %v695 = vpack.c.b16 %v615, %v607
    %v696 = vpack.c.b16 %v616, %v608
    %v697 = vpack.c.b16 %v617, %v609
    %v698 = vpack.c.b16 %v618, %v610
    %v699 = vpack.c.b16 %v619, %v611
    %v700 = vpack.c.b16 %v620, %v612
    %v701 = vpack.c.b16 %v629, %v621
    %v702 = vpack.c.b16 %v630, %v622
    %v703 = vpack.c.b16 %v631, %v623
    %v704 = vpack.c.b16 %v632, %v624
    %v705 = vpack.c.b16 %v633, %v625
    %v706 = vpack.c.b16 %v634, %v626
    %v707 = vpack.c.b16 %v635, %v627
    %v708 = vpack.c.b16 %v636, %v628
    %v709 = vpack.c.b16 %v645, %v637
    %v710 = vpack.c.b16 %v646, %v638
    %v711 = vpack.c.b16 %v647, %v639
    %v712 = vpack.c.b16 %v648, %v640
    %v713 = vpack.c.b16 %v649, %v641
    %v714 = vpack.c.b16 %v650, %v642
    %v715 = vpack.c.b16 %v651, %v643
    %v716 = vpack.c.b16 %v652, %v644
    %v1037 = vunpack.c.l.b16 %v183
    %v1038 = vunpack.c.h.b16 %v183
    %v1039 = vunpack.c.l.b16 %v184
    %v1040 = vunpack.c.h.b16 %v184
    %v1041 = vunpack.c.l.b16 %v185
    %v1042 = vunpack.c.h.b16 %v185
    %v1043 = vunpack.c.l.b16 %v186
    %v1044 = vunpack.c.h.b16 %v186
    %v1045 = vunpack.c.l.b16 %v187
    %v1046 = vunpack.c.h.b16 %v187
    %v1047 = vunpack.c.l.b16 %v188
    %v1048 = vunpack.c.h.b16 %v188
    %v1049 = vunpack.c.l.b16 %v189
    %v1050 = vunpack.c.h.b16 %v189
    %v1051 = vunpack.c.l.b16 %v190
    %v1052 = vunpack.c.h.b16 %v190
    %v1053 = vunpack.c.l.b16 %v191
    %v1054 = vunpack.c.h.b16 %v191
    %v1055 = vunpack.c.l.b16 %v192
    %v1056 = vunpack.c.h.b16 %v192
    %v1057 = vunpack.c.l.b16 %v193
    %v1058 = vunpack.c.h.b16 %v193
    %v1059 = vunpack.c.l.b16 %v194
    %v1060 = vunpack.c.h.b16 %v194
    %v1061 = vunpack.c.l.b16 %v195
    %v1062 = vunpack.c.h.b16 %v195
    %v1063 = vunpack.c.l.b16 %v196
    %v1064 = vunpack.c.h.b16 %v196
    %v1065 = vunpack.c.l.b16 %v197
    %v1066 = vunpack.c.h.b16 %v197
    %v1067 = vunpack.c.l.b16 %v198
    %v1068 = vunpack.c.h.b16 %v198
    %v1069 = vunpack.c.l.b16 %v199
    %v1070 = vunpack.c.h.b16 %v199
    %v1071 = vunpack.c.l.b16 %v200
    %v1072 = vunpack.c.h.b16 %v200
    %v1073 = vunpack.c.l.b16 %v201
    %v1074 = vunpack.c.h.b16 %v201
    %v1075 = vunpack.c.l.b16 %v202
    %v1076 = vunpack.c.h.b16 %v202
    %v1077 = vunpack.c.l.b16 %v203
    %v1078 = vunpack.c.h.b16 %v203
    %v1079 = vunpack.c.l.b16 %v204
    %v1080 = vunpack.c.h.b16 %v204
    %v1081 = vunpack.c.l.b16 %v205
    %v1082 = vunpack.c.h.b16 %v205
    %v1083 = vunpack.c.l.b16 %v206
    %v1084 = vunpack.c.h.b16 %v206
    %v1085 = vunpack.c.l.b16 %v207
    %v1086 = vunpack.c.h.b16 %v207
    %v1087 = vunpack.c.l.b16 %v208
    %v1088 = vunpack.c.h.b16 %v208
    %v1089 = vunpack.c.l.b16 %v209
    %v1090 = vunpack.c.h.b16 %v209
    %v1091 = vunpack.c.l.b16 %v210
    %v1092 = vunpack.c.h.b16 %v210
    %v1093 = vunpack.c.l.b16 %v211
    %v1094 = vunpack.c.h.b16 %v211
    %v1095 = vunpack.c.l.b16 %v212
    %v1096 = vunpack.c.h.b16 %v212
    %v1097 = vunpack.c.l.b16 %v213
    %v1098 = vunpack.c.h.b16 %v213
    %v1099 = vunpack.c.l.b16 %v214
    %v1100 = vunpack.c.h.b16 %v214
    %v1101 = vunpack.c.l.b16 %v215
    %v1102 = vunpack.c.h.b16 %v215
    %v1103 = vunpack.c.l.b16 %v216
    %v1104 = vunpack.c.h.b16 %v216
    %v1105 = vunpack.c.l.b16 %v217
    %v1106 = vunpack.c.h.b16 %v217
    %v1107 = vunpack.c.l.b16 %v218
    %v1108 = vunpack.c.h.b16 %v218
    %v1109 = vunpack.c.l.b16 %v219
    %v1110 = vunpack.c.h.b16 %v219
    %v1111 = vunpack.c.l.b16 %v220
    %v1112 = vunpack.c.h.b16 %v220
    %v1113 = vunpack.c.l.b16 %v221
    %v1114 = vunpack.c.h.b16 %v221
    %v1115 = vunpack.c.l.b16 %v222
    %v1116 = vunpack.c.h.b16 %v222
    %v1117 = vunpack.c.l.b16 %v223
    %v1118 = vunpack.c.h.b16 %v223
    %v1119 = vunpack.c.l.b16 %v224
    %v1120 = vunpack.c.h.b16 %v224
    %v1121 = vunpack.c.l.b16 %v225
    %v1122 = vunpack.c.h.b16 %v225
    %v1123 = vunpack.c.l.b16 %v226
    %v1124 = vunpack.c.h.b16 %v226
    %v1125 = vunpack.c.l.b16 %v227
    %v1126 = vunpack.c.h.b16 %v227
    %v1127 = vunpack.c.l.b16 %v228
    %v1128 = vunpack.c.h.b16 %v228
    %v1129 = vunpack.c.l.b16 %v229
    %v1130 = vunpack.c.h.b16 %v229
    %v1131 = vunpack.c.l.b16 %v230
    %v1132 = vunpack.c.h.b16 %v230
    %v1133 = vunpack.c.l.b16 %v231
    %v1134 = vunpack.c.h.b16 %v231
    %v1135 = vunpack.c.l.b16 %v232
    %v1136 = vunpack.c.h.b16 %v232
    %v1137 = vunpack.c.l.b16 %v233
    %v1138 = vunpack.c.h.b16 %v233
    %v1139 = vunpack.c.l.b16 %v234
    %v1140 = vunpack.c.h.b16 %v234
    %v1141 = vunpack.c.l.b16 %v235
    %v1142 = vunpack.c.h.b16 %v235
    %v1143 = vunpack.c.l.b16 %v236
    %v1144 = vunpack.c.h.b16 %v236
    %v1145 = vunpack.c.l.b16 %v237
    %v1146 = vunpack.c.h.b16 %v237
    %v1147 = vunpack.c.l.b16 %v238
    %v1148 = vunpack.c.h.b16 %v238
    %v1149 = vunpack.c.l.b16 %v239
    %v1150 = vunpack.c.h.b16 %v239
    %v1151 = vunpack.c.l.b16 %v240
    %v1152 = vunpack.c.h.b16 %v240
    %v1153 = vunpack.c.l.b16 %v241
    %v1154 = vunpack.c.h.b16 %v241
    %v1155 = vunpack.c.l.b16 %v242
    %v1156 = vunpack.c.h.b16 %v242
    %v1157 = vunpack.c.l.b16 %v243
    %v1158 = vunpack.c.h.b16 %v243
    %v1159 = vunpack.c.l.b16 %v244
    %v1160 = vunpack.c.h.b16 %v244
    %v1161 = vunpack.c.l.b16 %v245
    %v1162 = vunpack.c.h.b16 %v245
    %v1163 = vunpack.c.l.b16 %v246
    %v1164 = vunpack.c.h.b16 %v246
    %v1165 = vunpack.c.l.b16 %v247
    %v1166 = vunpack.c.h.b16 %v247
    %v1167 = vunpack.c.l.b16 %v248
    %v1168 = vunpack.c.h.b16 %v248
    %v1169 = vunpack.c.l.b16 %v249
    %v1170 = vunpack.c.h.b16 %v249
    %v1171 = vunpack.c.l.b16 %v250
    %v1172 = vunpack.c.h.b16 %v250
    %v1173 = vunpack.c.l.b16 %v251
    %v1174 = vunpack.c.h.b16 %v251
    %v1175 = vunpack.c.l.b16 %v252
    %v1176 = vunpack.c.h.b16 %v252
    %v1177 = vunpack.c.l.b16 %v253
    %v1178 = vunpack.c.h.b16 %v253
    %v1179 = vunpack.c.l.b16 %v254
    %v1180 = vunpack.c.h.b16 %v254
    %v1181 = vunpack.c.l.b16 %v255
    %v1182 = vunpack.c.h.b16 %v255
    %v1183 = vunpack.c.l.b16 %v256
    %v1184 = vunpack.c.h.b16 %v256
    %v1185 = vunpack.c.l.b16 %v257
    %v1186 = vunpack.c.h.b16 %v257
    %v1187 = vunpack.c.l.b16 %v258
    %v1188 = vunpack.c.h.b16 %v258
    %v1189 = vunpack.c.l.b16 %v259
    %v1190 = vunpack.c.h.b16 %v259
    %v1191 = vunpack.c.l.b16 %v260
    %v1192 = vunpack.c.h.b16 %v260
    %v1193 = vunpack.c.l.b16 %v261
    %v1194 = vunpack.c.h.b16 %v261
    %v1195 = vunpack.c.l.b16 %v262
    %v1196 = vunpack.c.h.b16 %v262
    %v1197 = vunpack.c.l.b16 %v263
    %v1198 = vunpack.c.h.b16 %v263
    %v1199 = vunpack.c.l.b16 %v264
    %v1200 = vunpack.c.h.b16 %v264
    %v1201 = vunpack.c.l.b16 %v265
    %v1202 = vunpack.c.h.b16 %v265
    %v1203 = vunpack.c.l.b16 %v266
    %v1204 = vunpack.c.h.b16 %v266
    %v1205 = vunpack.c.l.b16 %v267
    %v1206 = vunpack.c.h.b16 %v267
    %v1207 = vunpack.c.l.b16 %v268
    %v1208 = vunpack.c.h.b16 %v268
    %v1209 = vunpack.c.l.b16 %v269
    %v1210 = vunpack.c.h.b16 %v269
    %v1211 = vunpack.c.l.b16 %v270
    %v1212 = vunpack.c.h.b16 %v270
    %v1213 = vunpack.c.l.b16 %v271
    %v1214 = vunpack.c.h.b16 %v271
    %v1215 = vunpack.c.l.b16 %v272
    %v1216 = vunpack.c.h.b16 %v272
    %v1217 = vunpack.c.l.b16 %v273
    %v1218 = vunpack.c.h.b16 %v273
    %v1219 = vunpack.c.l.b16 %v274
    %v1220 = vunpack.c.h.b16 %v274
    %v1221 = vunpack.c.l.b16 %v275
    %v1222 = vunpack.c.h.b16 %v275
    %v1223 = vunpack.c.l.b16 %v276
    %v1224 = vunpack.c.h.b16 %v276
    %v1225 = vunpack.c.l.b16 %v277
    %v1226 = vunpack.c.h.b16 %v277
    %v1227 = vunpack.c.l.b16 %v278
    %v1228 = vunpack.c.h.b16 %v278
    %v1229 = vunpack.c.l.b16 %v279
    %v1230 = vunpack.c.h.b16 %v279
    %v1231 = vunpack.c.l.b16 %v280
    %v1232 = vunpack.c.h.b16 %v280
    %v1233 = vunpack.c.l.b16 %v281
    %v1234 = vunpack.c.h.b16 %v281
    %v1235 = vunpack.c.l.b16 %v282
    %v1236 = vunpack.c.h.b16 %v282
    %v1237 = vunpack.c.l.b16 %v283
    %v1238 = vunpack.c.h.b16 %v283
    %v1239 = vunpack.c.l.b16 %v284
    %v1240 = vunpack.c.h.b16 %v284
    %v1241 = vunpack.c.l.b16 %v285
    %v1242 = vunpack.c.h.b16 %v285
    %v1243 = vunpack.c.l.b16 %v286
    %v1244 = vunpack.c.h.b16 %v286
    %v1245 = vunpack.c.l.b16 %v287
    %v1246 = vunpack.c.h.b16 %v287
    %v1247 = vunpack.c.l.b16 %v288
    %v1248 = vunpack.c.h.b16 %v288
    %v1249 = vunpack.c.l.b16 %v289
    %v1250 = vunpack.c.h.b16 %v289
    %v1251 = vunpack.c.l.b16 %v290
    %v1252 = vunpack.c.h.b16 %v290
    %v1253 = vunpack.c.l.b16 %v291
    %v1254 = vunpack.c.h.b16 %v291
    %v1255 = vunpack.c.l.b16 %v292
    %v1256 = vunpack.c.h.b16 %v292
    %v1257 = vunpack.c.l.b16 %v293
    %v1258 = vunpack.c.h.b16 %v293
    %v1259 = vunpack.c.l.b16 %v294
    %v1260 = vunpack.c.h.b16 %v294
    %v1261 = vunpack.c.l.b16 %v295
    %v1262 = vunpack.c.h.b16 %v295
    %v1263 = vunpack.c.l.b16 %v296
    %v1264 = vunpack.c.h.b16 %v296
    %v1265 = vunpack.c.l.b16 %v297
    %v1266 = vunpack.c.h.b16 %v297
    %v1267 = vunpack.c.l.b16 %v298
    %v1268 = vunpack.c.h.b16 %v298
    %v1269 = vunpack.c.l.b16 %v299
    %v1270 = vunpack.c.h.b16 %v299
    %v1271 = vunpack.c.l.b16 %v300
    %v1272 = vunpack.c.h.b16 %v300
    %v1273 = vunpack.c.l.b16 %v301
    %v1274 = vunpack.c.h.b16 %v301
    %v1275 = vunpack.c.l.b16 %v302
    %v1276 = vunpack.c.h.b16 %v302
    %v1277 = vunpack.c.l.b16 %v303
    %v1278 = vunpack.c.h.b16 %v303
    %v1279 = vunpack.c.l.b16 %v304
    %v1280 = vunpack.c.h.b16 %v304
    %v1281 = vunpack.c.l.b16 %v305
    %v1282 = vunpack.c.h.b16 %v305
    %v1283 = vunpack.c.l.b16 %v306
    %v1284 = vunpack.c.h.b16 %v306
    %v1285 = vunpack.c.l.b16 %v307
    %v1286 = vunpack.c.h.b16 %v307
    %v1287 = vunpack.c.l.b16 %v308
    %v1288 = vunpack.c.h.b16 %v308
    %v1289 = vunpack.c.l.b16 %v309
    %v1290 = vunpack.c.h.b16 %v309
    %v1291 = vunpack.c.l.b16 %v310
    %v1292 = vunpack.c.h.b16 %v310
    %v1293 = vunpack.c.l.b16 %v311
    %v1294 = vunpack.c.h.b16 %v311
    %v1295 = vunpack.c.l.b16 %v312
    %v1296 = vunpack.c.h.b16 %v312
    %v1297 = vunpack.c.l.b16 %v313
    %v1298 = vunpack.c.h.b16 %v313
    %v1299 = vunpack.c.l.b16 %v314
    %v1300 = vunpack.c.h.b16 %v314
    %v1301 = vunpack.c.l.b16 %v315
    %v1302 = vunpack.c.h.b16 %v315
    %v1303 = vunpack.c.l.b16 %v316
    %v1304 = vunpack.c.h.b16 %v316
    %v1305 = vunpack.c.l.b16 %v317
    %v1306 = vunpack.c.h.b16 %v317
    %v1307 = vunpack.c.l.b16 %v318
    %v1308 = vunpack.c.h.b16 %v318
    %v1309 = vunpack.c.l.b16 %v319
    %v1310 = vunpack.c.h.b16 %v319
    %v1311 = vunpack.c.l.b16 %v320
    %v1312 = vunpack.c.h.b16 %v320
    %v1313 = vunpack.c.l.b16 %v321
    %v1314 = vunpack.c.h.b16 %v321
    %v1315 = vunpack.c.l.b16 %v322
    %v1316 = vunpack.c.h.b16 %v322
    %v1317 = vunpack.c.l.b16 %v323
    %v1318 = vunpack.c.h.b16 %v323
    %v1319 = vunpack.c.l.b16 %v324
    %v1320 = vunpack.c.h.b16 %v324
    %v1321 = vunpack.c.l.b16 %v325
    %v1322 = vunpack.c.h.b16 %v325
    %v1323 = vunpack.c.l.b16 %v326
    %v1324 = vunpack.c.h.b16 %v326
    %v1325 = vunpack.c.l.b16 %v327
    %v1326 = vunpack.c.h.b16 %v327
    %v1327 = vunpack.c.l.b16 %v328
    %v1328 = vunpack.c.h.b16 %v328
    %v1329 = vunpack.c.l.b16 %v329
    %v1330 = vunpack.c.h.b16 %v329
    %v1331 = vunpack.c.l.b16 %v330
    %v1332 = vunpack.c.h.b16 %v330
    %v1333 = vunpack.c.l.b16 %v331
    %v1334 = vunpack.c.h.b16 %v331
    %v1335 = vunpack.c.l.b16 %v332
    %v1336 = vunpack.c.h.b16 %v332
    %v1337 = vunpack.c.l.b16 %v333
    %v1338 = vunpack.c.h.b16 %v333
    %v1339 = vunpack.c.l.b16 %v334
    %v1340 = vunpack.c.h.b16 %v334
    %v1341 = vunpack.c.l.b16 %v335
    %v1342 = vunpack.c.h.b16 %v335
    %v1343 = vunpack.c.l.b16 %v336
    %v1344 = vunpack.c.h.b16 %v336
    %v1345 = vunpack.c.l.b16 %v337
    %v1346 = vunpack.c.h.b16 %v337
    %v1347 = vunpack.c.l.b16 %v338
    %v1348 = vunpack.c.h.b16 %v338
    %v1349 = vunpack.c.l.b16 %v339
    %v1350 = vunpack.c.h.b16 %v339
    %v1351 = vunpack.c.l.b16 %v340
    %v1352 = vunpack.c.h.b16 %v340
    %v1353 = vunpack.c.l.b16 %v341
    %v1354 = vunpack.c.h.b16 %v341
    %v1355 = vunpack.c.l.b16 %v342
    %v1356 = vunpack.c.h.b16 %v342
    %v1357 = vunpack.c.l.b16 %v343
    %v1358 = vunpack.c.h.b16 %v343
    %v1359 = vunpack.c.l.b16 %v344
    %v1360 = vunpack.c.h.b16 %v344
    %v1361 = vunpack.c.l.b16 %v345
    %v1362 = vunpack.c.h.b16 %v345
    %v1363 = vunpack.c.l.b16 %v346
    %v1364 = vunpack.c.h.b16 %v346
    %v1365 = vunpack.c.l.b16 %v347
    %v1366 = vunpack.c.h.b16 %v347
    %v1367 = vunpack.c.l.b16 %v348
    %v1368 = vunpack.c.h.b16 %v348
    %v1369 = vunpack.c.l.b16 %v349
    %v1370 = vunpack.c.h.b16 %v349
    %v1371 = vunpack.c.l.b16 %v350
    %v1372 = vunpack.c.h.b16 %v350
    %v1373 = vunpack.c.l.b16 %v351
    %v1374 = vunpack.c.h.b16 %v351
    %v1375 = vunpack.c.l.b16 %v352
    %v1376 = vunpack.c.h.b16 %v352
    %v1377 = vunpack.c.l.b16 %v353
    %v1378 = vunpack.c.h.b16 %v353
    %v1379 = vunpack.c.l.b16 %v354
    %v1380 = vunpack.c.h.b16 %v354
    %v1381 = vunpack.c.l.b16 %v355
    %v1382 = vunpack.c.h.b16 %v355
    %v1383 = vunpack.c.l.b16 %v356
    %v1384 = vunpack.c.h.b16 %v356
    %v1385 = vunpack.c.l.b16 %v357
    %v1386 = vunpack.c.h.b16 %v357
    %v1387 = vunpack.c.l.b16 %v358
    %v1388 = vunpack.c.h.b16 %v358
    %v1389 = vunpack.c.l.b16 %v359
    %v1390 = vunpack.c.h.b16 %v359
    %v1391 = vunpack.c.l.b16 %v360
    %v1392 = vunpack.c.h.b16 %v360
    %v1393 = vunpack.c.l.b16 %v361
    %v1394 = vunpack.c.h.b16 %v361
    %v1395 = vunpack.c.l.b16 %v362
    %v1396 = vunpack.c.h.b16 %v362
    %v1397 = vunpack.c.l.b16 %v363
    %v1398 = vunpack.c.h.b16 %v363
    %v1399 = vunpack.c.l.b16 %v364
    %v1400 = vunpack.c.h.b16 %v364
    %v1401 = vunpack.c.l.b16 %v365
    %v1402 = vunpack.c.h.b16 %v365
    %v1403 = vunpack.c.l.b16 %v366
    %v1404 = vunpack.c.h.b16 %v366
    %v1405 = vunpack.c.l.b16 %v367
    %v1406 = vunpack.c.h.b16 %v367
    %v1407 = vunpack.c.l.b16 %v368
    %v1408 = vunpack.c.h.b16 %v368
    %v1409 = vunpack.c.l.b16 %v369
    %v1410 = vunpack.c.h.b16 %v369
    %v1411 = vunpack.c.l.b16 %v370
    %v1412 = vunpack.c.h.b16 %v370
    %v1413 = vunpack.c.l.b16 %v371
    %v1414 = vunpack.c.h.b16 %v371
    %v1415 = vunpack.c.l.b16 %v372
    %v1416 = vunpack.c.h.b16 %v372
    %v1417 = vunpack.c.l.b16 %v373
    %v1418 = vunpack.c.h.b16 %v373
    %v1419 = vunpack.c.l.b16 %v374
    %v1420 = vunpack.c.h.b16 %v374
    %v1421 = vunpack.c.l.b16 %v375
    %v1422 = vunpack.c.h.b16 %v375
    %v1423 = vunpack.c.l.b16 %v376
    %v1424 = vunpack.c.h.b16 %v376
    %v1425 = vunpack.c.l.b16 %v377
    %v1426 = vunpack.c.h.b16 %v377
    %v1427 = vunpack.c.l.b16 %v378
    %v1428 = vunpack.c.h.b16 %v378
    %v1429 = vunpack.c.l.b16 %v379
    %v1430 = vunpack.c.h.b16 %v379
    %v1431 = vunpack.c.l.b16 %v380
    %v1432 = vunpack.c.h.b16 %v380
    %v1433 = vunpack.c.l.b16 %v381
    %v1434 = vunpack.c.h.b16 %v381
    %v1435 = vunpack.c.l.b16 %v382
    %v1436 = vunpack.c.h.b16 %v382
    %v1437 = vunpack.c.l.b16 %v383
    %v1438 = vunpack.c.h.b16 %v383
    %v1439 = vunpack.c.l.b16 %v384
    %v1440 = vunpack.c.h.b16 %v384
    %v1441 = vunpack.c.l.b16 %v385
    %v1442 = vunpack.c.h.b16 %v385
    %v1443 = vunpack.c.l.b16 %v386
    %v1444 = vunpack.c.h.b16 %v386
    %v1445 = vunpack.c.l.b16 %v387
    %v1446 = vunpack.c.h.b16 %v387
    %v1447 = vunpack.c.l.b16 %v388
    %v1448 = vunpack.c.h.b16 %v388
    %v1449 = vunpack.c.l.b16 %v389
    %v1450 = vunpack.c.h.b16 %v389
    %v1451 = vunpack.c.l.b16 %v390
    %v1452 = vunpack.c.h.b16 %v390
    %v1453 = vunpack.c.l.b16 %v391
    %v1454 = vunpack.c.h.b16 %v391
    %v1455 = vunpack.c.l.b16 %v392
    %v1456 = vunpack.c.h.b16 %v392
    %v1457 = vunpack.c.l.b16 %v393
    %v1458 = vunpack.c.h.b16 %v393
    %v1459 = vunpack.c.l.b16 %v394
    %v1460 = vunpack.c.h.b16 %v394
    %v1461 = vunpack.c.l.b16 %v395
    %v1462 = vunpack.c.h.b16 %v395
    %v1463 = vunpack.c.l.b16 %v396
    %v1464 = vunpack.c.h.b16 %v396
    %v1465 = vunpack.c.l.b16 %v397
    %v1466 = vunpack.c.h.b16 %v397
    %v1467 = vunpack.c.l.b16 %v398
    %v1468 = vunpack.c.h.b16 %v398
    %v1469 = vunpack.c.l.b16 %v399
    %v1470 = vunpack.c.h.b16 %v399
    %v1471 = vunpack.c.l.b16 %v400
    %v1472 = vunpack.c.h.b16 %v400
    %v1473 = vunpack.c.l.b16 %v401
    %v1474 = vunpack.c.h.b16 %v401
    %v1475 = vunpack.c.l.b16 %v402
    %v1476 = vunpack.c.h.b16 %v402
    %v1477 = vunpack.c.l.b16 %v403
    %v1478 = vunpack.c.h.b16 %v403
    %v1479 = vunpack.c.l.b16 %v404
    %v1480 = vunpack.c.h.b16 %v404
    %v1481 = vunpack.c.l.b16 %v405
    %v1482 = vunpack.c.h.b16 %v405
    %v1483 = vunpack.c.l.b16 %v406
    %v1484 = vunpack.c.h.b16 %v406
    %v1485 = vunpack.c.l.b16 %v407
    %v1486 = vunpack.c.h.b16 %v407
    %v1487 = vunpack.c.l.b16 %v408
    %v1488 = vunpack.c.h.b16 %v408
    %v1489 = vunpack.c.l.b16 %v409
    %v1490 = vunpack.c.h.b16 %v409
    %v1491 = vunpack.c.l.b16 %v410
    %v1492 = vunpack.c.h.b16 %v410
    %v1493 = vunpack.c.l.b16 %v411
    %v1494 = vunpack.c.h.b16 %v411
    %v1495 = vunpack.c.l.b16 %v412
    %v1496 = vunpack.c.h.b16 %v412
    %v1497 = vunpack.c.l.b16 %v413
    %v1498 = vunpack.c.h.b16 %v413
    %v1499 = vunpack.c.l.b16 %v414
    %v1500 = vunpack.c.h.b16 %v414
    %v1501 = vunpack.c.l.b16 %v415
    %v1502 = vunpack.c.h.b16 %v415
    %v1503 = vunpack.c.l.b16 %v416
    %v1504 = vunpack.c.h.b16 %v416
    %v1505 = vunpack.c.l.b16 %v417
    %v1506 = vunpack.c.h.b16 %v417
    %v1507 = vunpack.c.l.b16 %v418
    %v1508 = vunpack.c.h.b16 %v418
    %v1509 = vunpack.c.l.b16 %v419
    %v1510 = vunpack.c.h.b16 %v419
    %v1511 = vunpack.c.l.b16 %v420
    %v1512 = vunpack.c.h.b16 %v420
    %v1513 = vunpack.c.l.b16 %v421
    %v1514 = vunpack.c.h.b16 %v421
    %v1515 = vunpack.c.l.b16 %v422
    %v1516 = vunpack.c.h.b16 %v422
    %v1517 = vunpack.c.l.b16 %v423
    %v1518 = vunpack.c.h.b16 %v423
    %v1519 = vunpack.c.l.b16 %v424
    %v1520 = vunpack.c.h.b16 %v424
    %v1521 = vunpack.c.l.b16 %v425
    %v1522 = vunpack.c.h.b16 %v425
    %v1523 = vunpack.c.l.b16 %v426
    %v1524 = vunpack.c.h.b16 %v426
    %v1525 = vunpack.c.l.b16 %v427
    %v1526 = vunpack.c.h.b16 %v427
    %v1527 = vunpack.c.l.b16 %v428
    %v1528 = vunpack.c.h.b16 %v428
    %v1529 = vunpack.c.l.b16 %v429
    %v1530 = vunpack.c.h.b16 %v429
    %v1531 = vunpack.c.l.b16 %v430
    %v1532 = vunpack.c.h.b16 %v430
    %v1533 = vunpack.c.l.b16 %v431
    %v1534 = vunpack.c.h.b16 %v431
    %v1535 = vunpack.c.l.b16 %v432
    %v1536 = vunpack.c.h.b16 %v432
    %v1537 = vunpack.c.l.b16 %v433
    %v1538 = vunpack.c.h.b16 %v433
    %v1539 = vunpack.c.l.b16 %v434
    %v1540 = vunpack.c.h.b16 %v434
    %v1541 = vunpack.c.l.b16 %v435
    %v1542 = vunpack.c.h.b16 %v435
    %v1543 = vunpack.c.l.b16 %v436
    %v1544 = vunpack.c.h.b16 %v436
    %v1545 = vunpack.c.l.b16 %v437
    %v1546 = vunpack.c.h.b16 %v437
    %v1547 = vunpack.c.l.b16 %v438
    %v1548 = vunpack.c.h.b16 %v438
    %v1549 = vpack.c.b16 %v1041, %v1037
    %v1550 = vpack.c.b16 %v1042, %v1038
    %v1551 = vpack.c.b16 %v1043, %v1039
    %v1552 = vpack.c.b16 %v1044, %v1040
    %v1553 = vpack.c.b16 %v1049, %v1045
    %v1554 = vpack.c.b16 %v1050, %v1046
    %v1555 = vpack.c.b16 %v1051, %v1047
    %v1556 = vpack.c.b16 %v1052, %v1048
    %v1557 = vpack.c.b16 %v1057, %v1053
    %v1558 = vpack.c.b16 %v1058, %v1054
    %v1559 = vpack.c.b16 %v1059, %v1055
    %v1560 = vpack.c.b16 %v1060, %v1056
    %v1561 = vpack.c.b16 %v1065, %v1061
    %v1562 = vpack.c.b16 %v1066, %v1062
    %v1563 = vpack.c.b16 %v1067, %v1063
    %v1564 = vpack.c.b16 %v1068, %v1064
    %v1565 = vpack.c.b16 %v1073, %v1069
    %v1566 = vpack.c.b16 %v1074, %v1070
    %v1567 = vpack.c.b16 %v1075, %v1071
    %v1568 = vpack.c.b16 %v1076, %v1072
    %v1569 = vpack.c.b16 %v1081, %v1077
    %v1570 = vpack.c.b16 %v1082, %v1078
    %v1571 = vpack.c.b16 %v1083, %v1079
    %v1572 = vpack.c.b16 %v1084, %v1080
    %v1573 = vpack.c.b16 %v1089, %v1085
    %v1574 = vpack.c.b16 %v1090, %v1086
    %v1575 = vpack.c.b16 %v1091, %v1087
    %v1576 = vpack.c.b16 %v1092, %v1088
    %v1577 = vpack.c.b16 %v1097, %v1093
    %v1578 = vpack.c.b16 %v1098, %v1094
    %v1579 = vpack.c.b16 %v1099, %v1095
    %v1580 = vpack.c.b16 %v1100, %v1096
    %v1581 = vpack.c.b16 %v1105, %v1101
    %v1582 = vpack.c.b16 %v1106, %v1102
    %v1583 = vpack.c.b16 %v1107, %v1103
    %v1584 = vpack.c.b16 %v1108, %v1104
    %v1585 = vpack.c.b16 %v1113, %v1109
    %v1586 = vpack.c.b16 %v1114, %v1110
    %v1587 = vpack.c.b16 %v1115, %v1111
    %v1588 = vpack.c.b16 %v1116, %v1112
    %v1589 = vpack.c.b16 %v1121, %v1117
    %v1590 = vpack.c.b16 %v1122, %v1118
    %v1591 = vpack.c.b16 %v1123, %v1119
    %v1592 = vpack.c.b16 %v1124, %v1120
    %v1593 = vpack.c.b16 %v1129, %v1125
    %v1594 = vpack.c.b16 %v1130, %v1126
    %v1595 = vpack.c.b16 %v1131, %v1127
    %v1596 = vpack.c.b16 %v1132, %v1128
    %v1597 = vpack.c.b16 %v1137, %v1133
    %v1598 = vpack.c.b16 %v1138, %v1134
    %v1599 = vpack.c.b16 %v1139, %v1135
    %v1600 = vpack.c.b16 %v1140, %v1136
    %v1601 = vpack.c.b16 %v1145, %v1141
    %v1602 = vpack.c.b16 %v1146, %v1142
    %v1603 = vpack.c.b16 %v1147, %v1143
    %v1604 = vpack.c.b16 %v1148, %v1144
    %v1605 = vpack.c.b16 %v1153, %v1149
    %v1606 = vpack.c.b16 %v1154, %v1150
    %v1607 = vpack.c.b16 %v1155, %v1151
    %v1608 = vpack.c.b16 %v1156, %v1152
    %v1609 = vpack.c.b16 %v1161, %v1157
    %v1610 = vpack.c.b16 %v1162, %v1158
    %v1611 = vpack.c.b16 %v1163, %v1159
    %v1612 = vpack.c.b16 %v1164, %v1160
    %v1613 = vpack.c.b16 %v1169, %v1165
    %v1614 = vpack.c.b16 %v1170, %v1166
    %v1615 = vpack.c.b16 %v1171, %v1167
    %v1616 = vpack.c.b16 %v1172, %v1168
    %v1617 = vpack.c.b16 %v1177, %v1173
    %v1618 = vpack.c.b16 %v1178, %v1174
    %v1619 = vpack.c.b16 %v1179, %v1175
    %v1620 = vpack.c.b16 %v1180, %v1176
    %v1621 = vpack.c.b16 %v1185, %v1181
    %v1622 = vpack.c.b16 %v1186, %v1182
    %v1623 = vpack.c.b16 %v1187, %v1183
    %v1624 = vpack.c.b16 %v1188, %v1184
    %v1625 = vpack.c.b16 %v1193, %v1189
    %v1626 = vpack.c.b16 %v1194, %v1190
    %v1627 = vpack.c.b16 %v1195, %v1191
    %v1628 = vpack.c.b16 %v1196, %v1192
    %v1629 = vpack.c.b16 %v1201, %v1197
    %v1630 = vpack.c.b16 %v1202, %v1198
    %v1631 = vpack.c.b16 %v1203, %v1199
    %v1632 = vpack.c.b16 %v1204, %v1200
    %v1633 = vpack.c.b16 %v1209, %v1205
    %v1634 = vpack.c.b16 %v1210, %v1206
    %v1635 = vpack.c.b16 %v1211, %v1207
    %v1636 = vpack.c.b16 %v1212, %v1208
    %v1637 = vpack.c.b16 %v1217, %v1213
    %v1638 = vpack.c.b16 %v1218, %v1214
    %v1639 = vpack.c.b16 %v1219, %v1215
    %v1640 = vpack.c.b16 %v1220, %v1216
    %v1641 = vpack.c.b16 %v1225, %v1221
    %v1642 = vpack.c.b16 %v1226, %v1222
    %v1643 = vpack.c.b16 %v1227, %v1223
    %v1644 = vpack.c.b16 %v1228, %v1224
    %v1645 = vpack.c.b16 %v1233, %v1229
    %v1646 = vpack.c.b16 %v1234, %v1230
    %v1647 = vpack.c.b16 %v1235, %v1231
    %v1648 = vpack.c.b16 %v1236, %v1232
    %v1649 = vpack.c.b16 %v1241, %v1237
    %v1650 = vpack.c.b16 %v1242, %v1238
    %v1651 = vpack.c.b16 %v1243, %v1239
    %v1652 = vpack.c.b16 %v1244, %v1240
    %v1653 = vpack.c.b16 %v1249, %v1245
    %v1654 = vpack.c.b16 %v1250, %v1246
    %v1655 = vpack.c.b16 %v1251, %v1247
    %v1656 = vpack.c.b16 %v1252, %v1248
    %v1657 = vpack.c.b16 %v1257, %v1253
    %v1658 = vpack.c.b16 %v1258, %v1254
    %v1659 = vpack.c.b16 %v1259, %v1255
    %v1660 = vpack.c.b16 %v1260, %v1256
    %v1661 = vpack.c.b16 %v1265, %v1261
    %v1662 = vpack.c.b16 %v1266, %v1262
    %v1663 = vpack.c.b16 %v1267, %v1263
    %v1664 = vpack.c.b16 %v1268, %v1264
    %v1665 = vpack.c.b16 %v1273, %v1269
    %v1666 = vpack.c.b16 %v1274, %v1270
    %v1667 = vpack.c.b16 %v1275, %v1271
    %v1668 = vpack.c.b16 %v1276, %v1272
    %v1669 = vpack.c.b16 %v1281, %v1277
    %v1670 = vpack.c.b16 %v1282, %v1278
    %v1671 = vpack.c.b16 %v1283, %v1279
    %v1672 = vpack.c.b16 %v1284, %v1280
    %v1673 = vpack.c.b16 %v1289, %v1285
    %v1674 = vpack.c.b16 %v1290, %v1286
    %v1675 = vpack.c.b16 %v1291, %v1287
    %v1676 = vpack.c.b16 %v1292, %v1288
    %v1677 = vpack.c.b16 %v1297, %v1293
    %v1678 = vpack.c.b16 %v1298, %v1294
    %v1679 = vpack.c.b16 %v1299, %v1295
    %v1680 = vpack.c.b16 %v1300, %v1296
    %v1681 = vpack.c.b16 %v1305, %v1301
    %v1682 = vpack.c.b16 %v1306, %v1302
    %v1683 = vpack.c.b16 %v1307, %v1303
    %v1684 = vpack.c.b16 %v1308, %v1304
    %v1685 = vpack.c.b16 %v1313, %v1309
    %v1686 = vpack.c.b16 %v1314, %v1310
    %v1687 = vpack.c.b16 %v1315, %v1311
    %v1688 = vpack.c.b16 %v1316, %v1312
    %v1689 = vpack.c.b16 %v1321, %v1317
    %v1690 = vpack.c.b16 %v1322, %v1318
    %v1691 = vpack.c.b16 %v1323, %v1319
    %v1692 = vpack.c.b16 %v1324, %v1320
    %v1693 = vpack.c.b16 %v1329, %v1325
    %v1694 = vpack.c.b16 %v1330, %v1326
    %v1695 = vpack.c.b16 %v1331, %v1327
    %v1696 = vpack.c.b16 %v1332, %v1328
    %v1697 = vpack.c.b16 %v1337, %v1333
    %v1698 = vpack.c.b16 %v1338, %v1334
    %v1699 = vpack.c.b16 %v1339, %v1335
    %v1700 = vpack.c.b16 %v1340, %v1336
    %v1701 = vpack.c.b16 %v1345, %v1341
    %v1702 = vpack.c.b16 %v1346, %v1342
    %v1703 = vpack.c.b16 %v1347, %v1343
    %v1704 = vpack.c.b16 %v1348, %v1344
    %v1705 = vpack.c.b16 %v1353, %v1349
    %v1706 = vpack.c.b16 %v1354, %v1350
    %v1707 = vpack.c.b16 %v1355, %v1351
    %v1708 = vpack.c.b16 %v1356, %v1352
    %v1709 = vpack.c.b16 %v1361, %v1357
    %v1710 = vpack.c.b16 %v1362, %v1358
    %v1711 = vpack.c.b16 %v1363, %v1359
    %v1712 = vpack.c.b16 %v1364, %v1360
    %v1713 = vpack.c.b16 %v1369, %v1365
    %v1714 = vpack.c.b16 %v1370, %v1366
    %v1715 = vpack.c.b16 %v1371, %v1367
    %v1716 = vpack.c.b16 %v1372, %v1368
    %v1717 = vpack.c.b16 %v1377, %v1373
    %v1718 = vpack.c.b16 %v1378, %v1374
    %v1719 = vpack.c.b16 %v1379, %v1375
    %v1720 = vpack.c.b16 %v1380, %v1376
    %v1721 = vpack.c.b16 %v1385, %v1381
    %v1722 = vpack.c.b16 %v1386, %v1382
    %v1723 = vpack.c.b16 %v1387, %v1383
    %v1724 = vpack.c.b16 %v1388, %v1384
    %v1725 = vpack.c.b16 %v1393, %v1389
    %v1726 = vpack.c.b16 %v1394, %v1390
    %v1727 = vpack.c.b16 %v1395, %v1391
    %v1728 = vpack.c.b16 %v1396, %v1392
    %v1729 = vpack.c.b16 %v1401, %v1397
    %v1730 = vpack.c.b16 %v1402, %v1398
    %v1731 = vpack.c.b16 %v1403, %v1399
    %v1732 = vpack.c.b16 %v1404, %v1400
    %v1733 = vpack.c.b16 %v1409, %v1405
    %v1734 = vpack.c.b16 %v1410, %v1406
    %v1735 = vpack.c.b16 %v1411, %v1407
    %v1736 = vpack.c.b16 %v1412, %v1408
    %v1737 = vpack.c.b16 %v1417, %v1413
    %v1738 = vpack.c.b16 %v1418, %v1414
    %v1739 = vpack.c.b16 %v1419, %v1415
    %v1740 = vpack.c.b16 %v1420, %v1416
    %v1741 = vpack.c.b16 %v1425, %v1421
    %v1742 = vpack.c.b16 %v1426, %v1422
    %v1743 = vpack.c.b16 %v1427, %v1423
    %v1744 = vpack.c.b16 %v1428, %v1424
    %v1745 = vpack.c.b16 %v1433, %v1429
    %v1746 = vpack.c.b16 %v1434, %v1430
    %v1747 = vpack.c.b16 %v1435, %v1431
    %v1748 = vpack.c.b16 %v1436, %v1432
    %v1749 = vpack.c.b16 %v1441, %v1437
    %v1750 = vpack.c.b16 %v1442, %v1438
    %v1751 = vpack.c.b16 %v1443, %v1439
    %v1752 = vpack.c.b16 %v1444, %v1440
    %v1753 = vpack.c.b16 %v1449, %v1445
    %v1754 = vpack.c.b16 %v1450, %v1446
    %v1755 = vpack.c.b16 %v1451, %v1447
    %v1756 = vpack.c.b16 %v1452, %v1448
    %v1757 = vpack.c.b16 %v1457, %v1453
    %v1758 = vpack.c.b16 %v1458, %v1454
    %v1759 = vpack.c.b16 %v1459, %v1455
    %v1760 = vpack.c.b16 %v1460, %v1456
    %v1761 = vpack.c.b16 %v1465, %v1461
    %v1762 = vpack.c.b16 %v1466, %v1462
    %v1763 = vpack.c.b16 %v1467, %v1463
    %v1764 = vpack.c.b16 %v1468, %v1464
    %v1765 = vpack.c.b16 %v1473, %v1469
    %v1766 = vpack.c.b16 %v1474, %v1470
    %v1767 = vpack.c.b16 %v1475, %v1471
    %v1768 = vpack.c.b16 %v1476, %v1472
    %v1769 = vpack.c.b16 %v1481, %v1477
    %v1770 = vpack.c.b16 %v1482, %v1478
    %v1771 = vpack.c.b16 %v1483, %v1479
    %v1772 = vpack.c.b16 %v1484, %v1480
    %v1773 = vpack.c.b16 %v1489, %v1485
    %v1774 = vpack.c.b16 %v1490, %v1486
    %v1775 = vpack.c.b16 %v1491, %v1487
    %v1776 = vpack.c.b16 %v1492, %v1488
    %v1777 = vpack.c.b16 %v1497, %v1493
    %v1778 = vpack.c.b16 %v1498, %v1494
    %v1779 = vpack.c.b16 %v1499, %v1495
    %v1780 = vpack.c.b16 %v1500, %v1496
    %v1781 = vpack.c.b16 %v1505, %v1501
    %v1782 = vpack.c.b16 %v1506, %v1502
    %v1783 = vpack.c.b16 %v1507, %v1503
    %v1784 = vpack.c.b16 %v1508, %v1504
    %v1785 = vpack.c.b16 %v1513, %v1509
    %v1786 = vpack.c.b16 %v1514, %v1510
    %v1787 = vpack.c.b16 %v1515, %v1511
    %v1788 = vpack.c.b16 %v1516, %v1512
    %v1789 = vpack.c.b16 %v1521, %v1517
    %v1790 = vpack.c.b16 %v1522, %v1518
    %v1791 = vpack.c.b16 %v1523, %v1519
    %v1792 = vpack.c.b16 %v1524, %v1520
    %v1793 = vpack.c.b16 %v1529, %v1525
    %v1794 = vpack.c.b16 %v1530, %v1526
    %v1795 = vpack.c.b16 %v1531, %v1527
    %v1796 = vpack.c.b16 %v1532, %v1528
    %v1797 = vpack.c.b16 %v1537, %v1533
    %v1798 = vpack.c.b16 %v1538, %v1534
    %v1799 = vpack.c.b16 %v1539, %v1535
    %v1800 = vpack.c.b16 %v1540, %v1536
    %v1801 = vpack.c.b16 %v1545, %v1541
    %v1802 = vpack.c.b16 %v1546, %v1542
    %v1803 = vpack.c.b16 %v1547, %v1543
    %v1804 = vpack.c.b16 %v1548, %v1544
    %2061 = vmatprep.subr.bf16.mxu0 %v1578
    %2062 = vmatpush1.bf16.msra.mxu0 %v1577
    %2063 = vmatprep.subr.bf16.mxu0 %v1574
    %2064 = vmatpush1.bf16.msra.mxu0 %v1573
    %2065 = vmatprep.subr.bf16.mxu0 %v1570
    %2066 = vmatpush1.bf16.msra.mxu0 %v1569
    %2067 = vmatprep.subr.bf16.mxu0 %v1566
    %2068 = vmatpush1.bf16.msra.mxu0 %v1565
    %2069 = vmatprep.subr.bf16.mxu0 %v1562
    %2070 = vmatpush1.bf16.msra.mxu0 %v1561
    %2071 = vmatprep.subr.bf16.mxu0 %v1558
    %2072 = vmatpush1.bf16.msra.mxu0 %v1557
    %2073 = vmatprep.subr.bf16.mxu0 %v1554
    %2074 = vmatpush1.bf16.msra.mxu0 %v1553
    %2075 = vmatprep.subr.bf16.mxu0 %v1550
    %2076 = vmatpush1.bf16.msra.mxu0 %v1549
    %2077 = vmatprep.subr.bf16.mxu0 %v1610
    %2078 = vmatpush2.bf16.msra.mxu0 %v1609
    %2079 = vmatprep.subr.bf16.mxu0 %v1606
    %2080 = vmatpush2.bf16.msra.mxu0 %v1605
    %2081 = vmatprep.subr.bf16.mxu0 %v1602
    %2082 = vmatpush2.bf16.msra.mxu0 %v1601
    %2083 = vmatprep.subr.bf16.mxu0 %v1598
    %2084 = vmatpush2.bf16.msra.mxu0 %v1597
    %2085 = vmatprep.subr.bf16.mxu0 %v1594
    %2086 = vmatpush2.bf16.msra.mxu0 %v1593
    %2087 = vmatprep.subr.bf16.mxu0 %v1590
    %2088 = vmatpush2.bf16.msra.mxu0 %v1589
    %2089 = vmatprep.subr.bf16.mxu0 %v1586
    %2090 = vmatpush2.bf16.msra.mxu0 %v1585
    %2091 = vmatprep.subr.bf16.mxu0 %v1582
    %2092 = vmatpush2.bf16.msra.mxu0 %v1581
    %2093 = vmatprep.mubr.bf16.mxu0 %v654
    %2094 = vmatmul.mubr.bf16.gmra.mxu0 %v653
    %v2095 = vpop.f32.mrf.mxu0
    %v2096 = vadd.f32 %v444, %v2095
    %v2097 = vpop.f32.mrf.mxu0
    %v2098 = vadd.f32 %v448, %v2097
    %v2099 = vpop.f32.mrf.mxu0
    %v2100 = vadd.f32 %v444, %v2099
    %v2101 = vpop.f32.mrf.mxu0
    %v2102 = vadd.f32 %v448, %v2101
    %2103 = vmatprep.mubr.bf16.mxu0 %v662
    %2104 = vmatmul.mubr.bf16.gmra.mxu0 %v661
    %v2105 = vpop.f32.mrf.mxu0
    %v2106 = vadd.f32 %v444, %v2105
    %v2107 = vpop.f32.mrf.mxu0
    %v2108 = vadd.f32 %v448, %v2107
    %v2109 = vpop.f32.mrf.mxu0
    %v2110 = vadd.f32 %v444, %v2109
    %v2111 = vpop.f32.mrf.mxu0
    %v2112 = vadd.f32 %v448, %v2111
    %2113 = vmatprep.mubr.bf16.mxu0 %v670
    %2114 = vmatmul.mubr.bf16.gmra.mxu0 %v669
    %v2115 = vpop.f32.mrf.mxu0
    %v2116 = vadd.f32 %v444, %v2115
    %v2117 = vpop.f32.mrf.mxu0
    %v2118 = vadd.f32 %v448, %v2117
    %v2119 = vpop.f32.mrf.mxu0
    %v2120 = vadd.f32 %v444, %v2119
    %v2121 = vpop.f32.mrf.mxu0
    %v2122 = vadd.f32 %v448, %v2121
    %2123 = vmatprep.mubr.bf16.mxu0 %v678
    %2124 = vmatmul.mubr.bf16.gmra.mxu0 %v677
    %v2125 = vpop.f32.mrf.mxu0
    %v2126 = vadd.f32 %v444, %v2125
    %v2127 = vpop.f32.mrf.mxu0
    %v2128 = vadd.f32 %v448, %v2127
    %v2129 = vpop.f32.mrf.mxu0
    %v2130 = vadd.f32 %v444, %v2129
    %v2131 = vpop.f32.mrf.mxu0
    %v2132 = vadd.f32 %v448, %v2131
    %2133 = vmatprep.mubr.bf16.mxu0 %v686
    %2134 = vmatmul.mubr.bf16.gmra.mxu0 %v685
    %v2135 = vpop.f32.mrf.mxu0
    %v2136 = vadd.f32 %v444, %v2135
    %v2137 = vpop.f32.mrf.mxu0
    %v2138 = vadd.f32 %v448, %v2137
    %v2139 = vpop.f32.mrf.mxu0
    %v2140 = vadd.f32 %v444, %v2139
    %v2141 = vpop.f32.mrf.mxu0
    %v2142 = vadd.f32 %v448, %v2141
    %2143 = vmatprep.mubr.bf16.mxu0 %v694
    %2144 = vmatmul.mubr.bf16.gmra.mxu0 %v693
    %v2145 = vpop.f32.mrf.mxu0
    %v2146 = vadd.f32 %v444, %v2145
    %v2147 = vpop.f32.mrf.mxu0
    %v2148 = vadd.f32 %v448, %v2147
    %v2149 = vpop.f32.mrf.mxu0
    %v2150 = vadd.f32 %v444, %v2149
    %v2151 = vpop.f32.mrf.mxu0
    %v2152 = vadd.f32 %v448, %v2151
    %2153 = vmatprep.mubr.bf16.mxu0 %v702
    %2154 = vmatmul.mubr.bf16.gmra.mxu0 %v701
    %v2155 = vpop.f32.mrf.mxu0
    %v2156 = vadd.f32 %v444, %v2155
    %v2157 = vpop.f32.mrf.mxu0
    %v2158 = vadd.f32 %v448, %v2157
    %v2159 = vpop.f32.mrf.mxu0
    %v2160 = vadd.f32 %v444, %v2159
    %v2161 = vpop.f32.mrf.mxu0
    %v2162 = vadd.f32 %v448, %v2161
    %2163 = vmatprep.mubr.bf16.mxu0 %v710
    %2164 = vmatmul.mubr.bf16.gmra.mxu0 %v709
    %v2165 = vpop.f32.mrf.mxu0
    %v2166 = vadd.f32 %v444, %v2165
    %v2167 = vpop.f32.mrf.mxu0
    %v2168 = vadd.f32 %v448, %v2167
    %v2169 = vpop.f32.mrf.mxu0
    %v2170 = vadd.f32 %v444, %v2169
    %v2171 = vpop.f32.mrf.mxu0
    %v2172 = vadd.f32 %v448, %v2171
    %2173 = vdwg.mxu0
    %2174 = vmatprep.subr.bf16.mxu0 %v1642
    %2175 = vmatpush1.bf16.msra.mxu0 %v1641
    %2176 = vmatprep.subr.bf16.mxu0 %v1638
    %2177 = vmatpush1.bf16.msra.mxu0 %v1637
    %2178 = vmatprep.subr.bf16.mxu0 %v1634
    %2179 = vmatpush1.bf16.msra.mxu0 %v1633
    %2180 = vmatprep.subr.bf16.mxu0 %v1630
    %2181 = vmatpush1.bf16.msra.mxu0 %v1629
    %2182 = vmatprep.subr.bf16.mxu0 %v1626
    %2183 = vmatpush1.bf16.msra.mxu0 %v1625
    %2184 = vmatprep.subr.bf16.mxu0 %v1622
    %2185 = vmatpush1.bf16.msra.mxu0 %v1621
    %2186 = vmatprep.subr.bf16.mxu0 %v1618
    %2187 = vmatpush1.bf16.msra.mxu0 %v1617
    %2188 = vmatprep.subr.bf16.mxu0 %v1614
    %2189 = vmatpush1.bf16.msra.mxu0 %v1613
    %2190 = vmatprep.subr.bf16.mxu0 %v1674
    %2191 = vmatpush2.bf16.msra.mxu0 %v1673
    %2192 = vmatprep.subr.bf16.mxu0 %v1670
    %2193 = vmatpush2.bf16.msra.mxu0 %v1669
    %2194 = vmatprep.subr.bf16.mxu0 %v1666
    %2195 = vmatpush2.bf16.msra.mxu0 %v1665
    %2196 = vmatprep.subr.bf16.mxu0 %v1662
    %2197 = vmatpush2.bf16.msra.mxu0 %v1661
    %2198 = vmatprep.subr.bf16.mxu0 %v1658
    %2199 = vmatpush2.bf16.msra.mxu0 %v1657
    %2200 = vmatprep.subr.bf16.mxu0 %v1654
    %2201 = vmatpush2.bf16.msra.mxu0 %v1653
    %2202 = vmatprep.subr.bf16.mxu0 %v1650
    %2203 = vmatpush2.bf16.msra.mxu0 %v1649
    %2204 = vmatprep.subr.bf16.mxu0 %v1646
    %2205 = vmatpush2.bf16.msra.mxu0 %v1645
    %2206 = vmatprep.mubr.bf16.mxu0 %v656
    %2207 = vmatmul.mubr.bf16.gmra.mxu0 %v655
    %v2208 = vpop.f32.mrf.mxu0
    %v2209 = vadd.f32 %v2096, %v2208
    %v2210 = vpop.f32.mrf.mxu0
    %v2211 = vadd.f32 %v2098, %v2210
    %v2212 = vpop.f32.mrf.mxu0
    %v2213 = vadd.f32 %v2100, %v2212
    %v2214 = vpop.f32.mrf.mxu0
    %v2215 = vadd.f32 %v2102, %v2214
    %2216 = vmatprep.mubr.bf16.mxu0 %v664
    %2217 = vmatmul.mubr.bf16.gmra.mxu0 %v663
    %v2218 = vpop.f32.mrf.mxu0
    %v2219 = vadd.f32 %v2106, %v2218
    %v2220 = vpop.f32.mrf.mxu0
    %v2221 = vadd.f32 %v2108, %v2220
    %v2222 = vpop.f32.mrf.mxu0
    %v2223 = vadd.f32 %v2110, %v2222
    %v2224 = vpop.f32.mrf.mxu0
    %v2225 = vadd.f32 %v2112, %v2224
    %2226 = vmatprep.mubr.bf16.mxu0 %v672
    %2227 = vmatmul.mubr.bf16.gmra.mxu0 %v671
    %v2228 = vpop.f32.mrf.mxu0
    %v2229 = vadd.f32 %v2116, %v2228
    %v2230 = vpop.f32.mrf.mxu0
    %v2231 = vadd.f32 %v2118, %v2230
    %v2232 = vpop.f32.mrf.mxu0
    %v2233 = vadd.f32 %v2120, %v2232
    %v2234 = vpop.f32.mrf.mxu0
    %v2235 = vadd.f32 %v2122, %v2234
    %2236 = vmatprep.mubr.bf16.mxu0 %v680
    %2237 = vmatmul.mubr.bf16.gmra.mxu0 %v679
    %v2238 = vpop.f32.mrf.mxu0
    %v2239 = vadd.f32 %v2126, %v2238
    %v2240 = vpop.f32.mrf.mxu0
    %v2241 = vadd.f32 %v2128, %v2240
    %v2242 = vpop.f32.mrf.mxu0
    %v2243 = vadd.f32 %v2130, %v2242
    %v2244 = vpop.f32.mrf.mxu0
    %v2245 = vadd.f32 %v2132, %v2244
    %2246 = vmatprep.mubr.bf16.mxu0 %v688
    %2247 = vmatmul.mubr.bf16.gmra.mxu0 %v687
    %v2248 = vpop.f32.mrf.mxu0
    %v2249 = vadd.f32 %v2136, %v2248
    %v2250 = vpop.f32.mrf.mxu0
    %v2251 = vadd.f32 %v2138, %v2250
    %v2252 = vpop.f32.mrf.mxu0
    %v2253 = vadd.f32 %v2140, %v2252
    %v2254 = vpop.f32.mrf.mxu0
    %v2255 = vadd.f32 %v2142, %v2254
    %2256 = vmatprep.mubr.bf16.mxu0 %v696
    %2257 = vmatmul.mubr.bf16.gmra.mxu0 %v695
    %v2258 = vpop.f32.mrf.mxu0
    %v2259 = vadd.f32 %v2146, %v2258
    %v2260 = vpop.f32.mrf.mxu0
    %v2261 = vadd.f32 %v2148, %v2260
    %v2262 = vpop.f32.mrf.mxu0
    %v2263 = vadd.f32 %v2150, %v2262
    %v2264 = vpop.f32.mrf.mxu0
    %v2265 = vadd.f32 %v2152, %v2264
    %2266 = vmatprep.mubr.bf16.mxu0 %v704
    %2267 = vmatmul.mubr.bf16.gmra.mxu0 %v703
    %v2268 = vpop.f32.mrf.mxu0
    %v2269 = vadd.f32 %v2156, %v2268
    %v2270 = vpop.f32.mrf.mxu0
    %v2271 = vadd.f32 %v2158, %v2270
    %v2272 = vpop.f32.mrf.mxu0
    %v2273 = vadd.f32 %v2160, %v2272
    %v2274 = vpop.f32.mrf.mxu0
    %v2275 = vadd.f32 %v2162, %v2274
    %2276 = vmatprep.mubr.bf16.mxu0 %v712
    %2277 = vmatmul.mubr.bf16.gmra.mxu0 %v711
    %v2278 = vpop.f32.mrf.mxu0
    %v2279 = vadd.f32 %v2166, %v2278
    %v2280 = vpop.f32.mrf.mxu0
    %v2281 = vadd.f32 %v2168, %v2280
    %v2282 = vpop.f32.mrf.mxu0
    %v2283 = vadd.f32 %v2170, %v2282
    %v2284 = vpop.f32.mrf.mxu0
    %v2285 = vadd.f32 %v2172, %v2284
    %2286 = vdwg.mxu0
    %2287 = vmatprep.subr.bf16.mxu0 %v1706
    %2288 = vmatpush1.bf16.msra.mxu0 %v1705
    %2289 = vmatprep.subr.bf16.mxu0 %v1702
    %2290 = vmatpush1.bf16.msra.mxu0 %v1701
    %2291 = vmatprep.subr.bf16.mxu0 %v1698
    %2292 = vmatpush1.bf16.msra.mxu0 %v1697
    %2293 = vmatprep.subr.bf16.mxu0 %v1694
    %2294 = vmatpush1.bf16.msra.mxu0 %v1693
    %2295 = vmatprep.subr.bf16.mxu0 %v1690
    %2296 = vmatpush1.bf16.msra.mxu0 %v1689
    %2297 = vmatprep.subr.bf16.mxu0 %v1686
    %2298 = vmatpush1.bf16.msra.mxu0 %v1685
    %2299 = vmatprep.subr.bf16.mxu0 %v1682
    %2300 = vmatpush1.bf16.msra.mxu0 %v1681
    %2301 = vmatprep.subr.bf16.mxu0 %v1678
    %2302 = vmatpush1.bf16.msra.mxu0 %v1677
    %2303 = vmatprep.subr.bf16.mxu0 %v1738
    %2304 = vmatpush2.bf16.msra.mxu0 %v1737
    %2305 = vmatprep.subr.bf16.mxu0 %v1734
    %2306 = vmatpush2.bf16.msra.mxu0 %v1733
    %2307 = vmatprep.subr.bf16.mxu0 %v1730
    %2308 = vmatpush2.bf16.msra.mxu0 %v1729
    %2309 = vmatprep.subr.bf16.mxu0 %v1726
    %2310 = vmatpush2.bf16.msra.mxu0 %v1725
    %2311 = vmatprep.subr.bf16.mxu0 %v1722
    %2312 = vmatpush2.bf16.msra.mxu0 %v1721
    %2313 = vmatprep.subr.bf16.mxu0 %v1718
    %2314 = vmatpush2.bf16.msra.mxu0 %v1717
    %2315 = vmatprep.subr.bf16.mxu0 %v1714
    %2316 = vmatpush2.bf16.msra.mxu0 %v1713
    %2317 = vmatprep.subr.bf16.mxu0 %v1710
    %2318 = vmatpush2.bf16.msra.mxu0 %v1709
    %2319 = vmatprep.mubr.bf16.mxu0 %v658
    %2320 = vmatmul.mubr.bf16.gmra.mxu0 %v657
    %v2321 = vpop.f32.mrf.mxu0
    %v2322 = vadd.f32 %v2209, %v2321
    %v2323 = vpop.f32.mrf.mxu0
    %v2324 = vadd.f32 %v2211, %v2323
    %v2325 = vpop.f32.mrf.mxu0
    %v2326 = vadd.f32 %v2213, %v2325
    %v2327 = vpop.f32.mrf.mxu0
    %v2328 = vadd.f32 %v2215, %v2327
    %2329 = vmatprep.mubr.bf16.mxu0 %v666
    %2330 = vmatmul.mubr.bf16.gmra.mxu0 %v665
    %v2331 = vpop.f32.mrf.mxu0
    %v2332 = vadd.f32 %v2219, %v2331
    %v2333 = vpop.f32.mrf.mxu0
    %v2334 = vadd.f32 %v2221, %v2333
    %v2335 = vpop.f32.mrf.mxu0
    %v2336 = vadd.f32 %v2223, %v2335
    %v2337 = vpop.f32.mrf.mxu0
    %v2338 = vadd.f32 %v2225, %v2337
    %2339 = vmatprep.mubr.bf16.mxu0 %v674
    %2340 = vmatmul.mubr.bf16.gmra.mxu0 %v673
    %v2341 = vpop.f32.mrf.mxu0
    %v2342 = vadd.f32 %v2229, %v2341
    %v2343 = vpop.f32.mrf.mxu0
    %v2344 = vadd.f32 %v2231, %v2343
    %v2345 = vpop.f32.mrf.mxu0
    %v2346 = vadd.f32 %v2233, %v2345
    %v2347 = vpop.f32.mrf.mxu0
    %v2348 = vadd.f32 %v2235, %v2347
    %2349 = vmatprep.mubr.bf16.mxu0 %v682
    %2350 = vmatmul.mubr.bf16.gmra.mxu0 %v681
    %v2351 = vpop.f32.mrf.mxu0
    %v2352 = vadd.f32 %v2239, %v2351
    %v2353 = vpop.f32.mrf.mxu0
    %v2354 = vadd.f32 %v2241, %v2353
    %v2355 = vpop.f32.mrf.mxu0
    %v2356 = vadd.f32 %v2243, %v2355
    %v2357 = vpop.f32.mrf.mxu0
    %v2358 = vadd.f32 %v2245, %v2357
    %2359 = vmatprep.mubr.bf16.mxu0 %v690
    %2360 = vmatmul.mubr.bf16.gmra.mxu0 %v689
    %v2361 = vpop.f32.mrf.mxu0
    %v2362 = vadd.f32 %v2249, %v2361
    %v2363 = vpop.f32.mrf.mxu0
    %v2364 = vadd.f32 %v2251, %v2363
    %v2365 = vpop.f32.mrf.mxu0
    %v2366 = vadd.f32 %v2253, %v2365
    %v2367 = vpop.f32.mrf.mxu0
    %v2368 = vadd.f32 %v2255, %v2367
    %2369 = vmatprep.mubr.bf16.mxu0 %v698
    %2370 = vmatmul.mubr.bf16.gmra.mxu0 %v697
    %v2371 = vpop.f32.mrf.mxu0
    %v2372 = vadd.f32 %v2259, %v2371
    %v2373 = vpop.f32.mrf.mxu0
    %v2374 = vadd.f32 %v2261, %v2373
    %v2375 = vpop.f32.mrf.mxu0
    %v2376 = vadd.f32 %v2263, %v2375
    %v2377 = vpop.f32.mrf.mxu0
    %v2378 = vadd.f32 %v2265, %v2377
    %2379 = vmatprep.mubr.bf16.mxu0 %v706
    %2380 = vmatmul.mubr.bf16.gmra.mxu0 %v705
    %v2381 = vpop.f32.mrf.mxu0
    %v2382 = vadd.f32 %v2269, %v2381
    %v2383 = vpop.f32.mrf.mxu0
    %v2384 = vadd.f32 %v2271, %v2383
    %v2385 = vpop.f32.mrf.mxu0
    %v2386 = vadd.f32 %v2273, %v2385
    %v2387 = vpop.f32.mrf.mxu0
    %v2388 = vadd.f32 %v2275, %v2387
    %2389 = vmatprep.mubr.bf16.mxu0 %v714
    %2390 = vmatmul.mubr.bf16.gmra.mxu0 %v713
    %v2391 = vpop.f32.mrf.mxu0
    %v2392 = vadd.f32 %v2279, %v2391
    %v2393 = vpop.f32.mrf.mxu0
    %v2394 = vadd.f32 %v2281, %v2393
    %v2395 = vpop.f32.mrf.mxu0
    %v2396 = vadd.f32 %v2283, %v2395
    %v2397 = vpop.f32.mrf.mxu0
    %v2398 = vadd.f32 %v2285, %v2397
    %2399 = vdwg.mxu0
    %2400 = vmatprep.subr.bf16.mxu0 %v1770
    %2401 = vmatpush1.bf16.msra.mxu0 %v1769
    %2402 = vmatprep.subr.bf16.mxu0 %v1766
    %2403 = vmatpush1.bf16.msra.mxu0 %v1765
    %2404 = vmatprep.subr.bf16.mxu0 %v1762
    %2405 = vmatpush1.bf16.msra.mxu0 %v1761
    %2406 = vmatprep.subr.bf16.mxu0 %v1758
    %2407 = vmatpush1.bf16.msra.mxu0 %v1757
    %2408 = vmatprep.subr.bf16.mxu0 %v1754
    %2409 = vmatpush1.bf16.msra.mxu0 %v1753
    %2410 = vmatprep.subr.bf16.mxu0 %v1750
    %2411 = vmatpush1.bf16.msra.mxu0 %v1749
    %2412 = vmatprep.subr.bf16.mxu0 %v1746
    %2413 = vmatpush1.bf16.msra.mxu0 %v1745
    %2414 = vmatprep.subr.bf16.mxu0 %v1742
    %2415 = vmatpush1.bf16.msra.mxu0 %v1741
    %2416 = vmatprep.subr.bf16.mxu0 %v1802
    %2417 = vmatpush2.bf16.msra.mxu0 %v1801
    %2418 = vmatprep.subr.bf16.mxu0 %v1798
    %2419 = vmatpush2.bf16.msra.mxu0 %v1797
    %2420 = vmatprep.subr.bf16.mxu0 %v1794
    %2421 = vmatpush2.bf16.msra.mxu0 %v1793
    %2422 = vmatprep.subr.bf16.mxu0 %v1790
    %2423 = vmatpush2.bf16.msra.mxu0 %v1789
    %2424 = vmatprep.subr.bf16.mxu0 %v1786
    %2425 = vmatpush2.bf16.msra.mxu0 %v1785
    %2426 = vmatprep.subr.bf16.mxu0 %v1782
    %2427 = vmatpush2.bf16.msra.mxu0 %v1781
    %2428 = vmatprep.subr.bf16.mxu0 %v1778
    %2429 = vmatpush2.bf16.msra.mxu0 %v1777
    %2430 = vmatprep.subr.bf16.mxu0 %v1774
    %2431 = vmatpush2.bf16.msra.mxu0 %v1773
    %2432 = vmatprep.mubr.bf16.mxu0 %v660
    %2433 = vmatmul.mubr.bf16.gmra.mxu0 %v659
    %v2434 = vpop.f32.mrf.mxu0
    %v2435 = vadd.f32 %v2322, %v2434
    %v2436 = vpop.f32.mrf.mxu0
    %v2437 = vadd.f32 %v2324, %v2436
    %v2438 = vpop.f32.mrf.mxu0
    %v2439 = vadd.f32 %v2326, %v2438
    %v2440 = vpop.f32.mrf.mxu0
    %v2441 = vadd.f32 %v2328, %v2440
    %2442 = vmatprep.mubr.bf16.mxu0 %v668
    %2443 = vmatmul.mubr.bf16.gmra.mxu0 %v667
    %v2444 = vpop.f32.mrf.mxu0
    %v2445 = vadd.f32 %v2332, %v2444
    %v2446 = vpop.f32.mrf.mxu0
    %v2447 = vadd.f32 %v2334, %v2446
    %v2448 = vpop.f32.mrf.mxu0
    %v2449 = vadd.f32 %v2336, %v2448
    %v2450 = vpop.f32.mrf.mxu0
    %v2451 = vadd.f32 %v2338, %v2450
    %2452 = vmatprep.mubr.bf16.mxu0 %v676
    %2453 = vmatmul.mubr.bf16.gmra.mxu0 %v675
    %v2454 = vpop.f32.mrf.mxu0
    %v2455 = vadd.f32 %v2342, %v2454
    %v2456 = vpop.f32.mrf.mxu0
    %v2457 = vadd.f32 %v2344, %v2456
    %v2458 = vpop.f32.mrf.mxu0
    %v2459 = vadd.f32 %v2346, %v2458
    %v2460 = vpop.f32.mrf.mxu0
    %v2461 = vadd.f32 %v2348, %v2460
    %2462 = vmatprep.mubr.bf16.mxu0 %v684
    %2463 = vmatmul.mubr.bf16.gmra.mxu0 %v683
    %v2464 = vpop.f32.mrf.mxu0
    %v2465 = vadd.f32 %v2352, %v2464
    %v2466 = vpop.f32.mrf.mxu0
    %v2467 = vadd.f32 %v2354, %v2466
    %v2468 = vpop.f32.mrf.mxu0
    %v2469 = vadd.f32 %v2356, %v2468
    %v2470 = vpop.f32.mrf.mxu0
    %v2471 = vadd.f32 %v2358, %v2470
    %2472 = vmatprep.mubr.bf16.mxu0 %v692
    %2473 = vmatmul.mubr.bf16.gmra.mxu0 %v691
    %v2474 = vpop.f32.mrf.mxu0
    %v2475 = vadd.f32 %v2362, %v2474
    %v2476 = vpop.f32.mrf.mxu0
    %v2477 = vadd.f32 %v2364, %v2476
    %v2478 = vpop.f32.mrf.mxu0
    %v2479 = vadd.f32 %v2366, %v2478
    %v2480 = vpop.f32.mrf.mxu0
    %v2481 = vadd.f32 %v2368, %v2480
    %2482 = vmatprep.mubr.bf16.mxu0 %v700
    %2483 = vmatmul.mubr.bf16.gmra.mxu0 %v699
    %v2484 = vpop.f32.mrf.mxu0
    %v2485 = vadd.f32 %v2372, %v2484
    %v2486 = vpop.f32.mrf.mxu0
    %v2487 = vadd.f32 %v2374, %v2486
    %v2488 = vpop.f32.mrf.mxu0
    %v2489 = vadd.f32 %v2376, %v2488
    %v2490 = vpop.f32.mrf.mxu0
    %v2491 = vadd.f32 %v2378, %v2490
    %2492 = vmatprep.mubr.bf16.mxu0 %v708
    %2493 = vmatmul.mubr.bf16.gmra.mxu0 %v707
    %v2494 = vpop.f32.mrf.mxu0
    %v2495 = vadd.f32 %v2382, %v2494
    %v2496 = vpop.f32.mrf.mxu0
    %v2497 = vadd.f32 %v2384, %v2496
    %v2498 = vpop.f32.mrf.mxu0
    %v2499 = vadd.f32 %v2386, %v2498
    %v2500 = vpop.f32.mrf.mxu0
    %v2501 = vadd.f32 %v2388, %v2500
    %2502 = vmatprep.mubr.bf16.mxu0 %v716
    %2503 = vmatmul.mubr.bf16.gmra.mxu0 %v715
    %v2504 = vpop.f32.mrf.mxu0
    %v2505 = vadd.f32 %v2392, %v2504
    %v2506 = vpop.f32.mrf.mxu0
    %v2507 = vadd.f32 %v2394, %v2506
    %v2508 = vpop.f32.mrf.mxu0
    %v2509 = vadd.f32 %v2396, %v2508
    %v2510 = vpop.f32.mrf.mxu0
    %v2511 = vadd.f32 %v2398, %v2510
    %2512 = vdwg.mxu0
    %2513 = vmatprep.subr.bf16.mxu0 %v1580
    %2514 = vmatpush1.bf16.msra.mxu0 %v1579
    %2515 = vmatprep.subr.bf16.mxu0 %v1576
    %2516 = vmatpush1.bf16.msra.mxu0 %v1575
    %2517 = vmatprep.subr.bf16.mxu0 %v1572
    %2518 = vmatpush1.bf16.msra.mxu0 %v1571
    %2519 = vmatprep.subr.bf16.mxu0 %v1568
    %2520 = vmatpush1.bf16.msra.mxu0 %v1567
    %2521 = vmatprep.subr.bf16.mxu0 %v1564
    %2522 = vmatpush1.bf16.msra.mxu0 %v1563
    %2523 = vmatprep.subr.bf16.mxu0 %v1560
    %2524 = vmatpush1.bf16.msra.mxu0 %v1559
    %2525 = vmatprep.subr.bf16.mxu0 %v1556
    %2526 = vmatpush1.bf16.msra.mxu0 %v1555
    %2527 = vmatprep.subr.bf16.mxu0 %v1552
    %2528 = vmatpush1.bf16.msra.mxu0 %v1551
    %2529 = vmatprep.subr.bf16.mxu0 %v1612
    %2530 = vmatpush2.bf16.msra.mxu0 %v1611
    %2531 = vmatprep.subr.bf16.mxu0 %v1608
    %2532 = vmatpush2.bf16.msra.mxu0 %v1607
    %2533 = vmatprep.subr.bf16.mxu0 %v1604
    %2534 = vmatpush2.bf16.msra.mxu0 %v1603
    %2535 = vmatprep.subr.bf16.mxu0 %v1600
    %2536 = vmatpush2.bf16.msra.mxu0 %v1599
    %2537 = vmatprep.subr.bf16.mxu0 %v1596
    %2538 = vmatpush2.bf16.msra.mxu0 %v1595
    %2539 = vmatprep.subr.bf16.mxu0 %v1592
    %2540 = vmatpush2.bf16.msra.mxu0 %v1591
    %2541 = vmatprep.subr.bf16.mxu0 %v1588
    %2542 = vmatpush2.bf16.msra.mxu0 %v1587
    %2543 = vmatprep.subr.bf16.mxu0 %v1584
    %2544 = vmatpush2.bf16.msra.mxu0 %v1583
    %2545 = vmatprep.mubr.bf16.mxu0 %v654
    %2546 = vmatmul.mubr.bf16.gmra.mxu0 %v653
    %v2547 = vpop.f32.mrf.mxu0
    %v2548 = vadd.f32 %v452, %v2547
    %v2549 = vpop.f32.mrf.mxu0
    %v2550 = vadd.f32 %v456, %v2549
    %v2551 = vpop.f32.mrf.mxu0
    %v2552 = vadd.f32 %v452, %v2551
    %v2553 = vpop.f32.mrf.mxu0
    %v2554 = vadd.f32 %v456, %v2553
    %2555 = vmatprep.mubr.bf16.mxu0 %v662
    %2556 = vmatmul.mubr.bf16.gmra.mxu0 %v661
    %v2557 = vpop.f32.mrf.mxu0
    %v2558 = vadd.f32 %v452, %v2557
    %v2559 = vpop.f32.mrf.mxu0
    %v2560 = vadd.f32 %v456, %v2559
    %v2561 = vpop.f32.mrf.mxu0
    %v2562 = vadd.f32 %v452, %v2561
    %v2563 = vpop.f32.mrf.mxu0
    %v2564 = vadd.f32 %v456, %v2563
    %2565 = vmatprep.mubr.bf16.mxu0 %v670
    %2566 = vmatmul.mubr.bf16.gmra.mxu0 %v669
    %v2567 = vpop.f32.mrf.mxu0
    %v2568 = vadd.f32 %v452, %v2567
    %v2569 = vpop.f32.mrf.mxu0
    %v2570 = vadd.f32 %v456, %v2569
    %v2571 = vpop.f32.mrf.mxu0
    %v2572 = vadd.f32 %v452, %v2571
    %v2573 = vpop.f32.mrf.mxu0
    %v2574 = vadd.f32 %v456, %v2573
    %2575 = vmatprep.mubr.bf16.mxu0 %v678
    %2576 = vmatmul.mubr.bf16.gmra.mxu0 %v677
    %v2577 = vpop.f32.mrf.mxu0
    %v2578 = vadd.f32 %v452, %v2577
    %v2579 = vpop.f32.mrf.mxu0
    %v2580 = vadd.f32 %v456, %v2579
    %v2581 = vpop.f32.mrf.mxu0
    %v2582 = vadd.f32 %v452, %v2581
    %v2583 = vpop.f32.mrf.mxu0
    %v2584 = vadd.f32 %v456, %v2583
    %2585 = vmatprep.mubr.bf16.mxu0 %v686
    %2586 = vmatmul.mubr.bf16.gmra.mxu0 %v685
    %v2587 = vpop.f32.mrf.mxu0
    %v2588 = vadd.f32 %v452, %v2587
    %v2589 = vpop.f32.mrf.mxu0
    %v2590 = vadd.f32 %v456, %v2589
    %v2591 = vpop.f32.mrf.mxu0
    %v2592 = vadd.f32 %v452, %v2591
    %v2593 = vpop.f32.mrf.mxu0
    %v2594 = vadd.f32 %v456, %v2593
    %2595 = vmatprep.mubr.bf16.mxu0 %v694
    %2596 = vmatmul.mubr.bf16.gmra.mxu0 %v693
    %v2597 = vpop.f32.mrf.mxu0
    %v2598 = vadd.f32 %v452, %v2597
    %v2599 = vpop.f32.mrf.mxu0
    %v2600 = vadd.f32 %v456, %v2599
    %v2601 = vpop.f32.mrf.mxu0
    %v2602 = vadd.f32 %v452, %v2601
    %v2603 = vpop.f32.mrf.mxu0
    %v2604 = vadd.f32 %v456, %v2603
    %2605 = vmatprep.mubr.bf16.mxu0 %v702
    %2606 = vmatmul.mubr.bf16.gmra.mxu0 %v701
    %v2607 = vpop.f32.mrf.mxu0
    %v2608 = vadd.f32 %v452, %v2607
    %v2609 = vpop.f32.mrf.mxu0
    %v2610 = vadd.f32 %v456, %v2609
    %v2611 = vpop.f32.mrf.mxu0
    %v2612 = vadd.f32 %v452, %v2611
    %v2613 = vpop.f32.mrf.mxu0
    %v2614 = vadd.f32 %v456, %v2613
    %2615 = vmatprep.mubr.bf16.mxu0 %v710
    %2616 = vmatmul.mubr.bf16.gmra.mxu0 %v709
    %v2617 = vpop.f32.mrf.mxu0
    %v2618 = vadd.f32 %v452, %v2617
    %v2619 = vpop.f32.mrf.mxu0
    %v2620 = vadd.f32 %v456, %v2619
    %v2621 = vpop.f32.mrf.mxu0
    %v2622 = vadd.f32 %v452, %v2621
    %v2623 = vpop.f32.mrf.mxu0
    %v2624 = vadd.f32 %v456, %v2623
    %2625 = vdwg.mxu0
    %2626 = vmatprep.subr.bf16.mxu0 %v1644
    %2627 = vmatpush1.bf16.msra.mxu0 %v1643
    %2628 = vmatprep.subr.bf16.mxu0 %v1640
    %2629 = vmatpush1.bf16.msra.mxu0 %v1639
    %2630 = vmatprep.subr.bf16.mxu0 %v1636
    %2631 = vmatpush1.bf16.msra.mxu0 %v1635
    %2632 = vmatprep.subr.bf16.mxu0 %v1632
    %2633 = vmatpush1.bf16.msra.mxu0 %v1631
    %2634 = vmatprep.subr.bf16.mxu0 %v1628
    %2635 = vmatpush1.bf16.msra.mxu0 %v1627
    %2636 = vmatprep.subr.bf16.mxu0 %v1624
    %2637 = vmatpush1.bf16.msra.mxu0 %v1623
    %2638 = vmatprep.subr.bf16.mxu0 %v1620
    %2639 = vmatpush1.bf16.msra.mxu0 %v1619
    %2640 = vmatprep.subr.bf16.mxu0 %v1616
    %2641 = vmatpush1.bf16.msra.mxu0 %v1615
    %2642 = vmatprep.subr.bf16.mxu0 %v1676
    %2643 = vmatpush2.bf16.msra.mxu0 %v1675
    %2644 = vmatprep.subr.bf16.mxu0 %v1672
    %2645 = vmatpush2.bf16.msra.mxu0 %v1671
    %2646 = vmatprep.subr.bf16.mxu0 %v1668
    %2647 = vmatpush2.bf16.msra.mxu0 %v1667
    %2648 = vmatprep.subr.bf16.mxu0 %v1664
    %2649 = vmatpush2.bf16.msra.mxu0 %v1663
    %2650 = vmatprep.subr.bf16.mxu0 %v1660
    %2651 = vmatpush2.bf16.msra.mxu0 %v1659
    %2652 = vmatprep.subr.bf16.mxu0 %v1656
    %2653 = vmatpush2.bf16.msra.mxu0 %v1655
    %2654 = vmatprep.subr.bf16.mxu0 %v1652
    %2655 = vmatpush2.bf16.msra.mxu0 %v1651
    %2656 = vmatprep.subr.bf16.mxu0 %v1648
    %2657 = vmatpush2.bf16.msra.mxu0 %v1647
    %2658 = vmatprep.mubr.bf16.mxu0 %v656
    %2659 = vmatmul.mubr.bf16.gmra.mxu0 %v655
    %v2660 = vpop.f32.mrf.mxu0
    %v2661 = vadd.f32 %v2548, %v2660
    %v2662 = vpop.f32.mrf.mxu0
    %v2663 = vadd.f32 %v2550, %v2662
    %v2664 = vpop.f32.mrf.mxu0
    %v2665 = vadd.f32 %v2552, %v2664
    %v2666 = vpop.f32.mrf.mxu0
    %v2667 = vadd.f32 %v2554, %v2666
    %2668 = vmatprep.mubr.bf16.mxu0 %v664
    %2669 = vmatmul.mubr.bf16.gmra.mxu0 %v663
    %v2670 = vpop.f32.mrf.mxu0
    %v2671 = vadd.f32 %v2558, %v2670
    %v2672 = vpop.f32.mrf.mxu0
    %v2673 = vadd.f32 %v2560, %v2672
    %v2674 = vpop.f32.mrf.mxu0
    %v2675 = vadd.f32 %v2562, %v2674
    %v2676 = vpop.f32.mrf.mxu0
    %v2677 = vadd.f32 %v2564, %v2676
    %2678 = vmatprep.mubr.bf16.mxu0 %v672
    %2679 = vmatmul.mubr.bf16.gmra.mxu0 %v671
    %v2680 = vpop.f32.mrf.mxu0
    %v2681 = vadd.f32 %v2568, %v2680
    %v2682 = vpop.f32.mrf.mxu0
    %v2683 = vadd.f32 %v2570, %v2682
    %v2684 = vpop.f32.mrf.mxu0
    %v2685 = vadd.f32 %v2572, %v2684
    %v2686 = vpop.f32.mrf.mxu0
    %v2687 = vadd.f32 %v2574, %v2686
    %2688 = vmatprep.mubr.bf16.mxu0 %v680
    %2689 = vmatmul.mubr.bf16.gmra.mxu0 %v679
    %v2690 = vpop.f32.mrf.mxu0
    %v2691 = vadd.f32 %v2578, %v2690
    %v2692 = vpop.f32.mrf.mxu0
    %v2693 = vadd.f32 %v2580, %v2692
    %v2694 = vpop.f32.mrf.mxu0
    %v2695 = vadd.f32 %v2582, %v2694
    %v2696 = vpop.f32.mrf.mxu0
    %v2697 = vadd.f32 %v2584, %v2696
    %2698 = vmatprep.mubr.bf16.mxu0 %v688
    %2699 = vmatmul.mubr.bf16.gmra.mxu0 %v687
    %v2700 = vpop.f32.mrf.mxu0
    %v2701 = vadd.f32 %v2588, %v2700
    %v2702 = vpop.f32.mrf.mxu0
    %v2703 = vadd.f32 %v2590, %v2702
    %v2704 = vpop.f32.mrf.mxu0
    %v2705 = vadd.f32 %v2592, %v2704
    %v2706 = vpop.f32.mrf.mxu0
    %v2707 = vadd.f32 %v2594, %v2706
    %2708 = vmatprep.mubr.bf16.mxu0 %v696
    %2709 = vmatmul.mubr.bf16.gmra.mxu0 %v695
    %v2710 = vpop.f32.mrf.mxu0
    %v2711 = vadd.f32 %v2598, %v2710
    %v2712 = vpop.f32.mrf.mxu0
    %v2713 = vadd.f32 %v2600, %v2712
    %v2714 = vpop.f32.mrf.mxu0
    %v2715 = vadd.f32 %v2602, %v2714
    %v2716 = vpop.f32.mrf.mxu0
    %v2717 = vadd.f32 %v2604, %v2716
    %2718 = vmatprep.mubr.bf16.mxu0 %v704
    %2719 = vmatmul.mubr.bf16.gmra.mxu0 %v703
    %v2720 = vpop.f32.mrf.mxu0
    %v2721 = vadd.f32 %v2608, %v2720
    %v2722 = vpop.f32.mrf.mxu0
    %v2723 = vadd.f32 %v2610, %v2722
    %v2724 = vpop.f32.mrf.mxu0
    %v2725 = vadd.f32 %v2612, %v2724
    %v2726 = vpop.f32.mrf.mxu0
    %v2727 = vadd.f32 %v2614, %v2726
    %2728 = vmatprep.mubr.bf16.mxu0 %v712
    %2729 = vmatmul.mubr.bf16.gmra.mxu0 %v711
    %v2730 = vpop.f32.mrf.mxu0
    %v2731 = vadd.f32 %v2618, %v2730
    %v2732 = vpop.f32.mrf.mxu0
    %v2733 = vadd.f32 %v2620, %v2732
    %v2734 = vpop.f32.mrf.mxu0
    %v2735 = vadd.f32 %v2622, %v2734
    %v2736 = vpop.f32.mrf.mxu0
    %v2737 = vadd.f32 %v2624, %v2736
    %2738 = vdwg.mxu0
    %2739 = vmatprep.subr.bf16.mxu0 %v1708
    %2740 = vmatpush1.bf16.msra.mxu0 %v1707
    %2741 = vmatprep.subr.bf16.mxu0 %v1704
    %2742 = vmatpush1.bf16.msra.mxu0 %v1703
    %2743 = vmatprep.subr.bf16.mxu0 %v1700
    %2744 = vmatpush1.bf16.msra.mxu0 %v1699
    %2745 = vmatprep.subr.bf16.mxu0 %v1696
    %2746 = vmatpush1.bf16.msra.mxu0 %v1695
    %2747 = vmatprep.subr.bf16.mxu0 %v1692
    %2748 = vmatpush1.bf16.msra.mxu0 %v1691
    %2749 = vmatprep.subr.bf16.mxu0 %v1688
    %2750 = vmatpush1.bf16.msra.mxu0 %v1687
    %2751 = vmatprep.subr.bf16.mxu0 %v1684
    %2752 = vmatpush1.bf16.msra.mxu0 %v1683
    %2753 = vmatprep.subr.bf16.mxu0 %v1680
    %2754 = vmatpush1.bf16.msra.mxu0 %v1679
    %2755 = vmatprep.subr.bf16.mxu0 %v1740
    %2756 = vmatpush2.bf16.msra.mxu0 %v1739
    %2757 = vmatprep.subr.bf16.mxu0 %v1736
    %2758 = vmatpush2.bf16.msra.mxu0 %v1735
    %2759 = vmatprep.subr.bf16.mxu0 %v1732
    %2760 = vmatpush2.bf16.msra.mxu0 %v1731
    %2761 = vmatprep.subr.bf16.mxu0 %v1728
    %2762 = vmatpush2.bf16.msra.mxu0 %v1727
    %2763 = vmatprep.subr.bf16.mxu0 %v1724
    %2764 = vmatpush2.bf16.msra.mxu0 %v1723
    %2765 = vmatprep.subr.bf16.mxu0 %v1720
    %2766 = vmatpush2.bf16.msra.mxu0 %v1719
    %2767 = vmatprep.subr.bf16.mxu0 %v1716
    %2768 = vmatpush2.bf16.msra.mxu0 %v1715
    %2769 = vmatprep.subr.bf16.mxu0 %v1712
    %2770 = vmatpush2.bf16.msra.mxu0 %v1711
    %2771 = vmatprep.mubr.bf16.mxu0 %v658
    %2772 = vmatmul.mubr.bf16.gmra.mxu0 %v657
    %v2773 = vpop.f32.mrf.mxu0
    %v2774 = vadd.f32 %v2661, %v2773
    %v2775 = vpop.f32.mrf.mxu0
    %v2776 = vadd.f32 %v2663, %v2775
    %v2777 = vpop.f32.mrf.mxu0
    %v2778 = vadd.f32 %v2665, %v2777
    %v2779 = vpop.f32.mrf.mxu0
    %v2780 = vadd.f32 %v2667, %v2779
    %2781 = vmatprep.mubr.bf16.mxu0 %v666
    %2782 = vmatmul.mubr.bf16.gmra.mxu0 %v665
    %v2783 = vpop.f32.mrf.mxu0
    %v2784 = vadd.f32 %v2671, %v2783
    %v2785 = vpop.f32.mrf.mxu0
    %v2786 = vadd.f32 %v2673, %v2785
    %v2787 = vpop.f32.mrf.mxu0
    %v2788 = vadd.f32 %v2675, %v2787
    %v2789 = vpop.f32.mrf.mxu0
    %v2790 = vadd.f32 %v2677, %v2789
    %2791 = vmatprep.mubr.bf16.mxu0 %v674
    %2792 = vmatmul.mubr.bf16.gmra.mxu0 %v673
    %v2793 = vpop.f32.mrf.mxu0
    %v2794 = vadd.f32 %v2681, %v2793
    %v2795 = vpop.f32.mrf.mxu0
    %v2796 = vadd.f32 %v2683, %v2795
    %v2797 = vpop.f32.mrf.mxu0
    %v2798 = vadd.f32 %v2685, %v2797
    %v2799 = vpop.f32.mrf.mxu0
    %v2800 = vadd.f32 %v2687, %v2799
    %2801 = vmatprep.mubr.bf16.mxu0 %v682
    %2802 = vmatmul.mubr.bf16.gmra.mxu0 %v681
    %v2803 = vpop.f32.mrf.mxu0
    %v2804 = vadd.f32 %v2691, %v2803
    %v2805 = vpop.f32.mrf.mxu0
    %v2806 = vadd.f32 %v2693, %v2805
    %v2807 = vpop.f32.mrf.mxu0
    %v2808 = vadd.f32 %v2695, %v2807
    %v2809 = vpop.f32.mrf.mxu0
    %v2810 = vadd.f32 %v2697, %v2809
    %2811 = vmatprep.mubr.bf16.mxu0 %v690
    %2812 = vmatmul.mubr.bf16.gmra.mxu0 %v689
    %v2813 = vpop.f32.mrf.mxu0
    %v2814 = vadd.f32 %v2701, %v2813
    %v2815 = vpop.f32.mrf.mxu0
    %v2816 = vadd.f32 %v2703, %v2815
    %v2817 = vpop.f32.mrf.mxu0
    %v2818 = vadd.f32 %v2705, %v2817
    %v2819 = vpop.f32.mrf.mxu0
    %v2820 = vadd.f32 %v2707, %v2819
    %2821 = vmatprep.mubr.bf16.mxu0 %v698
    %2822 = vmatmul.mubr.bf16.gmra.mxu0 %v697
    %v2823 = vpop.f32.mrf.mxu0
    %v2824 = vadd.f32 %v2711, %v2823
    %v2825 = vpop.f32.mrf.mxu0
    %v2826 = vadd.f32 %v2713, %v2825
    %v2827 = vpop.f32.mrf.mxu0
    %v2828 = vadd.f32 %v2715, %v2827
    %v2829 = vpop.f32.mrf.mxu0
    %v2830 = vadd.f32 %v2717, %v2829
    %2831 = vmatprep.mubr.bf16.mxu0 %v706
    %2832 = vmatmul.mubr.bf16.gmra.mxu0 %v705
    %v2833 = vpop.f32.mrf.mxu0
    %v2834 = vadd.f32 %v2721, %v2833
    %v2835 = vpop.f32.mrf.mxu0
    %v2836 = vadd.f32 %v2723, %v2835
    %v2837 = vpop.f32.mrf.mxu0
    %v2838 = vadd.f32 %v2725, %v2837
    %v2839 = vpop.f32.mrf.mxu0
    %v2840 = vadd.f32 %v2727, %v2839
    %2841 = vmatprep.mubr.bf16.mxu0 %v714
    %2842 = vmatmul.mubr.bf16.gmra.mxu0 %v713
    %v2843 = vpop.f32.mrf.mxu0
    %v2844 = vadd.f32 %v2731, %v2843
    %v2845 = vpop.f32.mrf.mxu0
    %v2846 = vadd.f32 %v2733, %v2845
    %v2847 = vpop.f32.mrf.mxu0
    %v2848 = vadd.f32 %v2735, %v2847
    %v2849 = vpop.f32.mrf.mxu0
    %v2850 = vadd.f32 %v2737, %v2849
    %2851 = vdwg.mxu0
    %2852 = vmatprep.subr.bf16.mxu0 %v1772
    %2853 = vmatpush1.bf16.msra.mxu0 %v1771
    %2854 = vmatprep.subr.bf16.mxu0 %v1768
    %2855 = vmatpush1.bf16.msra.mxu0 %v1767
    %2856 = vmatprep.subr.bf16.mxu0 %v1764
    %2857 = vmatpush1.bf16.msra.mxu0 %v1763
    %2858 = vmatprep.subr.bf16.mxu0 %v1760
    %2859 = vmatpush1.bf16.msra.mxu0 %v1759
    %2860 = vmatprep.subr.bf16.mxu0 %v1756
    %2861 = vmatpush1.bf16.msra.mxu0 %v1755
    %2862 = vmatprep.subr.bf16.mxu0 %v1752
    %2863 = vmatpush1.bf16.msra.mxu0 %v1751
    %2864 = vmatprep.subr.bf16.mxu0 %v1748
    %2865 = vmatpush1.bf16.msra.mxu0 %v1747
    %2866 = vmatprep.subr.bf16.mxu0 %v1744
    %2867 = vmatpush1.bf16.msra.mxu0 %v1743
    %2868 = vmatprep.subr.bf16.mxu0 %v1804
    %2869 = vmatpush2.bf16.msra.mxu0 %v1803
    %2870 = vmatprep.subr.bf16.mxu0 %v1800
    %2871 = vmatpush2.bf16.msra.mxu0 %v1799
    %2872 = vmatprep.subr.bf16.mxu0 %v1796
    %2873 = vmatpush2.bf16.msra.mxu0 %v1795
    %2874 = vmatprep.subr.bf16.mxu0 %v1792
    %2875 = vmatpush2.bf16.msra.mxu0 %v1791
    %2876 = vmatprep.subr.bf16.mxu0 %v1788
    %2877 = vmatpush2.bf16.msra.mxu0 %v1787
    %2878 = vmatprep.subr.bf16.mxu0 %v1784
    %2879 = vmatpush2.bf16.msra.mxu0 %v1783
    %2880 = vmatprep.subr.bf16.mxu0 %v1780
    %2881 = vmatpush2.bf16.msra.mxu0 %v1779
    %2882 = vmatprep.subr.bf16.mxu0 %v1776
    %2883 = vmatpush2.bf16.msra.mxu0 %v1775
    %2884 = vmatprep.mubr.bf16.mxu0 %v660
    %2885 = vmatmul.mubr.bf16.gmra.mxu0 %v659
    %v2886 = vpop.f32.mrf.mxu0
    %v2887 = vadd.f32 %v2774, %v2886
    %v2888 = vpop.f32.mrf.mxu0
    %v2889 = vadd.f32 %v2776, %v2888
    %v2890 = vpop.f32.mrf.mxu0
    %v2891 = vadd.f32 %v2778, %v2890
    %v2892 = vpop.f32.mrf.mxu0
    %v2893 = vadd.f32 %v2780, %v2892
    %2894 = vmatprep.mubr.bf16.mxu0 %v668
    %2895 = vmatmul.mubr.bf16.gmra.mxu0 %v667
    %v2896 = vpop.f32.mrf.mxu0
    %v2897 = vadd.f32 %v2784, %v2896
    %v2898 = vpop.f32.mrf.mxu0
    %v2899 = vadd.f32 %v2786, %v2898
    %v2900 = vpop.f32.mrf.mxu0
    %v2901 = vadd.f32 %v2788, %v2900
    %v2902 = vpop.f32.mrf.mxu0
    %v2903 = vadd.f32 %v2790, %v2902
    %2904 = vmatprep.mubr.bf16.mxu0 %v676
    %2905 = vmatmul.mubr.bf16.gmra.mxu0 %v675
    %v2906 = vpop.f32.mrf.mxu0
    %v2907 = vadd.f32 %v2794, %v2906
    %v2908 = vpop.f32.mrf.mxu0
    %v2909 = vadd.f32 %v2796, %v2908
    %v2910 = vpop.f32.mrf.mxu0
    %v2911 = vadd.f32 %v2798, %v2910
    %v2912 = vpop.f32.mrf.mxu0
    %v2913 = vadd.f32 %v2800, %v2912
    %2914 = vmatprep.mubr.bf16.mxu0 %v684
    %2915 = vmatmul.mubr.bf16.gmra.mxu0 %v683
    %v2916 = vpop.f32.mrf.mxu0
    %v2917 = vadd.f32 %v2804, %v2916
    %v2918 = vpop.f32.mrf.mxu0
    %v2919 = vadd.f32 %v2806, %v2918
    %v2920 = vpop.f32.mrf.mxu0
    %v2921 = vadd.f32 %v2808, %v2920
    %v2922 = vpop.f32.mrf.mxu0
    %v2923 = vadd.f32 %v2810, %v2922
    %2924 = vmatprep.mubr.bf16.mxu0 %v692
    %2925 = vmatmul.mubr.bf16.gmra.mxu0 %v691
    %v2926 = vpop.f32.mrf.mxu0
    %v2927 = vadd.f32 %v2814, %v2926
    %v2928 = vpop.f32.mrf.mxu0
    %v2929 = vadd.f32 %v2816, %v2928
    %v2930 = vpop.f32.mrf.mxu0
    %v2931 = vadd.f32 %v2818, %v2930
    %v2932 = vpop.f32.mrf.mxu0
    %v2933 = vadd.f32 %v2820, %v2932
    %2934 = vmatprep.mubr.bf16.mxu0 %v700
    %2935 = vmatmul.mubr.bf16.gmra.mxu0 %v699
    %v2936 = vpop.f32.mrf.mxu0
    %v2937 = vadd.f32 %v2824, %v2936
    %v2938 = vpop.f32.mrf.mxu0
    %v2939 = vadd.f32 %v2826, %v2938
    %v2940 = vpop.f32.mrf.mxu0
    %v2941 = vadd.f32 %v2828, %v2940
    %v2942 = vpop.f32.mrf.mxu0
    %v2943 = vadd.f32 %v2830, %v2942
    %2944 = vmatprep.mubr.bf16.mxu0 %v708
    %2945 = vmatmul.mubr.bf16.gmra.mxu0 %v707
    %v2946 = vpop.f32.mrf.mxu0
    %v2947 = vadd.f32 %v2834, %v2946
    %v2948 = vpop.f32.mrf.mxu0
    %v2949 = vadd.f32 %v2836, %v2948
    %v2950 = vpop.f32.mrf.mxu0
    %v2951 = vadd.f32 %v2838, %v2950
    %v2952 = vpop.f32.mrf.mxu0
    %v2953 = vadd.f32 %v2840, %v2952
    %2954 = vmatprep.mubr.bf16.mxu0 %v716
    %2955 = vmatmul.mubr.bf16.gmra.mxu0 %v715
    %v2956 = vpop.f32.mrf.mxu0
    %v2957 = vadd.f32 %v2844, %v2956
    %v2958 = vpop.f32.mrf.mxu0
    %v2959 = vadd.f32 %v2846, %v2958
    %v2960 = vpop.f32.mrf.mxu0
    %v2961 = vadd.f32 %v2848, %v2960
    %v2962 = vpop.f32.mrf.mxu0
    %v2963 = vadd.f32 %v2850, %v2962
    %2964 = vdwg.mxu0
    %v2965 = vld [vmem:[#allocation5] sm:$0xff]
    %v2966 = vld [vmem:[#allocation5 + $0x8] sm:$0xff]
    %v2967 = vld [vmem:[#allocation5 + $0x10] sm:$0xff]
    %v2968 = vld [vmem:[#allocation5 + $0x18] sm:$0xff]
    %v2969 = vld [vmem:[#allocation5 + $0x20] sm:$0xff]
    %v2970 = vld [vmem:[#allocation5 + $0x28] sm:$0xff]
    %v2971 = vld [vmem:[#allocation5 + $0x30] sm:$0xff]
    %v2972 = vld [vmem:[#allocation5 + $0x38] sm:$0xff]
    %v2973 = vld [vmem:[#allocation5 + $0x40] sm:$0xff]
    %v2974 = vld [vmem:[#allocation5 + $0x48] sm:$0xff]
    %v2975 = vld [vmem:[#allocation5 + $0x50] sm:$0xff]
    %v2976 = vld [vmem:[#allocation5 + $0x58] sm:$0xff]
    %v2977 = vld [vmem:[#allocation5 + $0x60] sm:$0xff]
    %v2978 = vld [vmem:[#allocation5 + $0x68] sm:$0xff]
    %v2979 = vld [vmem:[#allocation5 + $0x70] sm:$0xff]
    %v2980 = vld [vmem:[#allocation5 + $0x78] sm:$0xff]
    %v2981 = vld [vmem:[#allocation5 + $0x80] sm:$0xff]
    %v2982 = vld [vmem:[#allocation5 + $0x88] sm:$0xff]
    %v2983 = vld [vmem:[#allocation5 + $0x90] sm:$0xff]
    %v2984 = vld [vmem:[#allocation5 + $0x98] sm:$0xff]
    %v2985 = vld [vmem:[#allocation5 + $0xa0] sm:$0xff]
    %v2986 = vld [vmem:[#allocation5 + $0xa8] sm:$0xff]
    %v2987 = vld [vmem:[#allocation5 + $0xb0] sm:$0xff]
    %v2988 = vld [vmem:[#allocation5 + $0xb8] sm:$0xff]
    %v2989 = vld [vmem:[#allocation5 + $0xc0] sm:$0xff]
    %v2990 = vld [vmem:[#allocation5 + $0xc8] sm:$0xff]
    %v2991 = vld [vmem:[#allocation5 + $0xd0] sm:$0xff]
    %v2992 = vld [vmem:[#allocation5 + $0xd8] sm:$0xff]
    %v2993 = vld [vmem:[#allocation5 + $0xe0] sm:$0xff]
    %v2994 = vld [vmem:[#allocation5 + $0xe8] sm:$0xff]
    %v2995 = vld [vmem:[#allocation5 + $0xf0] sm:$0xff]
    %v2996 = vld [vmem:[#allocation5 + $0xf8] sm:$0xff]
    %v2997 = vld [vmem:[#allocation5 + $0x100] sm:$0xff]
    %v2998 = vld [vmem:[#allocation5 + $0x108] sm:$0xff]
    %v2999 = vld [vmem:[#allocation5 + $0x110] sm:$0xff]
    %v3000 = vld [vmem:[#allocation5 + $0x118] sm:$0xff]
    %v3001 = vld [vmem:[#allocation5 + $0x120] sm:$0xff]
    %v3002 = vld [vmem:[#allocation5 + $0x128] sm:$0xff]
    %v3003 = vld [vmem:[#allocation5 + $0x130] sm:$0xff]
    %v3004 = vld [vmem:[#allocation5 + $0x138] sm:$0xff]
    %v3005 = vld [vmem:[#allocation5 + $0x140] sm:$0xff]
    %v3006 = vld [vmem:[#allocation5 + $0x148] sm:$0xff]
    %v3007 = vld [vmem:[#allocation5 + $0x150] sm:$0xff]
    %v3008 = vld [vmem:[#allocation5 + $0x158] sm:$0xff]
    %v3009 = vld [vmem:[#allocation5 + $0x160] sm:$0xff]
    %v3010 = vld [vmem:[#allocation5 + $0x168] sm:$0xff]
    %v3011 = vld [vmem:[#allocation5 + $0x170] sm:$0xff]
    %v3012 = vld [vmem:[#allocation5 + $0x178] sm:$0xff]
    %v3013 = vld [vmem:[#allocation5 + $0x180] sm:$0xff]
    %v3014 = vld [vmem:[#allocation5 + $0x188] sm:$0xff]
    %v3015 = vld [vmem:[#allocation5 + $0x190] sm:$0xff]
    %v3016 = vld [vmem:[#allocation5 + $0x198] sm:$0xff]
    %v3017 = vld [vmem:[#allocation5 + $0x1a0] sm:$0xff]
    %v3018 = vld [vmem:[#allocation5 + $0x1a8] sm:$0xff]
    %v3019 = vld [vmem:[#allocation5 + $0x1b0] sm:$0xff]
    %v3020 = vld [vmem:[#allocation5 + $0x1b8] sm:$0xff]
    %v3021 = vld [vmem:[#allocation5 + $0x1c0] sm:$0xff]
    %v3022 = vld [vmem:[#allocation5 + $0x1c8] sm:$0xff]
    %v3023 = vld [vmem:[#allocation5 + $0x1d0] sm:$0xff]
    %v3024 = vld [vmem:[#allocation5 + $0x1d8] sm:$0xff]
    %v3025 = vld [vmem:[#allocation5 + $0x1e0] sm:$0xff]
    %v3026 = vld [vmem:[#allocation5 + $0x1e8] sm:$0xff]
    %v3027 = vld [vmem:[#allocation5 + $0x1f0] sm:$0xff]
    %v3028 = vld [vmem:[#allocation5 + $0x1f8] sm:$0xff]
    %v3029 = vld [vmem:[#allocation10] sm:$0xff]
    %v3030 = vld [vmem:[#allocation10 + $0x8] sm:$0xff]
    %v3031 = vld [vmem:[#allocation10 + $0x10] sm:$0xff]
    %v3032 = vld [vmem:[#allocation10 + $0x18] sm:$0xff]
    %v3033 = vld [vmem:[#allocation10 + $0x20] sm:$0xff]
    %v3034 = vld [vmem:[#allocation10 + $0x28] sm:$0xff]
    %v3035 = vld [vmem:[#allocation10 + $0x30] sm:$0xff]
    %v3036 = vld [vmem:[#allocation10 + $0x38] sm:$0xff]
    %v3037 = vld [vmem:[#allocation10 + $0x40] sm:$0xff]
    %v3038 = vld [vmem:[#allocation10 + $0x48] sm:$0xff]
    %v3039 = vld [vmem:[#allocation10 + $0x50] sm:$0xff]
    %v3040 = vld [vmem:[#allocation10 + $0x58] sm:$0xff]
    %v3041 = vld [vmem:[#allocation10 + $0x60] sm:$0xff]
    %v3042 = vld [vmem:[#allocation10 + $0x68] sm:$0xff]
    %v3043 = vld [vmem:[#allocation10 + $0x70] sm:$0xff]
    %v3044 = vld [vmem:[#allocation10 + $0x78] sm:$0xff]
    %v3045 = vld [vmem:[#allocation10 + $0x80] sm:$0xff]
    %v3046 = vld [vmem:[#allocation10 + $0x88] sm:$0xff]
    %v3047 = vld [vmem:[#allocation10 + $0x90] sm:$0xff]
    %v3048 = vld [vmem:[#allocation10 + $0x98] sm:$0xff]
    %v3049 = vld [vmem:[#allocation10 + $0xa0] sm:$0xff]
    %v3050 = vld [vmem:[#allocation10 + $0xa8] sm:$0xff]
    %v3051 = vld [vmem:[#allocation10 + $0xb0] sm:$0xff]
    %v3052 = vld [vmem:[#allocation10 + $0xb8] sm:$0xff]
    %v3053 = vld [vmem:[#allocation10 + $0xc0] sm:$0xff]
    %v3054 = vld [vmem:[#allocation10 + $0xc8] sm:$0xff]
    %v3055 = vld [vmem:[#allocation10 + $0xd0] sm:$0xff]
    %v3056 = vld [vmem:[#allocation10 + $0xd8] sm:$0xff]
    %v3057 = vld [vmem:[#allocation10 + $0xe0] sm:$0xff]
    %v3058 = vld [vmem:[#allocation10 + $0xe8] sm:$0xff]
    %v3059 = vld [vmem:[#allocation10 + $0xf0] sm:$0xff]
    %v3060 = vld [vmem:[#allocation10 + $0xf8] sm:$0xff]
    %v3061 = vld [vmem:[#allocation10 + $0x100] sm:$0xff]
    %v3062 = vld [vmem:[#allocation10 + $0x108] sm:$0xff]
    %v3063 = vld [vmem:[#allocation10 + $0x110] sm:$0xff]
    %v3064 = vld [vmem:[#allocation10 + $0x118] sm:$0xff]
    %v3065 = vld [vmem:[#allocation10 + $0x120] sm:$0xff]
    %v3066 = vld [vmem:[#allocation10 + $0x128] sm:$0xff]
    %v3067 = vld [vmem:[#allocation10 + $0x130] sm:$0xff]
    %v3068 = vld [vmem:[#allocation10 + $0x138] sm:$0xff]
    %v3069 = vld [vmem:[#allocation10 + $0x140] sm:$0xff]
    %v3070 = vld [vmem:[#allocation10 + $0x148] sm:$0xff]
    %v3071 = vld [vmem:[#allocation10 + $0x150] sm:$0xff]
    %v3072 = vld [vmem:[#allocation10 + $0x158] sm:$0xff]
    %v3073 = vld [vmem:[#allocation10 + $0x160] sm:$0xff]
    %v3074 = vld [vmem:[#allocation10 + $0x168] sm:$0xff]
    %v3075 = vld [vmem:[#allocation10 + $0x170] sm:$0xff]
    %v3076 = vld [vmem:[#allocation10 + $0x178] sm:$0xff]
    %v3077 = vld [vmem:[#allocation10 + $0x180] sm:$0xff]
    %v3078 = vld [vmem:[#allocation10 + $0x188] sm:$0xff]
    %v3079 = vld [vmem:[#allocation10 + $0x190] sm:$0xff]
    %v3080 = vld [vmem:[#allocation10 + $0x198] sm:$0xff]
    %v3081 = vld [vmem:[#allocation10 + $0x1a0] sm:$0xff]
    %v3082 = vld [vmem:[#allocation10 + $0x1a8] sm:$0xff]
    %v3083 = vld [vmem:[#allocation10 + $0x1b0] sm:$0xff]
    %v3084 = vld [vmem:[#allocation10 + $0x1b8] sm:$0xff]
    %v3085 = vld [vmem:[#allocation10 + $0x1c0] sm:$0xff]
    %v3086 = vld [vmem:[#allocation10 + $0x1c8] sm:$0xff]
    %v3087 = vld [vmem:[#allocation10 + $0x1d0] sm:$0xff]
    %v3088 = vld [vmem:[#allocation10 + $0x1d8] sm:$0xff]
    %v3089 = vld [vmem:[#allocation10 + $0x1e0] sm:$0xff]
    %v3090 = vld [vmem:[#allocation10 + $0x1e8] sm:$0xff]
    %v3091 = vld [vmem:[#allocation10 + $0x1f0] sm:$0xff]
    %v3092 = vld [vmem:[#allocation10 + $0x1f8] sm:$0xff]
    %v3093 = vld [vmem:[#allocation10 + $0x200] sm:$0xff]
    %v3094 = vld [vmem:[#allocation10 + $0x208] sm:$0xff]
    %v3095 = vld [vmem:[#allocation10 + $0x210] sm:$0xff]
    %v3096 = vld [vmem:[#allocation10 + $0x218] sm:$0xff]
    %v3097 = vld [vmem:[#allocation10 + $0x220] sm:$0xff]
    %v3098 = vld [vmem:[#allocation10 + $0x228] sm:$0xff]
    %v3099 = vld [vmem:[#allocation10 + $0x230] sm:$0xff]
    %v3100 = vld [vmem:[#allocation10 + $0x238] sm:$0xff]
    %v3101 = vld [vmem:[#allocation10 + $0x240] sm:$0xff]
    %v3102 = vld [vmem:[#allocation10 + $0x248] sm:$0xff]
    %v3103 = vld [vmem:[#allocation10 + $0x250] sm:$0xff]
    %v3104 = vld [vmem:[#allocation10 + $0x258] sm:$0xff]
    %v3105 = vld [vmem:[#allocation10 + $0x260] sm:$0xff]
    %v3106 = vld [vmem:[#allocation10 + $0x268] sm:$0xff]
    %v3107 = vld [vmem:[#allocation10 + $0x270] sm:$0xff]
    %v3108 = vld [vmem:[#allocation10 + $0x278] sm:$0xff]
    %v3109 = vld [vmem:[#allocation10 + $0x280] sm:$0xff]
    %v3110 = vld [vmem:[#allocation10 + $0x288] sm:$0xff]
    %v3111 = vld [vmem:[#allocation10 + $0x290] sm:$0xff]
    %v3112 = vld [vmem:[#allocation10 + $0x298] sm:$0xff]
    %v3113 = vld [vmem:[#allocation10 + $0x2a0] sm:$0xff]
    %v3114 = vld [vmem:[#allocation10 + $0x2a8] sm:$0xff]
    %v3115 = vld [vmem:[#allocation10 + $0x2b0] sm:$0xff]
    %v3116 = vld [vmem:[#allocation10 + $0x2b8] sm:$0xff]
    %v3117 = vld [vmem:[#allocation10 + $0x2c0] sm:$0xff]
    %v3118 = vld [vmem:[#allocation10 + $0x2c8] sm:$0xff]
    %v3119 = vld [vmem:[#allocation10 + $0x2d0] sm:$0xff]
    %v3120 = vld [vmem:[#allocation10 + $0x2d8] sm:$0xff]
    %v3121 = vld [vmem:[#allocation10 + $0x2e0] sm:$0xff]
    %v3122 = vld [vmem:[#allocation10 + $0x2e8] sm:$0xff]
    %v3123 = vld [vmem:[#allocation10 + $0x2f0] sm:$0xff]
    %v3124 = vld [vmem:[#allocation10 + $0x2f8] sm:$0xff]
    %v3125 = vld [vmem:[#allocation10 + $0x300] sm:$0xff]
    %v3126 = vld [vmem:[#allocation10 + $0x308] sm:$0xff]
    %v3127 = vld [vmem:[#allocation10 + $0x310] sm:$0xff]
    %v3128 = vld [vmem:[#allocation10 + $0x318] sm:$0xff]
    %v3129 = vld [vmem:[#allocation10 + $0x320] sm:$0xff]
    %v3130 = vld [vmem:[#allocation10 + $0x328] sm:$0xff]
    %v3131 = vld [vmem:[#allocation10 + $0x330] sm:$0xff]
    %v3132 = vld [vmem:[#allocation10 + $0x338] sm:$0xff]
    %v3133 = vld [vmem:[#allocation10 + $0x340] sm:$0xff]
    %v3134 = vld [vmem:[#allocation10 + $0x348] sm:$0xff]
    %v3135 = vld [vmem:[#allocation10 + $0x350] sm:$0xff]
    %v3136 = vld [vmem:[#allocation10 + $0x358] sm:$0xff]
    %v3137 = vld [vmem:[#allocation10 + $0x360] sm:$0xff]
    %v3138 = vld [vmem:[#allocation10 + $0x368] sm:$0xff]
    %v3139 = vld [vmem:[#allocation10 + $0x370] sm:$0xff]
    %v3140 = vld [vmem:[#allocation10 + $0x378] sm:$0xff]
    %v3141 = vld [vmem:[#allocation10 + $0x380] sm:$0xff]
    %v3142 = vld [vmem:[#allocation10 + $0x388] sm:$0xff]
    %v3143 = vld [vmem:[#allocation10 + $0x390] sm:$0xff]
    %v3144 = vld [vmem:[#allocation10 + $0x398] sm:$0xff]
    %v3145 = vld [vmem:[#allocation10 + $0x3a0] sm:$0xff]
    %v3146 = vld [vmem:[#allocation10 + $0x3a8] sm:$0xff]
    %v3147 = vld [vmem:[#allocation10 + $0x3b0] sm:$0xff]
    %v3148 = vld [vmem:[#allocation10 + $0x3b8] sm:$0xff]
    %v3149 = vld [vmem:[#allocation10 + $0x3c0] sm:$0xff]
    %v3150 = vld [vmem:[#allocation10 + $0x3c8] sm:$0xff]
    %v3151 = vld [vmem:[#allocation10 + $0x3d0] sm:$0xff]
    %v3152 = vld [vmem:[#allocation10 + $0x3d8] sm:$0xff]
    %v3153 = vld [vmem:[#allocation10 + $0x3e0] sm:$0xff]
    %v3154 = vld [vmem:[#allocation10 + $0x3e8] sm:$0xff]
    %v3155 = vld [vmem:[#allocation10 + $0x3f0] sm:$0xff]
    %v3156 = vld [vmem:[#allocation10 + $0x3f8] sm:$0xff]
    %v3157 = vld [vmem:[#allocation10 + $0x400] sm:$0xff]
    %v3158 = vld [vmem:[#allocation10 + $0x408] sm:$0xff]
    %v3159 = vld [vmem:[#allocation10 + $0x410] sm:$0xff]
    %v3160 = vld [vmem:[#allocation10 + $0x418] sm:$0xff]
    %v3161 = vld [vmem:[#allocation10 + $0x420] sm:$0xff]
    %v3162 = vld [vmem:[#allocation10 + $0x428] sm:$0xff]
    %v3163 = vld [vmem:[#allocation10 + $0x430] sm:$0xff]
    %v3164 = vld [vmem:[#allocation10 + $0x438] sm:$0xff]
    %v3165 = vld [vmem:[#allocation10 + $0x440] sm:$0xff]
    %v3166 = vld [vmem:[#allocation10 + $0x448] sm:$0xff]
    %v3167 = vld [vmem:[#allocation10 + $0x450] sm:$0xff]
    %v3168 = vld [vmem:[#allocation10 + $0x458] sm:$0xff]
    %v3169 = vld [vmem:[#allocation10 + $0x460] sm:$0xff]
    %v3170 = vld [vmem:[#allocation10 + $0x468] sm:$0xff]
    %v3171 = vld [vmem:[#allocation10 + $0x470] sm:$0xff]
    %v3172 = vld [vmem:[#allocation10 + $0x478] sm:$0xff]
    %v3173 = vld [vmem:[#allocation10 + $0x480] sm:$0xff]
    %v3174 = vld [vmem:[#allocation10 + $0x488] sm:$0xff]
    %v3175 = vld [vmem:[#allocation10 + $0x490] sm:$0xff]
    %v3176 = vld [vmem:[#allocation10 + $0x498] sm:$0xff]
    %v3177 = vld [vmem:[#allocation10 + $0x4a0] sm:$0xff]
    %v3178 = vld [vmem:[#allocation10 + $0x4a8] sm:$0xff]
    %v3179 = vld [vmem:[#allocation10 + $0x4b0] sm:$0xff]
    %v3180 = vld [vmem:[#allocation10 + $0x4b8] sm:$0xff]
    %v3181 = vld [vmem:[#allocation10 + $0x4c0] sm:$0xff]
    %v3182 = vld [vmem:[#allocation10 + $0x4c8] sm:$0xff]
    %v3183 = vld [vmem:[#allocation10 + $0x4d0] sm:$0xff]
    %v3184 = vld [vmem:[#allocation10 + $0x4d8] sm:$0xff]
    %v3185 = vld [vmem:[#allocation10 + $0x4e0] sm:$0xff]
    %v3186 = vld [vmem:[#allocation10 + $0x4e8] sm:$0xff]
    %v3187 = vld [vmem:[#allocation10 + $0x4f0] sm:$0xff]
    %v3188 = vld [vmem:[#allocation10 + $0x4f8] sm:$0xff]
    %v3189 = vld [vmem:[#allocation10 + $0x500] sm:$0xff]
    %v3190 = vld [vmem:[#allocation10 + $0x508] sm:$0xff]
    %v3191 = vld [vmem:[#allocation10 + $0x510] sm:$0xff]
    %v3192 = vld [vmem:[#allocation10 + $0x518] sm:$0xff]
    %v3193 = vld [vmem:[#allocation10 + $0x520] sm:$0xff]
    %v3194 = vld [vmem:[#allocation10 + $0x528] sm:$0xff]
    %v3195 = vld [vmem:[#allocation10 + $0x530] sm:$0xff]
    %v3196 = vld [vmem:[#allocation10 + $0x538] sm:$0xff]
    %v3197 = vld [vmem:[#allocation10 + $0x540] sm:$0xff]
    %v3198 = vld [vmem:[#allocation10 + $0x548] sm:$0xff]
    %v3199 = vld [vmem:[#allocation10 + $0x550] sm:$0xff]
    %v3200 = vld [vmem:[#allocation10 + $0x558] sm:$0xff]
    %v3201 = vld [vmem:[#allocation10 + $0x560] sm:$0xff]
    %v3202 = vld [vmem:[#allocation10 + $0x568] sm:$0xff]
    %v3203 = vld [vmem:[#allocation10 + $0x570] sm:$0xff]
    %v3204 = vld [vmem:[#allocation10 + $0x578] sm:$0xff]
    %v3205 = vld [vmem:[#allocation10 + $0x580] sm:$0xff]
    %v3206 = vld [vmem:[#allocation10 + $0x588] sm:$0xff]
    %v3207 = vld [vmem:[#allocation10 + $0x590] sm:$0xff]
    %v3208 = vld [vmem:[#allocation10 + $0x598] sm:$0xff]
    %v3209 = vld [vmem:[#allocation10 + $0x5a0] sm:$0xff]
    %v3210 = vld [vmem:[#allocation10 + $0x5a8] sm:$0xff]
    %v3211 = vld [vmem:[#allocation10 + $0x5b0] sm:$0xff]
    %v3212 = vld [vmem:[#allocation10 + $0x5b8] sm:$0xff]
    %v3213 = vld [vmem:[#allocation10 + $0x5c0] sm:$0xff]
    %v3214 = vld [vmem:[#allocation10 + $0x5c8] sm:$0xff]
    %v3215 = vld [vmem:[#allocation10 + $0x5d0] sm:$0xff]
    %v3216 = vld [vmem:[#allocation10 + $0x5d8] sm:$0xff]
    %v3217 = vld [vmem:[#allocation10 + $0x5e0] sm:$0xff]
    %v3218 = vld [vmem:[#allocation10 + $0x5e8] sm:$0xff]
    %v3219 = vld [vmem:[#allocation10 + $0x5f0] sm:$0xff]
    %v3220 = vld [vmem:[#allocation10 + $0x5f8] sm:$0xff]
    %v3221 = vld [vmem:[#allocation10 + $0x600] sm:$0xff]
    %v3222 = vld [vmem:[#allocation10 + $0x608] sm:$0xff]
    %v3223 = vld [vmem:[#allocation10 + $0x610] sm:$0xff]
    %v3224 = vld [vmem:[#allocation10 + $0x618] sm:$0xff]
    %v3225 = vld [vmem:[#allocation10 + $0x620] sm:$0xff]
    %v3226 = vld [vmem:[#allocation10 + $0x628] sm:$0xff]
    %v3227 = vld [vmem:[#allocation10 + $0x630] sm:$0xff]
    %v3228 = vld [vmem:[#allocation10 + $0x638] sm:$0xff]
    %v3229 = vld [vmem:[#allocation10 + $0x640] sm:$0xff]
    %v3230 = vld [vmem:[#allocation10 + $0x648] sm:$0xff]
    %v3231 = vld [vmem:[#allocation10 + $0x650] sm:$0xff]
    %v3232 = vld [vmem:[#allocation10 + $0x658] sm:$0xff]
    %v3233 = vld [vmem:[#allocation10 + $0x660] sm:$0xff]
    %v3234 = vld [vmem:[#allocation10 + $0x668] sm:$0xff]
    %v3235 = vld [vmem:[#allocation10 + $0x670] sm:$0xff]
    %v3236 = vld [vmem:[#allocation10 + $0x678] sm:$0xff]
    %v3237 = vld [vmem:[#allocation10 + $0x680] sm:$0xff]
    %v3238 = vld [vmem:[#allocation10 + $0x688] sm:$0xff]
    %v3239 = vld [vmem:[#allocation10 + $0x690] sm:$0xff]
    %v3240 = vld [vmem:[#allocation10 + $0x698] sm:$0xff]
    %v3241 = vld [vmem:[#allocation10 + $0x6a0] sm:$0xff]
    %v3242 = vld [vmem:[#allocation10 + $0x6a8] sm:$0xff]
    %v3243 = vld [vmem:[#allocation10 + $0x6b0] sm:$0xff]
    %v3244 = vld [vmem:[#allocation10 + $0x6b8] sm:$0xff]
    %v3245 = vld [vmem:[#allocation10 + $0x6c0] sm:$0xff]
    %v3246 = vld [vmem:[#allocation10 + $0x6c8] sm:$0xff]
    %v3247 = vld [vmem:[#allocation10 + $0x6d0] sm:$0xff]
    %v3248 = vld [vmem:[#allocation10 + $0x6d8] sm:$0xff]
    %v3249 = vld [vmem:[#allocation10 + $0x6e0] sm:$0xff]
    %v3250 = vld [vmem:[#allocation10 + $0x6e8] sm:$0xff]
    %v3251 = vld [vmem:[#allocation10 + $0x6f0] sm:$0xff]
    %v3252 = vld [vmem:[#allocation10 + $0x6f8] sm:$0xff]
    %v3253 = vld [vmem:[#allocation10 + $0x700] sm:$0xff]
    %v3254 = vld [vmem:[#allocation10 + $0x708] sm:$0xff]
    %v3255 = vld [vmem:[#allocation10 + $0x710] sm:$0xff]
    %v3256 = vld [vmem:[#allocation10 + $0x718] sm:$0xff]
    %v3257 = vld [vmem:[#allocation10 + $0x720] sm:$0xff]
    %v3258 = vld [vmem:[#allocation10 + $0x728] sm:$0xff]
    %v3259 = vld [vmem:[#allocation10 + $0x730] sm:$0xff]
    %v3260 = vld [vmem:[#allocation10 + $0x738] sm:$0xff]
    %v3261 = vld [vmem:[#allocation10 + $0x740] sm:$0xff]
    %v3262 = vld [vmem:[#allocation10 + $0x748] sm:$0xff]
    %v3263 = vld [vmem:[#allocation10 + $0x750] sm:$0xff]
    %v3264 = vld [vmem:[#allocation10 + $0x758] sm:$0xff]
    %v3265 = vld [vmem:[#allocation10 + $0x760] sm:$0xff]
    %v3266 = vld [vmem:[#allocation10 + $0x768] sm:$0xff]
    %v3267 = vld [vmem:[#allocation10 + $0x770] sm:$0xff]
    %v3268 = vld [vmem:[#allocation10 + $0x778] sm:$0xff]
    %v3269 = vld [vmem:[#allocation10 + $0x780] sm:$0xff]
    %v3270 = vld [vmem:[#allocation10 + $0x788] sm:$0xff]
    %v3271 = vld [vmem:[#allocation10 + $0x790] sm:$0xff]
    %v3272 = vld [vmem:[#allocation10 + $0x798] sm:$0xff]
    %v3273 = vld [vmem:[#allocation10 + $0x7a0] sm:$0xff]
    %v3274 = vld [vmem:[#allocation10 + $0x7a8] sm:$0xff]
    %v3275 = vld [vmem:[#allocation10 + $0x7b0] sm:$0xff]
    %v3276 = vld [vmem:[#allocation10 + $0x7b8] sm:$0xff]
    %v3277 = vld [vmem:[#allocation10 + $0x7c0] sm:$0xff]
    %v3278 = vld [vmem:[#allocation10 + $0x7c8] sm:$0xff]
    %v3279 = vld [vmem:[#allocation10 + $0x7d0] sm:$0xff]
    %v3280 = vld [vmem:[#allocation10 + $0x7d8] sm:$0xff]
    %v3281 = vld [vmem:[#allocation10 + $0x7e0] sm:$0xff]
    %v3282 = vld [vmem:[#allocation10 + $0x7e8] sm:$0xff]
    %v3283 = vld [vmem:[#allocation10 + $0x7f0] sm:$0xff]
    %v3284 = vld [vmem:[#allocation10 + $0x7f8] sm:$0xff]
    %v3285 = vld [vmem:[%s6] sm:$0xf]
    %v3287 = vlaneseq
    %v3288 = vshrl.u32 %v3287, 7
    %v3289 = vsub.s32 0, %v3288
    %v3290 = vrot.slane %v3285, %v3289
    %v3291 = vlaneseq
    %v3292 = vshrl.u32 %v3291, 7
    %v3293 = vsub.s32 1, %v3292
    %v3294 = vrot.slane %v3285, %v3293
    %v3295 = vlaneseq
    %v3296 = vshrl.u32 %v3295, 7
    %v3297 = vsub.s32 2, %v3296
    %v3298 = vrot.slane %v3285, %v3297
    %v3299 = vlaneseq
    %v3300 = vshrl.u32 %v3299, 7
    %v3301 = vsub.s32 3, %v3300
    %v3302 = vrot.slane %v3285, %v3301
    %v3371 = vunpack.c.l.b16 %v2965
    %v3372 = vunpack.c.h.b16 %v2965
    %v3373 = vunpack.c.l.b16 %v2966
    %v3374 = vunpack.c.h.b16 %v2966
    %v3375 = vunpack.c.l.b16 %v2967
    %v3376 = vunpack.c.h.b16 %v2967
    %v3377 = vunpack.c.l.b16 %v2968
    %v3378 = vunpack.c.h.b16 %v2968
    %v3379 = vunpack.c.l.b16 %v2969
    %v3380 = vunpack.c.h.b16 %v2969
    %v3381 = vunpack.c.l.b16 %v2970
    %v3382 = vunpack.c.h.b16 %v2970
    %v3383 = vunpack.c.l.b16 %v2971
    %v3384 = vunpack.c.h.b16 %v2971
    %v3385 = vunpack.c.l.b16 %v2972
    %v3386 = vunpack.c.h.b16 %v2972
    %v3387 = vunpack.c.l.b16 %v2973
    %v3388 = vunpack.c.h.b16 %v2973
    %v3389 = vunpack.c.l.b16 %v2974
    %v3390 = vunpack.c.h.b16 %v2974
    %v3391 = vunpack.c.l.b16 %v2975
    %v3392 = vunpack.c.h.b16 %v2975
    %v3393 = vunpack.c.l.b16 %v2976
    %v3394 = vunpack.c.h.b16 %v2976
    %v3395 = vunpack.c.l.b16 %v2977
    %v3396 = vunpack.c.h.b16 %v2977
    %v3397 = vunpack.c.l.b16 %v2978
    %v3398 = vunpack.c.h.b16 %v2978
    %v3399 = vunpack.c.l.b16 %v2979
    %v3400 = vunpack.c.h.b16 %v2979
    %v3401 = vunpack.c.l.b16 %v2980
    %v3402 = vunpack.c.h.b16 %v2980
    %v3403 = vunpack.c.l.b16 %v2981
    %v3404 = vunpack.c.h.b16 %v2981
    %v3405 = vunpack.c.l.b16 %v2982
    %v3406 = vunpack.c.h.b16 %v2982
    %v3407 = vunpack.c.l.b16 %v2983
    %v3408 = vunpack.c.h.b16 %v2983
    %v3409 = vunpack.c.l.b16 %v2984
    %v3410 = vunpack.c.h.b16 %v2984
    %v3411 = vunpack.c.l.b16 %v2985
    %v3412 = vunpack.c.h.b16 %v2985
    %v3413 = vunpack.c.l.b16 %v2986
    %v3414 = vunpack.c.h.b16 %v2986
    %v3415 = vunpack.c.l.b16 %v2987
    %v3416 = vunpack.c.h.b16 %v2987
    %v3417 = vunpack.c.l.b16 %v2988
    %v3418 = vunpack.c.h.b16 %v2988
    %v3419 = vunpack.c.l.b16 %v2989
    %v3420 = vunpack.c.h.b16 %v2989
    %v3421 = vunpack.c.l.b16 %v2990
    %v3422 = vunpack.c.h.b16 %v2990
    %v3423 = vunpack.c.l.b16 %v2991
    %v3424 = vunpack.c.h.b16 %v2991
    %v3425 = vunpack.c.l.b16 %v2992
    %v3426 = vunpack.c.h.b16 %v2992
    %v3427 = vunpack.c.l.b16 %v2993
    %v3428 = vunpack.c.h.b16 %v2993
    %v3429 = vunpack.c.l.b16 %v2994
    %v3430 = vunpack.c.h.b16 %v2994
    %v3431 = vunpack.c.l.b16 %v2995
    %v3432 = vunpack.c.h.b16 %v2995
    %v3433 = vunpack.c.l.b16 %v2996
    %v3434 = vunpack.c.h.b16 %v2996
    %v3435 = vunpack.c.l.b16 %v2997
    %v3436 = vunpack.c.h.b16 %v2997
    %v3437 = vunpack.c.l.b16 %v2998
    %v3438 = vunpack.c.h.b16 %v2998
    %v3439 = vunpack.c.l.b16 %v2999
    %v3440 = vunpack.c.h.b16 %v2999
    %v3441 = vunpack.c.l.b16 %v3000
    %v3442 = vunpack.c.h.b16 %v3000
    %v3443 = vunpack.c.l.b16 %v3001
    %v3444 = vunpack.c.h.b16 %v3001
    %v3445 = vunpack.c.l.b16 %v3002
    %v3446 = vunpack.c.h.b16 %v3002
    %v3447 = vunpack.c.l.b16 %v3003
    %v3448 = vunpack.c.h.b16 %v3003
    %v3449 = vunpack.c.l.b16 %v3004
    %v3450 = vunpack.c.h.b16 %v3004
    %v3451 = vunpack.c.l.b16 %v3005
    %v3452 = vunpack.c.h.b16 %v3005
    %v3453 = vunpack.c.l.b16 %v3006
    %v3454 = vunpack.c.h.b16 %v3006
    %v3455 = vunpack.c.l.b16 %v3007
    %v3456 = vunpack.c.h.b16 %v3007
    %v3457 = vunpack.c.l.b16 %v3008
    %v3458 = vunpack.c.h.b16 %v3008
    %v3459 = vunpack.c.l.b16 %v3009
    %v3460 = vunpack.c.h.b16 %v3009
    %v3461 = vunpack.c.l.b16 %v3010
    %v3462 = vunpack.c.h.b16 %v3010
    %v3463 = vunpack.c.l.b16 %v3011
    %v3464 = vunpack.c.h.b16 %v3011
    %v3465 = vunpack.c.l.b16 %v3012
    %v3466 = vunpack.c.h.b16 %v3012
    %v3467 = vunpack.c.l.b16 %v3013
    %v3468 = vunpack.c.h.b16 %v3013
    %v3469 = vunpack.c.l.b16 %v3014
    %v3470 = vunpack.c.h.b16 %v3014
    %v3471 = vunpack.c.l.b16 %v3015
    %v3472 = vunpack.c.h.b16 %v3015
    %v3473 = vunpack.c.l.b16 %v3016
    %v3474 = vunpack.c.h.b16 %v3016
    %v3475 = vunpack.c.l.b16 %v3017
    %v3476 = vunpack.c.h.b16 %v3017
    %v3477 = vunpack.c.l.b16 %v3018
    %v3478 = vunpack.c.h.b16 %v3018
    %v3479 = vunpack.c.l.b16 %v3019
    %v3480 = vunpack.c.h.b16 %v3019
    %v3481 = vunpack.c.l.b16 %v3020
    %v3482 = vunpack.c.h.b16 %v3020
    %v3483 = vunpack.c.l.b16 %v3021
    %v3484 = vunpack.c.h.b16 %v3021
    %v3485 = vunpack.c.l.b16 %v3022
    %v3486 = vunpack.c.h.b16 %v3022
    %v3487 = vunpack.c.l.b16 %v3023
    %v3488 = vunpack.c.h.b16 %v3023
    %v3489 = vunpack.c.l.b16 %v3024
    %v3490 = vunpack.c.h.b16 %v3024
    %v3491 = vunpack.c.l.b16 %v3025
    %v3492 = vunpack.c.h.b16 %v3025
    %v3493 = vunpack.c.l.b16 %v3026
    %v3494 = vunpack.c.h.b16 %v3026
    %v3495 = vunpack.c.l.b16 %v3027
    %v3496 = vunpack.c.h.b16 %v3027
    %v3497 = vunpack.c.l.b16 %v3028
    %v3498 = vunpack.c.h.b16 %v3028
    %v3499 = vpack.c.b16 %v3379, %v3371
    %v3500 = vpack.c.b16 %v3380, %v3372
    %v3501 = vpack.c.b16 %v3381, %v3373
    %v3502 = vpack.c.b16 %v3382, %v3374
    %v3503 = vpack.c.b16 %v3383, %v3375
    %v3504 = vpack.c.b16 %v3384, %v3376
    %v3505 = vpack.c.b16 %v3385, %v3377
    %v3506 = vpack.c.b16 %v3386, %v3378
    %v3507 = vpack.c.b16 %v3395, %v3387
    %v3508 = vpack.c.b16 %v3396, %v3388
    %v3509 = vpack.c.b16 %v3397, %v3389
    %v3510 = vpack.c.b16 %v3398, %v3390
    %v3511 = vpack.c.b16 %v3399, %v3391
    %v3512 = vpack.c.b16 %v3400, %v3392
    %v3513 = vpack.c.b16 %v3401, %v3393
    %v3514 = vpack.c.b16 %v3402, %v3394
    %v3515 = vpack.c.b16 %v3411, %v3403
    %v3516 = vpack.c.b16 %v3412, %v3404
    %v3517 = vpack.c.b16 %v3413, %v3405
    %v3518 = vpack.c.b16 %v3414, %v3406
    %v3519 = vpack.c.b16 %v3415, %v3407
    %v3520 = vpack.c.b16 %v3416, %v3408
    %v3521 = vpack.c.b16 %v3417, %v3409
    %v3522 = vpack.c.b16 %v3418, %v3410
    %v3523 = vpack.c.b16 %v3427, %v3419
    %v3524 = vpack.c.b16 %v3428, %v3420
    %v3525 = vpack.c.b16 %v3429, %v3421
    %v3526 = vpack.c.b16 %v3430, %v3422
    %v3527 = vpack.c.b16 %v3431, %v3423
    %v3528 = vpack.c.b16 %v3432, %v3424
    %v3529 = vpack.c.b16 %v3433, %v3425
    %v3530 = vpack.c.b16 %v3434, %v3426
    %v3531 = vpack.c.b16 %v3443, %v3435
    %v3532 = vpack.c.b16 %v3444, %v3436
    %v3533 = vpack.c.b16 %v3445, %v3437
    %v3534 = vpack.c.b16 %v3446, %v3438
    %v3535 = vpack.c.b16 %v3447, %v3439
    %v3536 = vpack.c.b16 %v3448, %v3440
    %v3537 = vpack.c.b16 %v3449, %v3441
    %v3538 = vpack.c.b16 %v3450, %v3442
    %v3539 = vpack.c.b16 %v3459, %v3451
    %v3540 = vpack.c.b16 %v3460, %v3452
    %v3541 = vpack.c.b16 %v3461, %v3453
    %v3542 = vpack.c.b16 %v3462, %v3454
    %v3543 = vpack.c.b16 %v3463, %v3455
    %v3544 = vpack.c.b16 %v3464, %v3456
    %v3545 = vpack.c.b16 %v3465, %v3457
    %v3546 = vpack.c.b16 %v3466, %v3458
    %v3547 = vpack.c.b16 %v3475, %v3467
    %v3548 = vpack.c.b16 %v3476, %v3468
    %v3549 = vpack.c.b16 %v3477, %v3469
    %v3550 = vpack.c.b16 %v3478, %v3470
    %v3551 = vpack.c.b16 %v3479, %v3471
    %v3552 = vpack.c.b16 %v3480, %v3472
    %v3553 = vpack.c.b16 %v3481, %v3473
    %v3554 = vpack.c.b16 %v3482, %v3474
    %v3555 = vpack.c.b16 %v3491, %v3483
    %v3556 = vpack.c.b16 %v3492, %v3484
    %v3557 = vpack.c.b16 %v3493, %v3485
    %v3558 = vpack.c.b16 %v3494, %v3486
    %v3559 = vpack.c.b16 %v3495, %v3487
    %v3560 = vpack.c.b16 %v3496, %v3488
    %v3561 = vpack.c.b16 %v3497, %v3489
    %v3562 = vpack.c.b16 %v3498, %v3490
    %v3883 = vunpack.c.l.b16 %v3029
    %v3884 = vunpack.c.h.b16 %v3029
    %v3885 = vunpack.c.l.b16 %v3030
    %v3886 = vunpack.c.h.b16 %v3030
    %v3887 = vunpack.c.l.b16 %v3031
    %v3888 = vunpack.c.h.b16 %v3031
    %v3889 = vunpack.c.l.b16 %v3032
    %v3890 = vunpack.c.h.b16 %v3032
    %v3891 = vunpack.c.l.b16 %v3033
    %v3892 = vunpack.c.h.b16 %v3033
    %v3893 = vunpack.c.l.b16 %v3034
    %v3894 = vunpack.c.h.b16 %v3034
    %v3895 = vunpack.c.l.b16 %v3035
    %v3896 = vunpack.c.h.b16 %v3035
    %v3897 = vunpack.c.l.b16 %v3036
    %v3898 = vunpack.c.h.b16 %v3036
    %v3899 = vunpack.c.l.b16 %v3037
    %v3900 = vunpack.c.h.b16 %v3037
    %v3901 = vunpack.c.l.b16 %v3038
    %v3902 = vunpack.c.h.b16 %v3038
    %v3903 = vunpack.c.l.b16 %v3039
    %v3904 = vunpack.c.h.b16 %v3039
    %v3905 = vunpack.c.l.b16 %v3040
    %v3906 = vunpack.c.h.b16 %v3040
    %v3907 = vunpack.c.l.b16 %v3041
    %v3908 = vunpack.c.h.b16 %v3041
    %v3909 = vunpack.c.l.b16 %v3042
    %v3910 = vunpack.c.h.b16 %v3042
    %v3911 = vunpack.c.l.b16 %v3043
    %v3912 = vunpack.c.h.b16 %v3043
    %v3913 = vunpack.c.l.b16 %v3044
    %v3914 = vunpack.c.h.b16 %v3044
    %v3915 = vunpack.c.l.b16 %v3045
    %v3916 = vunpack.c.h.b16 %v3045
    %v3917 = vunpack.c.l.b16 %v3046
    %v3918 = vunpack.c.h.b16 %v3046
    %v3919 = vunpack.c.l.b16 %v3047
    %v3920 = vunpack.c.h.b16 %v3047
    %v3921 = vunpack.c.l.b16 %v3048
    %v3922 = vunpack.c.h.b16 %v3048
    %v3923 = vunpack.c.l.b16 %v3049
    %v3924 = vunpack.c.h.b16 %v3049
    %v3925 = vunpack.c.l.b16 %v3050
    %v3926 = vunpack.c.h.b16 %v3050
    %v3927 = vunpack.c.l.b16 %v3051
    %v3928 = vunpack.c.h.b16 %v3051
    %v3929 = vunpack.c.l.b16 %v3052
    %v3930 = vunpack.c.h.b16 %v3052
    %v3931 = vunpack.c.l.b16 %v3053
    %v3932 = vunpack.c.h.b16 %v3053
    %v3933 = vunpack.c.l.b16 %v3054
    %v3934 = vunpack.c.h.b16 %v3054
    %v3935 = vunpack.c.l.b16 %v3055
    %v3936 = vunpack.c.h.b16 %v3055
    %v3937 = vunpack.c.l.b16 %v3056
    %v3938 = vunpack.c.h.b16 %v3056
    %v3939 = vunpack.c.l.b16 %v3057
    %v3940 = vunpack.c.h.b16 %v3057
    %v3941 = vunpack.c.l.b16 %v3058
    %v3942 = vunpack.c.h.b16 %v3058
    %v3943 = vunpack.c.l.b16 %v3059
    %v3944 = vunpack.c.h.b16 %v3059
    %v3945 = vunpack.c.l.b16 %v3060
    %v3946 = vunpack.c.h.b16 %v3060
    %v3947 = vunpack.c.l.b16 %v3061
    %v3948 = vunpack.c.h.b16 %v3061
    %v3949 = vunpack.c.l.b16 %v3062
    %v3950 = vunpack.c.h.b16 %v3062
    %v3951 = vunpack.c.l.b16 %v3063
    %v3952 = vunpack.c.h.b16 %v3063
    %v3953 = vunpack.c.l.b16 %v3064
    %v3954 = vunpack.c.h.b16 %v3064
    %v3955 = vunpack.c.l.b16 %v3065
    %v3956 = vunpack.c.h.b16 %v3065
    %v3957 = vunpack.c.l.b16 %v3066
    %v3958 = vunpack.c.h.b16 %v3066
    %v3959 = vunpack.c.l.b16 %v3067
    %v3960 = vunpack.c.h.b16 %v3067
    %v3961 = vunpack.c.l.b16 %v3068
    %v3962 = vunpack.c.h.b16 %v3068
    %v3963 = vunpack.c.l.b16 %v3069
    %v3964 = vunpack.c.h.b16 %v3069
    %v3965 = vunpack.c.l.b16 %v3070
    %v3966 = vunpack.c.h.b16 %v3070
    %v3967 = vunpack.c.l.b16 %v3071
    %v3968 = vunpack.c.h.b16 %v3071
    %v3969 = vunpack.c.l.b16 %v3072
    %v3970 = vunpack.c.h.b16 %v3072
    %v3971 = vunpack.c.l.b16 %v3073
    %v3972 = vunpack.c.h.b16 %v3073
    %v3973 = vunpack.c.l.b16 %v3074
    %v3974 = vunpack.c.h.b16 %v3074
    %v3975 = vunpack.c.l.b16 %v3075
    %v3976 = vunpack.c.h.b16 %v3075
    %v3977 = vunpack.c.l.b16 %v3076
    %v3978 = vunpack.c.h.b16 %v3076
    %v3979 = vunpack.c.l.b16 %v3077
    %v3980 = vunpack.c.h.b16 %v3077
    %v3981 = vunpack.c.l.b16 %v3078
    %v3982 = vunpack.c.h.b16 %v3078
    %v3983 = vunpack.c.l.b16 %v3079
    %v3984 = vunpack.c.h.b16 %v3079
    %v3985 = vunpack.c.l.b16 %v3080
    %v3986 = vunpack.c.h.b16 %v3080
    %v3987 = vunpack.c.l.b16 %v3081
    %v3988 = vunpack.c.h.b16 %v3081
    %v3989 = vunpack.c.l.b16 %v3082
    %v3990 = vunpack.c.h.b16 %v3082
    %v3991 = vunpack.c.l.b16 %v3083
    %v3992 = vunpack.c.h.b16 %v3083
    %v3993 = vunpack.c.l.b16 %v3084
    %v3994 = vunpack.c.h.b16 %v3084
    %v3995 = vunpack.c.l.b16 %v3085
    %v3996 = vunpack.c.h.b16 %v3085
    %v3997 = vunpack.c.l.b16 %v3086
    %v3998 = vunpack.c.h.b16 %v3086
    %v3999 = vunpack.c.l.b16 %v3087
    %v4000 = vunpack.c.h.b16 %v3087
    %v4001 = vunpack.c.l.b16 %v3088
    %v4002 = vunpack.c.h.b16 %v3088
    %v4003 = vunpack.c.l.b16 %v3089
    %v4004 = vunpack.c.h.b16 %v3089
    %v4005 = vunpack.c.l.b16 %v3090
    %v4006 = vunpack.c.h.b16 %v3090
    %v4007 = vunpack.c.l.b16 %v3091
    %v4008 = vunpack.c.h.b16 %v3091
    %v4009 = vunpack.c.l.b16 %v3092
    %v4010 = vunpack.c.h.b16 %v3092
    %v4011 = vunpack.c.l.b16 %v3093
    %v4012 = vunpack.c.h.b16 %v3093
    %v4013 = vunpack.c.l.b16 %v3094
    %v4014 = vunpack.c.h.b16 %v3094
    %v4015 = vunpack.c.l.b16 %v3095
    %v4016 = vunpack.c.h.b16 %v3095
    %v4017 = vunpack.c.l.b16 %v3096
    %v4018 = vunpack.c.h.b16 %v3096
    %v4019 = vunpack.c.l.b16 %v3097
    %v4020 = vunpack.c.h.b16 %v3097
    %v4021 = vunpack.c.l.b16 %v3098
    %v4022 = vunpack.c.h.b16 %v3098
    %v4023 = vunpack.c.l.b16 %v3099
    %v4024 = vunpack.c.h.b16 %v3099
    %v4025 = vunpack.c.l.b16 %v3100
    %v4026 = vunpack.c.h.b16 %v3100
    %v4027 = vunpack.c.l.b16 %v3101
    %v4028 = vunpack.c.h.b16 %v3101
    %v4029 = vunpack.c.l.b16 %v3102
    %v4030 = vunpack.c.h.b16 %v3102
    %v4031 = vunpack.c.l.b16 %v3103
    %v4032 = vunpack.c.h.b16 %v3103
    %v4033 = vunpack.c.l.b16 %v3104
    %v4034 = vunpack.c.h.b16 %v3104
    %v4035 = vunpack.c.l.b16 %v3105
    %v4036 = vunpack.c.h.b16 %v3105
    %v4037 = vunpack.c.l.b16 %v3106
    %v4038 = vunpack.c.h.b16 %v3106
    %v4039 = vunpack.c.l.b16 %v3107
    %v4040 = vunpack.c.h.b16 %v3107
    %v4041 = vunpack.c.l.b16 %v3108
    %v4042 = vunpack.c.h.b16 %v3108
    %v4043 = vunpack.c.l.b16 %v3109
    %v4044 = vunpack.c.h.b16 %v3109
    %v4045 = vunpack.c.l.b16 %v3110
    %v4046 = vunpack.c.h.b16 %v3110
    %v4047 = vunpack.c.l.b16 %v3111
    %v4048 = vunpack.c.h.b16 %v3111
    %v4049 = vunpack.c.l.b16 %v3112
    %v4050 = vunpack.c.h.b16 %v3112
    %v4051 = vunpack.c.l.b16 %v3113
    %v4052 = vunpack.c.h.b16 %v3113
    %v4053 = vunpack.c.l.b16 %v3114
    %v4054 = vunpack.c.h.b16 %v3114
    %v4055 = vunpack.c.l.b16 %v3115
    %v4056 = vunpack.c.h.b16 %v3115
    %v4057 = vunpack.c.l.b16 %v3116
    %v4058 = vunpack.c.h.b16 %v3116
    %v4059 = vunpack.c.l.b16 %v3117
    %v4060 = vunpack.c.h.b16 %v3117
    %v4061 = vunpack.c.l.b16 %v3118
    %v4062 = vunpack.c.h.b16 %v3118
    %v4063 = vunpack.c.l.b16 %v3119
    %v4064 = vunpack.c.h.b16 %v3119
    %v4065 = vunpack.c.l.b16 %v3120
    %v4066 = vunpack.c.h.b16 %v3120
    %v4067 = vunpack.c.l.b16 %v3121
    %v4068 = vunpack.c.h.b16 %v3121
    %v4069 = vunpack.c.l.b16 %v3122
    %v4070 = vunpack.c.h.b16 %v3122
    %v4071 = vunpack.c.l.b16 %v3123
    %v4072 = vunpack.c.h.b16 %v3123
    %v4073 = vunpack.c.l.b16 %v3124
    %v4074 = vunpack.c.h.b16 %v3124
    %v4075 = vunpack.c.l.b16 %v3125
    %v4076 = vunpack.c.h.b16 %v3125
    %v4077 = vunpack.c.l.b16 %v3126
    %v4078 = vunpack.c.h.b16 %v3126
    %v4079 = vunpack.c.l.b16 %v3127
    %v4080 = vunpack.c.h.b16 %v3127
    %v4081 = vunpack.c.l.b16 %v3128
    %v4082 = vunpack.c.h.b16 %v3128
    %v4083 = vunpack.c.l.b16 %v3129
    %v4084 = vunpack.c.h.b16 %v3129
    %v4085 = vunpack.c.l.b16 %v3130
    %v4086 = vunpack.c.h.b16 %v3130
    %v4087 = vunpack.c.l.b16 %v3131
    %v4088 = vunpack.c.h.b16 %v3131
    %v4089 = vunpack.c.l.b16 %v3132
    %v4090 = vunpack.c.h.b16 %v3132
    %v4091 = vunpack.c.l.b16 %v3133
    %v4092 = vunpack.c.h.b16 %v3133
    %v4093 = vunpack.c.l.b16 %v3134
    %v4094 = vunpack.c.h.b16 %v3134
    %v4095 = vunpack.c.l.b16 %v3135
    %v4096 = vunpack.c.h.b16 %v3135
    %v4097 = vunpack.c.l.b16 %v3136
    %v4098 = vunpack.c.h.b16 %v3136
    %v4099 = vunpack.c.l.b16 %v3137
    %v4100 = vunpack.c.h.b16 %v3137
    %v4101 = vunpack.c.l.b16 %v3138
    %v4102 = vunpack.c.h.b16 %v3138
    %v4103 = vunpack.c.l.b16 %v3139
    %v4104 = vunpack.c.h.b16 %v3139
    %v4105 = vunpack.c.l.b16 %v3140
    %v4106 = vunpack.c.h.b16 %v3140
    %v4107 = vunpack.c.l.b16 %v3141
    %v4108 = vunpack.c.h.b16 %v3141
    %v4109 = vunpack.c.l.b16 %v3142
    %v4110 = vunpack.c.h.b16 %v3142
    %v4111 = vunpack.c.l.b16 %v3143
    %v4112 = vunpack.c.h.b16 %v3143
    %v4113 = vunpack.c.l.b16 %v3144
    %v4114 = vunpack.c.h.b16 %v3144
    %v4115 = vunpack.c.l.b16 %v3145
    %v4116 = vunpack.c.h.b16 %v3145
    %v4117 = vunpack.c.l.b16 %v3146
    %v4118 = vunpack.c.h.b16 %v3146
    %v4119 = vunpack.c.l.b16 %v3147
    %v4120 = vunpack.c.h.b16 %v3147
    %v4121 = vunpack.c.l.b16 %v3148
    %v4122 = vunpack.c.h.b16 %v3148
    %v4123 = vunpack.c.l.b16 %v3149
    %v4124 = vunpack.c.h.b16 %v3149
    %v4125 = vunpack.c.l.b16 %v3150
    %v4126 = vunpack.c.h.b16 %v3150
    %v4127 = vunpack.c.l.b16 %v3151
    %v4128 = vunpack.c.h.b16 %v3151
    %v4129 = vunpack.c.l.b16 %v3152
    %v4130 = vunpack.c.h.b16 %v3152
    %v4131 = vunpack.c.l.b16 %v3153
    %v4132 = vunpack.c.h.b16 %v3153
    %v4133 = vunpack.c.l.b16 %v3154
    %v4134 = vunpack.c.h.b16 %v3154
    %v4135 = vunpack.c.l.b16 %v3155
    %v4136 = vunpack.c.h.b16 %v3155
    %v4137 = vunpack.c.l.b16 %v3156
    %v4138 = vunpack.c.h.b16 %v3156
    %v4139 = vunpack.c.l.b16 %v3157
    %v4140 = vunpack.c.h.b16 %v3157
    %v4141 = vunpack.c.l.b16 %v3158
    %v4142 = vunpack.c.h.b16 %v3158
    %v4143 = vunpack.c.l.b16 %v3159
    %v4144 = vunpack.c.h.b16 %v3159
    %v4145 = vunpack.c.l.b16 %v3160
    %v4146 = vunpack.c.h.b16 %v3160
    %v4147 = vunpack.c.l.b16 %v3161
    %v4148 = vunpack.c.h.b16 %v3161
    %v4149 = vunpack.c.l.b16 %v3162
    %v4150 = vunpack.c.h.b16 %v3162
    %v4151 = vunpack.c.l.b16 %v3163
    %v4152 = vunpack.c.h.b16 %v3163
    %v4153 = vunpack.c.l.b16 %v3164
    %v4154 = vunpack.c.h.b16 %v3164
    %v4155 = vunpack.c.l.b16 %v3165
    %v4156 = vunpack.c.h.b16 %v3165
    %v4157 = vunpack.c.l.b16 %v3166
    %v4158 = vunpack.c.h.b16 %v3166
    %v4159 = vunpack.c.l.b16 %v3167
    %v4160 = vunpack.c.h.b16 %v3167
    %v4161 = vunpack.c.l.b16 %v3168
    %v4162 = vunpack.c.h.b16 %v3168
    %v4163 = vunpack.c.l.b16 %v3169
    %v4164 = vunpack.c.h.b16 %v3169
    %v4165 = vunpack.c.l.b16 %v3170
    %v4166 = vunpack.c.h.b16 %v3170
    %v4167 = vunpack.c.l.b16 %v3171
    %v4168 = vunpack.c.h.b16 %v3171
    %v4169 = vunpack.c.l.b16 %v3172
    %v4170 = vunpack.c.h.b16 %v3172
    %v4171 = vunpack.c.l.b16 %v3173
    %v4172 = vunpack.c.h.b16 %v3173
    %v4173 = vunpack.c.l.b16 %v3174
    %v4174 = vunpack.c.h.b16 %v3174
    %v4175 = vunpack.c.l.b16 %v3175
    %v4176 = vunpack.c.h.b16 %v3175
    %v4177 = vunpack.c.l.b16 %v3176
    %v4178 = vunpack.c.h.b16 %v3176
    %v4179 = vunpack.c.l.b16 %v3177
    %v4180 = vunpack.c.h.b16 %v3177
    %v4181 = vunpack.c.l.b16 %v3178
    %v4182 = vunpack.c.h.b16 %v3178
    %v4183 = vunpack.c.l.b16 %v3179
    %v4184 = vunpack.c.h.b16 %v3179
    %v4185 = vunpack.c.l.b16 %v3180
    %v4186 = vunpack.c.h.b16 %v3180
    %v4187 = vunpack.c.l.b16 %v3181
    %v4188 = vunpack.c.h.b16 %v3181
    %v4189 = vunpack.c.l.b16 %v3182
    %v4190 = vunpack.c.h.b16 %v3182
    %v4191 = vunpack.c.l.b16 %v3183
    %v4192 = vunpack.c.h.b16 %v3183
    %v4193 = vunpack.c.l.b16 %v3184
    %v4194 = vunpack.c.h.b16 %v3184
    %v4195 = vunpack.c.l.b16 %v3185
    %v4196 = vunpack.c.h.b16 %v3185
    %v4197 = vunpack.c.l.b16 %v3186
    %v4198 = vunpack.c.h.b16 %v3186
    %v4199 = vunpack.c.l.b16 %v3187
    %v4200 = vunpack.c.h.b16 %v3187
    %v4201 = vunpack.c.l.b16 %v3188
    %v4202 = vunpack.c.h.b16 %v3188
    %v4203 = vunpack.c.l.b16 %v3189
    %v4204 = vunpack.c.h.b16 %v3189
    %v4205 = vunpack.c.l.b16 %v3190
    %v4206 = vunpack.c.h.b16 %v3190
    %v4207 = vunpack.c.l.b16 %v3191
    %v4208 = vunpack.c.h.b16 %v3191
    %v4209 = vunpack.c.l.b16 %v3192
    %v4210 = vunpack.c.h.b16 %v3192
    %v4211 = vunpack.c.l.b16 %v3193
    %v4212 = vunpack.c.h.b16 %v3193
    %v4213 = vunpack.c.l.b16 %v3194
    %v4214 = vunpack.c.h.b16 %v3194
    %v4215 = vunpack.c.l.b16 %v3195
    %v4216 = vunpack.c.h.b16 %v3195
    %v4217 = vunpack.c.l.b16 %v3196
    %v4218 = vunpack.c.h.b16 %v3196
    %v4219 = vunpack.c.l.b16 %v3197
    %v4220 = vunpack.c.h.b16 %v3197
    %v4221 = vunpack.c.l.b16 %v3198
    %v4222 = vunpack.c.h.b16 %v3198
    %v4223 = vunpack.c.l.b16 %v3199
    %v4224 = vunpack.c.h.b16 %v3199
    %v4225 = vunpack.c.l.b16 %v3200
    %v4226 = vunpack.c.h.b16 %v3200
    %v4227 = vunpack.c.l.b16 %v3201
    %v4228 = vunpack.c.h.b16 %v3201
    %v4229 = vunpack.c.l.b16 %v3202
    %v4230 = vunpack.c.h.b16 %v3202
    %v4231 = vunpack.c.l.b16 %v3203
    %v4232 = vunpack.c.h.b16 %v3203
    %v4233 = vunpack.c.l.b16 %v3204
    %v4234 = vunpack.c.h.b16 %v3204
    %v4235 = vunpack.c.l.b16 %v3205
    %v4236 = vunpack.c.h.b16 %v3205
    %v4237 = vunpack.c.l.b16 %v3206
    %v4238 = vunpack.c.h.b16 %v3206
    %v4239 = vunpack.c.l.b16 %v3207
    %v4240 = vunpack.c.h.b16 %v3207
    %v4241 = vunpack.c.l.b16 %v3208
    %v4242 = vunpack.c.h.b16 %v3208
    %v4243 = vunpack.c.l.b16 %v3209
    %v4244 = vunpack.c.h.b16 %v3209
    %v4245 = vunpack.c.l.b16 %v3210
    %v4246 = vunpack.c.h.b16 %v3210
    %v4247 = vunpack.c.l.b16 %v3211
    %v4248 = vunpack.c.h.b16 %v3211
    %v4249 = vunpack.c.l.b16 %v3212
    %v4250 = vunpack.c.h.b16 %v3212
    %v4251 = vunpack.c.l.b16 %v3213
    %v4252 = vunpack.c.h.b16 %v3213
    %v4253 = vunpack.c.l.b16 %v3214
    %v4254 = vunpack.c.h.b16 %v3214
    %v4255 = vunpack.c.l.b16 %v3215
    %v4256 = vunpack.c.h.b16 %v3215
    %v4257 = vunpack.c.l.b16 %v3216
    %v4258 = vunpack.c.h.b16 %v3216
    %v4259 = vunpack.c.l.b16 %v3217
    %v4260 = vunpack.c.h.b16 %v3217
    %v4261 = vunpack.c.l.b16 %v3218
    %v4262 = vunpack.c.h.b16 %v3218
    %v4263 = vunpack.c.l.b16 %v3219
    %v4264 = vunpack.c.h.b16 %v3219
    %v4265 = vunpack.c.l.b16 %v3220
    %v4266 = vunpack.c.h.b16 %v3220
    %v4267 = vunpack.c.l.b16 %v3221
    %v4268 = vunpack.c.h.b16 %v3221
    %v4269 = vunpack.c.l.b16 %v3222
    %v4270 = vunpack.c.h.b16 %v3222
    %v4271 = vunpack.c.l.b16 %v3223
    %v4272 = vunpack.c.h.b16 %v3223
    %v4273 = vunpack.c.l.b16 %v3224
    %v4274 = vunpack.c.h.b16 %v3224
    %v4275 = vunpack.c.l.b16 %v3225
    %v4276 = vunpack.c.h.b16 %v3225
    %v4277 = vunpack.c.l.b16 %v3226
    %v4278 = vunpack.c.h.b16 %v3226
    %v4279 = vunpack.c.l.b16 %v3227
    %v4280 = vunpack.c.h.b16 %v3227
    %v4281 = vunpack.c.l.b16 %v3228
    %v4282 = vunpack.c.h.b16 %v3228
    %v4283 = vunpack.c.l.b16 %v3229
    %v4284 = vunpack.c.h.b16 %v3229
    %v4285 = vunpack.c.l.b16 %v3230
    %v4286 = vunpack.c.h.b16 %v3230
    %v4287 = vunpack.c.l.b16 %v3231
    %v4288 = vunpack.c.h.b16 %v3231
    %v4289 = vunpack.c.l.b16 %v3232
    %v4290 = vunpack.c.h.b16 %v3232
    %v4291 = vunpack.c.l.b16 %v3233
    %v4292 = vunpack.c.h.b16 %v3233
    %v4293 = vunpack.c.l.b16 %v3234
    %v4294 = vunpack.c.h.b16 %v3234
    %v4295 = vunpack.c.l.b16 %v3235
    %v4296 = vunpack.c.h.b16 %v3235
    %v4297 = vunpack.c.l.b16 %v3236
    %v4298 = vunpack.c.h.b16 %v3236
    %v4299 = vunpack.c.l.b16 %v3237
    %v4300 = vunpack.c.h.b16 %v3237
    %v4301 = vunpack.c.l.b16 %v3238
    %v4302 = vunpack.c.h.b16 %v3238
    %v4303 = vunpack.c.l.b16 %v3239
    %v4304 = vunpack.c.h.b16 %v3239
    %v4305 = vunpack.c.l.b16 %v3240
    %v4306 = vunpack.c.h.b16 %v3240
    %v4307 = vunpack.c.l.b16 %v3241
    %v4308 = vunpack.c.h.b16 %v3241
    %v4309 = vunpack.c.l.b16 %v3242
    %v4310 = vunpack.c.h.b16 %v3242
    %v4311 = vunpack.c.l.b16 %v3243
    %v4312 = vunpack.c.h.b16 %v3243
    %v4313 = vunpack.c.l.b16 %v3244
    %v4314 = vunpack.c.h.b16 %v3244
    %v4315 = vunpack.c.l.b16 %v3245
    %v4316 = vunpack.c.h.b16 %v3245
    %v4317 = vunpack.c.l.b16 %v3246
    %v4318 = vunpack.c.h.b16 %v3246
    %v4319 = vunpack.c.l.b16 %v3247
    %v4320 = vunpack.c.h.b16 %v3247
    %v4321 = vunpack.c.l.b16 %v3248
    %v4322 = vunpack.c.h.b16 %v3248
    %v4323 = vunpack.c.l.b16 %v3249
    %v4324 = vunpack.c.h.b16 %v3249
    %v4325 = vunpack.c.l.b16 %v3250
    %v4326 = vunpack.c.h.b16 %v3250
    %v4327 = vunpack.c.l.b16 %v3251
    %v4328 = vunpack.c.h.b16 %v3251
    %v4329 = vunpack.c.l.b16 %v3252
    %v4330 = vunpack.c.h.b16 %v3252
    %v4331 = vunpack.c.l.b16 %v3253
    %v4332 = vunpack.c.h.b16 %v3253
    %v4333 = vunpack.c.l.b16 %v3254
    %v4334 = vunpack.c.h.b16 %v3254
    %v4335 = vunpack.c.l.b16 %v3255
    %v4336 = vunpack.c.h.b16 %v3255
    %v4337 = vunpack.c.l.b16 %v3256
    %v4338 = vunpack.c.h.b16 %v3256
    %v4339 = vunpack.c.l.b16 %v3257
    %v4340 = vunpack.c.h.b16 %v3257
    %v4341 = vunpack.c.l.b16 %v3258
    %v4342 = vunpack.c.h.b16 %v3258
    %v4343 = vunpack.c.l.b16 %v3259
    %v4344 = vunpack.c.h.b16 %v3259
    %v4345 = vunpack.c.l.b16 %v3260
    %v4346 = vunpack.c.h.b16 %v3260
    %v4347 = vunpack.c.l.b16 %v3261
    %v4348 = vunpack.c.h.b16 %v3261
    %v4349 = vunpack.c.l.b16 %v3262
    %v4350 = vunpack.c.h.b16 %v3262
    %v4351 = vunpack.c.l.b16 %v3263
    %v4352 = vunpack.c.h.b16 %v3263
    %v4353 = vunpack.c.l.b16 %v3264
    %v4354 = vunpack.c.h.b16 %v3264
    %v4355 = vunpack.c.l.b16 %v3265
    %v4356 = vunpack.c.h.b16 %v3265
    %v4357 = vunpack.c.l.b16 %v3266
    %v4358 = vunpack.c.h.b16 %v3266
    %v4359 = vunpack.c.l.b16 %v3267
    %v4360 = vunpack.c.h.b16 %v3267
    %v4361 = vunpack.c.l.b16 %v3268
    %v4362 = vunpack.c.h.b16 %v3268
    %v4363 = vunpack.c.l.b16 %v3269
    %v4364 = vunpack.c.h.b16 %v3269
    %v4365 = vunpack.c.l.b16 %v3270
    %v4366 = vunpack.c.h.b16 %v3270
    %v4367 = vunpack.c.l.b16 %v3271
    %v4368 = vunpack.c.h.b16 %v3271
    %v4369 = vunpack.c.l.b16 %v3272
    %v4370 = vunpack.c.h.b16 %v3272
    %v4371 = vunpack.c.l.b16 %v3273
    %v4372 = vunpack.c.h.b16 %v3273
    %v4373 = vunpack.c.l.b16 %v3274
    %v4374 = vunpack.c.h.b16 %v3274
    %v4375 = vunpack.c.l.b16 %v3275
    %v4376 = vunpack.c.h.b16 %v3275
    %v4377 = vunpack.c.l.b16 %v3276
    %v4378 = vunpack.c.h.b16 %v3276
    %v4379 = vunpack.c.l.b16 %v3277
    %v4380 = vunpack.c.h.b16 %v3277
    %v4381 = vunpack.c.l.b16 %v3278
    %v4382 = vunpack.c.h.b16 %v3278
    %v4383 = vunpack.c.l.b16 %v3279
    %v4384 = vunpack.c.h.b16 %v3279
    %v4385 = vunpack.c.l.b16 %v3280
    %v4386 = vunpack.c.h.b16 %v3280
    %v4387 = vunpack.c.l.b16 %v3281
    %v4388 = vunpack.c.h.b16 %v3281
    %v4389 = vunpack.c.l.b16 %v3282
    %v4390 = vunpack.c.h.b16 %v3282
    %v4391 = vunpack.c.l.b16 %v3283
    %v4392 = vunpack.c.h.b16 %v3283
    %v4393 = vunpack.c.l.b16 %v3284
    %v4394 = vunpack.c.h.b16 %v3284
    %v4395 = vpack.c.b16 %v3887, %v3883
    %v4396 = vpack.c.b16 %v3888, %v3884
    %v4397 = vpack.c.b16 %v3889, %v3885
    %v4398 = vpack.c.b16 %v3890, %v3886
    %v4399 = vpack.c.b16 %v3895, %v3891
    %v4400 = vpack.c.b16 %v3896, %v3892
    %v4401 = vpack.c.b16 %v3897, %v3893
    %v4402 = vpack.c.b16 %v3898, %v3894
    %v4403 = vpack.c.b16 %v3903, %v3899
    %v4404 = vpack.c.b16 %v3904, %v3900
    %v4405 = vpack.c.b16 %v3905, %v3901
    %v4406 = vpack.c.b16 %v3906, %v3902
    %v4407 = vpack.c.b16 %v3911, %v3907
    %v4408 = vpack.c.b16 %v3912, %v3908
    %v4409 = vpack.c.b16 %v3913, %v3909
    %v4410 = vpack.c.b16 %v3914, %v3910
    %v4411 = vpack.c.b16 %v3919, %v3915
    %v4412 = vpack.c.b16 %v3920, %v3916
    %v4413 = vpack.c.b16 %v3921, %v3917
    %v4414 = vpack.c.b16 %v3922, %v3918
    %v4415 = vpack.c.b16 %v3927, %v3923
    %v4416 = vpack.c.b16 %v3928, %v3924
    %v4417 = vpack.c.b16 %v3929, %v3925
    %v4418 = vpack.c.b16 %v3930, %v3926
    %v4419 = vpack.c.b16 %v3935, %v3931
    %v4420 = vpack.c.b16 %v3936, %v3932
    %v4421 = vpack.c.b16 %v3937, %v3933
    %v4422 = vpack.c.b16 %v3938, %v3934
    %v4423 = vpack.c.b16 %v3943, %v3939
    %v4424 = vpack.c.b16 %v3944, %v3940
    %v4425 = vpack.c.b16 %v3945, %v3941
    %v4426 = vpack.c.b16 %v3946, %v3942
    %v4427 = vpack.c.b16 %v3951, %v3947
    %v4428 = vpack.c.b16 %v3952, %v3948
    %v4429 = vpack.c.b16 %v3953, %v3949
    %v4430 = vpack.c.b16 %v3954, %v3950
    %v4431 = vpack.c.b16 %v3959, %v3955
    %v4432 = vpack.c.b16 %v3960, %v3956
    %v4433 = vpack.c.b16 %v3961, %v3957
    %v4434 = vpack.c.b16 %v3962, %v3958
    %v4435 = vpack.c.b16 %v3967, %v3963
    %v4436 = vpack.c.b16 %v3968, %v3964
    %v4437 = vpack.c.b16 %v3969, %v3965
    %v4438 = vpack.c.b16 %v3970, %v3966
    %v4439 = vpack.c.b16 %v3975, %v3971
    %v4440 = vpack.c.b16 %v3976, %v3972
    %v4441 = vpack.c.b16 %v3977, %v3973
    %v4442 = vpack.c.b16 %v3978, %v3974
    %v4443 = vpack.c.b16 %v3983, %v3979
    %v4444 = vpack.c.b16 %v3984, %v3980
    %v4445 = vpack.c.b16 %v3985, %v3981
    %v4446 = vpack.c.b16 %v3986, %v3982
    %v4447 = vpack.c.b16 %v3991, %v3987
    %v4448 = vpack.c.b16 %v3992, %v3988
    %v4449 = vpack.c.b16 %v3993, %v3989
    %v4450 = vpack.c.b16 %v3994, %v3990
    %v4451 = vpack.c.b16 %v3999, %v3995
    %v4452 = vpack.c.b16 %v4000, %v3996
    %v4453 = vpack.c.b16 %v4001, %v3997
    %v4454 = vpack.c.b16 %v4002, %v3998
    %v4455 = vpack.c.b16 %v4007, %v4003
    %v4456 = vpack.c.b16 %v4008, %v4004
    %v4457 = vpack.c.b16 %v4009, %v4005
    %v4458 = vpack.c.b16 %v4010, %v4006
    %v4459 = vpack.c.b16 %v4015, %v4011
    %v4460 = vpack.c.b16 %v4016, %v4012
    %v4461 = vpack.c.b16 %v4017, %v4013
    %v4462 = vpack.c.b16 %v4018, %v4014
    %v4463 = vpack.c.b16 %v4023, %v4019
    %v4464 = vpack.c.b16 %v4024, %v4020
    %v4465 = vpack.c.b16 %v4025, %v4021
    %v4466 = vpack.c.b16 %v4026, %v4022
    %v4467 = vpack.c.b16 %v4031, %v4027
    %v4468 = vpack.c.b16 %v4032, %v4028
    %v4469 = vpack.c.b16 %v4033, %v4029
    %v4470 = vpack.c.b16 %v4034, %v4030
    %v4471 = vpack.c.b16 %v4039, %v4035
    %v4472 = vpack.c.b16 %v4040, %v4036
    %v4473 = vpack.c.b16 %v4041, %v4037
    %v4474 = vpack.c.b16 %v4042, %v4038
    %v4475 = vpack.c.b16 %v4047, %v4043
    %v4476 = vpack.c.b16 %v4048, %v4044
    %v4477 = vpack.c.b16 %v4049, %v4045
    %v4478 = vpack.c.b16 %v4050, %v4046
    %v4479 = vpack.c.b16 %v4055, %v4051
    %v4480 = vpack.c.b16 %v4056, %v4052
    %v4481 = vpack.c.b16 %v4057, %v4053
    %v4482 = vpack.c.b16 %v4058, %v4054
    %v4483 = vpack.c.b16 %v4063, %v4059
    %v4484 = vpack.c.b16 %v4064, %v4060
    %v4485 = vpack.c.b16 %v4065, %v4061
    %v4486 = vpack.c.b16 %v4066, %v4062
    %v4487 = vpack.c.b16 %v4071, %v4067
    %v4488 = vpack.c.b16 %v4072, %v4068
    %v4489 = vpack.c.b16 %v4073, %v4069
    %v4490 = vpack.c.b16 %v4074, %v4070
    %v4491 = vpack.c.b16 %v4079, %v4075
    %v4492 = vpack.c.b16 %v4080, %v4076
    %v4493 = vpack.c.b16 %v4081, %v4077
    %v4494 = vpack.c.b16 %v4082, %v4078
    %v4495 = vpack.c.b16 %v4087, %v4083
    %v4496 = vpack.c.b16 %v4088, %v4084
    %v4497 = vpack.c.b16 %v4089, %v4085
    %v4498 = vpack.c.b16 %v4090, %v4086
    %v4499 = vpack.c.b16 %v4095, %v4091
    %v4500 = vpack.c.b16 %v4096, %v4092
    %v4501 = vpack.c.b16 %v4097, %v4093
    %v4502 = vpack.c.b16 %v4098, %v4094
    %v4503 = vpack.c.b16 %v4103, %v4099
    %v4504 = vpack.c.b16 %v4104, %v4100
    %v4505 = vpack.c.b16 %v4105, %v4101
    %v4506 = vpack.c.b16 %v4106, %v4102
    %v4507 = vpack.c.b16 %v4111, %v4107
    %v4508 = vpack.c.b16 %v4112, %v4108
    %v4509 = vpack.c.b16 %v4113, %v4109
    %v4510 = vpack.c.b16 %v4114, %v4110
    %v4511 = vpack.c.b16 %v4119, %v4115
    %v4512 = vpack.c.b16 %v4120, %v4116
    %v4513 = vpack.c.b16 %v4121, %v4117
    %v4514 = vpack.c.b16 %v4122, %v4118
    %v4515 = vpack.c.b16 %v4127, %v4123
    %v4516 = vpack.c.b16 %v4128, %v4124
    %v4517 = vpack.c.b16 %v4129, %v4125
    %v4518 = vpack.c.b16 %v4130, %v4126
    %v4519 = vpack.c.b16 %v4135, %v4131
    %v4520 = vpack.c.b16 %v4136, %v4132
    %v4521 = vpack.c.b16 %v4137, %v4133
    %v4522 = vpack.c.b16 %v4138, %v4134
    %v4523 = vpack.c.b16 %v4143, %v4139
    %v4524 = vpack.c.b16 %v4144, %v4140
    %v4525 = vpack.c.b16 %v4145, %v4141
    %v4526 = vpack.c.b16 %v4146, %v4142
    %v4527 = vpack.c.b16 %v4151, %v4147
    %v4528 = vpack.c.b16 %v4152, %v4148
    %v4529 = vpack.c.b16 %v4153, %v4149
    %v4530 = vpack.c.b16 %v4154, %v4150
    %v4531 = vpack.c.b16 %v4159, %v4155
    %v4532 = vpack.c.b16 %v4160, %v4156
    %v4533 = vpack.c.b16 %v4161, %v4157
    %v4534 = vpack.c.b16 %v4162, %v4158
    %v4535 = vpack.c.b16 %v4167, %v4163
    %v4536 = vpack.c.b16 %v4168, %v4164
    %v4537 = vpack.c.b16 %v4169, %v4165
    %v4538 = vpack.c.b16 %v4170, %v4166
    %v4539 = vpack.c.b16 %v4175, %v4171
    %v4540 = vpack.c.b16 %v4176, %v4172
    %v4541 = vpack.c.b16 %v4177, %v4173
    %v4542 = vpack.c.b16 %v4178, %v4174
    %v4543 = vpack.c.b16 %v4183, %v4179
    %v4544 = vpack.c.b16 %v4184, %v4180
    %v4545 = vpack.c.b16 %v4185, %v4181
    %v4546 = vpack.c.b16 %v4186, %v4182
    %v4547 = vpack.c.b16 %v4191, %v4187
    %v4548 = vpack.c.b16 %v4192, %v4188
    %v4549 = vpack.c.b16 %v4193, %v4189
    %v4550 = vpack.c.b16 %v4194, %v4190
    %v4551 = vpack.c.b16 %v4199, %v4195
    %v4552 = vpack.c.b16 %v4200, %v4196
    %v4553 = vpack.c.b16 %v4201, %v4197
    %v4554 = vpack.c.b16 %v4202, %v4198
    %v4555 = vpack.c.b16 %v4207, %v4203
    %v4556 = vpack.c.b16 %v4208, %v4204
    %v4557 = vpack.c.b16 %v4209, %v4205
    %v4558 = vpack.c.b16 %v4210, %v4206
    %v4559 = vpack.c.b16 %v4215, %v4211
    %v4560 = vpack.c.b16 %v4216, %v4212
    %v4561 = vpack.c.b16 %v4217, %v4213
    %v4562 = vpack.c.b16 %v4218, %v4214
    %v4563 = vpack.c.b16 %v4223, %v4219
    %v4564 = vpack.c.b16 %v4224, %v4220
    %v4565 = vpack.c.b16 %v4225, %v4221
    %v4566 = vpack.c.b16 %v4226, %v4222
    %v4567 = vpack.c.b16 %v4231, %v4227
    %v4568 = vpack.c.b16 %v4232, %v4228
    %v4569 = vpack.c.b16 %v4233, %v4229
    %v4570 = vpack.c.b16 %v4234, %v4230
    %v4571 = vpack.c.b16 %v4239, %v4235
    %v4572 = vpack.c.b16 %v4240, %v4236
    %v4573 = vpack.c.b16 %v4241, %v4237
    %v4574 = vpack.c.b16 %v4242, %v4238
    %v4575 = vpack.c.b16 %v4247, %v4243
    %v4576 = vpack.c.b16 %v4248, %v4244
    %v4577 = vpack.c.b16 %v4249, %v4245
    %v4578 = vpack.c.b16 %v4250, %v4246
    %v4579 = vpack.c.b16 %v4255, %v4251
    %v4580 = vpack.c.b16 %v4256, %v4252
    %v4581 = vpack.c.b16 %v4257, %v4253
    %v4582 = vpack.c.b16 %v4258, %v4254
    %v4583 = vpack.c.b16 %v4263, %v4259
    %v4584 = vpack.c.b16 %v4264, %v4260
    %v4585 = vpack.c.b16 %v4265, %v4261
    %v4586 = vpack.c.b16 %v4266, %v4262
    %v4587 = vpack.c.b16 %v4271, %v4267
    %v4588 = vpack.c.b16 %v4272, %v4268
    %v4589 = vpack.c.b16 %v4273, %v4269
    %v4590 = vpack.c.b16 %v4274, %v4270
    %v4591 = vpack.c.b16 %v4279, %v4275
    %v4592 = vpack.c.b16 %v4280, %v4276
    %v4593 = vpack.c.b16 %v4281, %v4277
    %v4594 = vpack.c.b16 %v4282, %v4278
    %v4595 = vpack.c.b16 %v4287, %v4283
    %v4596 = vpack.c.b16 %v4288, %v4284
    %v4597 = vpack.c.b16 %v4289, %v4285
    %v4598 = vpack.c.b16 %v4290, %v4286
    %v4599 = vpack.c.b16 %v4295, %v4291
    %v4600 = vpack.c.b16 %v4296, %v4292
    %v4601 = vpack.c.b16 %v4297, %v4293
    %v4602 = vpack.c.b16 %v4298, %v4294
    %v4603 = vpack.c.b16 %v4303, %v4299
    %v4604 = vpack.c.b16 %v4304, %v4300
    %v4605 = vpack.c.b16 %v4305, %v4301
    %v4606 = vpack.c.b16 %v4306, %v4302
    %v4607 = vpack.c.b16 %v4311, %v4307
    %v4608 = vpack.c.b16 %v4312, %v4308
    %v4609 = vpack.c.b16 %v4313, %v4309
    %v4610 = vpack.c.b16 %v4314, %v4310
    %v4611 = vpack.c.b16 %v4319, %v4315
    %v4612 = vpack.c.b16 %v4320, %v4316
    %v4613 = vpack.c.b16 %v4321, %v4317
    %v4614 = vpack.c.b16 %v4322, %v4318
    %v4615 = vpack.c.b16 %v4327, %v4323
    %v4616 = vpack.c.b16 %v4328, %v4324
    %v4617 = vpack.c.b16 %v4329, %v4325
    %v4618 = vpack.c.b16 %v4330, %v4326
    %v4619 = vpack.c.b16 %v4335, %v4331
    %v4620 = vpack.c.b16 %v4336, %v4332
    %v4621 = vpack.c.b16 %v4337, %v4333
    %v4622 = vpack.c.b16 %v4338, %v4334
    %v4623 = vpack.c.b16 %v4343, %v4339
    %v4624 = vpack.c.b16 %v4344, %v4340
    %v4625 = vpack.c.b16 %v4345, %v4341
    %v4626 = vpack.c.b16 %v4346, %v4342
    %v4627 = vpack.c.b16 %v4351, %v4347
    %v4628 = vpack.c.b16 %v4352, %v4348
    %v4629 = vpack.c.b16 %v4353, %v4349
    %v4630 = vpack.c.b16 %v4354, %v4350
    %v4631 = vpack.c.b16 %v4359, %v4355
    %v4632 = vpack.c.b16 %v4360, %v4356
    %v4633 = vpack.c.b16 %v4361, %v4357
    %v4634 = vpack.c.b16 %v4362, %v4358
    %v4635 = vpack.c.b16 %v4367, %v4363
    %v4636 = vpack.c.b16 %v4368, %v4364
    %v4637 = vpack.c.b16 %v4369, %v4365
    %v4638 = vpack.c.b16 %v4370, %v4366
    %v4639 = vpack.c.b16 %v4375, %v4371
    %v4640 = vpack.c.b16 %v4376, %v4372
    %v4641 = vpack.c.b16 %v4377, %v4373
    %v4642 = vpack.c.b16 %v4378, %v4374
    %v4643 = vpack.c.b16 %v4383, %v4379
    %v4644 = vpack.c.b16 %v4384, %v4380
    %v4645 = vpack.c.b16 %v4385, %v4381
    %v4646 = vpack.c.b16 %v4386, %v4382
    %v4647 = vpack.c.b16 %v4391, %v4387
    %v4648 = vpack.c.b16 %v4392, %v4388
    %v4649 = vpack.c.b16 %v4393, %v4389
    %v4650 = vpack.c.b16 %v4394, %v4390
    %4907 = vmatprep.subr.bf16.mxu0 %v4424
    %4908 = vmatpush1.bf16.msra.mxu0 %v4423
    %4909 = vmatprep.subr.bf16.mxu0 %v4420
    %4910 = vmatpush1.bf16.msra.mxu0 %v4419
    %4911 = vmatprep.subr.bf16.mxu0 %v4416
    %4912 = vmatpush1.bf16.msra.mxu0 %v4415
    %4913 = vmatprep.subr.bf16.mxu0 %v4412
    %4914 = vmatpush1.bf16.msra.mxu0 %v4411
    %4915 = vmatprep.subr.bf16.mxu0 %v4408
    %4916 = vmatpush1.bf16.msra.mxu0 %v4407
    %4917 = vmatprep.subr.bf16.mxu0 %v4404
    %4918 = vmatpush1.bf16.msra.mxu0 %v4403
    %4919 = vmatprep.subr.bf16.mxu0 %v4400
    %4920 = vmatpush1.bf16.msra.mxu0 %v4399
    %4921 = vmatprep.subr.bf16.mxu0 %v4396
    %4922 = vmatpush1.bf16.msra.mxu0 %v4395
    %4923 = vmatprep.subr.bf16.mxu0 %v4456
    %4924 = vmatpush2.bf16.msra.mxu0 %v4455
    %4925 = vmatprep.subr.bf16.mxu0 %v4452
    %4926 = vmatpush2.bf16.msra.mxu0 %v4451
    %4927 = vmatprep.subr.bf16.mxu0 %v4448
    %4928 = vmatpush2.bf16.msra.mxu0 %v4447
    %4929 = vmatprep.subr.bf16.mxu0 %v4444
    %4930 = vmatpush2.bf16.msra.mxu0 %v4443
    %4931 = vmatprep.subr.bf16.mxu0 %v4440
    %4932 = vmatpush2.bf16.msra.mxu0 %v4439
    %4933 = vmatprep.subr.bf16.mxu0 %v4436
    %4934 = vmatpush2.bf16.msra.mxu0 %v4435
    %4935 = vmatprep.subr.bf16.mxu0 %v4432
    %4936 = vmatpush2.bf16.msra.mxu0 %v4431
    %4937 = vmatprep.subr.bf16.mxu0 %v4428
    %4938 = vmatpush2.bf16.msra.mxu0 %v4427
    %4939 = vmatprep.mubr.bf16.mxu0 %v3500
    %4940 = vmatmul.mubr.bf16.gmra.mxu0 %v3499
    %v4941 = vpop.f32.mrf.mxu0
    %v4942 = vadd.f32 %v3290, %v4941
    %v4943 = vpop.f32.mrf.mxu0
    %v4944 = vadd.f32 %v3294, %v4943
    %v4945 = vpop.f32.mrf.mxu0
    %v4946 = vadd.f32 %v3290, %v4945
    %v4947 = vpop.f32.mrf.mxu0
    %v4948 = vadd.f32 %v3294, %v4947
    %4949 = vmatprep.mubr.bf16.mxu0 %v3508
    %4950 = vmatmul.mubr.bf16.gmra.mxu0 %v3507
    %v4951 = vpop.f32.mrf.mxu0
    %v4952 = vadd.f32 %v3290, %v4951
    %v4953 = vpop.f32.mrf.mxu0
    %v4954 = vadd.f32 %v3294, %v4953
    %v4955 = vpop.f32.mrf.mxu0
    %v4956 = vadd.f32 %v3290, %v4955
    %v4957 = vpop.f32.mrf.mxu0
    %v4958 = vadd.f32 %v3294, %v4957
    %4959 = vmatprep.mubr.bf16.mxu0 %v3516
    %4960 = vmatmul.mubr.bf16.gmra.mxu0 %v3515
    %v4961 = vpop.f32.mrf.mxu0
    %v4962 = vadd.f32 %v3290, %v4961
    %v4963 = vpop.f32.mrf.mxu0
    %v4964 = vadd.f32 %v3294, %v4963
    %v4965 = vpop.f32.mrf.mxu0
    %v4966 = vadd.f32 %v3290, %v4965
    %v4967 = vpop.f32.mrf.mxu0
    %v4968 = vadd.f32 %v3294, %v4967
    %4969 = vmatprep.mubr.bf16.mxu0 %v3524
    %4970 = vmatmul.mubr.bf16.gmra.mxu0 %v3523
    %v4971 = vpop.f32.mrf.mxu0
    %v4972 = vadd.f32 %v3290, %v4971
    %v4973 = vpop.f32.mrf.mxu0
    %v4974 = vadd.f32 %v3294, %v4973
    %v4975 = vpop.f32.mrf.mxu0
    %v4976 = vadd.f32 %v3290, %v4975
    %v4977 = vpop.f32.mrf.mxu0
    %v4978 = vadd.f32 %v3294, %v4977
    %4979 = vmatprep.mubr.bf16.mxu0 %v3532
    %4980 = vmatmul.mubr.bf16.gmra.mxu0 %v3531
    %v4981 = vpop.f32.mrf.mxu0
    %v4982 = vadd.f32 %v3290, %v4981
    %v4983 = vpop.f32.mrf.mxu0
    %v4984 = vadd.f32 %v3294, %v4983
    %v4985 = vpop.f32.mrf.mxu0
    %v4986 = vadd.f32 %v3290, %v4985
    %v4987 = vpop.f32.mrf.mxu0
    %v4988 = vadd.f32 %v3294, %v4987
    %4989 = vmatprep.mubr.bf16.mxu0 %v3540
    %4990 = vmatmul.mubr.bf16.gmra.mxu0 %v3539
    %v4991 = vpop.f32.mrf.mxu0
    %v4992 = vadd.f32 %v3290, %v4991
    %v4993 = vpop.f32.mrf.mxu0
    %v4994 = vadd.f32 %v3294, %v4993
    %v4995 = vpop.f32.mrf.mxu0
    %v4996 = vadd.f32 %v3290, %v4995
    %v4997 = vpop.f32.mrf.mxu0
    %v4998 = vadd.f32 %v3294, %v4997
    %4999 = vmatprep.mubr.bf16.mxu0 %v3548
    %5000 = vmatmul.mubr.bf16.gmra.mxu0 %v3547
    %v5001 = vpop.f32.mrf.mxu0
    %v5002 = vadd.f32 %v3290, %v5001
    %v5003 = vpop.f32.mrf.mxu0
    %v5004 = vadd.f32 %v3294, %v5003
    %v5005 = vpop.f32.mrf.mxu0
    %v5006 = vadd.f32 %v3290, %v5005
    %v5007 = vpop.f32.mrf.mxu0
    %v5008 = vadd.f32 %v3294, %v5007
    %5009 = vmatprep.mubr.bf16.mxu0 %v3556
    %5010 = vmatmul.mubr.bf16.gmra.mxu0 %v3555
    %v5011 = vpop.f32.mrf.mxu0
    %v5012 = vadd.f32 %v3290, %v5011
    %v5013 = vpop.f32.mrf.mxu0
    %v5014 = vadd.f32 %v3294, %v5013
    %v5015 = vpop.f32.mrf.mxu0
    %v5016 = vadd.f32 %v3290, %v5015
    %v5017 = vpop.f32.mrf.mxu0
    %v5018 = vadd.f32 %v3294, %v5017
    %5019 = vdwg.mxu0
    %5020 = vmatprep.subr.bf16.mxu0 %v4488
    %5021 = vmatpush1.bf16.msra.mxu0 %v4487
    %5022 = vmatprep.subr.bf16.mxu0 %v4484
    %5023 = vmatpush1.bf16.msra.mxu0 %v4483
    %5024 = vmatprep.subr.bf16.mxu0 %v4480
    %5025 = vmatpush1.bf16.msra.mxu0 %v4479
    %5026 = vmatprep.subr.bf16.mxu0 %v4476
    %5027 = vmatpush1.bf16.msra.mxu0 %v4475
    %5028 = vmatprep.subr.bf16.mxu0 %v4472
    %5029 = vmatpush1.bf16.msra.mxu0 %v4471
    %5030 = vmatprep.subr.bf16.mxu0 %v4468
    %5031 = vmatpush1.bf16.msra.mxu0 %v4467
    %5032 = vmatprep.subr.bf16.mxu0 %v4464
    %5033 = vmatpush1.bf16.msra.mxu0 %v4463
    %5034 = vmatprep.subr.bf16.mxu0 %v4460
    %5035 = vmatpush1.bf16.msra.mxu0 %v4459
    %5036 = vmatprep.subr.bf16.mxu0 %v4520
    %5037 = vmatpush2.bf16.msra.mxu0 %v4519
    %5038 = vmatprep.subr.bf16.mxu0 %v4516
    %5039 = vmatpush2.bf16.msra.mxu0 %v4515
    %5040 = vmatprep.subr.bf16.mxu0 %v4512
    %5041 = vmatpush2.bf16.msra.mxu0 %v4511
    %5042 = vmatprep.subr.bf16.mxu0 %v4508
    %5043 = vmatpush2.bf16.msra.mxu0 %v4507
    %5044 = vmatprep.subr.bf16.mxu0 %v4504
    %5045 = vmatpush2.bf16.msra.mxu0 %v4503
    %5046 = vmatprep.subr.bf16.mxu0 %v4500
    %5047 = vmatpush2.bf16.msra.mxu0 %v4499
    %5048 = vmatprep.subr.bf16.mxu0 %v4496
    %5049 = vmatpush2.bf16.msra.mxu0 %v4495
    %5050 = vmatprep.subr.bf16.mxu0 %v4492
    %5051 = vmatpush2.bf16.msra.mxu0 %v4491
    %5052 = vmatprep.mubr.bf16.mxu0 %v3502
    %5053 = vmatmul.mubr.bf16.gmra.mxu0 %v3501
    %v5054 = vpop.f32.mrf.mxu0
    %v5055 = vadd.f32 %v4942, %v5054
    %v5056 = vpop.f32.mrf.mxu0
    %v5057 = vadd.f32 %v4944, %v5056
    %v5058 = vpop.f32.mrf.mxu0
    %v5059 = vadd.f32 %v4946, %v5058
    %v5060 = vpop.f32.mrf.mxu0
    %v5061 = vadd.f32 %v4948, %v5060
    %5062 = vmatprep.mubr.bf16.mxu0 %v3510
    %5063 = vmatmul.mubr.bf16.gmra.mxu0 %v3509
    %v5064 = vpop.f32.mrf.mxu0
    %v5065 = vadd.f32 %v4952, %v5064
    %v5066 = vpop.f32.mrf.mxu0
    %v5067 = vadd.f32 %v4954, %v5066
    %v5068 = vpop.f32.mrf.mxu0
    %v5069 = vadd.f32 %v4956, %v5068
    %v5070 = vpop.f32.mrf.mxu0
    %v5071 = vadd.f32 %v4958, %v5070
    %5072 = vmatprep.mubr.bf16.mxu0 %v3518
    %5073 = vmatmul.mubr.bf16.gmra.mxu0 %v3517
    %v5074 = vpop.f32.mrf.mxu0
    %v5075 = vadd.f32 %v4962, %v5074
    %v5076 = vpop.f32.mrf.mxu0
    %v5077 = vadd.f32 %v4964, %v5076
    %v5078 = vpop.f32.mrf.mxu0
    %v5079 = vadd.f32 %v4966, %v5078
    %v5080 = vpop.f32.mrf.mxu0
    %v5081 = vadd.f32 %v4968, %v5080
    %5082 = vmatprep.mubr.bf16.mxu0 %v3526
    %5083 = vmatmul.mubr.bf16.gmra.mxu0 %v3525
    %v5084 = vpop.f32.mrf.mxu0
    %v5085 = vadd.f32 %v4972, %v5084
    %v5086 = vpop.f32.mrf.mxu0
    %v5087 = vadd.f32 %v4974, %v5086
    %v5088 = vpop.f32.mrf.mxu0
    %v5089 = vadd.f32 %v4976, %v5088
    %v5090 = vpop.f32.mrf.mxu0
    %v5091 = vadd.f32 %v4978, %v5090
    %5092 = vmatprep.mubr.bf16.mxu0 %v3534
    %5093 = vmatmul.mubr.bf16.gmra.mxu0 %v3533
    %v5094 = vpop.f32.mrf.mxu0
    %v5095 = vadd.f32 %v4982, %v5094
    %v5096 = vpop.f32.mrf.mxu0
    %v5097 = vadd.f32 %v4984, %v5096
    %v5098 = vpop.f32.mrf.mxu0
    %v5099 = vadd.f32 %v4986, %v5098
    %v5100 = vpop.f32.mrf.mxu0
    %v5101 = vadd.f32 %v4988, %v5100
    %5102 = vmatprep.mubr.bf16.mxu0 %v3542
    %5103 = vmatmul.mubr.bf16.gmra.mxu0 %v3541
    %v5104 = vpop.f32.mrf.mxu0
    %v5105 = vadd.f32 %v4992, %v5104
    %v5106 = vpop.f32.mrf.mxu0
    %v5107 = vadd.f32 %v4994, %v5106
    %v5108 = vpop.f32.mrf.mxu0
    %v5109 = vadd.f32 %v4996, %v5108
    %v5110 = vpop.f32.mrf.mxu0
    %v5111 = vadd.f32 %v4998, %v5110
    %5112 = vmatprep.mubr.bf16.mxu0 %v3550
    %5113 = vmatmul.mubr.bf16.gmra.mxu0 %v3549
    %v5114 = vpop.f32.mrf.mxu0
    %v5115 = vadd.f32 %v5002, %v5114
    %v5116 = vpop.f32.mrf.mxu0
    %v5117 = vadd.f32 %v5004, %v5116
    %v5118 = vpop.f32.mrf.mxu0
    %v5119 = vadd.f32 %v5006, %v5118
    %v5120 = vpop.f32.mrf.mxu0
    %v5121 = vadd.f32 %v5008, %v5120
    %5122 = vmatprep.mubr.bf16.mxu0 %v3558
    %5123 = vmatmul.mubr.bf16.gmra.mxu0 %v3557
    %v5124 = vpop.f32.mrf.mxu0
    %v5125 = vadd.f32 %v5012, %v5124
    %v5126 = vpop.f32.mrf.mxu0
    %v5127 = vadd.f32 %v5014, %v5126
    %v5128 = vpop.f32.mrf.mxu0
    %v5129 = vadd.f32 %v5016, %v5128
    %v5130 = vpop.f32.mrf.mxu0
    %v5131 = vadd.f32 %v5018, %v5130
    %5132 = vdwg.mxu0
    %5133 = vmatprep.subr.bf16.mxu0 %v4552
    %5134 = vmatpush1.bf16.msra.mxu0 %v4551
    %5135 = vmatprep.subr.bf16.mxu0 %v4548
    %5136 = vmatpush1.bf16.msra.mxu0 %v4547
    %5137 = vmatprep.subr.bf16.mxu0 %v4544
    %5138 = vmatpush1.bf16.msra.mxu0 %v4543
    %5139 = vmatprep.subr.bf16.mxu0 %v4540
    %5140 = vmatpush1.bf16.msra.mxu0 %v4539
    %5141 = vmatprep.subr.bf16.mxu0 %v4536
    %5142 = vmatpush1.bf16.msra.mxu0 %v4535
    %5143 = vmatprep.subr.bf16.mxu0 %v4532
    %5144 = vmatpush1.bf16.msra.mxu0 %v4531
    %5145 = vmatprep.subr.bf16.mxu0 %v4528
    %5146 = vmatpush1.bf16.msra.mxu0 %v4527
    %5147 = vmatprep.subr.bf16.mxu0 %v4524
    %5148 = vmatpush1.bf16.msra.mxu0 %v4523
    %5149 = vmatprep.subr.bf16.mxu0 %v4584
    %5150 = vmatpush2.bf16.msra.mxu0 %v4583
    %5151 = vmatprep.subr.bf16.mxu0 %v4580
    %5152 = vmatpush2.bf16.msra.mxu0 %v4579
    %5153 = vmatprep.subr.bf16.mxu0 %v4576
    %5154 = vmatpush2.bf16.msra.mxu0 %v4575
    %5155 = vmatprep.subr.bf16.mxu0 %v4572
    %5156 = vmatpush2.bf16.msra.mxu0 %v4571
    %5157 = vmatprep.subr.bf16.mxu0 %v4568
    %5158 = vmatpush2.bf16.msra.mxu0 %v4567
    %5159 = vmatprep.subr.bf16.mxu0 %v4564
    %5160 = vmatpush2.bf16.msra.mxu0 %v4563
    %5161 = vmatprep.subr.bf16.mxu0 %v4560
    %5162 = vmatpush2.bf16.msra.mxu0 %v4559
    %5163 = vmatprep.subr.bf16.mxu0 %v4556
    %5164 = vmatpush2.bf16.msra.mxu0 %v4555
    %5165 = vmatprep.mubr.bf16.mxu0 %v3504
    %5166 = vmatmul.mubr.bf16.gmra.mxu0 %v3503
    %v5167 = vpop.f32.mrf.mxu0
    %v5168 = vadd.f32 %v5055, %v5167
    %v5169 = vpop.f32.mrf.mxu0
    %v5170 = vadd.f32 %v5057, %v5169
    %v5171 = vpop.f32.mrf.mxu0
    %v5172 = vadd.f32 %v5059, %v5171
    %v5173 = vpop.f32.mrf.mxu0
    %v5174 = vadd.f32 %v5061, %v5173
    %5175 = vmatprep.mubr.bf16.mxu0 %v3512
    %5176 = vmatmul.mubr.bf16.gmra.mxu0 %v3511
    %v5177 = vpop.f32.mrf.mxu0
    %v5178 = vadd.f32 %v5065, %v5177
    %v5179 = vpop.f32.mrf.mxu0
    %v5180 = vadd.f32 %v5067, %v5179
    %v5181 = vpop.f32.mrf.mxu0
    %v5182 = vadd.f32 %v5069, %v5181
    %v5183 = vpop.f32.mrf.mxu0
    %v5184 = vadd.f32 %v5071, %v5183
    %5185 = vmatprep.mubr.bf16.mxu0 %v3520
    %5186 = vmatmul.mubr.bf16.gmra.mxu0 %v3519
    %v5187 = vpop.f32.mrf.mxu0
    %v5188 = vadd.f32 %v5075, %v5187
    %v5189 = vpop.f32.mrf.mxu0
    %v5190 = vadd.f32 %v5077, %v5189
    %v5191 = vpop.f32.mrf.mxu0
    %v5192 = vadd.f32 %v5079, %v5191
    %v5193 = vpop.f32.mrf.mxu0
    %v5194 = vadd.f32 %v5081, %v5193
    %5195 = vmatprep.mubr.bf16.mxu0 %v3528
    %5196 = vmatmul.mubr.bf16.gmra.mxu0 %v3527
    %v5197 = vpop.f32.mrf.mxu0
    %v5198 = vadd.f32 %v5085, %v5197
    %v5199 = vpop.f32.mrf.mxu0
    %v5200 = vadd.f32 %v5087, %v5199
    %v5201 = vpop.f32.mrf.mxu0
    %v5202 = vadd.f32 %v5089, %v5201
    %v5203 = vpop.f32.mrf.mxu0
    %v5204 = vadd.f32 %v5091, %v5203
    %5205 = vmatprep.mubr.bf16.mxu0 %v3536
    %5206 = vmatmul.mubr.bf16.gmra.mxu0 %v3535
    %v5207 = vpop.f32.mrf.mxu0
    %v5208 = vadd.f32 %v5095, %v5207
    %v5209 = vpop.f32.mrf.mxu0
    %v5210 = vadd.f32 %v5097, %v5209
    %v5211 = vpop.f32.mrf.mxu0
    %v5212 = vadd.f32 %v5099, %v5211
    %v5213 = vpop.f32.mrf.mxu0
    %v5214 = vadd.f32 %v5101, %v5213
    %5215 = vmatprep.mubr.bf16.mxu0 %v3544
    %5216 = vmatmul.mubr.bf16.gmra.mxu0 %v3543
    %v5217 = vpop.f32.mrf.mxu0
    %v5218 = vadd.f32 %v5105, %v5217
    %v5219 = vpop.f32.mrf.mxu0
    %v5220 = vadd.f32 %v5107, %v5219
    %v5221 = vpop.f32.mrf.mxu0
    %v5222 = vadd.f32 %v5109, %v5221
    %v5223 = vpop.f32.mrf.mxu0
    %v5224 = vadd.f32 %v5111, %v5223
    %5225 = vmatprep.mubr.bf16.mxu0 %v3552
    %5226 = vmatmul.mubr.bf16.gmra.mxu0 %v3551
    %v5227 = vpop.f32.mrf.mxu0
    %v5228 = vadd.f32 %v5115, %v5227
    %v5229 = vpop.f32.mrf.mxu0
    %v5230 = vadd.f32 %v5117, %v5229
    %v5231 = vpop.f32.mrf.mxu0
    %v5232 = vadd.f32 %v5119, %v5231
    %v5233 = vpop.f32.mrf.mxu0
    %v5234 = vadd.f32 %v5121, %v5233
    %5235 = vmatprep.mubr.bf16.mxu0 %v3560
    %5236 = vmatmul.mubr.bf16.gmra.mxu0 %v3559
    %v5237 = vpop.f32.mrf.mxu0
    %v5238 = vadd.f32 %v5125, %v5237
    %v5239 = vpop.f32.mrf.mxu0
    %v5240 = vadd.f32 %v5127, %v5239
    %v5241 = vpop.f32.mrf.mxu0
    %v5242 = vadd.f32 %v5129, %v5241
    %v5243 = vpop.f32.mrf.mxu0
    %v5244 = vadd.f32 %v5131, %v5243
    %5245 = vdwg.mxu0
    %5246 = vmatprep.subr.bf16.mxu0 %v4616
    %5247 = vmatpush1.bf16.msra.mxu0 %v4615
    %5248 = vmatprep.subr.bf16.mxu0 %v4612
    %5249 = vmatpush1.bf16.msra.mxu0 %v4611
    %5250 = vmatprep.subr.bf16.mxu0 %v4608
    %5251 = vmatpush1.bf16.msra.mxu0 %v4607
    %5252 = vmatprep.subr.bf16.mxu0 %v4604
    %5253 = vmatpush1.bf16.msra.mxu0 %v4603
    %5254 = vmatprep.subr.bf16.mxu0 %v4600
    %5255 = vmatpush1.bf16.msra.mxu0 %v4599
    %5256 = vmatprep.subr.bf16.mxu0 %v4596
    %5257 = vmatpush1.bf16.msra.mxu0 %v4595
    %5258 = vmatprep.subr.bf16.mxu0 %v4592
    %5259 = vmatpush1.bf16.msra.mxu0 %v4591
    %5260 = vmatprep.subr.bf16.mxu0 %v4588
    %5261 = vmatpush1.bf16.msra.mxu0 %v4587
    %5262 = vmatprep.subr.bf16.mxu0 %v4648
    %5263 = vmatpush2.bf16.msra.mxu0 %v4647
    %5264 = vmatprep.subr.bf16.mxu0 %v4644
    %5265 = vmatpush2.bf16.msra.mxu0 %v4643
    %5266 = vmatprep.subr.bf16.mxu0 %v4640
    %5267 = vmatpush2.bf16.msra.mxu0 %v4639
    %5268 = vmatprep.subr.bf16.mxu0 %v4636
    %5269 = vmatpush2.bf16.msra.mxu0 %v4635
    %5270 = vmatprep.subr.bf16.mxu0 %v4632
    %5271 = vmatpush2.bf16.msra.mxu0 %v4631
    %5272 = vmatprep.subr.bf16.mxu0 %v4628
    %5273 = vmatpush2.bf16.msra.mxu0 %v4627
    %5274 = vmatprep.subr.bf16.mxu0 %v4624
    %5275 = vmatpush2.bf16.msra.mxu0 %v4623
    %5276 = vmatprep.subr.bf16.mxu0 %v4620
    %5277 = vmatpush2.bf16.msra.mxu0 %v4619
    %5278 = vmatprep.mubr.bf16.mxu0 %v3506
    %5279 = vmatmul.mubr.bf16.gmra.mxu0 %v3505
    %v5280 = vpop.f32.mrf.mxu0
    %v5281 = vadd.f32 %v5168, %v5280
    %v5282 = vpop.f32.mrf.mxu0
    %v5283 = vadd.f32 %v5170, %v5282
    %v5284 = vpop.f32.mrf.mxu0
    %v5285 = vadd.f32 %v5172, %v5284
    %v5286 = vpop.f32.mrf.mxu0
    %v5287 = vadd.f32 %v5174, %v5286
    %5288 = vmatprep.mubr.bf16.mxu0 %v3514
    %5289 = vmatmul.mubr.bf16.gmra.mxu0 %v3513
    %v5290 = vpop.f32.mrf.mxu0
    %v5291 = vadd.f32 %v5178, %v5290
    %v5292 = vpop.f32.mrf.mxu0
    %v5293 = vadd.f32 %v5180, %v5292
    %v5294 = vpop.f32.mrf.mxu0
    %v5295 = vadd.f32 %v5182, %v5294
    %v5296 = vpop.f32.mrf.mxu0
    %v5297 = vadd.f32 %v5184, %v5296
    %5298 = vmatprep.mubr.bf16.mxu0 %v3522
    %5299 = vmatmul.mubr.bf16.gmra.mxu0 %v3521
    %v5300 = vpop.f32.mrf.mxu0
    %v5301 = vadd.f32 %v5188, %v5300
    %v5302 = vpop.f32.mrf.mxu0
    %v5303 = vadd.f32 %v5190, %v5302
    %v5304 = vpop.f32.mrf.mxu0
    %v5305 = vadd.f32 %v5192, %v5304
    %v5306 = vpop.f32.mrf.mxu0
    %v5307 = vadd.f32 %v5194, %v5306
    %5308 = vmatprep.mubr.bf16.mxu0 %v3530
    %5309 = vmatmul.mubr.bf16.gmra.mxu0 %v3529
    %v5310 = vpop.f32.mrf.mxu0
    %v5311 = vadd.f32 %v5198, %v5310
    %v5312 = vpop.f32.mrf.mxu0
    %v5313 = vadd.f32 %v5200, %v5312
    %v5314 = vpop.f32.mrf.mxu0
    %v5315 = vadd.f32 %v5202, %v5314
    %v5316 = vpop.f32.mrf.mxu0
    %v5317 = vadd.f32 %v5204, %v5316
    %5318 = vmatprep.mubr.bf16.mxu0 %v3538
    %5319 = vmatmul.mubr.bf16.gmra.mxu0 %v3537
    %v5320 = vpop.f32.mrf.mxu0
    %v5321 = vadd.f32 %v5208, %v5320
    %v5322 = vpop.f32.mrf.mxu0
    %v5323 = vadd.f32 %v5210, %v5322
    %v5324 = vpop.f32.mrf.mxu0
    %v5325 = vadd.f32 %v5212, %v5324
    %v5326 = vpop.f32.mrf.mxu0
    %v5327 = vadd.f32 %v5214, %v5326
    %5328 = vmatprep.mubr.bf16.mxu0 %v3546
    %5329 = vmatmul.mubr.bf16.gmra.mxu0 %v3545
    %v5330 = vpop.f32.mrf.mxu0
    %v5331 = vadd.f32 %v5218, %v5330
    %v5332 = vpop.f32.mrf.mxu0
    %v5333 = vadd.f32 %v5220, %v5332
    %v5334 = vpop.f32.mrf.mxu0
    %v5335 = vadd.f32 %v5222, %v5334
    %v5336 = vpop.f32.mrf.mxu0
    %v5337 = vadd.f32 %v5224, %v5336
    %5338 = vmatprep.mubr.bf16.mxu0 %v3554
    %5339 = vmatmul.mubr.bf16.gmra.mxu0 %v3553
    %v5340 = vpop.f32.mrf.mxu0
    %v5341 = vadd.f32 %v5228, %v5340
    %v5342 = vpop.f32.mrf.mxu0
    %v5343 = vadd.f32 %v5230, %v5342
    %v5344 = vpop.f32.mrf.mxu0
    %v5345 = vadd.f32 %v5232, %v5344
    %v5346 = vpop.f32.mrf.mxu0
    %v5347 = vadd.f32 %v5234, %v5346
    %5348 = vmatprep.mubr.bf16.mxu0 %v3562
    %5349 = vmatmul.mubr.bf16.gmra.mxu0 %v3561
    %v5350 = vpop.f32.mrf.mxu0
    %v5351 = vadd.f32 %v5238, %v5350
    %v5352 = vpop.f32.mrf.mxu0
    %v5353 = vadd.f32 %v5240, %v5352
    %v5354 = vpop.f32.mrf.mxu0
    %v5355 = vadd.f32 %v5242, %v5354
    %v5356 = vpop.f32.mrf.mxu0
    %v5357 = vadd.f32 %v5244, %v5356
    %5358 = vdwg.mxu0
    %5359 = vmatprep.subr.bf16.mxu0 %v4426
    %5360 = vmatpush1.bf16.msra.mxu0 %v4425
    %5361 = vmatprep.subr.bf16.mxu0 %v4422
    %5362 = vmatpush1.bf16.msra.mxu0 %v4421
    %5363 = vmatprep.subr.bf16.mxu0 %v4418
    %5364 = vmatpush1.bf16.msra.mxu0 %v4417
    %5365 = vmatprep.subr.bf16.mxu0 %v4414
    %5366 = vmatpush1.bf16.msra.mxu0 %v4413
    %5367 = vmatprep.subr.bf16.mxu0 %v4410
    %5368 = vmatpush1.bf16.msra.mxu0 %v4409
    %5369 = vmatprep.subr.bf16.mxu0 %v4406
    %5370 = vmatpush1.bf16.msra.mxu0 %v4405
    %5371 = vmatprep.subr.bf16.mxu0 %v4402
    %5372 = vmatpush1.bf16.msra.mxu0 %v4401
    %5373 = vmatprep.subr.bf16.mxu0 %v4398
    %5374 = vmatpush1.bf16.msra.mxu0 %v4397
    %5375 = vmatprep.subr.bf16.mxu0 %v4458
    %5376 = vmatpush2.bf16.msra.mxu0 %v4457
    %5377 = vmatprep.subr.bf16.mxu0 %v4454
    %5378 = vmatpush2.bf16.msra.mxu0 %v4453
    %5379 = vmatprep.subr.bf16.mxu0 %v4450
    %5380 = vmatpush2.bf16.msra.mxu0 %v4449
    %5381 = vmatprep.subr.bf16.mxu0 %v4446
    %5382 = vmatpush2.bf16.msra.mxu0 %v4445
    %5383 = vmatprep.subr.bf16.mxu0 %v4442
    %5384 = vmatpush2.bf16.msra.mxu0 %v4441
    %5385 = vmatprep.subr.bf16.mxu0 %v4438
    %5386 = vmatpush2.bf16.msra.mxu0 %v4437
    %5387 = vmatprep.subr.bf16.mxu0 %v4434
    %5388 = vmatpush2.bf16.msra.mxu0 %v4433
    %5389 = vmatprep.subr.bf16.mxu0 %v4430
    %5390 = vmatpush2.bf16.msra.mxu0 %v4429
    %5391 = vmatprep.mubr.bf16.mxu0 %v3500
    %5392 = vmatmul.mubr.bf16.gmra.mxu0 %v3499
    %v5393 = vpop.f32.mrf.mxu0
    %v5394 = vadd.f32 %v3298, %v5393
    %v5395 = vpop.f32.mrf.mxu0
    %v5396 = vadd.f32 %v3302, %v5395
    %v5397 = vpop.f32.mrf.mxu0
    %v5398 = vadd.f32 %v3298, %v5397
    %v5399 = vpop.f32.mrf.mxu0
    %v5400 = vadd.f32 %v3302, %v5399
    %5401 = vmatprep.mubr.bf16.mxu0 %v3508
    %5402 = vmatmul.mubr.bf16.gmra.mxu0 %v3507
    %v5403 = vpop.f32.mrf.mxu0
    %v5404 = vadd.f32 %v3298, %v5403
    %v5405 = vpop.f32.mrf.mxu0
    %v5406 = vadd.f32 %v3302, %v5405
    %v5407 = vpop.f32.mrf.mxu0
    %v5408 = vadd.f32 %v3298, %v5407
    %v5409 = vpop.f32.mrf.mxu0
    %v5410 = vadd.f32 %v3302, %v5409
    %5411 = vmatprep.mubr.bf16.mxu0 %v3516
    %5412 = vmatmul.mubr.bf16.gmra.mxu0 %v3515
    %v5413 = vpop.f32.mrf.mxu0
    %v5414 = vadd.f32 %v3298, %v5413
    %v5415 = vpop.f32.mrf.mxu0
    %v5416 = vadd.f32 %v3302, %v5415
    %v5417 = vpop.f32.mrf.mxu0
    %v5418 = vadd.f32 %v3298, %v5417
    %v5419 = vpop.f32.mrf.mxu0
    %v5420 = vadd.f32 %v3302, %v5419
    %5421 = vmatprep.mubr.bf16.mxu0 %v3524
    %5422 = vmatmul.mubr.bf16.gmra.mxu0 %v3523
    %v5423 = vpop.f32.mrf.mxu0
    %v5424 = vadd.f32 %v3298, %v5423
    %v5425 = vpop.f32.mrf.mxu0
    %v5426 = vadd.f32 %v3302, %v5425
    %v5427 = vpop.f32.mrf.mxu0
    %v5428 = vadd.f32 %v3298, %v5427
    %v5429 = vpop.f32.mrf.mxu0
    %v5430 = vadd.f32 %v3302, %v5429
    %5431 = vmatprep.mubr.bf16.mxu0 %v3532
    %5432 = vmatmul.mubr.bf16.gmra.mxu0 %v3531
    %v5433 = vpop.f32.mrf.mxu0
    %v5434 = vadd.f32 %v3298, %v5433
    %v5435 = vpop.f32.mrf.mxu0
    %v5436 = vadd.f32 %v3302, %v5435
    %v5437 = vpop.f32.mrf.mxu0
    %v5438 = vadd.f32 %v3298, %v5437
    %v5439 = vpop.f32.mrf.mxu0
    %v5440 = vadd.f32 %v3302, %v5439
    %5441 = vmatprep.mubr.bf16.mxu0 %v3540
    %5442 = vmatmul.mubr.bf16.gmra.mxu0 %v3539
    %v5443 = vpop.f32.mrf.mxu0
    %v5444 = vadd.f32 %v3298, %v5443
    %v5445 = vpop.f32.mrf.mxu0
    %v5446 = vadd.f32 %v3302, %v5445
    %v5447 = vpop.f32.mrf.mxu0
    %v5448 = vadd.f32 %v3298, %v5447
    %v5449 = vpop.f32.mrf.mxu0
    %v5450 = vadd.f32 %v3302, %v5449
    %5451 = vmatprep.mubr.bf16.mxu0 %v3548
    %5452 = vmatmul.mubr.bf16.gmra.mxu0 %v3547
    %v5453 = vpop.f32.mrf.mxu0
    %v5454 = vadd.f32 %v3298, %v5453
    %v5455 = vpop.f32.mrf.mxu0
    %v5456 = vadd.f32 %v3302, %v5455
    %v5457 = vpop.f32.mrf.mxu0
    %v5458 = vadd.f32 %v3298, %v5457
    %v5459 = vpop.f32.mrf.mxu0
    %v5460 = vadd.f32 %v3302, %v5459
    %5461 = vmatprep.mubr.bf16.mxu0 %v3556
    %5462 = vmatmul.mubr.bf16.gmra.mxu0 %v3555
    %v5463 = vpop.f32.mrf.mxu0
    %v5464 = vadd.f32 %v3298, %v5463
    %v5465 = vpop.f32.mrf.mxu0
    %v5466 = vadd.f32 %v3302, %v5465
    %v5467 = vpop.f32.mrf.mxu0
    %v5468 = vadd.f32 %v3298, %v5467
    %v5469 = vpop.f32.mrf.mxu0
    %v5470 = vadd.f32 %v3302, %v5469
    %5471 = vdwg.mxu0
    %5472 = vmatprep.subr.bf16.mxu0 %v4490
    %5473 = vmatpush1.bf16.msra.mxu0 %v4489
    %5474 = vmatprep.subr.bf16.mxu0 %v4486
    %5475 = vmatpush1.bf16.msra.mxu0 %v4485
    %5476 = vmatprep.subr.bf16.mxu0 %v4482
    %5477 = vmatpush1.bf16.msra.mxu0 %v4481
    %5478 = vmatprep.subr.bf16.mxu0 %v4478
    %5479 = vmatpush1.bf16.msra.mxu0 %v4477
    %5480 = vmatprep.subr.bf16.mxu0 %v4474
    %5481 = vmatpush1.bf16.msra.mxu0 %v4473
    %5482 = vmatprep.subr.bf16.mxu0 %v4470
    %5483 = vmatpush1.bf16.msra.mxu0 %v4469
    %5484 = vmatprep.subr.bf16.mxu0 %v4466
    %5485 = vmatpush1.bf16.msra.mxu0 %v4465
    %5486 = vmatprep.subr.bf16.mxu0 %v4462
    %5487 = vmatpush1.bf16.msra.mxu0 %v4461
    %5488 = vmatprep.subr.bf16.mxu0 %v4522
    %5489 = vmatpush2.bf16.msra.mxu0 %v4521
    %5490 = vmatprep.subr.bf16.mxu0 %v4518
    %5491 = vmatpush2.bf16.msra.mxu0 %v4517
    %5492 = vmatprep.subr.bf16.mxu0 %v4514
    %5493 = vmatpush2.bf16.msra.mxu0 %v4513
    %5494 = vmatprep.subr.bf16.mxu0 %v4510
    %5495 = vmatpush2.bf16.msra.mxu0 %v4509
    %5496 = vmatprep.subr.bf16.mxu0 %v4506
    %5497 = vmatpush2.bf16.msra.mxu0 %v4505
    %5498 = vmatprep.subr.bf16.mxu0 %v4502
    %5499 = vmatpush2.bf16.msra.mxu0 %v4501
    %5500 = vmatprep.subr.bf16.mxu0 %v4498
    %5501 = vmatpush2.bf16.msra.mxu0 %v4497
    %5502 = vmatprep.subr.bf16.mxu0 %v4494
    %5503 = vmatpush2.bf16.msra.mxu0 %v4493
    %5504 = vmatprep.mubr.bf16.mxu0 %v3502
    %5505 = vmatmul.mubr.bf16.gmra.mxu0 %v3501
    %v5506 = vpop.f32.mrf.mxu0
    %v5507 = vadd.f32 %v5394, %v5506
    %v5508 = vpop.f32.mrf.mxu0
    %v5509 = vadd.f32 %v5396, %v5508
    %v5510 = vpop.f32.mrf.mxu0
    %v5511 = vadd.f32 %v5398, %v5510
    %v5512 = vpop.f32.mrf.mxu0
    %v5513 = vadd.f32 %v5400, %v5512
    %5514 = vmatprep.mubr.bf16.mxu0 %v3510
    %5515 = vmatmul.mubr.bf16.gmra.mxu0 %v3509
    %v5516 = vpop.f32.mrf.mxu0
    %v5517 = vadd.f32 %v5404, %v5516
    %v5518 = vpop.f32.mrf.mxu0
    %v5519 = vadd.f32 %v5406, %v5518
    %v5520 = vpop.f32.mrf.mxu0
    %v5521 = vadd.f32 %v5408, %v5520
    %v5522 = vpop.f32.mrf.mxu0
    %v5523 = vadd.f32 %v5410, %v5522
    %5524 = vmatprep.mubr.bf16.mxu0 %v3518
    %5525 = vmatmul.mubr.bf16.gmra.mxu0 %v3517
    %v5526 = vpop.f32.mrf.mxu0
    %v5527 = vadd.f32 %v5414, %v5526
    %v5528 = vpop.f32.mrf.mxu0
    %v5529 = vadd.f32 %v5416, %v5528
    %v5530 = vpop.f32.mrf.mxu0
    %v5531 = vadd.f32 %v5418, %v5530
    %v5532 = vpop.f32.mrf.mxu0
    %v5533 = vadd.f32 %v5420, %v5532
    %5534 = vmatprep.mubr.bf16.mxu0 %v3526
    %5535 = vmatmul.mubr.bf16.gmra.mxu0 %v3525
    %v5536 = vpop.f32.mrf.mxu0
    %v5537 = vadd.f32 %v5424, %v5536
    %v5538 = vpop.f32.mrf.mxu0
    %v5539 = vadd.f32 %v5426, %v5538
    %v5540 = vpop.f32.mrf.mxu0
    %v5541 = vadd.f32 %v5428, %v5540
    %v5542 = vpop.f32.mrf.mxu0
    %v5543 = vadd.f32 %v5430, %v5542
    %5544 = vmatprep.mubr.bf16.mxu0 %v3534
    %5545 = vmatmul.mubr.bf16.gmra.mxu0 %v3533
    %v5546 = vpop.f32.mrf.mxu0
    %v5547 = vadd.f32 %v5434, %v5546
    %v5548 = vpop.f32.mrf.mxu0
    %v5549 = vadd.f32 %v5436, %v5548
    %v5550 = vpop.f32.mrf.mxu0
    %v5551 = vadd.f32 %v5438, %v5550
    %v5552 = vpop.f32.mrf.mxu0
    %v5553 = vadd.f32 %v5440, %v5552
    %5554 = vmatprep.mubr.bf16.mxu0 %v3542
    %5555 = vmatmul.mubr.bf16.gmra.mxu0 %v3541
    %v5556 = vpop.f32.mrf.mxu0
    %v5557 = vadd.f32 %v5444, %v5556
    %v5558 = vpop.f32.mrf.mxu0
    %v5559 = vadd.f32 %v5446, %v5558
    %v5560 = vpop.f32.mrf.mxu0
    %v5561 = vadd.f32 %v5448, %v5560
    %v5562 = vpop.f32.mrf.mxu0
    %v5563 = vadd.f32 %v5450, %v5562
    %5564 = vmatprep.mubr.bf16.mxu0 %v3550
    %5565 = vmatmul.mubr.bf16.gmra.mxu0 %v3549
    %v5566 = vpop.f32.mrf.mxu0
    %v5567 = vadd.f32 %v5454, %v5566
    %v5568 = vpop.f32.mrf.mxu0
    %v5569 = vadd.f32 %v5456, %v5568
    %v5570 = vpop.f32.mrf.mxu0
    %v5571 = vadd.f32 %v5458, %v5570
    %v5572 = vpop.f32.mrf.mxu0
    %v5573 = vadd.f32 %v5460, %v5572
    %5574 = vmatprep.mubr.bf16.mxu0 %v3558
    %5575 = vmatmul.mubr.bf16.gmra.mxu0 %v3557
    %v5576 = vpop.f32.mrf.mxu0
    %v5577 = vadd.f32 %v5464, %v5576
    %v5578 = vpop.f32.mrf.mxu0
    %v5579 = vadd.f32 %v5466, %v5578
    %v5580 = vpop.f32.mrf.mxu0
    %v5581 = vadd.f32 %v5468, %v5580
    %v5582 = vpop.f32.mrf.mxu0
    %v5583 = vadd.f32 %v5470, %v5582
    %5584 = vdwg.mxu0
    %5585 = vmatprep.subr.bf16.mxu0 %v4554
    %5586 = vmatpush1.bf16.msra.mxu0 %v4553
    %5587 = vmatprep.subr.bf16.mxu0 %v4550
    %5588 = vmatpush1.bf16.msra.mxu0 %v4549
    %5589 = vmatprep.subr.bf16.mxu0 %v4546
    %5590 = vmatpush1.bf16.msra.mxu0 %v4545
    %5591 = vmatprep.subr.bf16.mxu0 %v4542
    %5592 = vmatpush1.bf16.msra.mxu0 %v4541
    %5593 = vmatprep.subr.bf16.mxu0 %v4538
    %5594 = vmatpush1.bf16.msra.mxu0 %v4537
    %5595 = vmatprep.subr.bf16.mxu0 %v4534
    %5596 = vmatpush1.bf16.msra.mxu0 %v4533
    %5597 = vmatprep.subr.bf16.mxu0 %v4530
    %5598 = vmatpush1.bf16.msra.mxu0 %v4529
    %5599 = vmatprep.subr.bf16.mxu0 %v4526
    %5600 = vmatpush1.bf16.msra.mxu0 %v4525
    %5601 = vmatprep.subr.bf16.mxu0 %v4586
    %5602 = vmatpush2.bf16.msra.mxu0 %v4585
    %5603 = vmatprep.subr.bf16.mxu0 %v4582
    %5604 = vmatpush2.bf16.msra.mxu0 %v4581
    %5605 = vmatprep.subr.bf16.mxu0 %v4578
    %5606 = vmatpush2.bf16.msra.mxu0 %v4577
    %5607 = vmatprep.subr.bf16.mxu0 %v4574
    %5608 = vmatpush2.bf16.msra.mxu0 %v4573
    %5609 = vmatprep.subr.bf16.mxu0 %v4570
    %5610 = vmatpush2.bf16.msra.mxu0 %v4569
    %5611 = vmatprep.subr.bf16.mxu0 %v4566
    %5612 = vmatpush2.bf16.msra.mxu0 %v4565
    %5613 = vmatprep.subr.bf16.mxu0 %v4562
    %5614 = vmatpush2.bf16.msra.mxu0 %v4561
    %5615 = vmatprep.subr.bf16.mxu0 %v4558
    %5616 = vmatpush2.bf16.msra.mxu0 %v4557
    %5617 = vmatprep.mubr.bf16.mxu0 %v3504
    %5618 = vmatmul.mubr.bf16.gmra.mxu0 %v3503
    %v5619 = vpop.f32.mrf.mxu0
    %v5620 = vadd.f32 %v5507, %v5619
    %v5621 = vpop.f32.mrf.mxu0
    %v5622 = vadd.f32 %v5509, %v5621
    %v5623 = vpop.f32.mrf.mxu0
    %v5624 = vadd.f32 %v5511, %v5623
    %v5625 = vpop.f32.mrf.mxu0
    %v5626 = vadd.f32 %v5513, %v5625
    %5627 = vmatprep.mubr.bf16.mxu0 %v3512
    %5628 = vmatmul.mubr.bf16.gmra.mxu0 %v3511
    %v5629 = vpop.f32.mrf.mxu0
    %v5630 = vadd.f32 %v5517, %v5629
    %v5631 = vpop.f32.mrf.mxu0
    %v5632 = vadd.f32 %v5519, %v5631
    %v5633 = vpop.f32.mrf.mxu0
    %v5634 = vadd.f32 %v5521, %v5633
    %v5635 = vpop.f32.mrf.mxu0
    %v5636 = vadd.f32 %v5523, %v5635
    %5637 = vmatprep.mubr.bf16.mxu0 %v3520
    %5638 = vmatmul.mubr.bf16.gmra.mxu0 %v3519
    %v5639 = vpop.f32.mrf.mxu0
    %v5640 = vadd.f32 %v5527, %v5639
    %v5641 = vpop.f32.mrf.mxu0
    %v5642 = vadd.f32 %v5529, %v5641
    %v5643 = vpop.f32.mrf.mxu0
    %v5644 = vadd.f32 %v5531, %v5643
    %v5645 = vpop.f32.mrf.mxu0
    %v5646 = vadd.f32 %v5533, %v5645
    %5647 = vmatprep.mubr.bf16.mxu0 %v3528
    %5648 = vmatmul.mubr.bf16.gmra.mxu0 %v3527
    %v5649 = vpop.f32.mrf.mxu0
    %v5650 = vadd.f32 %v5537, %v5649
    %v5651 = vpop.f32.mrf.mxu0
    %v5652 = vadd.f32 %v5539, %v5651
    %v5653 = vpop.f32.mrf.mxu0
    %v5654 = vadd.f32 %v5541, %v5653
    %v5655 = vpop.f32.mrf.mxu0
    %v5656 = vadd.f32 %v5543, %v5655
    %5657 = vmatprep.mubr.bf16.mxu0 %v3536
    %5658 = vmatmul.mubr.bf16.gmra.mxu0 %v3535
    %v5659 = vpop.f32.mrf.mxu0
    %v5660 = vadd.f32 %v5547, %v5659
    %v5661 = vpop.f32.mrf.mxu0
    %v5662 = vadd.f32 %v5549, %v5661
    %v5663 = vpop.f32.mrf.mxu0
    %v5664 = vadd.f32 %v5551, %v5663
    %v5665 = vpop.f32.mrf.mxu0
    %v5666 = vadd.f32 %v5553, %v5665
    %5667 = vmatprep.mubr.bf16.mxu0 %v3544
    %5668 = vmatmul.mubr.bf16.gmra.mxu0 %v3543
    %v5669 = vpop.f32.mrf.mxu0
    %v5670 = vadd.f32 %v5557, %v5669
    %v5671 = vpop.f32.mrf.mxu0
    %v5672 = vadd.f32 %v5559, %v5671
    %v5673 = vpop.f32.mrf.mxu0
    %v5674 = vadd.f32 %v5561, %v5673
    %v5675 = vpop.f32.mrf.mxu0
    %v5676 = vadd.f32 %v5563, %v5675
    %5677 = vmatprep.mubr.bf16.mxu0 %v3552
    %5678 = vmatmul.mubr.bf16.gmra.mxu0 %v3551
    %v5679 = vpop.f32.mrf.mxu0
    %v5680 = vadd.f32 %v5567, %v5679
    %v5681 = vpop.f32.mrf.mxu0
    %v5682 = vadd.f32 %v5569, %v5681
    %v5683 = vpop.f32.mrf.mxu0
    %v5684 = vadd.f32 %v5571, %v5683
    %v5685 = vpop.f32.mrf.mxu0
    %v5686 = vadd.f32 %v5573, %v5685
    %5687 = vmatprep.mubr.bf16.mxu0 %v3560
    %5688 = vmatmul.mubr.bf16.gmra.mxu0 %v3559
    %v5689 = vpop.f32.mrf.mxu0
    %v5690 = vadd.f32 %v5577, %v5689
    %v5691 = vpop.f32.mrf.mxu0
    %v5692 = vadd.f32 %v5579, %v5691
    %v5693 = vpop.f32.mrf.mxu0
    %v5694 = vadd.f32 %v5581, %v5693
    %v5695 = vpop.f32.mrf.mxu0
    %v5696 = vadd.f32 %v5583, %v5695
    %5697 = vdwg.mxu0
    %5698 = vmatprep.subr.bf16.mxu0 %v4618
    %5699 = vmatpush1.bf16.msra.mxu0 %v4617
    %5700 = vmatprep.subr.bf16.mxu0 %v4614
    %5701 = vmatpush1.bf16.msra.mxu0 %v4613
    %5702 = vmatprep.subr.bf16.mxu0 %v4610
    %5703 = vmatpush1.bf16.msra.mxu0 %v4609
    %5704 = vmatprep.subr.bf16.mxu0 %v4606
    %5705 = vmatpush1.bf16.msra.mxu0 %v4605
    %5706 = vmatprep.subr.bf16.mxu0 %v4602
    %5707 = vmatpush1.bf16.msra.mxu0 %v4601
    %5708 = vmatprep.subr.bf16.mxu0 %v4598
    %5709 = vmatpush1.bf16.msra.mxu0 %v4597
    %5710 = vmatprep.subr.bf16.mxu0 %v4594
    %5711 = vmatpush1.bf16.msra.mxu0 %v4593
    %5712 = vmatprep.subr.bf16.mxu0 %v4590
    %5713 = vmatpush1.bf16.msra.mxu0 %v4589
    %5714 = vmatprep.subr.bf16.mxu0 %v4650
    %5715 = vmatpush2.bf16.msra.mxu0 %v4649
    %5716 = vmatprep.subr.bf16.mxu0 %v4646
    %5717 = vmatpush2.bf16.msra.mxu0 %v4645
    %5718 = vmatprep.subr.bf16.mxu0 %v4642
    %5719 = vmatpush2.bf16.msra.mxu0 %v4641
    %5720 = vmatprep.subr.bf16.mxu0 %v4638
    %5721 = vmatpush2.bf16.msra.mxu0 %v4637
    %5722 = vmatprep.subr.bf16.mxu0 %v4634
    %5723 = vmatpush2.bf16.msra.mxu0 %v4633
    %5724 = vmatprep.subr.bf16.mxu0 %v4630
    %5725 = vmatpush2.bf16.msra.mxu0 %v4629
    %5726 = vmatprep.subr.bf16.mxu0 %v4626
    %5727 = vmatpush2.bf16.msra.mxu0 %v4625
    %5728 = vmatprep.subr.bf16.mxu0 %v4622
    %5729 = vmatpush2.bf16.msra.mxu0 %v4621
    %5730 = vmatprep.mubr.bf16.mxu0 %v3506
    %5731 = vmatmul.mubr.bf16.gmra.mxu0 %v3505
    %v5732 = vpop.f32.mrf.mxu0
    %v5733 = vadd.f32 %v5620, %v5732
    %v5734 = vpop.f32.mrf.mxu0
    %v5735 = vadd.f32 %v5622, %v5734
    %v5736 = vpop.f32.mrf.mxu0
    %v5737 = vadd.f32 %v5624, %v5736
    %v5738 = vpop.f32.mrf.mxu0
    %v5739 = vadd.f32 %v5626, %v5738
    %5740 = vmatprep.mubr.bf16.mxu0 %v3514
    %5741 = vmatmul.mubr.bf16.gmra.mxu0 %v3513
    %v5742 = vpop.f32.mrf.mxu0
    %v5743 = vadd.f32 %v5630, %v5742
    %v5744 = vpop.f32.mrf.mxu0
    %v5745 = vadd.f32 %v5632, %v5744
    %v5746 = vpop.f32.mrf.mxu0
    %v5747 = vadd.f32 %v5634, %v5746
    %v5748 = vpop.f32.mrf.mxu0
    %v5749 = vadd.f32 %v5636, %v5748
    %5750 = vmatprep.mubr.bf16.mxu0 %v3522
    %5751 = vmatmul.mubr.bf16.gmra.mxu0 %v3521
    %v5752 = vpop.f32.mrf.mxu0
    %v5753 = vadd.f32 %v5640, %v5752
    %v5754 = vpop.f32.mrf.mxu0
    %v5755 = vadd.f32 %v5642, %v5754
    %v5756 = vpop.f32.mrf.mxu0
    %v5757 = vadd.f32 %v5644, %v5756
    %v5758 = vpop.f32.mrf.mxu0
    %v5759 = vadd.f32 %v5646, %v5758
    %5760 = vmatprep.mubr.bf16.mxu0 %v3530
    %5761 = vmatmul.mubr.bf16.gmra.mxu0 %v3529
    %v5762 = vpop.f32.mrf.mxu0
    %v5763 = vadd.f32 %v5650, %v5762
    %v5764 = vpop.f32.mrf.mxu0
    %v5765 = vadd.f32 %v5652, %v5764
    %v5766 = vpop.f32.mrf.mxu0
    %v5767 = vadd.f32 %v5654, %v5766
    %v5768 = vpop.f32.mrf.mxu0
    %v5769 = vadd.f32 %v5656, %v5768
    %5770 = vmatprep.mubr.bf16.mxu0 %v3538
    %5771 = vmatmul.mubr.bf16.gmra.mxu0 %v3537
    %v5772 = vpop.f32.mrf.mxu0
    %v5773 = vadd.f32 %v5660, %v5772
    %v5774 = vpop.f32.mrf.mxu0
    %v5775 = vadd.f32 %v5662, %v5774
    %v5776 = vpop.f32.mrf.mxu0
    %v5777 = vadd.f32 %v5664, %v5776
    %v5778 = vpop.f32.mrf.mxu0
    %v5779 = vadd.f32 %v5666, %v5778
    %5780 = vmatprep.mubr.bf16.mxu0 %v3546
    %5781 = vmatmul.mubr.bf16.gmra.mxu0 %v3545
    %v5782 = vpop.f32.mrf.mxu0
    %v5783 = vadd.f32 %v5670, %v5782
    %v5784 = vpop.f32.mrf.mxu0
    %v5785 = vadd.f32 %v5672, %v5784
    %v5786 = vpop.f32.mrf.mxu0
    %v5787 = vadd.f32 %v5674, %v5786
    %v5788 = vpop.f32.mrf.mxu0
    %v5789 = vadd.f32 %v5676, %v5788
    %5790 = vmatprep.mubr.bf16.mxu0 %v3554
    %5791 = vmatmul.mubr.bf16.gmra.mxu0 %v3553
    %v5792 = vpop.f32.mrf.mxu0
    %v5793 = vadd.f32 %v5680, %v5792
    %v5794 = vpop.f32.mrf.mxu0
    %v5795 = vadd.f32 %v5682, %v5794
    %v5796 = vpop.f32.mrf.mxu0
    %v5797 = vadd.f32 %v5684, %v5796
    %v5798 = vpop.f32.mrf.mxu0
    %v5799 = vadd.f32 %v5686, %v5798
    %5800 = vmatprep.mubr.bf16.mxu0 %v3562
    %5801 = vmatmul.mubr.bf16.gmra.mxu0 %v3561
    %v5802 = vpop.f32.mrf.mxu0
    %v5803 = vadd.f32 %v5690, %v5802
    %v5804 = vpop.f32.mrf.mxu0
    %v5805 = vadd.f32 %v5692, %v5804
    %v5806 = vpop.f32.mrf.mxu0
    %v5807 = vadd.f32 %v5694, %v5806
    %v5808 = vpop.f32.mrf.mxu0
    %v5809 = vadd.f32 %v5696, %v5808
    %5810 = vdwg.mxu0
    %v5811 = vld [vmem:[#allocation7] sm:$0xff]
    %v5812 = vld [vmem:[#allocation7 + $0x8] sm:$0xff]
    %v5813 = vld [vmem:[#allocation7 + $0x10] sm:$0xff]
    %v5814 = vld [vmem:[#allocation7 + $0x18] sm:$0xff]
    %v5815 = vld [vmem:[#allocation7 + $0x20] sm:$0xff]
    %v5816 = vld [vmem:[#allocation7 + $0x28] sm:$0xff]
    %v5817 = vld [vmem:[#allocation7 + $0x30] sm:$0xff]
    %v5818 = vld [vmem:[#allocation7 + $0x38] sm:$0xff]
    %v5819 = vld [vmem:[#allocation7 + $0x40] sm:$0xff]
    %v5820 = vld [vmem:[#allocation7 + $0x48] sm:$0xff]
    %v5821 = vld [vmem:[#allocation7 + $0x50] sm:$0xff]
    %v5822 = vld [vmem:[#allocation7 + $0x58] sm:$0xff]
    %v5823 = vld [vmem:[#allocation7 + $0x60] sm:$0xff]
    %v5824 = vld [vmem:[#allocation7 + $0x68] sm:$0xff]
    %v5825 = vld [vmem:[#allocation7 + $0x70] sm:$0xff]
    %v5826 = vld [vmem:[#allocation7 + $0x78] sm:$0xff]
    %v5827 = vld [vmem:[#allocation7 + $0x80] sm:$0xff]
    %v5828 = vld [vmem:[#allocation7 + $0x88] sm:$0xff]
    %v5829 = vld [vmem:[#allocation7 + $0x90] sm:$0xff]
    %v5830 = vld [vmem:[#allocation7 + $0x98] sm:$0xff]
    %v5831 = vld [vmem:[#allocation7 + $0xa0] sm:$0xff]
    %v5832 = vld [vmem:[#allocation7 + $0xa8] sm:$0xff]
    %v5833 = vld [vmem:[#allocation7 + $0xb0] sm:$0xff]
    %v5834 = vld [vmem:[#allocation7 + $0xb8] sm:$0xff]
    %v5835 = vld [vmem:[#allocation7 + $0xc0] sm:$0xff]
    %v5836 = vld [vmem:[#allocation7 + $0xc8] sm:$0xff]
    %v5837 = vld [vmem:[#allocation7 + $0xd0] sm:$0xff]
    %v5838 = vld [vmem:[#allocation7 + $0xd8] sm:$0xff]
    %v5839 = vld [vmem:[#allocation7 + $0xe0] sm:$0xff]
    %v5840 = vld [vmem:[#allocation7 + $0xe8] sm:$0xff]
    %v5841 = vld [vmem:[#allocation7 + $0xf0] sm:$0xff]
    %v5842 = vld [vmem:[#allocation7 + $0xf8] sm:$0xff]
    %v5843 = vld [vmem:[#allocation7 + $0x100] sm:$0xff]
    %v5844 = vld [vmem:[#allocation7 + $0x108] sm:$0xff]
    %v5845 = vld [vmem:[#allocation7 + $0x110] sm:$0xff]
    %v5846 = vld [vmem:[#allocation7 + $0x118] sm:$0xff]
    %v5847 = vld [vmem:[#allocation7 + $0x120] sm:$0xff]
    %v5848 = vld [vmem:[#allocation7 + $0x128] sm:$0xff]
    %v5849 = vld [vmem:[#allocation7 + $0x130] sm:$0xff]
    %v5850 = vld [vmem:[#allocation7 + $0x138] sm:$0xff]
    %v5851 = vld [vmem:[#allocation7 + $0x140] sm:$0xff]
    %v5852 = vld [vmem:[#allocation7 + $0x148] sm:$0xff]
    %v5853 = vld [vmem:[#allocation7 + $0x150] sm:$0xff]
    %v5854 = vld [vmem:[#allocation7 + $0x158] sm:$0xff]
    %v5855 = vld [vmem:[#allocation7 + $0x160] sm:$0xff]
    %v5856 = vld [vmem:[#allocation7 + $0x168] sm:$0xff]
    %v5857 = vld [vmem:[#allocation7 + $0x170] sm:$0xff]
    %v5858 = vld [vmem:[#allocation7 + $0x178] sm:$0xff]
    %v5859 = vld [vmem:[#allocation7 + $0x180] sm:$0xff]
    %v5860 = vld [vmem:[#allocation7 + $0x188] sm:$0xff]
    %v5861 = vld [vmem:[#allocation7 + $0x190] sm:$0xff]
    %v5862 = vld [vmem:[#allocation7 + $0x198] sm:$0xff]
    %v5863 = vld [vmem:[#allocation7 + $0x1a0] sm:$0xff]
    %v5864 = vld [vmem:[#allocation7 + $0x1a8] sm:$0xff]
    %v5865 = vld [vmem:[#allocation7 + $0x1b0] sm:$0xff]
    %v5866 = vld [vmem:[#allocation7 + $0x1b8] sm:$0xff]
    %v5867 = vld [vmem:[#allocation7 + $0x1c0] sm:$0xff]
    %v5868 = vld [vmem:[#allocation7 + $0x1c8] sm:$0xff]
    %v5869 = vld [vmem:[#allocation7 + $0x1d0] sm:$0xff]
    %v5870 = vld [vmem:[#allocation7 + $0x1d8] sm:$0xff]
    %v5871 = vld [vmem:[#allocation7 + $0x1e0] sm:$0xff]
    %v5872 = vld [vmem:[#allocation7 + $0x1e8] sm:$0xff]
    %v5873 = vld [vmem:[#allocation7 + $0x1f0] sm:$0xff]
    %v5874 = vld [vmem:[#allocation7 + $0x1f8] sm:$0xff]
    %v5875 = vld [vmem:[#allocation11] sm:$0xff]
    %v5876 = vld [vmem:[#allocation11 + $0x8] sm:$0xff]
    %v5877 = vld [vmem:[#allocation11 + $0x10] sm:$0xff]
    %v5878 = vld [vmem:[#allocation11 + $0x18] sm:$0xff]
    %v5879 = vld [vmem:[#allocation11 + $0x20] sm:$0xff]
    %v5880 = vld [vmem:[#allocation11 + $0x28] sm:$0xff]
    %v5881 = vld [vmem:[#allocation11 + $0x30] sm:$0xff]
    %v5882 = vld [vmem:[#allocation11 + $0x38] sm:$0xff]
    %v5883 = vld [vmem:[#allocation11 + $0x40] sm:$0xff]
    %v5884 = vld [vmem:[#allocation11 + $0x48] sm:$0xff]
    %v5885 = vld [vmem:[#allocation11 + $0x50] sm:$0xff]
    %v5886 = vld [vmem:[#allocation11 + $0x58] sm:$0xff]
    %v5887 = vld [vmem:[#allocation11 + $0x60] sm:$0xff]
    %v5888 = vld [vmem:[#allocation11 + $0x68] sm:$0xff]
    %v5889 = vld [vmem:[#allocation11 + $0x70] sm:$0xff]
    %v5890 = vld [vmem:[#allocation11 + $0x78] sm:$0xff]
    %v5891 = vld [vmem:[#allocation11 + $0x80] sm:$0xff]
    %v5892 = vld [vmem:[#allocation11 + $0x88] sm:$0xff]
    %v5893 = vld [vmem:[#allocation11 + $0x90] sm:$0xff]
    %v5894 = vld [vmem:[#allocation11 + $0x98] sm:$0xff]
    %v5895 = vld [vmem:[#allocation11 + $0xa0] sm:$0xff]
    %v5896 = vld [vmem:[#allocation11 + $0xa8] sm:$0xff]
    %v5897 = vld [vmem:[#allocation11 + $0xb0] sm:$0xff]
    %v5898 = vld [vmem:[#allocation11 + $0xb8] sm:$0xff]
    %v5899 = vld [vmem:[#allocation11 + $0xc0] sm:$0xff]
    %v5900 = vld [vmem:[#allocation11 + $0xc8] sm:$0xff]
    %v5901 = vld [vmem:[#allocation11 + $0xd0] sm:$0xff]
    %v5902 = vld [vmem:[#allocation11 + $0xd8] sm:$0xff]
    %v5903 = vld [vmem:[#allocation11 + $0xe0] sm:$0xff]
    %v5904 = vld [vmem:[#allocation11 + $0xe8] sm:$0xff]
    %v5905 = vld [vmem:[#allocation11 + $0xf0] sm:$0xff]
    %v5906 = vld [vmem:[#allocation11 + $0xf8] sm:$0xff]
    %v5907 = vld [vmem:[#allocation11 + $0x100] sm:$0xff]
    %v5908 = vld [vmem:[#allocation11 + $0x108] sm:$0xff]
    %v5909 = vld [vmem:[#allocation11 + $0x110] sm:$0xff]
    %v5910 = vld [vmem:[#allocation11 + $0x118] sm:$0xff]
    %v5911 = vld [vmem:[#allocation11 + $0x120] sm:$0xff]
    %v5912 = vld [vmem:[#allocation11 + $0x128] sm:$0xff]
    %v5913 = vld [vmem:[#allocation11 + $0x130] sm:$0xff]
    %v5914 = vld [vmem:[#allocation11 + $0x138] sm:$0xff]
    %v5915 = vld [vmem:[#allocation11 + $0x140] sm:$0xff]
    %v5916 = vld [vmem:[#allocation11 + $0x148] sm:$0xff]
    %v5917 = vld [vmem:[#allocation11 + $0x150] sm:$0xff]
    %v5918 = vld [vmem:[#allocation11 + $0x158] sm:$0xff]
    %v5919 = vld [vmem:[#allocation11 + $0x160] sm:$0xff]
    %v5920 = vld [vmem:[#allocation11 + $0x168] sm:$0xff]
    %v5921 = vld [vmem:[#allocation11 + $0x170] sm:$0xff]
    %v5922 = vld [vmem:[#allocation11 + $0x178] sm:$0xff]
    %v5923 = vld [vmem:[#allocation11 + $0x180] sm:$0xff]
    %v5924 = vld [vmem:[#allocation11 + $0x188] sm:$0xff]
    %v5925 = vld [vmem:[#allocation11 + $0x190] sm:$0xff]
    %v5926 = vld [vmem:[#allocation11 + $0x198] sm:$0xff]
    %v5927 = vld [vmem:[#allocation11 + $0x1a0] sm:$0xff]
    %v5928 = vld [vmem:[#allocation11 + $0x1a8] sm:$0xff]
    %v5929 = vld [vmem:[#allocation11 + $0x1b0] sm:$0xff]
    %v5930 = vld [vmem:[#allocation11 + $0x1b8] sm:$0xff]
    %v5931 = vld [vmem:[#allocation11 + $0x1c0] sm:$0xff]
    %v5932 = vld [vmem:[#allocation11 + $0x1c8] sm:$0xff]
    %v5933 = vld [vmem:[#allocation11 + $0x1d0] sm:$0xff]
    %v5934 = vld [vmem:[#allocation11 + $0x1d8] sm:$0xff]
    %v5935 = vld [vmem:[#allocation11 + $0x1e0] sm:$0xff]
    %v5936 = vld [vmem:[#allocation11 + $0x1e8] sm:$0xff]
    %v5937 = vld [vmem:[#allocation11 + $0x1f0] sm:$0xff]
    %v5938 = vld [vmem:[#allocation11 + $0x1f8] sm:$0xff]
    %v5939 = vld [vmem:[#allocation11 + $0x200] sm:$0xff]
    %v5940 = vld [vmem:[#allocation11 + $0x208] sm:$0xff]
    %v5941 = vld [vmem:[#allocation11 + $0x210] sm:$0xff]
    %v5942 = vld [vmem:[#allocation11 + $0x218] sm:$0xff]
    %v5943 = vld [vmem:[#allocation11 + $0x220] sm:$0xff]
    %v5944 = vld [vmem:[#allocation11 + $0x228] sm:$0xff]
    %v5945 = vld [vmem:[#allocation11 + $0x230] sm:$0xff]
    %v5946 = vld [vmem:[#allocation11 + $0x238] sm:$0xff]
    %v5947 = vld [vmem:[#allocation11 + $0x240] sm:$0xff]
    %v5948 = vld [vmem:[#allocation11 + $0x248] sm:$0xff]
    %v5949 = vld [vmem:[#allocation11 + $0x250] sm:$0xff]
    %v5950 = vld [vmem:[#allocation11 + $0x258] sm:$0xff]
    %v5951 = vld [vmem:[#allocation11 + $0x260] sm:$0xff]
    %v5952 = vld [vmem:[#allocation11 + $0x268] sm:$0xff]
    %v5953 = vld [vmem:[#allocation11 + $0x270] sm:$0xff]
    %v5954 = vld [vmem:[#allocation11 + $0x278] sm:$0xff]
    %v5955 = vld [vmem:[#allocation11 + $0x280] sm:$0xff]
    %v5956 = vld [vmem:[#allocation11 + $0x288] sm:$0xff]
    %v5957 = vld [vmem:[#allocation11 + $0x290] sm:$0xff]
    %v5958 = vld [vmem:[#allocation11 + $0x298] sm:$0xff]
    %v5959 = vld [vmem:[#allocation11 + $0x2a0] sm:$0xff]
    %v5960 = vld [vmem:[#allocation11 + $0x2a8] sm:$0xff]
    %v5961 = vld [vmem:[#allocation11 + $0x2b0] sm:$0xff]
    %v5962 = vld [vmem:[#allocation11 + $0x2b8] sm:$0xff]
    %v5963 = vld [vmem:[#allocation11 + $0x2c0] sm:$0xff]
    %v5964 = vld [vmem:[#allocation11 + $0x2c8] sm:$0xff]
    %v5965 = vld [vmem:[#allocation11 + $0x2d0] sm:$0xff]
    %v5966 = vld [vmem:[#allocation11 + $0x2d8] sm:$0xff]
    %v5967 = vld [vmem:[#allocation11 + $0x2e0] sm:$0xff]
    %v5968 = vld [vmem:[#allocation11 + $0x2e8] sm:$0xff]
    %v5969 = vld [vmem:[#allocation11 + $0x2f0] sm:$0xff]
    %v5970 = vld [vmem:[#allocation11 + $0x2f8] sm:$0xff]
    %v5971 = vld [vmem:[#allocation11 + $0x300] sm:$0xff]
    %v5972 = vld [vmem:[#allocation11 + $0x308] sm:$0xff]
    %v5973 = vld [vmem:[#allocation11 + $0x310] sm:$0xff]
    %v5974 = vld [vmem:[#allocation11 + $0x318] sm:$0xff]
    %v5975 = vld [vmem:[#allocation11 + $0x320] sm:$0xff]
    %v5976 = vld [vmem:[#allocation11 + $0x328] sm:$0xff]
    %v5977 = vld [vmem:[#allocation11 + $0x330] sm:$0xff]
    %v5978 = vld [vmem:[#allocation11 + $0x338] sm:$0xff]
    %v5979 = vld [vmem:[#allocation11 + $0x340] sm:$0xff]
    %v5980 = vld [vmem:[#allocation11 + $0x348] sm:$0xff]
    %v5981 = vld [vmem:[#allocation11 + $0x350] sm:$0xff]
    %v5982 = vld [vmem:[#allocation11 + $0x358] sm:$0xff]
    %v5983 = vld [vmem:[#allocation11 + $0x360] sm:$0xff]
    %v5984 = vld [vmem:[#allocation11 + $0x368] sm:$0xff]
    %v5985 = vld [vmem:[#allocation11 + $0x370] sm:$0xff]
    %v5986 = vld [vmem:[#allocation11 + $0x378] sm:$0xff]
    %v5987 = vld [vmem:[#allocation11 + $0x380] sm:$0xff]
    %v5988 = vld [vmem:[#allocation11 + $0x388] sm:$0xff]
    %v5989 = vld [vmem:[#allocation11 + $0x390] sm:$0xff]
    %v5990 = vld [vmem:[#allocation11 + $0x398] sm:$0xff]
    %v5991 = vld [vmem:[#allocation11 + $0x3a0] sm:$0xff]
    %v5992 = vld [vmem:[#allocation11 + $0x3a8] sm:$0xff]
    %v5993 = vld [vmem:[#allocation11 + $0x3b0] sm:$0xff]
    %v5994 = vld [vmem:[#allocation11 + $0x3b8] sm:$0xff]
    %v5995 = vld [vmem:[#allocation11 + $0x3c0] sm:$0xff]
    %v5996 = vld [vmem:[#allocation11 + $0x3c8] sm:$0xff]
    %v5997 = vld [vmem:[#allocation11 + $0x3d0] sm:$0xff]
    %v5998 = vld [vmem:[#allocation11 + $0x3d8] sm:$0xff]
    %v5999 = vld [vmem:[#allocation11 + $0x3e0] sm:$0xff]
    %v6000 = vld [vmem:[#allocation11 + $0x3e8] sm:$0xff]
    %v6001 = vld [vmem:[#allocation11 + $0x3f0] sm:$0xff]
    %v6002 = vld [vmem:[#allocation11 + $0x3f8] sm:$0xff]
    %v6003 = vld [vmem:[#allocation11 + $0x400] sm:$0xff]
    %v6004 = vld [vmem:[#allocation11 + $0x408] sm:$0xff]
    %v6005 = vld [vmem:[#allocation11 + $0x410] sm:$0xff]
    %v6006 = vld [vmem:[#allocation11 + $0x418] sm:$0xff]
    %v6007 = vld [vmem:[#allocation11 + $0x420] sm:$0xff]
    %v6008 = vld [vmem:[#allocation11 + $0x428] sm:$0xff]
    %v6009 = vld [vmem:[#allocation11 + $0x430] sm:$0xff]
    %v6010 = vld [vmem:[#allocation11 + $0x438] sm:$0xff]
    %v6011 = vld [vmem:[#allocation11 + $0x440] sm:$0xff]
    %v6012 = vld [vmem:[#allocation11 + $0x448] sm:$0xff]
    %v6013 = vld [vmem:[#allocation11 + $0x450] sm:$0xff]
    %v6014 = vld [vmem:[#allocation11 + $0x458] sm:$0xff]
    %v6015 = vld [vmem:[#allocation11 + $0x460] sm:$0xff]
    %v6016 = vld [vmem:[#allocation11 + $0x468] sm:$0xff]
    %v6017 = vld [vmem:[#allocation11 + $0x470] sm:$0xff]
    %v6018 = vld [vmem:[#allocation11 + $0x478] sm:$0xff]
    %v6019 = vld [vmem:[#allocation11 + $0x480] sm:$0xff]
    %v6020 = vld [vmem:[#allocation11 + $0x488] sm:$0xff]
    %v6021 = vld [vmem:[#allocation11 + $0x490] sm:$0xff]
    %v6022 = vld [vmem:[#allocation11 + $0x498] sm:$0xff]
    %v6023 = vld [vmem:[#allocation11 + $0x4a0] sm:$0xff]
    %v6024 = vld [vmem:[#allocation11 + $0x4a8] sm:$0xff]
    %v6025 = vld [vmem:[#allocation11 + $0x4b0] sm:$0xff]
    %v6026 = vld [vmem:[#allocation11 + $0x4b8] sm:$0xff]
    %v6027 = vld [vmem:[#allocation11 + $0x4c0] sm:$0xff]
    %v6028 = vld [vmem:[#allocation11 + $0x4c8] sm:$0xff]
    %v6029 = vld [vmem:[#allocation11 + $0x4d0] sm:$0xff]
    %v6030 = vld [vmem:[#allocation11 + $0x4d8] sm:$0xff]
    %v6031 = vld [vmem:[#allocation11 + $0x4e0] sm:$0xff]
    %v6032 = vld [vmem:[#allocation11 + $0x4e8] sm:$0xff]
    %v6033 = vld [vmem:[#allocation11 + $0x4f0] sm:$0xff]
    %v6034 = vld [vmem:[#allocation11 + $0x4f8] sm:$0xff]
    %v6035 = vld [vmem:[#allocation11 + $0x500] sm:$0xff]
    %v6036 = vld [vmem:[#allocation11 + $0x508] sm:$0xff]
    %v6037 = vld [vmem:[#allocation11 + $0x510] sm:$0xff]
    %v6038 = vld [vmem:[#allocation11 + $0x518] sm:$0xff]
    %v6039 = vld [vmem:[#allocation11 + $0x520] sm:$0xff]
    %v6040 = vld [vmem:[#allocation11 + $0x528] sm:$0xff]
    %v6041 = vld [vmem:[#allocation11 + $0x530] sm:$0xff]
    %v6042 = vld [vmem:[#allocation11 + $0x538] sm:$0xff]
    %v6043 = vld [vmem:[#allocation11 + $0x540] sm:$0xff]
    %v6044 = vld [vmem:[#allocation11 + $0x548] sm:$0xff]
    %v6045 = vld [vmem:[#allocation11 + $0x550] sm:$0xff]
    %v6046 = vld [vmem:[#allocation11 + $0x558] sm:$0xff]
    %v6047 = vld [vmem:[#allocation11 + $0x560] sm:$0xff]
    %v6048 = vld [vmem:[#allocation11 + $0x568] sm:$0xff]
    %v6049 = vld [vmem:[#allocation11 + $0x570] sm:$0xff]
    %v6050 = vld [vmem:[#allocation11 + $0x578] sm:$0xff]
    %v6051 = vld [vmem:[#allocation11 + $0x580] sm:$0xff]
    %v6052 = vld [vmem:[#allocation11 + $0x588] sm:$0xff]
    %v6053 = vld [vmem:[#allocation11 + $0x590] sm:$0xff]
    %v6054 = vld [vmem:[#allocation11 + $0x598] sm:$0xff]
    %v6055 = vld [vmem:[#allocation11 + $0x5a0] sm:$0xff]
    %v6056 = vld [vmem:[#allocation11 + $0x5a8] sm:$0xff]
    %v6057 = vld [vmem:[#allocation11 + $0x5b0] sm:$0xff]
    %v6058 = vld [vmem:[#allocation11 + $0x5b8] sm:$0xff]
    %v6059 = vld [vmem:[#allocation11 + $0x5c0] sm:$0xff]
    %v6060 = vld [vmem:[#allocation11 + $0x5c8] sm:$0xff]
    %v6061 = vld [vmem:[#allocation11 + $0x5d0] sm:$0xff]
    %v6062 = vld [vmem:[#allocation11 + $0x5d8] sm:$0xff]
    %v6063 = vld [vmem:[#allocation11 + $0x5e0] sm:$0xff]
    %v6064 = vld [vmem:[#allocation11 + $0x5e8] sm:$0xff]
    %v6065 = vld [vmem:[#allocation11 + $0x5f0] sm:$0xff]
    %v6066 = vld [vmem:[#allocation11 + $0x5f8] sm:$0xff]
    %v6067 = vld [vmem:[#allocation11 + $0x600] sm:$0xff]
    %v6068 = vld [vmem:[#allocation11 + $0x608] sm:$0xff]
    %v6069 = vld [vmem:[#allocation11 + $0x610] sm:$0xff]
    %v6070 = vld [vmem:[#allocation11 + $0x618] sm:$0xff]
    %v6071 = vld [vmem:[#allocation11 + $0x620] sm:$0xff]
    %v6072 = vld [vmem:[#allocation11 + $0x628] sm:$0xff]
    %v6073 = vld [vmem:[#allocation11 + $0x630] sm:$0xff]
    %v6074 = vld [vmem:[#allocation11 + $0x638] sm:$0xff]
    %v6075 = vld [vmem:[#allocation11 + $0x640] sm:$0xff]
    %v6076 = vld [vmem:[#allocation11 + $0x648] sm:$0xff]
    %v6077 = vld [vmem:[#allocation11 + $0x650] sm:$0xff]
    %v6078 = vld [vmem:[#allocation11 + $0x658] sm:$0xff]
    %v6079 = vld [vmem:[#allocation11 + $0x660] sm:$0xff]
    %v6080 = vld [vmem:[#allocation11 + $0x668] sm:$0xff]
    %v6081 = vld [vmem:[#allocation11 + $0x670] sm:$0xff]
    %v6082 = vld [vmem:[#allocation11 + $0x678] sm:$0xff]
    %v6083 = vld [vmem:[#allocation11 + $0x680] sm:$0xff]
    %v6084 = vld [vmem:[#allocation11 + $0x688] sm:$0xff]
    %v6085 = vld [vmem:[#allocation11 + $0x690] sm:$0xff]
    %v6086 = vld [vmem:[#allocation11 + $0x698] sm:$0xff]
    %v6087 = vld [vmem:[#allocation11 + $0x6a0] sm:$0xff]
    %v6088 = vld [vmem:[#allocation11 + $0x6a8] sm:$0xff]
    %v6089 = vld [vmem:[#allocation11 + $0x6b0] sm:$0xff]
    %v6090 = vld [vmem:[#allocation11 + $0x6b8] sm:$0xff]
    %v6091 = vld [vmem:[#allocation11 + $0x6c0] sm:$0xff]
    %v6092 = vld [vmem:[#allocation11 + $0x6c8] sm:$0xff]
    %v6093 = vld [vmem:[#allocation11 + $0x6d0] sm:$0xff]
    %v6094 = vld [vmem:[#allocation11 + $0x6d8] sm:$0xff]
    %v6095 = vld [vmem:[#allocation11 + $0x6e0] sm:$0xff]
    %v6096 = vld [vmem:[#allocation11 + $0x6e8] sm:$0xff]
    %v6097 = vld [vmem:[#allocation11 + $0x6f0] sm:$0xff]
    %v6098 = vld [vmem:[#allocation11 + $0x6f8] sm:$0xff]
    %v6099 = vld [vmem:[#allocation11 + $0x700] sm:$0xff]
    %v6100 = vld [vmem:[#allocation11 + $0x708] sm:$0xff]
    %v6101 = vld [vmem:[#allocation11 + $0x710] sm:$0xff]
    %v6102 = vld [vmem:[#allocation11 + $0x718] sm:$0xff]
    %v6103 = vld [vmem:[#allocation11 + $0x720] sm:$0xff]
    %v6104 = vld [vmem:[#allocation11 + $0x728] sm:$0xff]
    %v6105 = vld [vmem:[#allocation11 + $0x730] sm:$0xff]
    %v6106 = vld [vmem:[#allocation11 + $0x738] sm:$0xff]
    %v6107 = vld [vmem:[#allocation11 + $0x740] sm:$0xff]
    %v6108 = vld [vmem:[#allocation11 + $0x748] sm:$0xff]
    %v6109 = vld [vmem:[#allocation11 + $0x750] sm:$0xff]
    %v6110 = vld [vmem:[#allocation11 + $0x758] sm:$0xff]
    %v6111 = vld [vmem:[#allocation11 + $0x760] sm:$0xff]
    %v6112 = vld [vmem:[#allocation11 + $0x768] sm:$0xff]
    %v6113 = vld [vmem:[#allocation11 + $0x770] sm:$0xff]
    %v6114 = vld [vmem:[#allocation11 + $0x778] sm:$0xff]
    %v6115 = vld [vmem:[#allocation11 + $0x780] sm:$0xff]
    %v6116 = vld [vmem:[#allocation11 + $0x788] sm:$0xff]
    %v6117 = vld [vmem:[#allocation11 + $0x790] sm:$0xff]
    %v6118 = vld [vmem:[#allocation11 + $0x798] sm:$0xff]
    %v6119 = vld [vmem:[#allocation11 + $0x7a0] sm:$0xff]
    %v6120 = vld [vmem:[#allocation11 + $0x7a8] sm:$0xff]
    %v6121 = vld [vmem:[#allocation11 + $0x7b0] sm:$0xff]
    %v6122 = vld [vmem:[#allocation11 + $0x7b8] sm:$0xff]
    %v6123 = vld [vmem:[#allocation11 + $0x7c0] sm:$0xff]
    %v6124 = vld [vmem:[#allocation11 + $0x7c8] sm:$0xff]
    %v6125 = vld [vmem:[#allocation11 + $0x7d0] sm:$0xff]
    %v6126 = vld [vmem:[#allocation11 + $0x7d8] sm:$0xff]
    %v6127 = vld [vmem:[#allocation11 + $0x7e0] sm:$0xff]
    %v6128 = vld [vmem:[#allocation11 + $0x7e8] sm:$0xff]
    %v6129 = vld [vmem:[#allocation11 + $0x7f0] sm:$0xff]
    %v6130 = vld [vmem:[#allocation11 + $0x7f8] sm:$0xff]
    %v6131 = vld [vmem:[%s8] sm:$0xf]
    %v6133 = vlaneseq
    %v6134 = vshrl.u32 %v6133, 7
    %v6135 = vsub.s32 0, %v6134
    %v6136 = vrot.slane %v6131, %v6135
    %v6137 = vlaneseq
    %v6138 = vshrl.u32 %v6137, 7
    %v6139 = vsub.s32 1, %v6138
    %v6140 = vrot.slane %v6131, %v6139
    %v6141 = vlaneseq
    %v6142 = vshrl.u32 %v6141, 7
    %v6143 = vsub.s32 2, %v6142
    %v6144 = vrot.slane %v6131, %v6143
    %v6145 = vlaneseq
    %v6146 = vshrl.u32 %v6145, 7
    %v6147 = vsub.s32 3, %v6146
    %v6148 = vrot.slane %v6131, %v6147
    %v6217 = vunpack.c.l.b16 %v5811
    %v6218 = vunpack.c.h.b16 %v5811
    %v6219 = vunpack.c.l.b16 %v5812
    %v6220 = vunpack.c.h.b16 %v5812
    %v6221 = vunpack.c.l.b16 %v5813
    %v6222 = vunpack.c.h.b16 %v5813
    %v6223 = vunpack.c.l.b16 %v5814
    %v6224 = vunpack.c.h.b16 %v5814
    %v6225 = vunpack.c.l.b16 %v5815
    %v6226 = vunpack.c.h.b16 %v5815
    %v6227 = vunpack.c.l.b16 %v5816
    %v6228 = vunpack.c.h.b16 %v5816
    %v6229 = vunpack.c.l.b16 %v5817
    %v6230 = vunpack.c.h.b16 %v5817
    %v6231 = vunpack.c.l.b16 %v5818
    %v6232 = vunpack.c.h.b16 %v5818
    %v6233 = vunpack.c.l.b16 %v5819
    %v6234 = vunpack.c.h.b16 %v5819
    %v6235 = vunpack.c.l.b16 %v5820
    %v6236 = vunpack.c.h.b16 %v5820
    %v6237 = vunpack.c.l.b16 %v5821
    %v6238 = vunpack.c.h.b16 %v5821
    %v6239 = vunpack.c.l.b16 %v5822
    %v6240 = vunpack.c.h.b16 %v5822
    %v6241 = vunpack.c.l.b16 %v5823
    %v6242 = vunpack.c.h.b16 %v5823
    %v6243 = vunpack.c.l.b16 %v5824
    %v6244 = vunpack.c.h.b16 %v5824
    %v6245 = vunpack.c.l.b16 %v5825
    %v6246 = vunpack.c.h.b16 %v5825
    %v6247 = vunpack.c.l.b16 %v5826
    %v6248 = vunpack.c.h.b16 %v5826
    %v6249 = vunpack.c.l.b16 %v5827
    %v6250 = vunpack.c.h.b16 %v5827
    %v6251 = vunpack.c.l.b16 %v5828
    %v6252 = vunpack.c.h.b16 %v5828
    %v6253 = vunpack.c.l.b16 %v5829
    %v6254 = vunpack.c.h.b16 %v5829
    %v6255 = vunpack.c.l.b16 %v5830
    %v6256 = vunpack.c.h.b16 %v5830
    %v6257 = vunpack.c.l.b16 %v5831
    %v6258 = vunpack.c.h.b16 %v5831
    %v6259 = vunpack.c.l.b16 %v5832
    %v6260 = vunpack.c.h.b16 %v5832
    %v6261 = vunpack.c.l.b16 %v5833
    %v6262 = vunpack.c.h.b16 %v5833
    %v6263 = vunpack.c.l.b16 %v5834
    %v6264 = vunpack.c.h.b16 %v5834
    %v6265 = vunpack.c.l.b16 %v5835
    %v6266 = vunpack.c.h.b16 %v5835
    %v6267 = vunpack.c.l.b16 %v5836
    %v6268 = vunpack.c.h.b16 %v5836
    %v6269 = vunpack.c.l.b16 %v5837
    %v6270 = vunpack.c.h.b16 %v5837
    %v6271 = vunpack.c.l.b16 %v5838
    %v6272 = vunpack.c.h.b16 %v5838
    %v6273 = vunpack.c.l.b16 %v5839
    %v6274 = vunpack.c.h.b16 %v5839
    %v6275 = vunpack.c.l.b16 %v5840
    %v6276 = vunpack.c.h.b16 %v5840
    %v6277 = vunpack.c.l.b16 %v5841
    %v6278 = vunpack.c.h.b16 %v5841
    %v6279 = vunpack.c.l.b16 %v5842
    %v6280 = vunpack.c.h.b16 %v5842
    %v6281 = vunpack.c.l.b16 %v5843
    %v6282 = vunpack.c.h.b16 %v5843
    %v6283 = vunpack.c.l.b16 %v5844
    %v6284 = vunpack.c.h.b16 %v5844
    %v6285 = vunpack.c.l.b16 %v5845
    %v6286 = vunpack.c.h.b16 %v5845
    %v6287 = vunpack.c.l.b16 %v5846
    %v6288 = vunpack.c.h.b16 %v5846
    %v6289 = vunpack.c.l.b16 %v5847
    %v6290 = vunpack.c.h.b16 %v5847
    %v6291 = vunpack.c.l.b16 %v5848
    %v6292 = vunpack.c.h.b16 %v5848
    %v6293 = vunpack.c.l.b16 %v5849
    %v6294 = vunpack.c.h.b16 %v5849
    %v6295 = vunpack.c.l.b16 %v5850
    %v6296 = vunpack.c.h.b16 %v5850
    %v6297 = vunpack.c.l.b16 %v5851
    %v6298 = vunpack.c.h.b16 %v5851
    %v6299 = vunpack.c.l.b16 %v5852
    %v6300 = vunpack.c.h.b16 %v5852
    %v6301 = vunpack.c.l.b16 %v5853
    %v6302 = vunpack.c.h.b16 %v5853
    %v6303 = vunpack.c.l.b16 %v5854
    %v6304 = vunpack.c.h.b16 %v5854
    %v6305 = vunpack.c.l.b16 %v5855
    %v6306 = vunpack.c.h.b16 %v5855
    %v6307 = vunpack.c.l.b16 %v5856
    %v6308 = vunpack.c.h.b16 %v5856
    %v6309 = vunpack.c.l.b16 %v5857
    %v6310 = vunpack.c.h.b16 %v5857
    %v6311 = vunpack.c.l.b16 %v5858
    %v6312 = vunpack.c.h.b16 %v5858
    %v6313 = vunpack.c.l.b16 %v5859
    %v6314 = vunpack.c.h.b16 %v5859
    %v6315 = vunpack.c.l.b16 %v5860
    %v6316 = vunpack.c.h.b16 %v5860
    %v6317 = vunpack.c.l.b16 %v5861
    %v6318 = vunpack.c.h.b16 %v5861
    %v6319 = vunpack.c.l.b16 %v5862
    %v6320 = vunpack.c.h.b16 %v5862
    %v6321 = vunpack.c.l.b16 %v5863
    %v6322 = vunpack.c.h.b16 %v5863
    %v6323 = vunpack.c.l.b16 %v5864
    %v6324 = vunpack.c.h.b16 %v5864
    %v6325 = vunpack.c.l.b16 %v5865
    %v6326 = vunpack.c.h.b16 %v5865
    %v6327 = vunpack.c.l.b16 %v5866
    %v6328 = vunpack.c.h.b16 %v5866
    %v6329 = vunpack.c.l.b16 %v5867
    %v6330 = vunpack.c.h.b16 %v5867
    %v6331 = vunpack.c.l.b16 %v5868
    %v6332 = vunpack.c.h.b16 %v5868
    %v6333 = vunpack.c.l.b16 %v5869
    %v6334 = vunpack.c.h.b16 %v5869
    %v6335 = vunpack.c.l.b16 %v5870
    %v6336 = vunpack.c.h.b16 %v5870
    %v6337 = vunpack.c.l.b16 %v5871
    %v6338 = vunpack.c.h.b16 %v5871
    %v6339 = vunpack.c.l.b16 %v5872
    %v6340 = vunpack.c.h.b16 %v5872
    %v6341 = vunpack.c.l.b16 %v5873
    %v6342 = vunpack.c.h.b16 %v5873
    %v6343 = vunpack.c.l.b16 %v5874
    %v6344 = vunpack.c.h.b16 %v5874
    %v6345 = vpack.c.b16 %v6225, %v6217
    %v6346 = vpack.c.b16 %v6226, %v6218
    %v6347 = vpack.c.b16 %v6227, %v6219
    %v6348 = vpack.c.b16 %v6228, %v6220
    %v6349 = vpack.c.b16 %v6229, %v6221
    %v6350 = vpack.c.b16 %v6230, %v6222
    %v6351 = vpack.c.b16 %v6231, %v6223
    %v6352 = vpack.c.b16 %v6232, %v6224
    %v6353 = vpack.c.b16 %v6241, %v6233
    %v6354 = vpack.c.b16 %v6242, %v6234
    %v6355 = vpack.c.b16 %v6243, %v6235
    %v6356 = vpack.c.b16 %v6244, %v6236
    %v6357 = vpack.c.b16 %v6245, %v6237
    %v6358 = vpack.c.b16 %v6246, %v6238
    %v6359 = vpack.c.b16 %v6247, %v6239
    %v6360 = vpack.c.b16 %v6248, %v6240
    %v6361 = vpack.c.b16 %v6257, %v6249
    %v6362 = vpack.c.b16 %v6258, %v6250
    %v6363 = vpack.c.b16 %v6259, %v6251
    %v6364 = vpack.c.b16 %v6260, %v6252
    %v6365 = vpack.c.b16 %v6261, %v6253
    %v6366 = vpack.c.b16 %v6262, %v6254
    %v6367 = vpack.c.b16 %v6263, %v6255
    %v6368 = vpack.c.b16 %v6264, %v6256
    %v6369 = vpack.c.b16 %v6273, %v6265
    %v6370 = vpack.c.b16 %v6274, %v6266
    %v6371 = vpack.c.b16 %v6275, %v6267
    %v6372 = vpack.c.b16 %v6276, %v6268
    %v6373 = vpack.c.b16 %v6277, %v6269
    %v6374 = vpack.c.b16 %v6278, %v6270
    %v6375 = vpack.c.b16 %v6279, %v6271
    %v6376 = vpack.c.b16 %v6280, %v6272
    %v6377 = vpack.c.b16 %v6289, %v6281
    %v6378 = vpack.c.b16 %v6290, %v6282
    %v6379 = vpack.c.b16 %v6291, %v6283
    %v6380 = vpack.c.b16 %v6292, %v6284
    %v6381 = vpack.c.b16 %v6293, %v6285
    %v6382 = vpack.c.b16 %v6294, %v6286
    %v6383 = vpack.c.b16 %v6295, %v6287
    %v6384 = vpack.c.b16 %v6296, %v6288
    %v6385 = vpack.c.b16 %v6305, %v6297
    %v6386 = vpack.c.b16 %v6306, %v6298
    %v6387 = vpack.c.b16 %v6307, %v6299
    %v6388 = vpack.c.b16 %v6308, %v6300
    %v6389 = vpack.c.b16 %v6309, %v6301
    %v6390 = vpack.c.b16 %v6310, %v6302
    %v6391 = vpack.c.b16 %v6311, %v6303
    %v6392 = vpack.c.b16 %v6312, %v6304
    %v6393 = vpack.c.b16 %v6321, %v6313
    %v6394 = vpack.c.b16 %v6322, %v6314
    %v6395 = vpack.c.b16 %v6323, %v6315
    %v6396 = vpack.c.b16 %v6324, %v6316
    %v6397 = vpack.c.b16 %v6325, %v6317
    %v6398 = vpack.c.b16 %v6326, %v6318
    %v6399 = vpack.c.b16 %v6327, %v6319
    %v6400 = vpack.c.b16 %v6328, %v6320
    %v6401 = vpack.c.b16 %v6337, %v6329
    %v6402 = vpack.c.b16 %v6338, %v6330
    %v6403 = vpack.c.b16 %v6339, %v6331
    %v6404 = vpack.c.b16 %v6340, %v6332
    %v6405 = vpack.c.b16 %v6341, %v6333
    %v6406 = vpack.c.b16 %v6342, %v6334
    %v6407 = vpack.c.b16 %v6343, %v6335
    %v6408 = vpack.c.b16 %v6344, %v6336
    %v6729 = vunpack.c.l.b16 %v5875
    %v6730 = vunpack.c.h.b16 %v5875
    %v6731 = vunpack.c.l.b16 %v5876
    %v6732 = vunpack.c.h.b16 %v5876
    %v6733 = vunpack.c.l.b16 %v5877
    %v6734 = vunpack.c.h.b16 %v5877
    %v6735 = vunpack.c.l.b16 %v5878
    %v6736 = vunpack.c.h.b16 %v5878
    %v6737 = vunpack.c.l.b16 %v5879
    %v6738 = vunpack.c.h.b16 %v5879
    %v6739 = vunpack.c.l.b16 %v5880
    %v6740 = vunpack.c.h.b16 %v5880
    %v6741 = vunpack.c.l.b16 %v5881
    %v6742 = vunpack.c.h.b16 %v5881
    %v6743 = vunpack.c.l.b16 %v5882
    %v6744 = vunpack.c.h.b16 %v5882
    %v6745 = vunpack.c.l.b16 %v5883
    %v6746 = vunpack.c.h.b16 %v5883
    %v6747 = vunpack.c.l.b16 %v5884
    %v6748 = vunpack.c.h.b16 %v5884
    %v6749 = vunpack.c.l.b16 %v5885
    %v6750 = vunpack.c.h.b16 %v5885
    %v6751 = vunpack.c.l.b16 %v5886
    %v6752 = vunpack.c.h.b16 %v5886
    %v6753 = vunpack.c.l.b16 %v5887
    %v6754 = vunpack.c.h.b16 %v5887
    %v6755 = vunpack.c.l.b16 %v5888
    %v6756 = vunpack.c.h.b16 %v5888
    %v6757 = vunpack.c.l.b16 %v5889
    %v6758 = vunpack.c.h.b16 %v5889
    %v6759 = vunpack.c.l.b16 %v5890
    %v6760 = vunpack.c.h.b16 %v5890
    %v6761 = vunpack.c.l.b16 %v5891
    %v6762 = vunpack.c.h.b16 %v5891
    %v6763 = vunpack.c.l.b16 %v5892
    %v6764 = vunpack.c.h.b16 %v5892
    %v6765 = vunpack.c.l.b16 %v5893
    %v6766 = vunpack.c.h.b16 %v5893
    %v6767 = vunpack.c.l.b16 %v5894
    %v6768 = vunpack.c.h.b16 %v5894
    %v6769 = vunpack.c.l.b16 %v5895
    %v6770 = vunpack.c.h.b16 %v5895
    %v6771 = vunpack.c.l.b16 %v5896
    %v6772 = vunpack.c.h.b16 %v5896
    %v6773 = vunpack.c.l.b16 %v5897
    %v6774 = vunpack.c.h.b16 %v5897
    %v6775 = vunpack.c.l.b16 %v5898
    %v6776 = vunpack.c.h.b16 %v5898
    %v6777 = vunpack.c.l.b16 %v5899
    %v6778 = vunpack.c.h.b16 %v5899
    %v6779 = vunpack.c.l.b16 %v5900
    %v6780 = vunpack.c.h.b16 %v5900
    %v6781 = vunpack.c.l.b16 %v5901
    %v6782 = vunpack.c.h.b16 %v5901
    %v6783 = vunpack.c.l.b16 %v5902
    %v6784 = vunpack.c.h.b16 %v5902
    %v6785 = vunpack.c.l.b16 %v5903
    %v6786 = vunpack.c.h.b16 %v5903
    %v6787 = vunpack.c.l.b16 %v5904
    %v6788 = vunpack.c.h.b16 %v5904
    %v6789 = vunpack.c.l.b16 %v5905
    %v6790 = vunpack.c.h.b16 %v5905
    %v6791 = vunpack.c.l.b16 %v5906
    %v6792 = vunpack.c.h.b16 %v5906
    %v6793 = vunpack.c.l.b16 %v5907
    %v6794 = vunpack.c.h.b16 %v5907
    %v6795 = vunpack.c.l.b16 %v5908
    %v6796 = vunpack.c.h.b16 %v5908
    %v6797 = vunpack.c.l.b16 %v5909
    %v6798 = vunpack.c.h.b16 %v5909
    %v6799 = vunpack.c.l.b16 %v5910
    %v6800 = vunpack.c.h.b16 %v5910
    %v6801 = vunpack.c.l.b16 %v5911
    %v6802 = vunpack.c.h.b16 %v5911
    %v6803 = vunpack.c.l.b16 %v5912
    %v6804 = vunpack.c.h.b16 %v5912
    %v6805 = vunpack.c.l.b16 %v5913
    %v6806 = vunpack.c.h.b16 %v5913
    %v6807 = vunpack.c.l.b16 %v5914
    %v6808 = vunpack.c.h.b16 %v5914
    %v6809 = vunpack.c.l.b16 %v5915
    %v6810 = vunpack.c.h.b16 %v5915
    %v6811 = vunpack.c.l.b16 %v5916
    %v6812 = vunpack.c.h.b16 %v5916
    %v6813 = vunpack.c.l.b16 %v5917
    %v6814 = vunpack.c.h.b16 %v5917
    %v6815 = vunpack.c.l.b16 %v5918
    %v6816 = vunpack.c.h.b16 %v5918
    %v6817 = vunpack.c.l.b16 %v5919
    %v6818 = vunpack.c.h.b16 %v5919
    %v6819 = vunpack.c.l.b16 %v5920
    %v6820 = vunpack.c.h.b16 %v5920
    %v6821 = vunpack.c.l.b16 %v5921
    %v6822 = vunpack.c.h.b16 %v5921
    %v6823 = vunpack.c.l.b16 %v5922
    %v6824 = vunpack.c.h.b16 %v5922
    %v6825 = vunpack.c.l.b16 %v5923
    %v6826 = vunpack.c.h.b16 %v5923
    %v6827 = vunpack.c.l.b16 %v5924
    %v6828 = vunpack.c.h.b16 %v5924
    %v6829 = vunpack.c.l.b16 %v5925
    %v6830 = vunpack.c.h.b16 %v5925
    %v6831 = vunpack.c.l.b16 %v5926
    %v6832 = vunpack.c.h.b16 %v5926
    %v6833 = vunpack.c.l.b16 %v5927
    %v6834 = vunpack.c.h.b16 %v5927
    %v6835 = vunpack.c.l.b16 %v5928
    %v6836 = vunpack.c.h.b16 %v5928
    %v6837 = vunpack.c.l.b16 %v5929
    %v6838 = vunpack.c.h.b16 %v5929
    %v6839 = vunpack.c.l.b16 %v5930
    %v6840 = vunpack.c.h.b16 %v5930
    %v6841 = vunpack.c.l.b16 %v5931
    %v6842 = vunpack.c.h.b16 %v5931
    %v6843 = vunpack.c.l.b16 %v5932
    %v6844 = vunpack.c.h.b16 %v5932
    %v6845 = vunpack.c.l.b16 %v5933
    %v6846 = vunpack.c.h.b16 %v5933
    %v6847 = vunpack.c.l.b16 %v5934
    %v6848 = vunpack.c.h.b16 %v5934
    %v6849 = vunpack.c.l.b16 %v5935
    %v6850 = vunpack.c.h.b16 %v5935
    %v6851 = vunpack.c.l.b16 %v5936
    %v6852 = vunpack.c.h.b16 %v5936
    %v6853 = vunpack.c.l.b16 %v5937
    %v6854 = vunpack.c.h.b16 %v5937
    %v6855 = vunpack.c.l.b16 %v5938
    %v6856 = vunpack.c.h.b16 %v5938
    %v6857 = vunpack.c.l.b16 %v5939
    %v6858 = vunpack.c.h.b16 %v5939
    %v6859 = vunpack.c.l.b16 %v5940
    %v6860 = vunpack.c.h.b16 %v5940
    %v6861 = vunpack.c.l.b16 %v5941
    %v6862 = vunpack.c.h.b16 %v5941
    %v6863 = vunpack.c.l.b16 %v5942
    %v6864 = vunpack.c.h.b16 %v5942
    %v6865 = vunpack.c.l.b16 %v5943
    %v6866 = vunpack.c.h.b16 %v5943
    %v6867 = vunpack.c.l.b16 %v5944
    %v6868 = vunpack.c.h.b16 %v5944
    %v6869 = vunpack.c.l.b16 %v5945
    %v6870 = vunpack.c.h.b16 %v5945
    %v6871 = vunpack.c.l.b16 %v5946
    %v6872 = vunpack.c.h.b16 %v5946
    %v6873 = vunpack.c.l.b16 %v5947
    %v6874 = vunpack.c.h.b16 %v5947
    %v6875 = vunpack.c.l.b16 %v5948
    %v6876 = vunpack.c.h.b16 %v5948
    %v6877 = vunpack.c.l.b16 %v5949
    %v6878 = vunpack.c.h.b16 %v5949
    %v6879 = vunpack.c.l.b16 %v5950
    %v6880 = vunpack.c.h.b16 %v5950
    %v6881 = vunpack.c.l.b16 %v5951
    %v6882 = vunpack.c.h.b16 %v5951
    %v6883 = vunpack.c.l.b16 %v5952
    %v6884 = vunpack.c.h.b16 %v5952
    %v6885 = vunpack.c.l.b16 %v5953
    %v6886 = vunpack.c.h.b16 %v5953
    %v6887 = vunpack.c.l.b16 %v5954
    %v6888 = vunpack.c.h.b16 %v5954
    %v6889 = vunpack.c.l.b16 %v5955
    %v6890 = vunpack.c.h.b16 %v5955
    %v6891 = vunpack.c.l.b16 %v5956
    %v6892 = vunpack.c.h.b16 %v5956
    %v6893 = vunpack.c.l.b16 %v5957
    %v6894 = vunpack.c.h.b16 %v5957
    %v6895 = vunpack.c.l.b16 %v5958
    %v6896 = vunpack.c.h.b16 %v5958
    %v6897 = vunpack.c.l.b16 %v5959
    %v6898 = vunpack.c.h.b16 %v5959
    %v6899 = vunpack.c.l.b16 %v5960
    %v6900 = vunpack.c.h.b16 %v5960
    %v6901 = vunpack.c.l.b16 %v5961
    %v6902 = vunpack.c.h.b16 %v5961
    %v6903 = vunpack.c.l.b16 %v5962
    %v6904 = vunpack.c.h.b16 %v5962
    %v6905 = vunpack.c.l.b16 %v5963
    %v6906 = vunpack.c.h.b16 %v5963
    %v6907 = vunpack.c.l.b16 %v5964
    %v6908 = vunpack.c.h.b16 %v5964
    %v6909 = vunpack.c.l.b16 %v5965
    %v6910 = vunpack.c.h.b16 %v5965
    %v6911 = vunpack.c.l.b16 %v5966
    %v6912 = vunpack.c.h.b16 %v5966
    %v6913 = vunpack.c.l.b16 %v5967
    %v6914 = vunpack.c.h.b16 %v5967
    %v6915 = vunpack.c.l.b16 %v5968
    %v6916 = vunpack.c.h.b16 %v5968
    %v6917 = vunpack.c.l.b16 %v5969
    %v6918 = vunpack.c.h.b16 %v5969
    %v6919 = vunpack.c.l.b16 %v5970
    %v6920 = vunpack.c.h.b16 %v5970
    %v6921 = vunpack.c.l.b16 %v5971
    %v6922 = vunpack.c.h.b16 %v5971
    %v6923 = vunpack.c.l.b16 %v5972
    %v6924 = vunpack.c.h.b16 %v5972
    %v6925 = vunpack.c.l.b16 %v5973
    %v6926 = vunpack.c.h.b16 %v5973
    %v6927 = vunpack.c.l.b16 %v5974
    %v6928 = vunpack.c.h.b16 %v5974
    %v6929 = vunpack.c.l.b16 %v5975
    %v6930 = vunpack.c.h.b16 %v5975
    %v6931 = vunpack.c.l.b16 %v5976
    %v6932 = vunpack.c.h.b16 %v5976
    %v6933 = vunpack.c.l.b16 %v5977
    %v6934 = vunpack.c.h.b16 %v5977
    %v6935 = vunpack.c.l.b16 %v5978
    %v6936 = vunpack.c.h.b16 %v5978
    %v6937 = vunpack.c.l.b16 %v5979
    %v6938 = vunpack.c.h.b16 %v5979
    %v6939 = vunpack.c.l.b16 %v5980
    %v6940 = vunpack.c.h.b16 %v5980
    %v6941 = vunpack.c.l.b16 %v5981
    %v6942 = vunpack.c.h.b16 %v5981
    %v6943 = vunpack.c.l.b16 %v5982
    %v6944 = vunpack.c.h.b16 %v5982
    %v6945 = vunpack.c.l.b16 %v5983
    %v6946 = vunpack.c.h.b16 %v5983
    %v6947 = vunpack.c.l.b16 %v5984
    %v6948 = vunpack.c.h.b16 %v5984
    %v6949 = vunpack.c.l.b16 %v5985
    %v6950 = vunpack.c.h.b16 %v5985
    %v6951 = vunpack.c.l.b16 %v5986
    %v6952 = vunpack.c.h.b16 %v5986
    %v6953 = vunpack.c.l.b16 %v5987
    %v6954 = vunpack.c.h.b16 %v5987
    %v6955 = vunpack.c.l.b16 %v5988
    %v6956 = vunpack.c.h.b16 %v5988
    %v6957 = vunpack.c.l.b16 %v5989
    %v6958 = vunpack.c.h.b16 %v5989
    %v6959 = vunpack.c.l.b16 %v5990
    %v6960 = vunpack.c.h.b16 %v5990
    %v6961 = vunpack.c.l.b16 %v5991
    %v6962 = vunpack.c.h.b16 %v5991
    %v6963 = vunpack.c.l.b16 %v5992
    %v6964 = vunpack.c.h.b16 %v5992
    %v6965 = vunpack.c.l.b16 %v5993
    %v6966 = vunpack.c.h.b16 %v5993
    %v6967 = vunpack.c.l.b16 %v5994
    %v6968 = vunpack.c.h.b16 %v5994
    %v6969 = vunpack.c.l.b16 %v5995
    %v6970 = vunpack.c.h.b16 %v5995
    %v6971 = vunpack.c.l.b16 %v5996
    %v6972 = vunpack.c.h.b16 %v5996
    %v6973 = vunpack.c.l.b16 %v5997
    %v6974 = vunpack.c.h.b16 %v5997
    %v6975 = vunpack.c.l.b16 %v5998
    %v6976 = vunpack.c.h.b16 %v5998
    %v6977 = vunpack.c.l.b16 %v5999
    %v6978 = vunpack.c.h.b16 %v5999
    %v6979 = vunpack.c.l.b16 %v6000
    %v6980 = vunpack.c.h.b16 %v6000
    %v6981 = vunpack.c.l.b16 %v6001
    %v6982 = vunpack.c.h.b16 %v6001
    %v6983 = vunpack.c.l.b16 %v6002
    %v6984 = vunpack.c.h.b16 %v6002
    %v6985 = vunpack.c.l.b16 %v6003
    %v6986 = vunpack.c.h.b16 %v6003
    %v6987 = vunpack.c.l.b16 %v6004
    %v6988 = vunpack.c.h.b16 %v6004
    %v6989 = vunpack.c.l.b16 %v6005
    %v6990 = vunpack.c.h.b16 %v6005
    %v6991 = vunpack.c.l.b16 %v6006
    %v6992 = vunpack.c.h.b16 %v6006
    %v6993 = vunpack.c.l.b16 %v6007
    %v6994 = vunpack.c.h.b16 %v6007
    %v6995 = vunpack.c.l.b16 %v6008
    %v6996 = vunpack.c.h.b16 %v6008
    %v6997 = vunpack.c.l.b16 %v6009
    %v6998 = vunpack.c.h.b16 %v6009
    %v6999 = vunpack.c.l.b16 %v6010
    %v7000 = vunpack.c.h.b16 %v6010
    %v7001 = vunpack.c.l.b16 %v6011
    %v7002 = vunpack.c.h.b16 %v6011
    %v7003 = vunpack.c.l.b16 %v6012
    %v7004 = vunpack.c.h.b16 %v6012
    %v7005 = vunpack.c.l.b16 %v6013
    %v7006 = vunpack.c.h.b16 %v6013
    %v7007 = vunpack.c.l.b16 %v6014
    %v7008 = vunpack.c.h.b16 %v6014
    %v7009 = vunpack.c.l.b16 %v6015
    %v7010 = vunpack.c.h.b16 %v6015
    %v7011 = vunpack.c.l.b16 %v6016
    %v7012 = vunpack.c.h.b16 %v6016
    %v7013 = vunpack.c.l.b16 %v6017
    %v7014 = vunpack.c.h.b16 %v6017
    %v7015 = vunpack.c.l.b16 %v6018
    %v7016 = vunpack.c.h.b16 %v6018
    %v7017 = vunpack.c.l.b16 %v6019
    %v7018 = vunpack.c.h.b16 %v6019
    %v7019 = vunpack.c.l.b16 %v6020
    %v7020 = vunpack.c.h.b16 %v6020
    %v7021 = vunpack.c.l.b16 %v6021
    %v7022 = vunpack.c.h.b16 %v6021
    %v7023 = vunpack.c.l.b16 %v6022
    %v7024 = vunpack.c.h.b16 %v6022
    %v7025 = vunpack.c.l.b16 %v6023
    %v7026 = vunpack.c.h.b16 %v6023
    %v7027 = vunpack.c.l.b16 %v6024
    %v7028 = vunpack.c.h.b16 %v6024
    %v7029 = vunpack.c.l.b16 %v6025
    %v7030 = vunpack.c.h.b16 %v6025
    %v7031 = vunpack.c.l.b16 %v6026
    %v7032 = vunpack.c.h.b16 %v6026
    %v7033 = vunpack.c.l.b16 %v6027
    %v7034 = vunpack.c.h.b16 %v6027
    %v7035 = vunpack.c.l.b16 %v6028
    %v7036 = vunpack.c.h.b16 %v6028
    %v7037 = vunpack.c.l.b16 %v6029
    %v7038 = vunpack.c.h.b16 %v6029
    %v7039 = vunpack.c.l.b16 %v6030
    %v7040 = vunpack.c.h.b16 %v6030
    %v7041 = vunpack.c.l.b16 %v6031
    %v7042 = vunpack.c.h.b16 %v6031
    %v7043 = vunpack.c.l.b16 %v6032
    %v7044 = vunpack.c.h.b16 %v6032
    %v7045 = vunpack.c.l.b16 %v6033
    %v7046 = vunpack.c.h.b16 %v6033
    %v7047 = vunpack.c.l.b16 %v6034
    %v7048 = vunpack.c.h.b16 %v6034
    %v7049 = vunpack.c.l.b16 %v6035
    %v7050 = vunpack.c.h.b16 %v6035
    %v7051 = vunpack.c.l.b16 %v6036
    %v7052 = vunpack.c.h.b16 %v6036
    %v7053 = vunpack.c.l.b16 %v6037
    %v7054 = vunpack.c.h.b16 %v6037
    %v7055 = vunpack.c.l.b16 %v6038
    %v7056 = vunpack.c.h.b16 %v6038
    %v7057 = vunpack.c.l.b16 %v6039
    %v7058 = vunpack.c.h.b16 %v6039
    %v7059 = vunpack.c.l.b16 %v6040
    %v7060 = vunpack.c.h.b16 %v6040
    %v7061 = vunpack.c.l.b16 %v6041
    %v7062 = vunpack.c.h.b16 %v6041
    %v7063 = vunpack.c.l.b16 %v6042
    %v7064 = vunpack.c.h.b16 %v6042
    %v7065 = vunpack.c.l.b16 %v6043
    %v7066 = vunpack.c.h.b16 %v6043
    %v7067 = vunpack.c.l.b16 %v6044
    %v7068 = vunpack.c.h.b16 %v6044
    %v7069 = vunpack.c.l.b16 %v6045
    %v7070 = vunpack.c.h.b16 %v6045
    %v7071 = vunpack.c.l.b16 %v6046
    %v7072 = vunpack.c.h.b16 %v6046
    %v7073 = vunpack.c.l.b16 %v6047
    %v7074 = vunpack.c.h.b16 %v6047
    %v7075 = vunpack.c.l.b16 %v6048
    %v7076 = vunpack.c.h.b16 %v6048
    %v7077 = vunpack.c.l.b16 %v6049
    %v7078 = vunpack.c.h.b16 %v6049
    %v7079 = vunpack.c.l.b16 %v6050
    %v7080 = vunpack.c.h.b16 %v6050
    %v7081 = vunpack.c.l.b16 %v6051
    %v7082 = vunpack.c.h.b16 %v6051
    %v7083 = vunpack.c.l.b16 %v6052
    %v7084 = vunpack.c.h.b16 %v6052
    %v7085 = vunpack.c.l.b16 %v6053
    %v7086 = vunpack.c.h.b16 %v6053
    %v7087 = vunpack.c.l.b16 %v6054
    %v7088 = vunpack.c.h.b16 %v6054
    %v7089 = vunpack.c.l.b16 %v6055
    %v7090 = vunpack.c.h.b16 %v6055
    %v7091 = vunpack.c.l.b16 %v6056
    %v7092 = vunpack.c.h.b16 %v6056
    %v7093 = vunpack.c.l.b16 %v6057
    %v7094 = vunpack.c.h.b16 %v6057
    %v7095 = vunpack.c.l.b16 %v6058
    %v7096 = vunpack.c.h.b16 %v6058
    %v7097 = vunpack.c.l.b16 %v6059
    %v7098 = vunpack.c.h.b16 %v6059
    %v7099 = vunpack.c.l.b16 %v6060
    %v7100 = vunpack.c.h.b16 %v6060
    %v7101 = vunpack.c.l.b16 %v6061
    %v7102 = vunpack.c.h.b16 %v6061
    %v7103 = vunpack.c.l.b16 %v6062
    %v7104 = vunpack.c.h.b16 %v6062
    %v7105 = vunpack.c.l.b16 %v6063
    %v7106 = vunpack.c.h.b16 %v6063
    %v7107 = vunpack.c.l.b16 %v6064
    %v7108 = vunpack.c.h.b16 %v6064
    %v7109 = vunpack.c.l.b16 %v6065
    %v7110 = vunpack.c.h.b16 %v6065
    %v7111 = vunpack.c.l.b16 %v6066
    %v7112 = vunpack.c.h.b16 %v6066
    %v7113 = vunpack.c.l.b16 %v6067
    %v7114 = vunpack.c.h.b16 %v6067
    %v7115 = vunpack.c.l.b16 %v6068
    %v7116 = vunpack.c.h.b16 %v6068
    %v7117 = vunpack.c.l.b16 %v6069
    %v7118 = vunpack.c.h.b16 %v6069
    %v7119 = vunpack.c.l.b16 %v6070
    %v7120 = vunpack.c.h.b16 %v6070
    %v7121 = vunpack.c.l.b16 %v6071
    %v7122 = vunpack.c.h.b16 %v6071
    %v7123 = vunpack.c.l.b16 %v6072
    %v7124 = vunpack.c.h.b16 %v6072
    %v7125 = vunpack.c.l.b16 %v6073
    %v7126 = vunpack.c.h.b16 %v6073
    %v7127 = vunpack.c.l.b16 %v6074
    %v7128 = vunpack.c.h.b16 %v6074
    %v7129 = vunpack.c.l.b16 %v6075
    %v7130 = vunpack.c.h.b16 %v6075
    %v7131 = vunpack.c.l.b16 %v6076
    %v7132 = vunpack.c.h.b16 %v6076
    %v7133 = vunpack.c.l.b16 %v6077
    %v7134 = vunpack.c.h.b16 %v6077
    %v7135 = vunpack.c.l.b16 %v6078
    %v7136 = vunpack.c.h.b16 %v6078
    %v7137 = vunpack.c.l.b16 %v6079
    %v7138 = vunpack.c.h.b16 %v6079
    %v7139 = vunpack.c.l.b16 %v6080
    %v7140 = vunpack.c.h.b16 %v6080
    %v7141 = vunpack.c.l.b16 %v6081
    %v7142 = vunpack.c.h.b16 %v6081
    %v7143 = vunpack.c.l.b16 %v6082
    %v7144 = vunpack.c.h.b16 %v6082
    %v7145 = vunpack.c.l.b16 %v6083
    %v7146 = vunpack.c.h.b16 %v6083
    %v7147 = vunpack.c.l.b16 %v6084
    %v7148 = vunpack.c.h.b16 %v6084
    %v7149 = vunpack.c.l.b16 %v6085
    %v7150 = vunpack.c.h.b16 %v6085
    %v7151 = vunpack.c.l.b16 %v6086
    %v7152 = vunpack.c.h.b16 %v6086
    %v7153 = vunpack.c.l.b16 %v6087
    %v7154 = vunpack.c.h.b16 %v6087
    %v7155 = vunpack.c.l.b16 %v6088
    %v7156 = vunpack.c.h.b16 %v6088
    %v7157 = vunpack.c.l.b16 %v6089
    %v7158 = vunpack.c.h.b16 %v6089
    %v7159 = vunpack.c.l.b16 %v6090
    %v7160 = vunpack.c.h.b16 %v6090
    %v7161 = vunpack.c.l.b16 %v6091
    %v7162 = vunpack.c.h.b16 %v6091
    %v7163 = vunpack.c.l.b16 %v6092
    %v7164 = vunpack.c.h.b16 %v6092
    %v7165 = vunpack.c.l.b16 %v6093
    %v7166 = vunpack.c.h.b16 %v6093
    %v7167 = vunpack.c.l.b16 %v6094
    %v7168 = vunpack.c.h.b16 %v6094
    %v7169 = vunpack.c.l.b16 %v6095
    %v7170 = vunpack.c.h.b16 %v6095
    %v7171 = vunpack.c.l.b16 %v6096
    %v7172 = vunpack.c.h.b16 %v6096
    %v7173 = vunpack.c.l.b16 %v6097
    %v7174 = vunpack.c.h.b16 %v6097
    %v7175 = vunpack.c.l.b16 %v6098
    %v7176 = vunpack.c.h.b16 %v6098
    %v7177 = vunpack.c.l.b16 %v6099
    %v7178 = vunpack.c.h.b16 %v6099
    %v7179 = vunpack.c.l.b16 %v6100
    %v7180 = vunpack.c.h.b16 %v6100
    %v7181 = vunpack.c.l.b16 %v6101
    %v7182 = vunpack.c.h.b16 %v6101
    %v7183 = vunpack.c.l.b16 %v6102
    %v7184 = vunpack.c.h.b16 %v6102
    %v7185 = vunpack.c.l.b16 %v6103
    %v7186 = vunpack.c.h.b16 %v6103
    %v7187 = vunpack.c.l.b16 %v6104
    %v7188 = vunpack.c.h.b16 %v6104
    %v7189 = vunpack.c.l.b16 %v6105
    %v7190 = vunpack.c.h.b16 %v6105
    %v7191 = vunpack.c.l.b16 %v6106
    %v7192 = vunpack.c.h.b16 %v6106
    %v7193 = vunpack.c.l.b16 %v6107
    %v7194 = vunpack.c.h.b16 %v6107
    %v7195 = vunpack.c.l.b16 %v6108
    %v7196 = vunpack.c.h.b16 %v6108
    %v7197 = vunpack.c.l.b16 %v6109
    %v7198 = vunpack.c.h.b16 %v6109
    %v7199 = vunpack.c.l.b16 %v6110
    %v7200 = vunpack.c.h.b16 %v6110
    %v7201 = vunpack.c.l.b16 %v6111
    %v7202 = vunpack.c.h.b16 %v6111
    %v7203 = vunpack.c.l.b16 %v6112
    %v7204 = vunpack.c.h.b16 %v6112
    %v7205 = vunpack.c.l.b16 %v6113
    %v7206 = vunpack.c.h.b16 %v6113
    %v7207 = vunpack.c.l.b16 %v6114
    %v7208 = vunpack.c.h.b16 %v6114
    %v7209 = vunpack.c.l.b16 %v6115
    %v7210 = vunpack.c.h.b16 %v6115
    %v7211 = vunpack.c.l.b16 %v6116
    %v7212 = vunpack.c.h.b16 %v6116
    %v7213 = vunpack.c.l.b16 %v6117
    %v7214 = vunpack.c.h.b16 %v6117
    %v7215 = vunpack.c.l.b16 %v6118
    %v7216 = vunpack.c.h.b16 %v6118
    %v7217 = vunpack.c.l.b16 %v6119
    %v7218 = vunpack.c.h.b16 %v6119
    %v7219 = vunpack.c.l.b16 %v6120
    %v7220 = vunpack.c.h.b16 %v6120
    %v7221 = vunpack.c.l.b16 %v6121
    %v7222 = vunpack.c.h.b16 %v6121
    %v7223 = vunpack.c.l.b16 %v6122
    %v7224 = vunpack.c.h.b16 %v6122
    %v7225 = vunpack.c.l.b16 %v6123
    %v7226 = vunpack.c.h.b16 %v6123
    %v7227 = vunpack.c.l.b16 %v6124
    %v7228 = vunpack.c.h.b16 %v6124
    %v7229 = vunpack.c.l.b16 %v6125
    %v7230 = vunpack.c.h.b16 %v6125
    %v7231 = vunpack.c.l.b16 %v6126
    %v7232 = vunpack.c.h.b16 %v6126
    %v7233 = vunpack.c.l.b16 %v6127
    %v7234 = vunpack.c.h.b16 %v6127
    %v7235 = vunpack.c.l.b16 %v6128
    %v7236 = vunpack.c.h.b16 %v6128
    %v7237 = vunpack.c.l.b16 %v6129
    %v7238 = vunpack.c.h.b16 %v6129
    %v7239 = vunpack.c.l.b16 %v6130
    %v7240 = vunpack.c.h.b16 %v6130
    %v7241 = vpack.c.b16 %v6733, %v6729
    %v7242 = vpack.c.b16 %v6734, %v6730
    %v7243 = vpack.c.b16 %v6735, %v6731
    %v7244 = vpack.c.b16 %v6736, %v6732
    %v7245 = vpack.c.b16 %v6741, %v6737
    %v7246 = vpack.c.b16 %v6742, %v6738
    %v7247 = vpack.c.b16 %v6743, %v6739
    %v7248 = vpack.c.b16 %v6744, %v6740
    %v7249 = vpack.c.b16 %v6749, %v6745
    %v7250 = vpack.c.b16 %v6750, %v6746
    %v7251 = vpack.c.b16 %v6751, %v6747
    %v7252 = vpack.c.b16 %v6752, %v6748
    %v7253 = vpack.c.b16 %v6757, %v6753
    %v7254 = vpack.c.b16 %v6758, %v6754
    %v7255 = vpack.c.b16 %v6759, %v6755
    %v7256 = vpack.c.b16 %v6760, %v6756
    %v7257 = vpack.c.b16 %v6765, %v6761
    %v7258 = vpack.c.b16 %v6766, %v6762
    %v7259 = vpack.c.b16 %v6767, %v6763
    %v7260 = vpack.c.b16 %v6768, %v6764
    %v7261 = vpack.c.b16 %v6773, %v6769
    %v7262 = vpack.c.b16 %v6774, %v6770
    %v7263 = vpack.c.b16 %v6775, %v6771
    %v7264 = vpack.c.b16 %v6776, %v6772
    %v7265 = vpack.c.b16 %v6781, %v6777
    %v7266 = vpack.c.b16 %v6782, %v6778
    %v7267 = vpack.c.b16 %v6783, %v6779
    %v7268 = vpack.c.b16 %v6784, %v6780
    %v7269 = vpack.c.b16 %v6789, %v6785
    %v7270 = vpack.c.b16 %v6790, %v6786
    %v7271 = vpack.c.b16 %v6791, %v6787
    %v7272 = vpack.c.b16 %v6792, %v6788
    %v7273 = vpack.c.b16 %v6797, %v6793
    %v7274 = vpack.c.b16 %v6798, %v6794
    %v7275 = vpack.c.b16 %v6799, %v6795
    %v7276 = vpack.c.b16 %v6800, %v6796
    %v7277 = vpack.c.b16 %v6805, %v6801
    %v7278 = vpack.c.b16 %v6806, %v6802
    %v7279 = vpack.c.b16 %v6807, %v6803
    %v7280 = vpack.c.b16 %v6808, %v6804
    %v7281 = vpack.c.b16 %v6813, %v6809
    %v7282 = vpack.c.b16 %v6814, %v6810
    %v7283 = vpack.c.b16 %v6815, %v6811
    %v7284 = vpack.c.b16 %v6816, %v6812
    %v7285 = vpack.c.b16 %v6821, %v6817
    %v7286 = vpack.c.b16 %v6822, %v6818
    %v7287 = vpack.c.b16 %v6823, %v6819
    %v7288 = vpack.c.b16 %v6824, %v6820
    %v7289 = vpack.c.b16 %v6829, %v6825
    %v7290 = vpack.c.b16 %v6830, %v6826
    %v7291 = vpack.c.b16 %v6831, %v6827
    %v7292 = vpack.c.b16 %v6832, %v6828
    %v7293 = vpack.c.b16 %v6837, %v6833
    %v7294 = vpack.c.b16 %v6838, %v6834
    %v7295 = vpack.c.b16 %v6839, %v6835
    %v7296 = vpack.c.b16 %v6840, %v6836
    %v7297 = vpack.c.b16 %v6845, %v6841
    %v7298 = vpack.c.b16 %v6846, %v6842
    %v7299 = vpack.c.b16 %v6847, %v6843
    %v7300 = vpack.c.b16 %v6848, %v6844
    %v7301 = vpack.c.b16 %v6853, %v6849
    %v7302 = vpack.c.b16 %v6854, %v6850
    %v7303 = vpack.c.b16 %v6855, %v6851
    %v7304 = vpack.c.b16 %v6856, %v6852
    %v7305 = vpack.c.b16 %v6861, %v6857
    %v7306 = vpack.c.b16 %v6862, %v6858
    %v7307 = vpack.c.b16 %v6863, %v6859
    %v7308 = vpack.c.b16 %v6864, %v6860
    %v7309 = vpack.c.b16 %v6869, %v6865
    %v7310 = vpack.c.b16 %v6870, %v6866
    %v7311 = vpack.c.b16 %v6871, %v6867
    %v7312 = vpack.c.b16 %v6872, %v6868
    %v7313 = vpack.c.b16 %v6877, %v6873
    %v7314 = vpack.c.b16 %v6878, %v6874
    %v7315 = vpack.c.b16 %v6879, %v6875
    %v7316 = vpack.c.b16 %v6880, %v6876
    %v7317 = vpack.c.b16 %v6885, %v6881
    %v7318 = vpack.c.b16 %v6886, %v6882
    %v7319 = vpack.c.b16 %v6887, %v6883
    %v7320 = vpack.c.b16 %v6888, %v6884
    %v7321 = vpack.c.b16 %v6893, %v6889
    %v7322 = vpack.c.b16 %v6894, %v6890
    %v7323 = vpack.c.b16 %v6895, %v6891
    %v7324 = vpack.c.b16 %v6896, %v6892
    %v7325 = vpack.c.b16 %v6901, %v6897
    %v7326 = vpack.c.b16 %v6902, %v6898
    %v7327 = vpack.c.b16 %v6903, %v6899
    %v7328 = vpack.c.b16 %v6904, %v6900
    %v7329 = vpack.c.b16 %v6909, %v6905
    %v7330 = vpack.c.b16 %v6910, %v6906
    %v7331 = vpack.c.b16 %v6911, %v6907
    %v7332 = vpack.c.b16 %v6912, %v6908
    %v7333 = vpack.c.b16 %v6917, %v6913
    %v7334 = vpack.c.b16 %v6918, %v6914
    %v7335 = vpack.c.b16 %v6919, %v6915
    %v7336 = vpack.c.b16 %v6920, %v6916
    %v7337 = vpack.c.b16 %v6925, %v6921
    %v7338 = vpack.c.b16 %v6926, %v6922
    %v7339 = vpack.c.b16 %v6927, %v6923
    %v7340 = vpack.c.b16 %v6928, %v6924
    %v7341 = vpack.c.b16 %v6933, %v6929
    %v7342 = vpack.c.b16 %v6934, %v6930
    %v7343 = vpack.c.b16 %v6935, %v6931
    %v7344 = vpack.c.b16 %v6936, %v6932
    %v7345 = vpack.c.b16 %v6941, %v6937
    %v7346 = vpack.c.b16 %v6942, %v6938
    %v7347 = vpack.c.b16 %v6943, %v6939
    %v7348 = vpack.c.b16 %v6944, %v6940
    %v7349 = vpack.c.b16 %v6949, %v6945
    %v7350 = vpack.c.b16 %v6950, %v6946
    %v7351 = vpack.c.b16 %v6951, %v6947
    %v7352 = vpack.c.b16 %v6952, %v6948
    %v7353 = vpack.c.b16 %v6957, %v6953
    %v7354 = vpack.c.b16 %v6958, %v6954
    %v7355 = vpack.c.b16 %v6959, %v6955
    %v7356 = vpack.c.b16 %v6960, %v6956
    %v7357 = vpack.c.b16 %v6965, %v6961
    %v7358 = vpack.c.b16 %v6966, %v6962
    %v7359 = vpack.c.b16 %v6967, %v6963
    %v7360 = vpack.c.b16 %v6968, %v6964
    %v7361 = vpack.c.b16 %v6973, %v6969
    %v7362 = vpack.c.b16 %v6974, %v6970
    %v7363 = vpack.c.b16 %v6975, %v6971
    %v7364 = vpack.c.b16 %v6976, %v6972
    %v7365 = vpack.c.b16 %v6981, %v6977
    %v7366 = vpack.c.b16 %v6982, %v6978
    %v7367 = vpack.c.b16 %v6983, %v6979
    %v7368 = vpack.c.b16 %v6984, %v6980
    %v7369 = vpack.c.b16 %v6989, %v6985
    %v7370 = vpack.c.b16 %v6990, %v6986
    %v7371 = vpack.c.b16 %v6991, %v6987
    %v7372 = vpack.c.b16 %v6992, %v6988
    %v7373 = vpack.c.b16 %v6997, %v6993
    %v7374 = vpack.c.b16 %v6998, %v6994
    %v7375 = vpack.c.b16 %v6999, %v6995
    %v7376 = vpack.c.b16 %v7000, %v6996
    %v7377 = vpack.c.b16 %v7005, %v7001
    %v7378 = vpack.c.b16 %v7006, %v7002
    %v7379 = vpack.c.b16 %v7007, %v7003
    %v7380 = vpack.c.b16 %v7008, %v7004
    %v7381 = vpack.c.b16 %v7013, %v7009
    %v7382 = vpack.c.b16 %v7014, %v7010
    %v7383 = vpack.c.b16 %v7015, %v7011
    %v7384 = vpack.c.b16 %v7016, %v7012
    %v7385 = vpack.c.b16 %v7021, %v7017
    %v7386 = vpack.c.b16 %v7022, %v7018
    %v7387 = vpack.c.b16 %v7023, %v7019
    %v7388 = vpack.c.b16 %v7024, %v7020
    %v7389 = vpack.c.b16 %v7029, %v7025
    %v7390 = vpack.c.b16 %v7030, %v7026
    %v7391 = vpack.c.b16 %v7031, %v7027
    %v7392 = vpack.c.b16 %v7032, %v7028
    %v7393 = vpack.c.b16 %v7037, %v7033
    %v7394 = vpack.c.b16 %v7038, %v7034
    %v7395 = vpack.c.b16 %v7039, %v7035
    %v7396 = vpack.c.b16 %v7040, %v7036
    %v7397 = vpack.c.b16 %v7045, %v7041
    %v7398 = vpack.c.b16 %v7046, %v7042
    %v7399 = vpack.c.b16 %v7047, %v7043
    %v7400 = vpack.c.b16 %v7048, %v7044
    %v7401 = vpack.c.b16 %v7053, %v7049
    %v7402 = vpack.c.b16 %v7054, %v7050
    %v7403 = vpack.c.b16 %v7055, %v7051
    %v7404 = vpack.c.b16 %v7056, %v7052
    %v7405 = vpack.c.b16 %v7061, %v7057
    %v7406 = vpack.c.b16 %v7062, %v7058
    %v7407 = vpack.c.b16 %v7063, %v7059
    %v7408 = vpack.c.b16 %v7064, %v7060
    %v7409 = vpack.c.b16 %v7069, %v7065
    %v7410 = vpack.c.b16 %v7070, %v7066
    %v7411 = vpack.c.b16 %v7071, %v7067
    %v7412 = vpack.c.b16 %v7072, %v7068
    %v7413 = vpack.c.b16 %v7077, %v7073
    %v7414 = vpack.c.b16 %v7078, %v7074
    %v7415 = vpack.c.b16 %v7079, %v7075
    %v7416 = vpack.c.b16 %v7080, %v7076
    %v7417 = vpack.c.b16 %v7085, %v7081
    %v7418 = vpack.c.b16 %v7086, %v7082
    %v7419 = vpack.c.b16 %v7087, %v7083
    %v7420 = vpack.c.b16 %v7088, %v7084
    %v7421 = vpack.c.b16 %v7093, %v7089
    %v7422 = vpack.c.b16 %v7094, %v7090
    %v7423 = vpack.c.b16 %v7095, %v7091
    %v7424 = vpack.c.b16 %v7096, %v7092
    %v7425 = vpack.c.b16 %v7101, %v7097
    %v7426 = vpack.c.b16 %v7102, %v7098
    %v7427 = vpack.c.b16 %v7103, %v7099
    %v7428 = vpack.c.b16 %v7104, %v7100
    %v7429 = vpack.c.b16 %v7109, %v7105
    %v7430 = vpack.c.b16 %v7110, %v7106
    %v7431 = vpack.c.b16 %v7111, %v7107
    %v7432 = vpack.c.b16 %v7112, %v7108
    %v7433 = vpack.c.b16 %v7117, %v7113
    %v7434 = vpack.c.b16 %v7118, %v7114
    %v7435 = vpack.c.b16 %v7119, %v7115
    %v7436 = vpack.c.b16 %v7120, %v7116
    %v7437 = vpack.c.b16 %v7125, %v7121
    %v7438 = vpack.c.b16 %v7126, %v7122
    %v7439 = vpack.c.b16 %v7127, %v7123
    %v7440 = vpack.c.b16 %v7128, %v7124
    %v7441 = vpack.c.b16 %v7133, %v7129
    %v7442 = vpack.c.b16 %v7134, %v7130
    %v7443 = vpack.c.b16 %v7135, %v7131
    %v7444 = vpack.c.b16 %v7136, %v7132
    %v7445 = vpack.c.b16 %v7141, %v7137
    %v7446 = vpack.c.b16 %v7142, %v7138
    %v7447 = vpack.c.b16 %v7143, %v7139
    %v7448 = vpack.c.b16 %v7144, %v7140
    %v7449 = vpack.c.b16 %v7149, %v7145
    %v7450 = vpack.c.b16 %v7150, %v7146
    %v7451 = vpack.c.b16 %v7151, %v7147
    %v7452 = vpack.c.b16 %v7152, %v7148
    %v7453 = vpack.c.b16 %v7157, %v7153
    %v7454 = vpack.c.b16 %v7158, %v7154
    %v7455 = vpack.c.b16 %v7159, %v7155
    %v7456 = vpack.c.b16 %v7160, %v7156
    %v7457 = vpack.c.b16 %v7165, %v7161
    %v7458 = vpack.c.b16 %v7166, %v7162
    %v7459 = vpack.c.b16 %v7167, %v7163
    %v7460 = vpack.c.b16 %v7168, %v7164
    %v7461 = vpack.c.b16 %v7173, %v7169
    %v7462 = vpack.c.b16 %v7174, %v7170
    %v7463 = vpack.c.b16 %v7175, %v7171
    %v7464 = vpack.c.b16 %v7176, %v7172
    %v7465 = vpack.c.b16 %v7181, %v7177
    %v7466 = vpack.c.b16 %v7182, %v7178
    %v7467 = vpack.c.b16 %v7183, %v7179
    %v7468 = vpack.c.b16 %v7184, %v7180
    %v7469 = vpack.c.b16 %v7189, %v7185
    %v7470 = vpack.c.b16 %v7190, %v7186
    %v7471 = vpack.c.b16 %v7191, %v7187
    %v7472 = vpack.c.b16 %v7192, %v7188
    %v7473 = vpack.c.b16 %v7197, %v7193
    %v7474 = vpack.c.b16 %v7198, %v7194
    %v7475 = vpack.c.b16 %v7199, %v7195
    %v7476 = vpack.c.b16 %v7200, %v7196
    %v7477 = vpack.c.b16 %v7205, %v7201
    %v7478 = vpack.c.b16 %v7206, %v7202
    %v7479 = vpack.c.b16 %v7207, %v7203
    %v7480 = vpack.c.b16 %v7208, %v7204
    %v7481 = vpack.c.b16 %v7213, %v7209
    %v7482 = vpack.c.b16 %v7214, %v7210
    %v7483 = vpack.c.b16 %v7215, %v7211
    %v7484 = vpack.c.b16 %v7216, %v7212
    %v7485 = vpack.c.b16 %v7221, %v7217
    %v7486 = vpack.c.b16 %v7222, %v7218
    %v7487 = vpack.c.b16 %v7223, %v7219
    %v7488 = vpack.c.b16 %v7224, %v7220
    %v7489 = vpack.c.b16 %v7229, %v7225
    %v7490 = vpack.c.b16 %v7230, %v7226
    %v7491 = vpack.c.b16 %v7231, %v7227
    %v7492 = vpack.c.b16 %v7232, %v7228
    %v7493 = vpack.c.b16 %v7237, %v7233
    %v7494 = vpack.c.b16 %v7238, %v7234
    %v7495 = vpack.c.b16 %v7239, %v7235
    %v7496 = vpack.c.b16 %v7240, %v7236
    %7753 = vmatprep.subr.bf16.mxu0 %v7270
    %7754 = vmatpush1.bf16.msra.mxu0 %v7269
    %7755 = vmatprep.subr.bf16.mxu0 %v7266
    %7756 = vmatpush1.bf16.msra.mxu0 %v7265
    %7757 = vmatprep.subr.bf16.mxu0 %v7262
    %7758 = vmatpush1.bf16.msra.mxu0 %v7261
    %7759 = vmatprep.subr.bf16.mxu0 %v7258
    %7760 = vmatpush1.bf16.msra.mxu0 %v7257
    %7761 = vmatprep.subr.bf16.mxu0 %v7254
    %7762 = vmatpush1.bf16.msra.mxu0 %v7253
    %7763 = vmatprep.subr.bf16.mxu0 %v7250
    %7764 = vmatpush1.bf16.msra.mxu0 %v7249
    %7765 = vmatprep.subr.bf16.mxu0 %v7246
    %7766 = vmatpush1.bf16.msra.mxu0 %v7245
    %7767 = vmatprep.subr.bf16.mxu0 %v7242
    %7768 = vmatpush1.bf16.msra.mxu0 %v7241
    %7769 = vmatprep.subr.bf16.mxu0 %v7302
    %7770 = vmatpush2.bf16.msra.mxu0 %v7301
    %7771 = vmatprep.subr.bf16.mxu0 %v7298
    %7772 = vmatpush2.bf16.msra.mxu0 %v7297
    %7773 = vmatprep.subr.bf16.mxu0 %v7294
    %7774 = vmatpush2.bf16.msra.mxu0 %v7293
    %7775 = vmatprep.subr.bf16.mxu0 %v7290
    %7776 = vmatpush2.bf16.msra.mxu0 %v7289
    %7777 = vmatprep.subr.bf16.mxu0 %v7286
    %7778 = vmatpush2.bf16.msra.mxu0 %v7285
    %7779 = vmatprep.subr.bf16.mxu0 %v7282
    %7780 = vmatpush2.bf16.msra.mxu0 %v7281
    %7781 = vmatprep.subr.bf16.mxu0 %v7278
    %7782 = vmatpush2.bf16.msra.mxu0 %v7277
    %7783 = vmatprep.subr.bf16.mxu0 %v7274
    %7784 = vmatpush2.bf16.msra.mxu0 %v7273
    %7785 = vmatprep.mubr.bf16.mxu0 %v6346
    %7786 = vmatmul.mubr.bf16.gmra.mxu0 %v6345
    %v7787 = vpop.f32.mrf.mxu0
    %v7788 = vadd.f32 %v6136, %v7787
    %v7789 = vpop.f32.mrf.mxu0
    %v7790 = vadd.f32 %v6140, %v7789
    %v7791 = vpop.f32.mrf.mxu0
    %v7792 = vadd.f32 %v6136, %v7791
    %v7793 = vpop.f32.mrf.mxu0
    %v7794 = vadd.f32 %v6140, %v7793
    %7795 = vmatprep.mubr.bf16.mxu0 %v6354
    %7796 = vmatmul.mubr.bf16.gmra.mxu0 %v6353
    %v7797 = vpop.f32.mrf.mxu0
    %v7798 = vadd.f32 %v6136, %v7797
    %v7799 = vpop.f32.mrf.mxu0
    %v7800 = vadd.f32 %v6140, %v7799
    %v7801 = vpop.f32.mrf.mxu0
    %v7802 = vadd.f32 %v6136, %v7801
    %v7803 = vpop.f32.mrf.mxu0
    %v7804 = vadd.f32 %v6140, %v7803
    %7805 = vmatprep.mubr.bf16.mxu0 %v6362
    %7806 = vmatmul.mubr.bf16.gmra.mxu0 %v6361
    %v7807 = vpop.f32.mrf.mxu0
    %v7808 = vadd.f32 %v6136, %v7807
    %v7809 = vpop.f32.mrf.mxu0
    %v7810 = vadd.f32 %v6140, %v7809
    %v7811 = vpop.f32.mrf.mxu0
    %v7812 = vadd.f32 %v6136, %v7811
    %v7813 = vpop.f32.mrf.mxu0
    %v7814 = vadd.f32 %v6140, %v7813
    %7815 = vmatprep.mubr.bf16.mxu0 %v6370
    %7816 = vmatmul.mubr.bf16.gmra.mxu0 %v6369
    %v7817 = vpop.f32.mrf.mxu0
    %v7818 = vadd.f32 %v6136, %v7817
    %v7819 = vpop.f32.mrf.mxu0
    %v7820 = vadd.f32 %v6140, %v7819
    %v7821 = vpop.f32.mrf.mxu0
    %v7822 = vadd.f32 %v6136, %v7821
    %v7823 = vpop.f32.mrf.mxu0
    %v7824 = vadd.f32 %v6140, %v7823
    %7825 = vmatprep.mubr.bf16.mxu0 %v6378
    %7826 = vmatmul.mubr.bf16.gmra.mxu0 %v6377
    %v7827 = vpop.f32.mrf.mxu0
    %v7828 = vadd.f32 %v6136, %v7827
    %v7829 = vpop.f32.mrf.mxu0
    %v7830 = vadd.f32 %v6140, %v7829
    %v7831 = vpop.f32.mrf.mxu0
    %v7832 = vadd.f32 %v6136, %v7831
    %v7833 = vpop.f32.mrf.mxu0
    %v7834 = vadd.f32 %v6140, %v7833
    %7835 = vmatprep.mubr.bf16.mxu0 %v6386
    %7836 = vmatmul.mubr.bf16.gmra.mxu0 %v6385
    %v7837 = vpop.f32.mrf.mxu0
    %v7838 = vadd.f32 %v6136, %v7837
    %v7839 = vpop.f32.mrf.mxu0
    %v7840 = vadd.f32 %v6140, %v7839
    %v7841 = vpop.f32.mrf.mxu0
    %v7842 = vadd.f32 %v6136, %v7841
    %v7843 = vpop.f32.mrf.mxu0
    %v7844 = vadd.f32 %v6140, %v7843
    %7845 = vmatprep.mubr.bf16.mxu0 %v6394
    %7846 = vmatmul.mubr.bf16.gmra.mxu0 %v6393
    %v7847 = vpop.f32.mrf.mxu0
    %v7848 = vadd.f32 %v6136, %v7847
    %v7849 = vpop.f32.mrf.mxu0
    %v7850 = vadd.f32 %v6140, %v7849
    %v7851 = vpop.f32.mrf.mxu0
    %v7852 = vadd.f32 %v6136, %v7851
    %v7853 = vpop.f32.mrf.mxu0
    %v7854 = vadd.f32 %v6140, %v7853
    %7855 = vmatprep.mubr.bf16.mxu0 %v6402
    %7856 = vmatmul.mubr.bf16.gmra.mxu0 %v6401
    %v7857 = vpop.f32.mrf.mxu0
    %v7858 = vadd.f32 %v6136, %v7857
    %v7859 = vpop.f32.mrf.mxu0
    %v7860 = vadd.f32 %v6140, %v7859
    %v7861 = vpop.f32.mrf.mxu0
    %v7862 = vadd.f32 %v6136, %v7861
    %v7863 = vpop.f32.mrf.mxu0
    %v7864 = vadd.f32 %v6140, %v7863
    %7865 = vdwg.mxu0
    %7866 = vmatprep.subr.bf16.mxu0 %v7334
    %7867 = vmatpush1.bf16.msra.mxu0 %v7333
    %7868 = vmatprep.subr.bf16.mxu0 %v7330
    %7869 = vmatpush1.bf16.msra.mxu0 %v7329
    %7870 = vmatprep.subr.bf16.mxu0 %v7326
    %7871 = vmatpush1.bf16.msra.mxu0 %v7325
    %7872 = vmatprep.subr.bf16.mxu0 %v7322
    %7873 = vmatpush1.bf16.msra.mxu0 %v7321
    %7874 = vmatprep.subr.bf16.mxu0 %v7318
    %7875 = vmatpush1.bf16.msra.mxu0 %v7317
    %7876 = vmatprep.subr.bf16.mxu0 %v7314
    %7877 = vmatpush1.bf16.msra.mxu0 %v7313
    %7878 = vmatprep.subr.bf16.mxu0 %v7310
    %7879 = vmatpush1.bf16.msra.mxu0 %v7309
    %7880 = vmatprep.subr.bf16.mxu0 %v7306
    %7881 = vmatpush1.bf16.msra.mxu0 %v7305
    %7882 = vmatprep.subr.bf16.mxu0 %v7366
    %7883 = vmatpush2.bf16.msra.mxu0 %v7365
    %7884 = vmatprep.subr.bf16.mxu0 %v7362
    %7885 = vmatpush2.bf16.msra.mxu0 %v7361
    %7886 = vmatprep.subr.bf16.mxu0 %v7358
    %7887 = vmatpush2.bf16.msra.mxu0 %v7357
    %7888 = vmatprep.subr.bf16.mxu0 %v7354
    %7889 = vmatpush2.bf16.msra.mxu0 %v7353
    %7890 = vmatprep.subr.bf16.mxu0 %v7350
    %7891 = vmatpush2.bf16.msra.mxu0 %v7349
    %7892 = vmatprep.subr.bf16.mxu0 %v7346
    %7893 = vmatpush2.bf16.msra.mxu0 %v7345
    %7894 = vmatprep.subr.bf16.mxu0 %v7342
    %7895 = vmatpush2.bf16.msra.mxu0 %v7341
    %7896 = vmatprep.subr.bf16.mxu0 %v7338
    %7897 = vmatpush2.bf16.msra.mxu0 %v7337
    %7898 = vmatprep.mubr.bf16.mxu0 %v6348
    %7899 = vmatmul.mubr.bf16.gmra.mxu0 %v6347
    %v7900 = vpop.f32.mrf.mxu0
    %v7901 = vadd.f32 %v7788, %v7900
    %v7902 = vpop.f32.mrf.mxu0
    %v7903 = vadd.f32 %v7790, %v7902
    %v7904 = vpop.f32.mrf.mxu0
    %v7905 = vadd.f32 %v7792, %v7904
    %v7906 = vpop.f32.mrf.mxu0
    %v7907 = vadd.f32 %v7794, %v7906
    %7908 = vmatprep.mubr.bf16.mxu0 %v6356
    %7909 = vmatmul.mubr.bf16.gmra.mxu0 %v6355
    %v7910 = vpop.f32.mrf.mxu0
    %v7911 = vadd.f32 %v7798, %v7910
    %v7912 = vpop.f32.mrf.mxu0
    %v7913 = vadd.f32 %v7800, %v7912
    %v7914 = vpop.f32.mrf.mxu0
    %v7915 = vadd.f32 %v7802, %v7914
    %v7916 = vpop.f32.mrf.mxu0
    %v7917 = vadd.f32 %v7804, %v7916
    %7918 = vmatprep.mubr.bf16.mxu0 %v6364
    %7919 = vmatmul.mubr.bf16.gmra.mxu0 %v6363
    %v7920 = vpop.f32.mrf.mxu0
    %v7921 = vadd.f32 %v7808, %v7920
    %v7922 = vpop.f32.mrf.mxu0
    %v7923 = vadd.f32 %v7810, %v7922
    %v7924 = vpop.f32.mrf.mxu0
    %v7925 = vadd.f32 %v7812, %v7924
    %v7926 = vpop.f32.mrf.mxu0
    %v7927 = vadd.f32 %v7814, %v7926
    %7928 = vmatprep.mubr.bf16.mxu0 %v6372
    %7929 = vmatmul.mubr.bf16.gmra.mxu0 %v6371
    %v7930 = vpop.f32.mrf.mxu0
    %v7931 = vadd.f32 %v7818, %v7930
    %v7932 = vpop.f32.mrf.mxu0
    %v7933 = vadd.f32 %v7820, %v7932
    %v7934 = vpop.f32.mrf.mxu0
    %v7935 = vadd.f32 %v7822, %v7934
    %v7936 = vpop.f32.mrf.mxu0
    %v7937 = vadd.f32 %v7824, %v7936
    %7938 = vmatprep.mubr.bf16.mxu0 %v6380
    %7939 = vmatmul.mubr.bf16.gmra.mxu0 %v6379
    %v7940 = vpop.f32.mrf.mxu0
    %v7941 = vadd.f32 %v7828, %v7940
    %v7942 = vpop.f32.mrf.mxu0
    %v7943 = vadd.f32 %v7830, %v7942
    %v7944 = vpop.f32.mrf.mxu0
    %v7945 = vadd.f32 %v7832, %v7944
    %v7946 = vpop.f32.mrf.mxu0
    %v7947 = vadd.f32 %v7834, %v7946
    %7948 = vmatprep.mubr.bf16.mxu0 %v6388
    %7949 = vmatmul.mubr.bf16.gmra.mxu0 %v6387
    %v7950 = vpop.f32.mrf.mxu0
    %v7951 = vadd.f32 %v7838, %v7950
    %v7952 = vpop.f32.mrf.mxu0
    %v7953 = vadd.f32 %v7840, %v7952
    %v7954 = vpop.f32.mrf.mxu0
    %v7955 = vadd.f32 %v7842, %v7954
    %v7956 = vpop.f32.mrf.mxu0
    %v7957 = vadd.f32 %v7844, %v7956
    %7958 = vmatprep.mubr.bf16.mxu0 %v6396
    %7959 = vmatmul.mubr.bf16.gmra.mxu0 %v6395
    %v7960 = vpop.f32.mrf.mxu0
    %v7961 = vadd.f32 %v7848, %v7960
    %v7962 = vpop.f32.mrf.mxu0
    %v7963 = vadd.f32 %v7850, %v7962
    %v7964 = vpop.f32.mrf.mxu0
    %v7965 = vadd.f32 %v7852, %v7964
    %v7966 = vpop.f32.mrf.mxu0
    %v7967 = vadd.f32 %v7854, %v7966
    %7968 = vmatprep.mubr.bf16.mxu0 %v6404
    %7969 = vmatmul.mubr.bf16.gmra.mxu0 %v6403
    %v7970 = vpop.f32.mrf.mxu0
    %v7971 = vadd.f32 %v7858, %v7970
    %v7972 = vpop.f32.mrf.mxu0
    %v7973 = vadd.f32 %v7860, %v7972
    %v7974 = vpop.f32.mrf.mxu0
    %v7975 = vadd.f32 %v7862, %v7974
    %v7976 = vpop.f32.mrf.mxu0
    %v7977 = vadd.f32 %v7864, %v7976
    %7978 = vdwg.mxu0
    %7979 = vmatprep.subr.bf16.mxu0 %v7398
    %7980 = vmatpush1.bf16.msra.mxu0 %v7397
    %7981 = vmatprep.subr.bf16.mxu0 %v7394
    %7982 = vmatpush1.bf16.msra.mxu0 %v7393
    %7983 = vmatprep.subr.bf16.mxu0 %v7390
    %7984 = vmatpush1.bf16.msra.mxu0 %v7389
    %7985 = vmatprep.subr.bf16.mxu0 %v7386
    %7986 = vmatpush1.bf16.msra.mxu0 %v7385
    %7987 = vmatprep.subr.bf16.mxu0 %v7382
    %7988 = vmatpush1.bf16.msra.mxu0 %v7381
    %7989 = vmatprep.subr.bf16.mxu0 %v7378
    %7990 = vmatpush1.bf16.msra.mxu0 %v7377
    %7991 = vmatprep.subr.bf16.mxu0 %v7374
    %7992 = vmatpush1.bf16.msra.mxu0 %v7373
    %7993 = vmatprep.subr.bf16.mxu0 %v7370
    %7994 = vmatpush1.bf16.msra.mxu0 %v7369
    %7995 = vmatprep.subr.bf16.mxu0 %v7430
    %7996 = vmatpush2.bf16.msra.mxu0 %v7429
    %7997 = vmatprep.subr.bf16.mxu0 %v7426
    %7998 = vmatpush2.bf16.msra.mxu0 %v7425
    %7999 = vmatprep.subr.bf16.mxu0 %v7422
    %8000 = vmatpush2.bf16.msra.mxu0 %v7421
    %8001 = vmatprep.subr.bf16.mxu0 %v7418
    %8002 = vmatpush2.bf16.msra.mxu0 %v7417
    %8003 = vmatprep.subr.bf16.mxu0 %v7414
    %8004 = vmatpush2.bf16.msra.mxu0 %v7413
    %8005 = vmatprep.subr.bf16.mxu0 %v7410
    %8006 = vmatpush2.bf16.msra.mxu0 %v7409
    %8007 = vmatprep.subr.bf16.mxu0 %v7406
    %8008 = vmatpush2.bf16.msra.mxu0 %v7405
    %8009 = vmatprep.subr.bf16.mxu0 %v7402
    %8010 = vmatpush2.bf16.msra.mxu0 %v7401
    %8011 = vmatprep.mubr.bf16.mxu0 %v6350
    %8012 = vmatmul.mubr.bf16.gmra.mxu0 %v6349
    %v8013 = vpop.f32.mrf.mxu0
    %v8014 = vadd.f32 %v7901, %v8013
    %v8015 = vpop.f32.mrf.mxu0
    %v8016 = vadd.f32 %v7903, %v8015
    %v8017 = vpop.f32.mrf.mxu0
    %v8018 = vadd.f32 %v7905, %v8017
    %v8019 = vpop.f32.mrf.mxu0
    %v8020 = vadd.f32 %v7907, %v8019
    %8021 = vmatprep.mubr.bf16.mxu0 %v6358
    %8022 = vmatmul.mubr.bf16.gmra.mxu0 %v6357
    %v8023 = vpop.f32.mrf.mxu0
    %v8024 = vadd.f32 %v7911, %v8023
    %v8025 = vpop.f32.mrf.mxu0
    %v8026 = vadd.f32 %v7913, %v8025
    %v8027 = vpop.f32.mrf.mxu0
    %v8028 = vadd.f32 %v7915, %v8027
    %v8029 = vpop.f32.mrf.mxu0
    %v8030 = vadd.f32 %v7917, %v8029
    %8031 = vmatprep.mubr.bf16.mxu0 %v6366
    %8032 = vmatmul.mubr.bf16.gmra.mxu0 %v6365
    %v8033 = vpop.f32.mrf.mxu0
    %v8034 = vadd.f32 %v7921, %v8033
    %v8035 = vpop.f32.mrf.mxu0
    %v8036 = vadd.f32 %v7923, %v8035
    %v8037 = vpop.f32.mrf.mxu0
    %v8038 = vadd.f32 %v7925, %v8037
    %v8039 = vpop.f32.mrf.mxu0
    %v8040 = vadd.f32 %v7927, %v8039
    %8041 = vmatprep.mubr.bf16.mxu0 %v6374
    %8042 = vmatmul.mubr.bf16.gmra.mxu0 %v6373
    %v8043 = vpop.f32.mrf.mxu0
    %v8044 = vadd.f32 %v7931, %v8043
    %v8045 = vpop.f32.mrf.mxu0
    %v8046 = vadd.f32 %v7933, %v8045
    %v8047 = vpop.f32.mrf.mxu0
    %v8048 = vadd.f32 %v7935, %v8047
    %v8049 = vpop.f32.mrf.mxu0
    %v8050 = vadd.f32 %v7937, %v8049
    %8051 = vmatprep.mubr.bf16.mxu0 %v6382
    %8052 = vmatmul.mubr.bf16.gmra.mxu0 %v6381
    %v8053 = vpop.f32.mrf.mxu0
    %v8054 = vadd.f32 %v7941, %v8053
    %v8055 = vpop.f32.mrf.mxu0
    %v8056 = vadd.f32 %v7943, %v8055
    %v8057 = vpop.f32.mrf.mxu0
    %v8058 = vadd.f32 %v7945, %v8057
    %v8059 = vpop.f32.mrf.mxu0
    %v8060 = vadd.f32 %v7947, %v8059
    %8061 = vmatprep.mubr.bf16.mxu0 %v6390
    %8062 = vmatmul.mubr.bf16.gmra.mxu0 %v6389
    %v8063 = vpop.f32.mrf.mxu0
    %v8064 = vadd.f32 %v7951, %v8063
    %v8065 = vpop.f32.mrf.mxu0
    %v8066 = vadd.f32 %v7953, %v8065
    %v8067 = vpop.f32.mrf.mxu0
    %v8068 = vadd.f32 %v7955, %v8067
    %v8069 = vpop.f32.mrf.mxu0
    %v8070 = vadd.f32 %v7957, %v8069
    %8071 = vmatprep.mubr.bf16.mxu0 %v6398
    %8072 = vmatmul.mubr.bf16.gmra.mxu0 %v6397
    %v8073 = vpop.f32.mrf.mxu0
    %v8074 = vadd.f32 %v7961, %v8073
    %v8075 = vpop.f32.mrf.mxu0
    %v8076 = vadd.f32 %v7963, %v8075
    %v8077 = vpop.f32.mrf.mxu0
    %v8078 = vadd.f32 %v7965, %v8077
    %v8079 = vpop.f32.mrf.mxu0
    %v8080 = vadd.f32 %v7967, %v8079
    %8081 = vmatprep.mubr.bf16.mxu0 %v6406
    %8082 = vmatmul.mubr.bf16.gmra.mxu0 %v6405
    %v8083 = vpop.f32.mrf.mxu0
    %v8084 = vadd.f32 %v7971, %v8083
    %v8085 = vpop.f32.mrf.mxu0
    %v8086 = vadd.f32 %v7973, %v8085
    %v8087 = vpop.f32.mrf.mxu0
    %v8088 = vadd.f32 %v7975, %v8087
    %v8089 = vpop.f32.mrf.mxu0
    %v8090 = vadd.f32 %v7977, %v8089
    %8091 = vdwg.mxu0
    %8092 = vmatprep.subr.bf16.mxu0 %v7462
    %8093 = vmatpush1.bf16.msra.mxu0 %v7461
    %8094 = vmatprep.subr.bf16.mxu0 %v7458
    %8095 = vmatpush1.bf16.msra.mxu0 %v7457
    %8096 = vmatprep.subr.bf16.mxu0 %v7454
    %8097 = vmatpush1.bf16.msra.mxu0 %v7453
    %8098 = vmatprep.subr.bf16.mxu0 %v7450
    %8099 = vmatpush1.bf16.msra.mxu0 %v7449
    %8100 = vmatprep.subr.bf16.mxu0 %v7446
    %8101 = vmatpush1.bf16.msra.mxu0 %v7445
    %8102 = vmatprep.subr.bf16.mxu0 %v7442
    %8103 = vmatpush1.bf16.msra.mxu0 %v7441
    %8104 = vmatprep.subr.bf16.mxu0 %v7438
    %8105 = vmatpush1.bf16.msra.mxu0 %v7437
    %8106 = vmatprep.subr.bf16.mxu0 %v7434
    %8107 = vmatpush1.bf16.msra.mxu0 %v7433
    %8108 = vmatprep.subr.bf16.mxu0 %v7494
    %8109 = vmatpush2.bf16.msra.mxu0 %v7493
    %8110 = vmatprep.subr.bf16.mxu0 %v7490
    %8111 = vmatpush2.bf16.msra.mxu0 %v7489
    %8112 = vmatprep.subr.bf16.mxu0 %v7486
    %8113 = vmatpush2.bf16.msra.mxu0 %v7485
    %8114 = vmatprep.subr.bf16.mxu0 %v7482
    %8115 = vmatpush2.bf16.msra.mxu0 %v7481
    %8116 = vmatprep.subr.bf16.mxu0 %v7478
    %8117 = vmatpush2.bf16.msra.mxu0 %v7477
    %8118 = vmatprep.subr.bf16.mxu0 %v7474
    %8119 = vmatpush2.bf16.msra.mxu0 %v7473
    %8120 = vmatprep.subr.bf16.mxu0 %v7470
    %8121 = vmatpush2.bf16.msra.mxu0 %v7469
    %8122 = vmatprep.subr.bf16.mxu0 %v7466
    %8123 = vmatpush2.bf16.msra.mxu0 %v7465
    %8124 = vmatprep.mubr.bf16.mxu0 %v6352
    %8125 = vmatmul.mubr.bf16.gmra.mxu0 %v6351
    %v8126 = vpop.f32.mrf.mxu0
    %v8127 = vadd.f32 %v8014, %v8126
    %v8128 = vpop.f32.mrf.mxu0
    %v8129 = vadd.f32 %v8016, %v8128
    %v8130 = vpop.f32.mrf.mxu0
    %v8131 = vadd.f32 %v8018, %v8130
    %v8132 = vpop.f32.mrf.mxu0
    %v8133 = vadd.f32 %v8020, %v8132
    %8134 = vmatprep.mubr.bf16.mxu0 %v6360
    %8135 = vmatmul.mubr.bf16.gmra.mxu0 %v6359
    %v8136 = vpop.f32.mrf.mxu0
    %v8137 = vadd.f32 %v8024, %v8136
    %v8138 = vpop.f32.mrf.mxu0
    %v8139 = vadd.f32 %v8026, %v8138
    %v8140 = vpop.f32.mrf.mxu0
    %v8141 = vadd.f32 %v8028, %v8140
    %v8142 = vpop.f32.mrf.mxu0
    %v8143 = vadd.f32 %v8030, %v8142
    %8144 = vmatprep.mubr.bf16.mxu0 %v6368
    %8145 = vmatmul.mubr.bf16.gmra.mxu0 %v6367
    %v8146 = vpop.f32.mrf.mxu0
    %v8147 = vadd.f32 %v8034, %v8146
    %v8148 = vpop.f32.mrf.mxu0
    %v8149 = vadd.f32 %v8036, %v8148
    %v8150 = vpop.f32.mrf.mxu0
    %v8151 = vadd.f32 %v8038, %v8150
    %v8152 = vpop.f32.mrf.mxu0
    %v8153 = vadd.f32 %v8040, %v8152
    %8154 = vmatprep.mubr.bf16.mxu0 %v6376
    %8155 = vmatmul.mubr.bf16.gmra.mxu0 %v6375
    %v8156 = vpop.f32.mrf.mxu0
    %v8157 = vadd.f32 %v8044, %v8156
    %v8158 = vpop.f32.mrf.mxu0
    %v8159 = vadd.f32 %v8046, %v8158
    %v8160 = vpop.f32.mrf.mxu0
    %v8161 = vadd.f32 %v8048, %v8160
    %v8162 = vpop.f32.mrf.mxu0
    %v8163 = vadd.f32 %v8050, %v8162
    %8164 = vmatprep.mubr.bf16.mxu0 %v6384
    %8165 = vmatmul.mubr.bf16.gmra.mxu0 %v6383
    %v8166 = vpop.f32.mrf.mxu0
    %v8167 = vadd.f32 %v8054, %v8166
    %v8168 = vpop.f32.mrf.mxu0
    %v8169 = vadd.f32 %v8056, %v8168
    %v8170 = vpop.f32.mrf.mxu0
    %v8171 = vadd.f32 %v8058, %v8170
    %v8172 = vpop.f32.mrf.mxu0
    %v8173 = vadd.f32 %v8060, %v8172
    %8174 = vmatprep.mubr.bf16.mxu0 %v6392
    %8175 = vmatmul.mubr.bf16.gmra.mxu0 %v6391
    %v8176 = vpop.f32.mrf.mxu0
    %v8177 = vadd.f32 %v8064, %v8176
    %v8178 = vpop.f32.mrf.mxu0
    %v8179 = vadd.f32 %v8066, %v8178
    %v8180 = vpop.f32.mrf.mxu0
    %v8181 = vadd.f32 %v8068, %v8180
    %v8182 = vpop.f32.mrf.mxu0
    %v8183 = vadd.f32 %v8070, %v8182
    %8184 = vmatprep.mubr.bf16.mxu0 %v6400
    %8185 = vmatmul.mubr.bf16.gmra.mxu0 %v6399
    %v8186 = vpop.f32.mrf.mxu0
    %v8187 = vadd.f32 %v8074, %v8186
    %v8188 = vpop.f32.mrf.mxu0
    %v8189 = vadd.f32 %v8076, %v8188
    %v8190 = vpop.f32.mrf.mxu0
    %v8191 = vadd.f32 %v8078, %v8190
    %v8192 = vpop.f32.mrf.mxu0
    %v8193 = vadd.f32 %v8080, %v8192
    %8194 = vmatprep.mubr.bf16.mxu0 %v6408
    %8195 = vmatmul.mubr.bf16.gmra.mxu0 %v6407
    %v8196 = vpop.f32.mrf.mxu0
    %v8197 = vadd.f32 %v8084, %v8196
    %v8198 = vpop.f32.mrf.mxu0
    %v8199 = vadd.f32 %v8086, %v8198
    %v8200 = vpop.f32.mrf.mxu0
    %v8201 = vadd.f32 %v8088, %v8200
    %v8202 = vpop.f32.mrf.mxu0
    %v8203 = vadd.f32 %v8090, %v8202
    %8204 = vdwg.mxu0
    %8205 = vmatprep.subr.bf16.mxu0 %v7272
    %8206 = vmatpush1.bf16.msra.mxu0 %v7271
    %8207 = vmatprep.subr.bf16.mxu0 %v7268
    %8208 = vmatpush1.bf16.msra.mxu0 %v7267
    %8209 = vmatprep.subr.bf16.mxu0 %v7264
    %8210 = vmatpush1.bf16.msra.mxu0 %v7263
    %8211 = vmatprep.subr.bf16.mxu0 %v7260
    %8212 = vmatpush1.bf16.msra.mxu0 %v7259
    %8213 = vmatprep.subr.bf16.mxu0 %v7256
    %8214 = vmatpush1.bf16.msra.mxu0 %v7255
    %8215 = vmatprep.subr.bf16.mxu0 %v7252
    %8216 = vmatpush1.bf16.msra.mxu0 %v7251
    %8217 = vmatprep.subr.bf16.mxu0 %v7248
    %8218 = vmatpush1.bf16.msra.mxu0 %v7247
    %8219 = vmatprep.subr.bf16.mxu0 %v7244
    %8220 = vmatpush1.bf16.msra.mxu0 %v7243
    %8221 = vmatprep.subr.bf16.mxu0 %v7304
    %8222 = vmatpush2.bf16.msra.mxu0 %v7303
    %8223 = vmatprep.subr.bf16.mxu0 %v7300
    %8224 = vmatpush2.bf16.msra.mxu0 %v7299
    %8225 = vmatprep.subr.bf16.mxu0 %v7296
    %8226 = vmatpush2.bf16.msra.mxu0 %v7295
    %8227 = vmatprep.subr.bf16.mxu0 %v7292
    %8228 = vmatpush2.bf16.msra.mxu0 %v7291
    %8229 = vmatprep.subr.bf16.mxu0 %v7288
    %8230 = vmatpush2.bf16.msra.mxu0 %v7287
    %8231 = vmatprep.subr.bf16.mxu0 %v7284
    %8232 = vmatpush2.bf16.msra.mxu0 %v7283
    %8233 = vmatprep.subr.bf16.mxu0 %v7280
    %8234 = vmatpush2.bf16.msra.mxu0 %v7279
    %8235 = vmatprep.subr.bf16.mxu0 %v7276
    %8236 = vmatpush2.bf16.msra.mxu0 %v7275
    %8237 = vmatprep.mubr.bf16.mxu0 %v6346
    %8238 = vmatmul.mubr.bf16.gmra.mxu0 %v6345
    %v8239 = vpop.f32.mrf.mxu0
    %v8240 = vadd.f32 %v6144, %v8239
    %v8241 = vpop.f32.mrf.mxu0
    %v8242 = vadd.f32 %v6148, %v8241
    %v8243 = vpop.f32.mrf.mxu0
    %v8244 = vadd.f32 %v6144, %v8243
    %v8245 = vpop.f32.mrf.mxu0
    %v8246 = vadd.f32 %v6148, %v8245
    %8247 = vmatprep.mubr.bf16.mxu0 %v6354
    %8248 = vmatmul.mubr.bf16.gmra.mxu0 %v6353
    %v8249 = vpop.f32.mrf.mxu0
    %v8250 = vadd.f32 %v6144, %v8249
    %v8251 = vpop.f32.mrf.mxu0
    %v8252 = vadd.f32 %v6148, %v8251
    %v8253 = vpop.f32.mrf.mxu0
    %v8254 = vadd.f32 %v6144, %v8253
    %v8255 = vpop.f32.mrf.mxu0
    %v8256 = vadd.f32 %v6148, %v8255
    %8257 = vmatprep.mubr.bf16.mxu0 %v6362
    %8258 = vmatmul.mubr.bf16.gmra.mxu0 %v6361
    %v8259 = vpop.f32.mrf.mxu0
    %v8260 = vadd.f32 %v6144, %v8259
    %v8261 = vpop.f32.mrf.mxu0
    %v8262 = vadd.f32 %v6148, %v8261
    %v8263 = vpop.f32.mrf.mxu0
    %v8264 = vadd.f32 %v6144, %v8263
    %v8265 = vpop.f32.mrf.mxu0
    %v8266 = vadd.f32 %v6148, %v8265
    %8267 = vmatprep.mubr.bf16.mxu0 %v6370
    %8268 = vmatmul.mubr.bf16.gmra.mxu0 %v6369
    %v8269 = vpop.f32.mrf.mxu0
    %v8270 = vadd.f32 %v6144, %v8269
    %v8271 = vpop.f32.mrf.mxu0
    %v8272 = vadd.f32 %v6148, %v8271
    %v8273 = vpop.f32.mrf.mxu0
    %v8274 = vadd.f32 %v6144, %v8273
    %v8275 = vpop.f32.mrf.mxu0
    %v8276 = vadd.f32 %v6148, %v8275
    %8277 = vmatprep.mubr.bf16.mxu0 %v6378
    %8278 = vmatmul.mubr.bf16.gmra.mxu0 %v6377
    %v8279 = vpop.f32.mrf.mxu0
    %v8280 = vadd.f32 %v6144, %v8279
    %v8281 = vpop.f32.mrf.mxu0
    %v8282 = vadd.f32 %v6148, %v8281
    %v8283 = vpop.f32.mrf.mxu0
    %v8284 = vadd.f32 %v6144, %v8283
    %v8285 = vpop.f32.mrf.mxu0
    %v8286 = vadd.f32 %v6148, %v8285
    %8287 = vmatprep.mubr.bf16.mxu0 %v6386
    %8288 = vmatmul.mubr.bf16.gmra.mxu0 %v6385
    %v8289 = vpop.f32.mrf.mxu0
    %v8290 = vadd.f32 %v6144, %v8289
    %v8291 = vpop.f32.mrf.mxu0
    %v8292 = vadd.f32 %v6148, %v8291
    %v8293 = vpop.f32.mrf.mxu0
    %v8294 = vadd.f32 %v6144, %v8293
    %v8295 = vpop.f32.mrf.mxu0
    %v8296 = vadd.f32 %v6148, %v8295
    %8297 = vmatprep.mubr.bf16.mxu0 %v6394
    %8298 = vmatmul.mubr.bf16.gmra.mxu0 %v6393
    %v8299 = vpop.f32.mrf.mxu0
    %v8300 = vadd.f32 %v6144, %v8299
    %v8301 = vpop.f32.mrf.mxu0
    %v8302 = vadd.f32 %v6148, %v8301
    %v8303 = vpop.f32.mrf.mxu0
    %v8304 = vadd.f32 %v6144, %v8303
    %v8305 = vpop.f32.mrf.mxu0
    %v8306 = vadd.f32 %v6148, %v8305
    %8307 = vmatprep.mubr.bf16.mxu0 %v6402
    %8308 = vmatmul.mubr.bf16.gmra.mxu0 %v6401
    %v8309 = vpop.f32.mrf.mxu0
    %v8310 = vadd.f32 %v6144, %v8309
    %v8311 = vpop.f32.mrf.mxu0
    %v8312 = vadd.f32 %v6148, %v8311
    %v8313 = vpop.f32.mrf.mxu0
    %v8314 = vadd.f32 %v6144, %v8313
    %v8315 = vpop.f32.mrf.mxu0
    %v8316 = vadd.f32 %v6148, %v8315
    %8317 = vdwg.mxu0
    %8318 = vmatprep.subr.bf16.mxu0 %v7336
    %8319 = vmatpush1.bf16.msra.mxu0 %v7335
    %8320 = vmatprep.subr.bf16.mxu0 %v7332
    %8321 = vmatpush1.bf16.msra.mxu0 %v7331
    %8322 = vmatprep.subr.bf16.mxu0 %v7328
    %8323 = vmatpush1.bf16.msra.mxu0 %v7327
    %8324 = vmatprep.subr.bf16.mxu0 %v7324
    %8325 = vmatpush1.bf16.msra.mxu0 %v7323
    %8326 = vmatprep.subr.bf16.mxu0 %v7320
    %8327 = vmatpush1.bf16.msra.mxu0 %v7319
    %8328 = vmatprep.subr.bf16.mxu0 %v7316
    %8329 = vmatpush1.bf16.msra.mxu0 %v7315
    %8330 = vmatprep.subr.bf16.mxu0 %v7312
    %8331 = vmatpush1.bf16.msra.mxu0 %v7311
    %8332 = vmatprep.subr.bf16.mxu0 %v7308
    %8333 = vmatpush1.bf16.msra.mxu0 %v7307
    %8334 = vmatprep.subr.bf16.mxu0 %v7368
    %8335 = vmatpush2.bf16.msra.mxu0 %v7367
    %8336 = vmatprep.subr.bf16.mxu0 %v7364
    %8337 = vmatpush2.bf16.msra.mxu0 %v7363
    %8338 = vmatprep.subr.bf16.mxu0 %v7360
    %8339 = vmatpush2.bf16.msra.mxu0 %v7359
    %8340 = vmatprep.subr.bf16.mxu0 %v7356
    %8341 = vmatpush2.bf16.msra.mxu0 %v7355
    %8342 = vmatprep.subr.bf16.mxu0 %v7352
    %8343 = vmatpush2.bf16.msra.mxu0 %v7351
    %8344 = vmatprep.subr.bf16.mxu0 %v7348
    %8345 = vmatpush2.bf16.msra.mxu0 %v7347
    %8346 = vmatprep.subr.bf16.mxu0 %v7344
    %8347 = vmatpush2.bf16.msra.mxu0 %v7343
    %8348 = vmatprep.subr.bf16.mxu0 %v7340
    %8349 = vmatpush2.bf16.msra.mxu0 %v7339
    %8350 = vmatprep.mubr.bf16.mxu0 %v6348
    %8351 = vmatmul.mubr.bf16.gmra.mxu0 %v6347
    %v8352 = vpop.f32.mrf.mxu0
    %v8353 = vadd.f32 %v8240, %v8352
    %v8354 = vpop.f32.mrf.mxu0
    %v8355 = vadd.f32 %v8242, %v8354
    %v8356 = vpop.f32.mrf.mxu0
    %v8357 = vadd.f32 %v8244, %v8356
    %v8358 = vpop.f32.mrf.mxu0
    %v8359 = vadd.f32 %v8246, %v8358
    %8360 = vmatprep.mubr.bf16.mxu0 %v6356
    %8361 = vmatmul.mubr.bf16.gmra.mxu0 %v6355
    %v8362 = vpop.f32.mrf.mxu0
    %v8363 = vadd.f32 %v8250, %v8362
    %v8364 = vpop.f32.mrf.mxu0
    %v8365 = vadd.f32 %v8252, %v8364
    %v8366 = vpop.f32.mrf.mxu0
    %v8367 = vadd.f32 %v8254, %v8366
    %v8368 = vpop.f32.mrf.mxu0
    %v8369 = vadd.f32 %v8256, %v8368
    %8370 = vmatprep.mubr.bf16.mxu0 %v6364
    %8371 = vmatmul.mubr.bf16.gmra.mxu0 %v6363
    %v8372 = vpop.f32.mrf.mxu0
    %v8373 = vadd.f32 %v8260, %v8372
    %v8374 = vpop.f32.mrf.mxu0
    %v8375 = vadd.f32 %v8262, %v8374
    %v8376 = vpop.f32.mrf.mxu0
    %v8377 = vadd.f32 %v8264, %v8376
    %v8378 = vpop.f32.mrf.mxu0
    %v8379 = vadd.f32 %v8266, %v8378
    %8380 = vmatprep.mubr.bf16.mxu0 %v6372
    %8381 = vmatmul.mubr.bf16.gmra.mxu0 %v6371
    %v8382 = vpop.f32.mrf.mxu0
    %v8383 = vadd.f32 %v8270, %v8382
    %v8384 = vpop.f32.mrf.mxu0
    %v8385 = vadd.f32 %v8272, %v8384
    %v8386 = vpop.f32.mrf.mxu0
    %v8387 = vadd.f32 %v8274, %v8386
    %v8388 = vpop.f32.mrf.mxu0
    %v8389 = vadd.f32 %v8276, %v8388
    %8390 = vmatprep.mubr.bf16.mxu0 %v6380
    %8391 = vmatmul.mubr.bf16.gmra.mxu0 %v6379
    %v8392 = vpop.f32.mrf.mxu0
    %v8393 = vadd.f32 %v8280, %v8392
    %v8394 = vpop.f32.mrf.mxu0
    %v8395 = vadd.f32 %v8282, %v8394
    %v8396 = vpop.f32.mrf.mxu0
    %v8397 = vadd.f32 %v8284, %v8396
    %v8398 = vpop.f32.mrf.mxu0
    %v8399 = vadd.f32 %v8286, %v8398
    %8400 = vmatprep.mubr.bf16.mxu0 %v6388
    %8401 = vmatmul.mubr.bf16.gmra.mxu0 %v6387
    %v8402 = vpop.f32.mrf.mxu0
    %v8403 = vadd.f32 %v8290, %v8402
    %v8404 = vpop.f32.mrf.mxu0
    %v8405 = vadd.f32 %v8292, %v8404
    %v8406 = vpop.f32.mrf.mxu0
    %v8407 = vadd.f32 %v8294, %v8406
    %v8408 = vpop.f32.mrf.mxu0
    %v8409 = vadd.f32 %v8296, %v8408
    %8410 = vmatprep.mubr.bf16.mxu0 %v6396
    %8411 = vmatmul.mubr.bf16.gmra.mxu0 %v6395
    %v8412 = vpop.f32.mrf.mxu0
    %v8413 = vadd.f32 %v8300, %v8412
    %v8414 = vpop.f32.mrf.mxu0
    %v8415 = vadd.f32 %v8302, %v8414
    %v8416 = vpop.f32.mrf.mxu0
    %v8417 = vadd.f32 %v8304, %v8416
    %v8418 = vpop.f32.mrf.mxu0
    %v8419 = vadd.f32 %v8306, %v8418
    %8420 = vmatprep.mubr.bf16.mxu0 %v6404
    %8421 = vmatmul.mubr.bf16.gmra.mxu0 %v6403
    %v8422 = vpop.f32.mrf.mxu0
    %v8423 = vadd.f32 %v8310, %v8422
    %v8424 = vpop.f32.mrf.mxu0
    %v8425 = vadd.f32 %v8312, %v8424
    %v8426 = vpop.f32.mrf.mxu0
    %v8427 = vadd.f32 %v8314, %v8426
    %v8428 = vpop.f32.mrf.mxu0
    %v8429 = vadd.f32 %v8316, %v8428
    %8430 = vdwg.mxu0
    %8431 = vmatprep.subr.bf16.mxu0 %v7400
    %8432 = vmatpush1.bf16.msra.mxu0 %v7399
    %8433 = vmatprep.subr.bf16.mxu0 %v7396
    %8434 = vmatpush1.bf16.msra.mxu0 %v7395
    %8435 = vmatprep.subr.bf16.mxu0 %v7392
    %8436 = vmatpush1.bf16.msra.mxu0 %v7391
    %8437 = vmatprep.subr.bf16.mxu0 %v7388
    %8438 = vmatpush1.bf16.msra.mxu0 %v7387
    %8439 = vmatprep.subr.bf16.mxu0 %v7384
    %8440 = vmatpush1.bf16.msra.mxu0 %v7383
    %8441 = vmatprep.subr.bf16.mxu0 %v7380
    %8442 = vmatpush1.bf16.msra.mxu0 %v7379
    %8443 = vmatprep.subr.bf16.mxu0 %v7376
    %8444 = vmatpush1.bf16.msra.mxu0 %v7375
    %8445 = vmatprep.subr.bf16.mxu0 %v7372
    %8446 = vmatpush1.bf16.msra.mxu0 %v7371
    %8447 = vmatprep.subr.bf16.mxu0 %v7432
    %8448 = vmatpush2.bf16.msra.mxu0 %v7431
    %8449 = vmatprep.subr.bf16.mxu0 %v7428
    %8450 = vmatpush2.bf16.msra.mxu0 %v7427
    %8451 = vmatprep.subr.bf16.mxu0 %v7424
    %8452 = vmatpush2.bf16.msra.mxu0 %v7423
    %8453 = vmatprep.subr.bf16.mxu0 %v7420
    %8454 = vmatpush2.bf16.msra.mxu0 %v7419
    %8455 = vmatprep.subr.bf16.mxu0 %v7416
    %8456 = vmatpush2.bf16.msra.mxu0 %v7415
    %8457 = vmatprep.subr.bf16.mxu0 %v7412
    %8458 = vmatpush2.bf16.msra.mxu0 %v7411
    %8459 = vmatprep.subr.bf16.mxu0 %v7408
    %8460 = vmatpush2.bf16.msra.mxu0 %v7407
    %8461 = vmatprep.subr.bf16.mxu0 %v7404
    %8462 = vmatpush2.bf16.msra.mxu0 %v7403
    %8463 = vmatprep.mubr.bf16.mxu0 %v6350
    %8464 = vmatmul.mubr.bf16.gmra.mxu0 %v6349
    %v8465 = vpop.f32.mrf.mxu0
    %v8466 = vadd.f32 %v8353, %v8465
    %v8467 = vpop.f32.mrf.mxu0
    %v8468 = vadd.f32 %v8355, %v8467
    %v8469 = vpop.f32.mrf.mxu0
    %v8470 = vadd.f32 %v8357, %v8469
    %v8471 = vpop.f32.mrf.mxu0
    %v8472 = vadd.f32 %v8359, %v8471
    %8473 = vmatprep.mubr.bf16.mxu0 %v6358
    %8474 = vmatmul.mubr.bf16.gmra.mxu0 %v6357
    %v8475 = vpop.f32.mrf.mxu0
    %v8476 = vadd.f32 %v8363, %v8475
    %v8477 = vpop.f32.mrf.mxu0
    %v8478 = vadd.f32 %v8365, %v8477
    %v8479 = vpop.f32.mrf.mxu0
    %v8480 = vadd.f32 %v8367, %v8479
    %v8481 = vpop.f32.mrf.mxu0
    %v8482 = vadd.f32 %v8369, %v8481
    %8483 = vmatprep.mubr.bf16.mxu0 %v6366
    %8484 = vmatmul.mubr.bf16.gmra.mxu0 %v6365
    %v8485 = vpop.f32.mrf.mxu0
    %v8486 = vadd.f32 %v8373, %v8485
    %v8487 = vpop.f32.mrf.mxu0
    %v8488 = vadd.f32 %v8375, %v8487
    %v8489 = vpop.f32.mrf.mxu0
    %v8490 = vadd.f32 %v8377, %v8489
    %v8491 = vpop.f32.mrf.mxu0
    %v8492 = vadd.f32 %v8379, %v8491
    %8493 = vmatprep.mubr.bf16.mxu0 %v6374
    %8494 = vmatmul.mubr.bf16.gmra.mxu0 %v6373
    %v8495 = vpop.f32.mrf.mxu0
    %v8496 = vadd.f32 %v8383, %v8495
    %v8497 = vpop.f32.mrf.mxu0
    %v8498 = vadd.f32 %v8385, %v8497
    %v8499 = vpop.f32.mrf.mxu0
    %v8500 = vadd.f32 %v8387, %v8499
    %v8501 = vpop.f32.mrf.mxu0
    %v8502 = vadd.f32 %v8389, %v8501
    %8503 = vmatprep.mubr.bf16.mxu0 %v6382
    %8504 = vmatmul.mubr.bf16.gmra.mxu0 %v6381
    %v8505 = vpop.f32.mrf.mxu0
    %v8506 = vadd.f32 %v8393, %v8505
    %v8507 = vpop.f32.mrf.mxu0
    %v8508 = vadd.f32 %v8395, %v8507
    %v8509 = vpop.f32.mrf.mxu0
    %v8510 = vadd.f32 %v8397, %v8509
    %v8511 = vpop.f32.mrf.mxu0
    %v8512 = vadd.f32 %v8399, %v8511
    %8513 = vmatprep.mubr.bf16.mxu0 %v6390
    %8514 = vmatmul.mubr.bf16.gmra.mxu0 %v6389
    %v8515 = vpop.f32.mrf.mxu0
    %v8516 = vadd.f32 %v8403, %v8515
    %v8517 = vpop.f32.mrf.mxu0
    %v8518 = vadd.f32 %v8405, %v8517
    %v8519 = vpop.f32.mrf.mxu0
    %v8520 = vadd.f32 %v8407, %v8519
    %v8521 = vpop.f32.mrf.mxu0
    %v8522 = vadd.f32 %v8409, %v8521
    %8523 = vmatprep.mubr.bf16.mxu0 %v6398
    %8524 = vmatmul.mubr.bf16.gmra.mxu0 %v6397
    %v8525 = vpop.f32.mrf.mxu0
    %v8526 = vadd.f32 %v8413, %v8525
    %v8527 = vpop.f32.mrf.mxu0
    %v8528 = vadd.f32 %v8415, %v8527
    %v8529 = vpop.f32.mrf.mxu0
    %v8530 = vadd.f32 %v8417, %v8529
    %v8531 = vpop.f32.mrf.mxu0
    %v8532 = vadd.f32 %v8419, %v8531
    %8533 = vmatprep.mubr.bf16.mxu0 %v6406
    %8534 = vmatmul.mubr.bf16.gmra.mxu0 %v6405
    %v8535 = vpop.f32.mrf.mxu0
    %v8536 = vadd.f32 %v8423, %v8535
    %v8537 = vpop.f32.mrf.mxu0
    %v8538 = vadd.f32 %v8425, %v8537
    %v8539 = vpop.f32.mrf.mxu0
    %v8540 = vadd.f32 %v8427, %v8539
    %v8541 = vpop.f32.mrf.mxu0
    %v8542 = vadd.f32 %v8429, %v8541
    %8543 = vdwg.mxu0
    %8544 = vmatprep.subr.bf16.mxu0 %v7464
    %8545 = vmatpush1.bf16.msra.mxu0 %v7463
    %8546 = vmatprep.subr.bf16.mxu0 %v7460
    %8547 = vmatpush1.bf16.msra.mxu0 %v7459
    %8548 = vmatprep.subr.bf16.mxu0 %v7456
    %8549 = vmatpush1.bf16.msra.mxu0 %v7455
    %8550 = vmatprep.subr.bf16.mxu0 %v7452
    %8551 = vmatpush1.bf16.msra.mxu0 %v7451
    %8552 = vmatprep.subr.bf16.mxu0 %v7448
    %8553 = vmatpush1.bf16.msra.mxu0 %v7447
    %8554 = vmatprep.subr.bf16.mxu0 %v7444
    %8555 = vmatpush1.bf16.msra.mxu0 %v7443
    %8556 = vmatprep.subr.bf16.mxu0 %v7440
    %8557 = vmatpush1.bf16.msra.mxu0 %v7439
    %8558 = vmatprep.subr.bf16.mxu0 %v7436
    %8559 = vmatpush1.bf16.msra.mxu0 %v7435
    %8560 = vmatprep.subr.bf16.mxu0 %v7496
    %8561 = vmatpush2.bf16.msra.mxu0 %v7495
    %8562 = vmatprep.subr.bf16.mxu0 %v7492
    %8563 = vmatpush2.bf16.msra.mxu0 %v7491
    %8564 = vmatprep.subr.bf16.mxu0 %v7488
    %8565 = vmatpush2.bf16.msra.mxu0 %v7487
    %8566 = vmatprep.subr.bf16.mxu0 %v7484
    %8567 = vmatpush2.bf16.msra.mxu0 %v7483
    %8568 = vmatprep.subr.bf16.mxu0 %v7480
    %8569 = vmatpush2.bf16.msra.mxu0 %v7479
    %8570 = vmatprep.subr.bf16.mxu0 %v7476
    %8571 = vmatpush2.bf16.msra.mxu0 %v7475
    %8572 = vmatprep.subr.bf16.mxu0 %v7472
    %8573 = vmatpush2.bf16.msra.mxu0 %v7471
    %8574 = vmatprep.subr.bf16.mxu0 %v7468
    %8575 = vmatpush2.bf16.msra.mxu0 %v7467
    %8576 = vmatprep.mubr.bf16.mxu0 %v6352
    %8577 = vmatmul.mubr.bf16.gmra.mxu0 %v6351
    %v8578 = vpop.f32.mrf.mxu0
    %v8579 = vadd.f32 %v8466, %v8578
    %v8580 = vpop.f32.mrf.mxu0
    %v8581 = vadd.f32 %v8468, %v8580
    %v8582 = vpop.f32.mrf.mxu0
    %v8583 = vadd.f32 %v8470, %v8582
    %v8584 = vpop.f32.mrf.mxu0
    %v8585 = vadd.f32 %v8472, %v8584
    %8586 = vmatprep.mubr.bf16.mxu0 %v6360
    %8587 = vmatmul.mubr.bf16.gmra.mxu0 %v6359
    %v8588 = vpop.f32.mrf.mxu0
    %v8589 = vadd.f32 %v8476, %v8588
    %v8590 = vpop.f32.mrf.mxu0
    %v8591 = vadd.f32 %v8478, %v8590
    %v8592 = vpop.f32.mrf.mxu0
    %v8593 = vadd.f32 %v8480, %v8592
    %v8594 = vpop.f32.mrf.mxu0
    %v8595 = vadd.f32 %v8482, %v8594
    %8596 = vmatprep.mubr.bf16.mxu0 %v6368
    %8597 = vmatmul.mubr.bf16.gmra.mxu0 %v6367
    %v8598 = vpop.f32.mrf.mxu0
    %v8599 = vadd.f32 %v8486, %v8598
    %v8600 = vpop.f32.mrf.mxu0
    %v8601 = vadd.f32 %v8488, %v8600
    %v8602 = vpop.f32.mrf.mxu0
    %v8603 = vadd.f32 %v8490, %v8602
    %v8604 = vpop.f32.mrf.mxu0
    %v8605 = vadd.f32 %v8492, %v8604
    %8606 = vmatprep.mubr.bf16.mxu0 %v6376
    %8607 = vmatmul.mubr.bf16.gmra.mxu0 %v6375
    %v8608 = vpop.f32.mrf.mxu0
    %v8609 = vadd.f32 %v8496, %v8608
    %v8610 = vpop.f32.mrf.mxu0
    %v8611 = vadd.f32 %v8498, %v8610
    %v8612 = vpop.f32.mrf.mxu0
    %v8613 = vadd.f32 %v8500, %v8612
    %v8614 = vpop.f32.mrf.mxu0
    %v8615 = vadd.f32 %v8502, %v8614
    %8616 = vmatprep.mubr.bf16.mxu0 %v6384
    %8617 = vmatmul.mubr.bf16.gmra.mxu0 %v6383
    %v8618 = vpop.f32.mrf.mxu0
    %v8619 = vadd.f32 %v8506, %v8618
    %v8620 = vpop.f32.mrf.mxu0
    %v8621 = vadd.f32 %v8508, %v8620
    %v8622 = vpop.f32.mrf.mxu0
    %v8623 = vadd.f32 %v8510, %v8622
    %v8624 = vpop.f32.mrf.mxu0
    %v8625 = vadd.f32 %v8512, %v8624
    %8626 = vmatprep.mubr.bf16.mxu0 %v6392
    %8627 = vmatmul.mubr.bf16.gmra.mxu0 %v6391
    %v8628 = vpop.f32.mrf.mxu0
    %v8629 = vadd.f32 %v8516, %v8628
    %v8630 = vpop.f32.mrf.mxu0
    %v8631 = vadd.f32 %v8518, %v8630
    %v8632 = vpop.f32.mrf.mxu0
    %v8633 = vadd.f32 %v8520, %v8632
    %v8634 = vpop.f32.mrf.mxu0
    %v8635 = vadd.f32 %v8522, %v8634
    %8636 = vmatprep.mubr.bf16.mxu0 %v6400
    %8637 = vmatmul.mubr.bf16.gmra.mxu0 %v6399
    %v8638 = vpop.f32.mrf.mxu0
    %v8639 = vadd.f32 %v8526, %v8638
    %v8640 = vpop.f32.mrf.mxu0
    %v8641 = vadd.f32 %v8528, %v8640
    %v8642 = vpop.f32.mrf.mxu0
    %v8643 = vadd.f32 %v8530, %v8642
    %v8644 = vpop.f32.mrf.mxu0
    %v8645 = vadd.f32 %v8532, %v8644
    %8646 = vmatprep.mubr.bf16.mxu0 %v6408
    %8647 = vmatmul.mubr.bf16.gmra.mxu0 %v6407
    %v8648 = vpop.f32.mrf.mxu0
    %v8649 = vadd.f32 %v8536, %v8648
    %v8650 = vpop.f32.mrf.mxu0
    %v8651 = vadd.f32 %v8538, %v8650
    %v8652 = vpop.f32.mrf.mxu0
    %v8653 = vadd.f32 %v8540, %v8652
    %v8654 = vpop.f32.mrf.mxu0
    %v8655 = vadd.f32 %v8542, %v8654
    %8656 = vdwg.mxu0
    %v8657 = vpack.c.bf16 %v2439, %v2435
    %v8658 = vpack.c.bf16 %v2441, %v2437
    %v8659 = vpack.c.bf16 %v2891, %v2887
    %v8660 = vpack.c.bf16 %v2893, %v2889
    %v8661 = vpack.c.bf16 %v2449, %v2445
    %v8662 = vpack.c.bf16 %v2451, %v2447
    %v8663 = vpack.c.bf16 %v2901, %v2897
    %v8664 = vpack.c.bf16 %v2903, %v2899
    %v8665 = vpack.c.bf16 %v2459, %v2455
    %v8666 = vpack.c.bf16 %v2461, %v2457
    %v8667 = vpack.c.bf16 %v2911, %v2907
    %v8668 = vpack.c.bf16 %v2913, %v2909
    %v8669 = vpack.c.bf16 %v2469, %v2465
    %v8670 = vpack.c.bf16 %v2471, %v2467
    %v8671 = vpack.c.bf16 %v2921, %v2917
    %v8672 = vpack.c.bf16 %v2923, %v2919
    %v8673 = vpack.c.bf16 %v2479, %v2475
    %v8674 = vpack.c.bf16 %v2481, %v2477
    %v8675 = vpack.c.bf16 %v2931, %v2927
    %v8676 = vpack.c.bf16 %v2933, %v2929
    %v8677 = vpack.c.bf16 %v2489, %v2485
    %v8678 = vpack.c.bf16 %v2491, %v2487
    %v8679 = vpack.c.bf16 %v2941, %v2937
    %v8680 = vpack.c.bf16 %v2943, %v2939
    %v8681 = vpack.c.bf16 %v2499, %v2495
    %v8682 = vpack.c.bf16 %v2501, %v2497
    %v8683 = vpack.c.bf16 %v2951, %v2947
    %v8684 = vpack.c.bf16 %v2953, %v2949
    %v8685 = vpack.c.bf16 %v2509, %v2505
    %v8686 = vpack.c.bf16 %v2511, %v2507
    %v8687 = vpack.c.bf16 %v2961, %v2957
    %v8688 = vpack.c.bf16 %v2963, %v2959
    %v8721 = vunpack.c.l.b16 %v8657
    %v8722 = vunpack.c.l.b16 %v8658
    %v8723 = vunpack.c.l.b16 %v8659
    %v8724 = vunpack.c.l.b16 %v8660
    %v8725 = vunpack.c.h.b16 %v8657
    %v8726 = vunpack.c.h.b16 %v8658
    %v8727 = vunpack.c.h.b16 %v8659
    %v8728 = vunpack.c.h.b16 %v8660
    %v8729 = vunpack.c.l.b16 %v8661
    %v8730 = vunpack.c.l.b16 %v8662
    %v8731 = vunpack.c.l.b16 %v8663
    %v8732 = vunpack.c.l.b16 %v8664
    %v8733 = vunpack.c.h.b16 %v8661
    %v8734 = vunpack.c.h.b16 %v8662
    %v8735 = vunpack.c.h.b16 %v8663
    %v8736 = vunpack.c.h.b16 %v8664
    %v8737 = vunpack.c.l.b16 %v8665
    %v8738 = vunpack.c.l.b16 %v8666
    %v8739 = vunpack.c.l.b16 %v8667
    %v8740 = vunpack.c.l.b16 %v8668
    %v8741 = vunpack.c.h.b16 %v8665
    %v8742 = vunpack.c.h.b16 %v8666
    %v8743 = vunpack.c.h.b16 %v8667
    %v8744 = vunpack.c.h.b16 %v8668
    %v8745 = vunpack.c.l.b16 %v8669
    %v8746 = vunpack.c.l.b16 %v8670
    %v8747 = vunpack.c.l.b16 %v8671
    %v8748 = vunpack.c.l.b16 %v8672
    %v8749 = vunpack.c.h.b16 %v8669
    %v8750 = vunpack.c.h.b16 %v8670
    %v8751 = vunpack.c.h.b16 %v8671
    %v8752 = vunpack.c.h.b16 %v8672
    %v8753 = vunpack.c.l.b16 %v8673
    %v8754 = vunpack.c.l.b16 %v8674
    %v8755 = vunpack.c.l.b16 %v8675
    %v8756 = vunpack.c.l.b16 %v8676
    %v8757 = vunpack.c.h.b16 %v8673
    %v8758 = vunpack.c.h.b16 %v8674
    %v8759 = vunpack.c.h.b16 %v8675
    %v8760 = vunpack.c.h.b16 %v8676
    %v8761 = vunpack.c.l.b16 %v8677
    %v8762 = vunpack.c.l.b16 %v8678
    %v8763 = vunpack.c.l.b16 %v8679
    %v8764 = vunpack.c.l.b16 %v8680
    %v8765 = vunpack.c.h.b16 %v8677
    %v8766 = vunpack.c.h.b16 %v8678
    %v8767 = vunpack.c.h.b16 %v8679
    %v8768 = vunpack.c.h.b16 %v8680
    %v8769 = vunpack.c.l.b16 %v8681
    %v8770 = vunpack.c.l.b16 %v8682
    %v8771 = vunpack.c.l.b16 %v8683
    %v8772 = vunpack.c.l.b16 %v8684
    %v8773 = vunpack.c.h.b16 %v8681
    %v8774 = vunpack.c.h.b16 %v8682
    %v8775 = vunpack.c.h.b16 %v8683
    %v8776 = vunpack.c.h.b16 %v8684
    %v8777 = vunpack.c.l.b16 %v8685
    %v8778 = vunpack.c.l.b16 %v8686
    %v8779 = vunpack.c.l.b16 %v8687
    %v8780 = vunpack.c.l.b16 %v8688
    %v8781 = vunpack.c.h.b16 %v8685
    %v8782 = vunpack.c.h.b16 %v8686
    %v8783 = vunpack.c.h.b16 %v8687
    %v8784 = vunpack.c.h.b16 %v8688
    %v8785 = vpack.c.b16 %v8722, %v8721
    %v8786 = vpack.c.b16 %v8724, %v8723
    %v8787 = vpack.c.b16 %v8726, %v8725
    %v8788 = vpack.c.b16 %v8728, %v8727
    %v8789 = vpack.c.b16 %v8730, %v8729
    %v8790 = vpack.c.b16 %v8732, %v8731
    %v8791 = vpack.c.b16 %v8734, %v8733
    %v8792 = vpack.c.b16 %v8736, %v8735
    %v8793 = vpack.c.b16 %v8738, %v8737
    %v8794 = vpack.c.b16 %v8740, %v8739
    %v8795 = vpack.c.b16 %v8742, %v8741
    %v8796 = vpack.c.b16 %v8744, %v8743
    %v8797 = vpack.c.b16 %v8746, %v8745
    %v8798 = vpack.c.b16 %v8748, %v8747
    %v8799 = vpack.c.b16 %v8750, %v8749
    %v8800 = vpack.c.b16 %v8752, %v8751
    %v8801 = vpack.c.b16 %v8754, %v8753
    %v8802 = vpack.c.b16 %v8756, %v8755
    %v8803 = vpack.c.b16 %v8758, %v8757
    %v8804 = vpack.c.b16 %v8760, %v8759
    %v8805 = vpack.c.b16 %v8762, %v8761
    %v8806 = vpack.c.b16 %v8764, %v8763
    %v8807 = vpack.c.b16 %v8766, %v8765
    %v8808 = vpack.c.b16 %v8768, %v8767
    %v8809 = vpack.c.b16 %v8770, %v8769
    %v8810 = vpack.c.b16 %v8772, %v8771
    %v8811 = vpack.c.b16 %v8774, %v8773
    %v8812 = vpack.c.b16 %v8776, %v8775
    %v8813 = vpack.c.b16 %v8778, %v8777
    %v8814 = vpack.c.b16 %v8780, %v8779
    %v8815 = vpack.c.b16 %v8782, %v8781
    %v8816 = vpack.c.b16 %v8784, %v8783
    %8849 = vst [vmem:[#allocation13] sm:$0xff] %v8785
    %8850 = vst [vmem:[#allocation13 + $0x8] sm:$0xff] %v8786
    %8851 = vst [vmem:[#allocation13 + $0x10] sm:$0xff] %v8787
    %8852 = vst [vmem:[#allocation13 + $0x18] sm:$0xff] %v8788
    %8853 = vst [vmem:[#allocation13 + $0x20] sm:$0xff] %v8789
    %8854 = vst [vmem:[#allocation13 + $0x28] sm:$0xff] %v8790
    %8855 = vst [vmem:[#allocation13 + $0x30] sm:$0xff] %v8791
    %8856 = vst [vmem:[#allocation13 + $0x38] sm:$0xff] %v8792
    %8857 = vst [vmem:[#allocation13 + $0x40] sm:$0xff] %v8793
    %8858 = vst [vmem:[#allocation13 + $0x48] sm:$0xff] %v8794
    %8859 = vst [vmem:[#allocation13 + $0x50] sm:$0xff] %v8795
    %8860 = vst [vmem:[#allocation13 + $0x58] sm:$0xff] %v8796
    %8861 = vst [vmem:[#allocation13 + $0x60] sm:$0xff] %v8797
    %8862 = vst [vmem:[#allocation13 + $0x68] sm:$0xff] %v8798
    %8863 = vst [vmem:[#allocation13 + $0x70] sm:$0xff] %v8799
    %8864 = vst [vmem:[#allocation13 + $0x78] sm:$0xff] %v8800
    %8865 = vst [vmem:[#allocation13 + $0x80] sm:$0xff] %v8801
    %8866 = vst [vmem:[#allocation13 + $0x88] sm:$0xff] %v8802
    %8867 = vst [vmem:[#allocation13 + $0x90] sm:$0xff] %v8803
    %8868 = vst [vmem:[#allocation13 + $0x98] sm:$0xff] %v8804
    %8869 = vst [vmem:[#allocation13 + $0xa0] sm:$0xff] %v8805
    %8870 = vst [vmem:[#allocation13 + $0xa8] sm:$0xff] %v8806
    %8871 = vst [vmem:[#allocation13 + $0xb0] sm:$0xff] %v8807
    %8872 = vst [vmem:[#allocation13 + $0xb8] sm:$0xff] %v8808
    %8873 = vst [vmem:[#allocation13 + $0xc0] sm:$0xff] %v8809
    %8874 = vst [vmem:[#allocation13 + $0xc8] sm:$0xff] %v8810
    %8875 = vst [vmem:[#allocation13 + $0xd0] sm:$0xff] %v8811
    %8876 = vst [vmem:[#allocation13 + $0xd8] sm:$0xff] %v8812
    %8877 = vst [vmem:[#allocation13 + $0xe0] sm:$0xff] %v8813
    %8878 = vst [vmem:[#allocation13 + $0xe8] sm:$0xff] %v8814
    %8879 = vst [vmem:[#allocation13 + $0xf0] sm:$0xff] %v8815
    %8880 = vst [vmem:[#allocation13 + $0xf8] sm:$0xff] %v8816
    %v8881 = vpack.c.bf16 %v5285, %v5281
    %v8882 = vpack.c.bf16 %v5287, %v5283
    %v8883 = vpack.c.bf16 %v5737, %v5733
    %v8884 = vpack.c.bf16 %v5739, %v5735
    %v8885 = vpack.c.bf16 %v5295, %v5291
    %v8886 = vpack.c.bf16 %v5297, %v5293
    %v8887 = vpack.c.bf16 %v5747, %v5743
    %v8888 = vpack.c.bf16 %v5749, %v5745
    %v8889 = vpack.c.bf16 %v5305, %v5301
    %v8890 = vpack.c.bf16 %v5307, %v5303
    %v8891 = vpack.c.bf16 %v5757, %v5753
    %v8892 = vpack.c.bf16 %v5759, %v5755
    %v8893 = vpack.c.bf16 %v5315, %v5311
    %v8894 = vpack.c.bf16 %v5317, %v5313
    %v8895 = vpack.c.bf16 %v5767, %v5763
    %v8896 = vpack.c.bf16 %v5769, %v5765
    %v8897 = vpack.c.bf16 %v5325, %v5321
    %v8898 = vpack.c.bf16 %v5327, %v5323
    %v8899 = vpack.c.bf16 %v5777, %v5773
    %v8900 = vpack.c.bf16 %v5779, %v5775
    %v8901 = vpack.c.bf16 %v5335, %v5331
    %v8902 = vpack.c.bf16 %v5337, %v5333
    %v8903 = vpack.c.bf16 %v5787, %v5783
    %v8904 = vpack.c.bf16 %v5789, %v5785
    %v8905 = vpack.c.bf16 %v5345, %v5341
    %v8906 = vpack.c.bf16 %v5347, %v5343
    %v8907 = vpack.c.bf16 %v5797, %v5793
    %v8908 = vpack.c.bf16 %v5799, %v5795
    %v8909 = vpack.c.bf16 %v5355, %v5351
    %v8910 = vpack.c.bf16 %v5357, %v5353
    %v8911 = vpack.c.bf16 %v5807, %v5803
    %v8912 = vpack.c.bf16 %v5809, %v5805
    %v8945 = vunpack.c.l.b16 %v8881
    %v8946 = vunpack.c.l.b16 %v8882
    %v8947 = vunpack.c.l.b16 %v8883
    %v8948 = vunpack.c.l.b16 %v8884
    %v8949 = vunpack.c.h.b16 %v8881
    %v8950 = vunpack.c.h.b16 %v8882
    %v8951 = vunpack.c.h.b16 %v8883
    %v8952 = vunpack.c.h.b16 %v8884
    %v8953 = vunpack.c.l.b16 %v8885
    %v8954 = vunpack.c.l.b16 %v8886
    %v8955 = vunpack.c.l.b16 %v8887
    %v8956 = vunpack.c.l.b16 %v8888
    %v8957 = vunpack.c.h.b16 %v8885
    %v8958 = vunpack.c.h.b16 %v8886
    %v8959 = vunpack.c.h.b16 %v8887
    %v8960 = vunpack.c.h.b16 %v8888
    %v8961 = vunpack.c.l.b16 %v8889
    %v8962 = vunpack.c.l.b16 %v8890
    %v8963 = vunpack.c.l.b16 %v8891
    %v8964 = vunpack.c.l.b16 %v8892
    %v8965 = vunpack.c.h.b16 %v8889
    %v8966 = vunpack.c.h.b16 %v8890
    %v8967 = vunpack.c.h.b16 %v8891
    %v8968 = vunpack.c.h.b16 %v8892
    %v8969 = vunpack.c.l.b16 %v8893
    %v8970 = vunpack.c.l.b16 %v8894
    %v8971 = vunpack.c.l.b16 %v8895
    %v8972 = vunpack.c.l.b16 %v8896
    %v8973 = vunpack.c.h.b16 %v8893
    %v8974 = vunpack.c.h.b16 %v8894
    %v8975 = vunpack.c.h.b16 %v8895
    %v8976 = vunpack.c.h.b16 %v8896
    %v8977 = vunpack.c.l.b16 %v8897
    %v8978 = vunpack.c.l.b16 %v8898
    %v8979 = vunpack.c.l.b16 %v8899
    %v8980 = vunpack.c.l.b16 %v8900
    %v8981 = vunpack.c.h.b16 %v8897
    %v8982 = vunpack.c.h.b16 %v8898
    %v8983 = vunpack.c.h.b16 %v8899
    %v8984 = vunpack.c.h.b16 %v8900
    %v8985 = vunpack.c.l.b16 %v8901
    %v8986 = vunpack.c.l.b16 %v8902
    %v8987 = vunpack.c.l.b16 %v8903
    %v8988 = vunpack.c.l.b16 %v8904
    %v8989 = vunpack.c.h.b16 %v8901
    %v8990 = vunpack.c.h.b16 %v8902
    %v8991 = vunpack.c.h.b16 %v8903
    %v8992 = vunpack.c.h.b16 %v8904
    %v8993 = vunpack.c.l.b16 %v8905
    %v8994 = vunpack.c.l.b16 %v8906
    %v8995 = vunpack.c.l.b16 %v8907
    %v8996 = vunpack.c.l.b16 %v8908
    %v8997 = vunpack.c.h.b16 %v8905
    %v8998 = vunpack.c.h.b16 %v8906
    %v8999 = vunpack.c.h.b16 %v8907
    %v9000 = vunpack.c.h.b16 %v8908
    %v9001 = vunpack.c.l.b16 %v8909
    %v9002 = vunpack.c.l.b16 %v8910
    %v9003 = vunpack.c.l.b16 %v8911
    %v9004 = vunpack.c.l.b16 %v8912
    %v9005 = vunpack.c.h.b16 %v8909
    %v9006 = vunpack.c.h.b16 %v8910
    %v9007 = vunpack.c.h.b16 %v8911
    %v9008 = vunpack.c.h.b16 %v8912
    %v9009 = vpack.c.b16 %v8946, %v8945
    %v9010 = vpack.c.b16 %v8948, %v8947
    %v9011 = vpack.c.b16 %v8950, %v8949
    %v9012 = vpack.c.b16 %v8952, %v8951
    %v9013 = vpack.c.b16 %v8954, %v8953
    %v9014 = vpack.c.b16 %v8956, %v8955
    %v9015 = vpack.c.b16 %v8958, %v8957
    %v9016 = vpack.c.b16 %v8960, %v8959
    %v9017 = vpack.c.b16 %v8962, %v8961
    %v9018 = vpack.c.b16 %v8964, %v8963
    %v9019 = vpack.c.b16 %v8966, %v8965
    %v9020 = vpack.c.b16 %v8968, %v8967
    %v9021 = vpack.c.b16 %v8970, %v8969
    %v9022 = vpack.c.b16 %v8972, %v8971
    %v9023 = vpack.c.b16 %v8974, %v8973
    %v9024 = vpack.c.b16 %v8976, %v8975
    %v9025 = vpack.c.b16 %v8978, %v8977
    %v9026 = vpack.c.b16 %v8980, %v8979
    %v9027 = vpack.c.b16 %v8982, %v8981
    %v9028 = vpack.c.b16 %v8984, %v8983
    %v9029 = vpack.c.b16 %v8986, %v8985
    %v9030 = vpack.c.b16 %v8988, %v8987
    %v9031 = vpack.c.b16 %v8990, %v8989
    %v9032 = vpack.c.b16 %v8992, %v8991
    %v9033 = vpack.c.b16 %v8994, %v8993
    %v9034 = vpack.c.b16 %v8996, %v8995
    %v9035 = vpack.c.b16 %v8998, %v8997
    %v9036 = vpack.c.b16 %v9000, %v8999
    %v9037 = vpack.c.b16 %v9002, %v9001
    %v9038 = vpack.c.b16 %v9004, %v9003
    %v9039 = vpack.c.b16 %v9006, %v9005
    %v9040 = vpack.c.b16 %v9008, %v9007
    %9073 = vst [vmem:[#allocation14] sm:$0xff] %v9009
    %9074 = vst [vmem:[#allocation14 + $0x8] sm:$0xff] %v9010
    %9075 = vst [vmem:[#allocation14 + $0x10] sm:$0xff] %v9011
    %9076 = vst [vmem:[#allocation14 + $0x18] sm:$0xff] %v9012
    %9077 = vst [vmem:[#allocation14 + $0x20] sm:$0xff] %v9013
    %9078 = vst [vmem:[#allocation14 + $0x28] sm:$0xff] %v9014
    %9079 = vst [vmem:[#allocation14 + $0x30] sm:$0xff] %v9015
    %9080 = vst [vmem:[#allocation14 + $0x38] sm:$0xff] %v9016
    %9081 = vst [vmem:[#allocation14 + $0x40] sm:$0xff] %v9017
    %9082 = vst [vmem:[#allocation14 + $0x48] sm:$0xff] %v9018
    %9083 = vst [vmem:[#allocation14 + $0x50] sm:$0xff] %v9019
    %9084 = vst [vmem:[#allocation14 + $0x58] sm:$0xff] %v9020
    %9085 = vst [vmem:[#allocation14 + $0x60] sm:$0xff] %v9021
    %9086 = vst [vmem:[#allocation14 + $0x68] sm:$0xff] %v9022
    %9087 = vst [vmem:[#allocation14 + $0x70] sm:$0xff] %v9023
    %9088 = vst [vmem:[#allocation14 + $0x78] sm:$0xff] %v9024
    %9089 = vst [vmem:[#allocation14 + $0x80] sm:$0xff] %v9025
    %9090 = vst [vmem:[#allocation14 + $0x88] sm:$0xff] %v9026
    %9091 = vst [vmem:[#allocation14 + $0x90] sm:$0xff] %v9027
    %9092 = vst [vmem:[#allocation14 + $0x98] sm:$0xff] %v9028
    %9093 = vst [vmem:[#allocation14 + $0xa0] sm:$0xff] %v9029
    %9094 = vst [vmem:[#allocation14 + $0xa8] sm:$0xff] %v9030
    %9095 = vst [vmem:[#allocation14 + $0xb0] sm:$0xff] %v9031
    %9096 = vst [vmem:[#allocation14 + $0xb8] sm:$0xff] %v9032
    %9097 = vst [vmem:[#allocation14 + $0xc0] sm:$0xff] %v9033
    %9098 = vst [vmem:[#allocation14 + $0xc8] sm:$0xff] %v9034
    %9099 = vst [vmem:[#allocation14 + $0xd0] sm:$0xff] %v9035
    %9100 = vst [vmem:[#allocation14 + $0xd8] sm:$0xff] %v9036
    %9101 = vst [vmem:[#allocation14 + $0xe0] sm:$0xff] %v9037
    %9102 = vst [vmem:[#allocation14 + $0xe8] sm:$0xff] %v9038
    %9103 = vst [vmem:[#allocation14 + $0xf0] sm:$0xff] %v9039
    %9104 = vst [vmem:[#allocation14 + $0xf8] sm:$0xff] %v9040
    %v9105 = vpack.c.bf16 %v8131, %v8127
    %v9106 = vpack.c.bf16 %v8133, %v8129
    %v9107 = vpack.c.bf16 %v8583, %v8579
    %v9108 = vpack.c.bf16 %v8585, %v8581
    %v9109 = vpack.c.bf16 %v8141, %v8137
    %v9110 = vpack.c.bf16 %v8143, %v8139
    %v9111 = vpack.c.bf16 %v8593, %v8589
    %v9112 = vpack.c.bf16 %v8595, %v8591
    %v9113 = vpack.c.bf16 %v8151, %v8147
    %v9114 = vpack.c.bf16 %v8153, %v8149
    %v9115 = vpack.c.bf16 %v8603, %v8599
    %v9116 = vpack.c.bf16 %v8605, %v8601
    %v9117 = vpack.c.bf16 %v8161, %v8157
    %v9118 = vpack.c.bf16 %v8163, %v8159
    %v9119 = vpack.c.bf16 %v8613, %v8609
    %v9120 = vpack.c.bf16 %v8615, %v8611
    %v9121 = vpack.c.bf16 %v8171, %v8167
    %v9122 = vpack.c.bf16 %v8173, %v8169
    %v9123 = vpack.c.bf16 %v8623, %v8619
    %v9124 = vpack.c.bf16 %v8625, %v8621
    %v9125 = vpack.c.bf16 %v8181, %v8177
    %v9126 = vpack.c.bf16 %v8183, %v8179
    %v9127 = vpack.c.bf16 %v8633, %v8629
    %v9128 = vpack.c.bf16 %v8635, %v8631
    %v9129 = vpack.c.bf16 %v8191, %v8187
    %v9130 = vpack.c.bf16 %v8193, %v8189
    %v9131 = vpack.c.bf16 %v8643, %v8639
    %v9132 = vpack.c.bf16 %v8645, %v8641
    %v9133 = vpack.c.bf16 %v8201, %v8197
    %v9134 = vpack.c.bf16 %v8203, %v8199
    %v9135 = vpack.c.bf16 %v8653, %v8649
    %v9136 = vpack.c.bf16 %v8655, %v8651
    %v9169 = vunpack.c.l.b16 %v9105
    %v9170 = vunpack.c.l.b16 %v9106
    %v9171 = vunpack.c.l.b16 %v9107
    %v9172 = vunpack.c.l.b16 %v9108
    %v9173 = vunpack.c.h.b16 %v9105
    %v9174 = vunpack.c.h.b16 %v9106
    %v9175 = vunpack.c.h.b16 %v9107
    %v9176 = vunpack.c.h.b16 %v9108
    %v9177 = vunpack.c.l.b16 %v9109
    %v9178 = vunpack.c.l.b16 %v9110
    %v9179 = vunpack.c.l.b16 %v9111
    %v9180 = vunpack.c.l.b16 %v9112
    %v9181 = vunpack.c.h.b16 %v9109
    %v9182 = vunpack.c.h.b16 %v9110
    %v9183 = vunpack.c.h.b16 %v9111
    %v9184 = vunpack.c.h.b16 %v9112
    %v9185 = vunpack.c.l.b16 %v9113
    %v9186 = vunpack.c.l.b16 %v9114
    %v9187 = vunpack.c.l.b16 %v9115
    %v9188 = vunpack.c.l.b16 %v9116
    %v9189 = vunpack.c.h.b16 %v9113
    %v9190 = vunpack.c.h.b16 %v9114
    %v9191 = vunpack.c.h.b16 %v9115
    %v9192 = vunpack.c.h.b16 %v9116
    %v9193 = vunpack.c.l.b16 %v9117
    %v9194 = vunpack.c.l.b16 %v9118
    %v9195 = vunpack.c.l.b16 %v9119
    %v9196 = vunpack.c.l.b16 %v9120
    %v9197 = vunpack.c.h.b16 %v9117
    %v9198 = vunpack.c.h.b16 %v9118
    %v9199 = vunpack.c.h.b16 %v9119
    %v9200 = vunpack.c.h.b16 %v9120
    %v9201 = vunpack.c.l.b16 %v9121
    %v9202 = vunpack.c.l.b16 %v9122
    %v9203 = vunpack.c.l.b16 %v9123
    %v9204 = vunpack.c.l.b16 %v9124
    %v9205 = vunpack.c.h.b16 %v9121
    %v9206 = vunpack.c.h.b16 %v9122
    %v9207 = vunpack.c.h.b16 %v9123
    %v9208 = vunpack.c.h.b16 %v9124
    %v9209 = vunpack.c.l.b16 %v9125
    %v9210 = vunpack.c.l.b16 %v9126
    %v9211 = vunpack.c.l.b16 %v9127
    %v9212 = vunpack.c.l.b16 %v9128
    %v9213 = vunpack.c.h.b16 %v9125
    %v9214 = vunpack.c.h.b16 %v9126
    %v9215 = vunpack.c.h.b16 %v9127
    %v9216 = vunpack.c.h.b16 %v9128
    %v9217 = vunpack.c.l.b16 %v9129
    %v9218 = vunpack.c.l.b16 %v9130
    %v9219 = vunpack.c.l.b16 %v9131
    %v9220 = vunpack.c.l.b16 %v9132
    %v9221 = vunpack.c.h.b16 %v9129
    %v9222 = vunpack.c.h.b16 %v9130
    %v9223 = vunpack.c.h.b16 %v9131
    %v9224 = vunpack.c.h.b16 %v9132
    %v9225 = vunpack.c.l.b16 %v9133
    %v9226 = vunpack.c.l.b16 %v9134
    %v9227 = vunpack.c.l.b16 %v9135
    %v9228 = vunpack.c.l.b16 %v9136
    %v9229 = vunpack.c.h.b16 %v9133
    %v9230 = vunpack.c.h.b16 %v9134
    %v9231 = vunpack.c.h.b16 %v9135
    %v9232 = vunpack.c.h.b16 %v9136
    %v9233 = vpack.c.b16 %v9170, %v9169
    %v9234 = vpack.c.b16 %v9172, %v9171
    %v9235 = vpack.c.b16 %v9174, %v9173
    %v9236 = vpack.c.b16 %v9176, %v9175
    %v9237 = vpack.c.b16 %v9178, %v9177
    %v9238 = vpack.c.b16 %v9180, %v9179
    %v9239 = vpack.c.b16 %v9182, %v9181
    %v9240 = vpack.c.b16 %v9184, %v9183
    %v9241 = vpack.c.b16 %v9186, %v9185
    %v9242 = vpack.c.b16 %v9188, %v9187
    %v9243 = vpack.c.b16 %v9190, %v9189
    %v9244 = vpack.c.b16 %v9192, %v9191
    %v9245 = vpack.c.b16 %v9194, %v9193
    %v9246 = vpack.c.b16 %v9196, %v9195
    %v9247 = vpack.c.b16 %v9198, %v9197
    %v9248 = vpack.c.b16 %v9200, %v9199
    %v9249 = vpack.c.b16 %v9202, %v9201
    %v9250 = vpack.c.b16 %v9204, %v9203
    %v9251 = vpack.c.b16 %v9206, %v9205
    %v9252 = vpack.c.b16 %v9208, %v9207
    %v9253 = vpack.c.b16 %v9210, %v9209
    %v9254 = vpack.c.b16 %v9212, %v9211
    %v9255 = vpack.c.b16 %v9214, %v9213
    %v9256 = vpack.c.b16 %v9216, %v9215
    %v9257 = vpack.c.b16 %v9218, %v9217
    %v9258 = vpack.c.b16 %v9220, %v9219
    %v9259 = vpack.c.b16 %v9222, %v9221
    %v9260 = vpack.c.b16 %v9224, %v9223
    %v9261 = vpack.c.b16 %v9226, %v9225
    %v9262 = vpack.c.b16 %v9228, %v9227
    %v9263 = vpack.c.b16 %v9230, %v9229
    %v9264 = vpack.c.b16 %v9232, %v9231
    %9297 = vst [vmem:[#allocation16] sm:$0xff] %v9233
    %9298 = vst [vmem:[#allocation16 + $0x8] sm:$0xff] %v9234
    %9299 = vst [vmem:[#allocation16 + $0x10] sm:$0xff] %v9235
    %9300 = vst [vmem:[#allocation16 + $0x18] sm:$0xff] %v9236
    %9301 = vst [vmem:[#allocation16 + $0x20] sm:$0xff] %v9237
    %9302 = vst [vmem:[#allocation16 + $0x28] sm:$0xff] %v9238
    %9303 = vst [vmem:[#allocation16 + $0x30] sm:$0xff] %v9239
    %9304 = vst [vmem:[#allocation16 + $0x38] sm:$0xff] %v9240
    %9305 = vst [vmem:[#allocation16 + $0x40] sm:$0xff] %v9241
    %9306 = vst [vmem:[#allocation16 + $0x48] sm:$0xff] %v9242
    %9307 = vst [vmem:[#allocation16 + $0x50] sm:$0xff] %v9243
    %9308 = vst [vmem:[#allocation16 + $0x58] sm:$0xff] %v9244
    %9309 = vst [vmem:[#allocation16 + $0x60] sm:$0xff] %v9245
    %9310 = vst [vmem:[#allocation16 + $0x68] sm:$0xff] %v9246
    %9311 = vst [vmem:[#allocation16 + $0x70] sm:$0xff] %v9247
    %9312 = vst [vmem:[#allocation16 + $0x78] sm:$0xff] %v9248
    %9313 = vst [vmem:[#allocation16 + $0x80] sm:$0xff] %v9249
    %9314 = vst [vmem:[#allocation16 + $0x88] sm:$0xff] %v9250
    %9315 = vst [vmem:[#allocation16 + $0x90] sm:$0xff] %v9251
    %9316 = vst [vmem:[#allocation16 + $0x98] sm:$0xff] %v9252
    %9317 = vst [vmem:[#allocation16 + $0xa0] sm:$0xff] %v9253
    %9318 = vst [vmem:[#allocation16 + $0xa8] sm:$0xff] %v9254
    %9319 = vst [vmem:[#allocation16 + $0xb0] sm:$0xff] %v9255
    %9320 = vst [vmem:[#allocation16 + $0xb8] sm:$0xff] %v9256
    %9321 = vst [vmem:[#allocation16 + $0xc0] sm:$0xff] %v9257
    %9322 = vst [vmem:[#allocation16 + $0xc8] sm:$0xff] %v9258
    %9323 = vst [vmem:[#allocation16 + $0xd0] sm:$0xff] %v9259
    %9324 = vst [vmem:[#allocation16 + $0xd8] sm:$0xff] %v9260
    %9325 = vst [vmem:[#allocation16 + $0xe0] sm:$0xff] %v9261
    %9326 = vst [vmem:[#allocation16 + $0xe8] sm:$0xff] %v9262
    %9327 = vst [vmem:[#allocation16 + $0xf0] sm:$0xff] %v9263
    %9328 = vst [vmem:[#allocation16 + $0xf8] sm:$0xff] %v9264
    // Predicated region
    $region62: #{tpu_custom_call.1} parent=1 // pred_check
      _
    $region63: #{tpu_custom_call.1} parent=1 // pred_check_branch
      %9330 = sbr.rel (0) target = $region65
    $region64: #{tpu_custom_call.1} parent=1 // pred_region
      %s9332 = ssub.s32 4096, 4096
      %9333 = vsyncadd [#allocation4], %s9332
      %s9334 = sshll.u32 [#allocation13], 4
      %s9335 = int_to_ptr.vmem [resolvable:$true] %s9334
      %9340 = dma.vmem_to_hbm [thread:$0]  %s9335, 4096, %s9, [#allocation4], 256, 256, 16
    $region65: #{tpu_custom_call.1} parent=1 // pred_fallthru
      _
    // Predicated region
    $region66: #{tpu_custom_call.1} parent=1 // pred_check
      _
    $region67: #{tpu_custom_call.1} parent=1 // pred_check_branch
      %9342 = sbr.rel (0) target = $region69
    $region68: #{tpu_custom_call.1} parent=1 // pred_region
      %s9344 = ssub.s32 4096, 4096
      %9345 = vsyncadd [#allocation15], %s9344
      %s9346 = sshll.u32 [#allocation14], 4
      %s9347 = int_to_ptr.vmem [resolvable:$true] %s9346
      %9352 = dma.vmem_to_hbm [thread:$0]  %s9347, 4096, %s10, [#allocation15], 256, 256, 16
    $region69: #{tpu_custom_call.1} parent=1 // pred_fallthru
      _
    // Predicated region
    $region70: #{tpu_custom_call.1} parent=1 // pred_check
      _
    $region71: #{tpu_custom_call.1} parent=1 // pred_check_branch
      %9354 = sbr.rel (0) target = $region73
    $region72: #{tpu_custom_call.1} parent=1 // pred_region
      %s9356 = ssub.s32 4096, 4096
      %9357 = vsyncadd [#allocation15], %s9356
      %s9358 = sshll.u32 [#allocation16], 4
      %s9359 = int_to_ptr.vmem [resolvable:$true] %s9358
      %9364 = dma.vmem_to_hbm [thread:$0]  %s9359, 4096, %s11, [#allocation15], 256, 256, 16
    $region73: #{tpu_custom_call.1} parent=1 // pred_fallthru
      _
    // Predicated region
    $region74: #{tpu_custom_call.1} parent=1 // pred_check
      _
    $region75: #{tpu_custom_call.1} parent=1 // pred_check_branch
      %9366 = sbr.rel (0) target = $region77
    $region76: #{tpu_custom_call.1} parent=1 // pred_region
      %9367 = dma.done [#allocation4], 4096
    $region77: #{tpu_custom_call.1} parent=1 // pred_fallthru
      _
    // Predicated region
    $region78: #{tpu_custom_call.1} parent=1 // pred_check
      _
    $region79: #{tpu_custom_call.1} parent=1 // pred_check_branch
      %9369 = sbr.rel (0) target = $region81
    $region80: #{tpu_custom_call.1} parent=1 // pred_region
      %9370 = dma.done [#allocation15], 4096
    $region81: #{tpu_custom_call.1} parent=1 // pred_fallthru
      _
    // Predicated region
    $region82: #{tpu_custom_call.1} parent=1 // pred_check
      _
    $region83: #{tpu_custom_call.1} parent=1 // pred_check_branch
      %9372 = sbr.rel (0) target = $region85
    $region84: #{tpu_custom_call.1} parent=1 // pred_region
      %9373 = dma.done [#allocation15], 4096
    $region85: #{tpu_custom_call.1} parent=1 // pred_fallthru
      _
    %9374 = vsyncpa [#allocation3], 1
    %9375 = vsyncpa [#allocation6], 1
    %9376 = vsyncpa [#allocation9], 1
    %9377 = vsyncpa [#allocation12], 1
    %9378 = vsyncpa [#allocation4], 1
    %9379 = vsyncpa [#allocation15], 1

</llo_original>
